<compile_context>
chip_gen: v7x
topology: tpu7x:2x2x1
jax: 0.10.0
libtpu: 0.0.40
codegen_flags: <defaults>
</compile_context>

<pallas_src>
import numpy as np
import jax
import jax.numpy as jnp
from jax import lax
from jax.experimental import pallas as pl
from jax.experimental.pallas import tpu as pltpu

H = W = 6                    # linearSize
HW = H * W
C0, C1, C2 = 1, 64, 128
HP = WP = 3                  # spatial size after first AvgPool2d(2)
NPOOL = HP * WP              # 9 pooled positions
NCLASSES = 10
NEG_SLOPE = 0.02
BN_EPS = 1e-5
LANES = 128                  # lane-dense padded output / head width
K_PAD = 128                  # input minor dim padded to one full vreg of lanes
POOL_W = (NPOOL + 1) * C1    # 640 = per-quadrant lane group (9*64 padded to x128)
Z1_W = 4 * POOL_W            # 2560 = width of z1 (quadrant-major layout)
Z2_W = NPOOL * C2            # 1152 = width of z2
NEG_BIG = -1e30              # finite sentinel for masked log-softmax


# ------------------------------------------------------------ per-chip tuning
def _tpu_tuning():
    """Batch rows per grid step and scoped-VMEM limit per TPU generation.
    v5e/v6e have 128 MiB VMEM per TensorCore (bigger blocks amortize per-step
    overhead); v7x has 64 MiB per TC so stay conservative (<= ~48 MiB)."""
    try:
        kind = jax.devices()[0].device_kind.lower()
    except Exception:
        kind = ""
    if "v6" in kind:
        return 512, 64 * 1024 * 1024
    if "v5" in kind:
        return 256, 48 * 1024 * 1024
    return 256, 40 * 1024 * 1024      # v7x / unknown: conservative


B_MAX, VMEM_LIMIT = _tpu_tuning()


# ------------------------------------------------------------------ constants
def _shift_mats(h, w, k=3, pad=1):
    """S[t] implements out[p] = x_zero_padded[p shifted by tap t] (flattened)."""
    hw = h * w
    mats = np.zeros((k * k, hw, hw), np.float64)
    for dh in range(k):
        for dw in range(k):
            t = dh * k + dw
            for oh in range(h):
                for ow in range(w):
                    ih, iw = oh + dh - pad, ow + dw - pad
                    if 0 <= ih < h and 0 <= iw < w:
                        mats[t, oh * w + ow, ih * w + iw] = 1.0
    return mats


def _avgpool_mat(h, w, k=2):
    """AvgPool2d(k) (floor mode, like torch) on flattened maps."""
    ho, wo = h // k, w // k
    m = np.zeros((ho * wo, h * w), np.float64)
    for oh in range(ho):
        for ow in range(wo):
            for i in range(k):
                for j in range(k):
                    m[oh * wo + ow, (oh * k + i) * w + (ow * k + j)] = 1.0 / (k * k)
    return m


def precompute_constants(p):
    """Fold the forward into 3 dense lane-aligned operators (host, float64,
    once at init). Matmul weights are stored bf16 (MXU), biases f32."""
    w1 = np.asarray(p['w1_hwio'], np.float64).reshape(9, C0, C1)[:, 0, :]   # (9, 64)
    b1 = np.asarray(p['b1'], np.float64)
    w2 = np.asarray(p['w2_hwio'], np.float64).reshape(9, C1, C2)            # (9, 64, 128)
    b2 = np.asarray(p['b2'], np.float64)
    gamma = np.asarray(p['gamma'], np.float64)
    beta = np.asarray(p['beta'], np.float64)
    rmean = np.asarray(p['running_mean'], np.float64)
    rvar = np.asarray(p['running_var'], np.float64)
    wl = np.asarray(p['wl'], np.float64)                                    # (128, 10)
    bl = np.asarray(p['bl'], np.float64)

    S1 = _shift_mats(H, W)            # (9, 36, 36)  [tap, out_pos, in_pos]
    S2 = _shift_mats(HP, WP)          # (9, 9, 9)
    pool2 = _avgpool_mat(HP, WP)[0]   # (9,)  second AvgPool2d(2) on 3x3 maps

    # conv1 as a dense operator: conv_out[p, c] = sum_q M1_full[q, p, c] * x[q]
    M1_full = np.einsum('tpq,tc->qpc', S1, w1)                               # (36, 36, 64)

    # z1 column layout: col = t*POOL_W + q*C1 + c, where t = pool quadrant
    # (dh*2+dw), q = pooled position (poh*3+pow), c = channel; each quadrant
    # group is padded from 9*64=576 to POOL_W=640 lanes (multiple of 128) so
    # the in-kernel AvgPool is 3 vreg-aligned slices + adds.
    M1p = np.zeros((K_PAD, Z1_W))
    b1p = np.zeros((1, Z1_W))
    for dh in range(2):
        for dw in range(2):
            t = dh * 2 + dw
            for poh in range(HP):
                for pow_ in range(WP):
                    q = poh * WP + pow_
                    pos = (2 * poh + dh) * W + (2 * pow_ + dw)
                    col = t * POOL_W + q * C1
                    M1p[:HW, col:col + C1] = M1_full[:, pos, :]
                    b1p[0, col:col + C1] = b1

    # conv2 on the pooled 3x3 maps, with eval-mode BatchNorm folded in.
    # (BN is a per-channel affine and commutes with the average pool.)
    bn_scale = gamma / np.sqrt(rvar + BN_EPS)
    bn_shift = beta - rmean * bn_scale
    M2_raw = np.einsum('taq,tcd->qcad', S2, w2).reshape(NPOOL * C1, Z2_W)    # (576, 1152)
    scale_vec = np.broadcast_to(bn_scale, (NPOOL, C1)).reshape(NPOOL * C1)
    shift_vec = np.broadcast_to(bn_shift, (NPOOL, C1)).reshape(NPOOL * C1)
    M2p = np.zeros((POOL_W, Z2_W))
    M2p[:NPOOL * C1] = M2_raw * scale_vec[:, None]
    b2v = (shift_vec @ M2_raw
           + np.broadcast_to(b2, (NPOOL, C2)).reshape(Z2_W)).reshape(1, Z2_W)

    # pool2 ∘ Flatten ∘ Linear, zero-padded to 128 output lanes (lane-dense).
    M3 = np.zeros((Z2_W, LANES))
    M3[:, :NCLASSES] = np.einsum('a,dk->adk', pool2, wl).reshape(Z2_W, NCLASSES)
    b3v = np.zeros((1, LANES))
    b3v[0, :NCLASSES] = bl

    bf16 = lambda a: jnp.asarray(a, jnp.bfloat16)
    f32 = lambda a: jnp.asarray(a, jnp.float32)
    return dict(M1=bf16(M1p), b1v=f32(b1p), M2=bf16(M2p), b2v=f32(b2v),
                M3=bf16(M3), b3v=f32(b3v))


# --------------------------------------------------------------------- kernel
def _simpleclas_kernel(x_ref, m1_ref, b1v_ref, m2_ref, b2v_ref,
                       m3_ref, b3v_ref, o_ref):
    # block 1: fused conv1 (+bias); LeakyReLU. bf16 MXU operands, f32 accumulate.
    x = x_ref[...].astype(jnp.bfloat16)                                     # (B, 128)
    z1 = jnp.dot(x, m1_ref[...], preferred_element_type=jnp.float32) + b1v_ref[...]
    a1 = jnp.where(z1 >= 0, z1, NEG_SLOPE * z1)                             # (B, 2560) f32
    # TODO(synk): Dropout2d / training-mode BatchNorm not implemented (eval only).

    # AvgPool2d(2): quadrant-major layout -> 3 lane-aligned slices + adds (VPU).
    pooled = 0.25 * (a1[:, 0:POOL_W] + a1[:, POOL_W:2 * POOL_W]
                     + a1[:, 2 * POOL_W:3 * POOL_W] + a1[:, 3 * POOL_W:4 * POOL_W])

    # block 2: fused BN ∘ conv2 (+bias) on pooled maps; LeakyReLU.
    z2 = jnp.dot(pooled.astype(jnp.bfloat16), m2_ref[...],
                 preferred_element_type=jnp.float32) + b2v_ref[...]         # (B, 1152)
    a2 = jnp.where(z2 >= 0, z2, NEG_SLOPE * z2)

    # head: fused AvgPool2d(2) ∘ Flatten ∘ Linear (padded to 128 lanes).
    logits = jnp.dot(a2.astype(jnp.bfloat16), m3_ref[...],
                     preferred_element_type=jnp.float32) + b3v_ref[...]     # (B, 128)

    # masked, max-stabilized log-softmax over the first NCLASSES lanes
    # (finite sentinel instead of -inf to avoid inf-arithmetic corner cases).
    col = lax.broadcasted_iota(jnp.int32, logits.shape, 1)
    masked = jnp.where(col < NCLASSES, logits, NEG_BIG)
    m = jnp.max(masked, axis=-1, keepdims=True)
    lse = jnp.log(jnp.sum(jnp.exp(masked - m), axis=-1, keepdims=True)) + m
    o_ref[...] = logits - lse                                               # lane-dense


# -------------------------------------------------------------------- wrapper
def _round_up(v, m):
    return ((v + m - 1) // m) * m


def _pick_block(n):
    """Rows per grid step: >=2 grid steps when possible (so the 'parallel'
    batch axis can shard across both v7x TensorCores), multiple of 8, capped
    at the per-generation B_MAX."""
    if n <= 8:
        return 8
    return min(B_MAX, _round_up(-(-n // 2), 8))


def _make_call(b, n_pad, use_buffered):
    const_kw = {}
    if use_buffered:
        # Grid-invariant constants: single-buffer them (their index_map is
        # constant across the grid, so a second pipeline buffer only costs VMEM).
        const_kw = dict(pipeline_mode=pl.Buffered(1))

    def _const(shape):
        zeros = (0,) * len(shape)
        return pl.BlockSpec(shape, lambda i, _z=zeros: _z, **const_kw)

    return pl.pallas_call(
        _simpleclas_kernel,
        out_shape=jax.ShapeDtypeStruct((n_pad, LANES), jnp.float32),
        grid_spec=pltpu.PrefetchScalarGridSpec(
            num_scalar_prefetch=0,
            grid=(n_pad // b,),
            in_specs=[pl.BlockSpec((b, K_PAD), lambda i: (i, 0)),
                      _const((K_PAD, Z1_W)), _const((1, Z1_W)),
                      _const((POOL_W, Z2_W)), _const((1, Z2_W)),
                      _const((Z2_W, LANES)), _const((1, LANES))],
            out_specs=pl.BlockSpec((b, LANES), lambda i: (i, 0)),
        ),
        compiler_params=pltpu.CompilerParams(
            dimension_semantics=("parallel",),
            vmem_limit_bytes=VMEM_LIMIT),
    )


# Cache compiled callables per (n_pad, block) — note each distinct batch size
# compiles its own specialization (fine for this workload, flagged for serving).
_FWD_CACHE = {}


def _run(x_pad, consts, n_pad, b):
    args = (x_pad, consts['M1'], consts['b1v'], consts['M2'], consts['b2v'],
            consts['M3'], consts['b3v'])
    key = (n_pad, b)
    fn = _FWD_CACHE.get(key)
    if fn is not None:
        return fn(*args)
    last_err = None
    for use_buffered in (True, False):       # fall back if Buffered(1) unsupported
        try:
            cand = jax.jit(_make_call(b, n_pad, use_buffered))
            out = jax.block_until_ready(cand(*args))
        except Exception as e:               # lowering/compile failure -> fallback
            last_err = e
            continue
        _FWD_CACHE[key] = cand
        return out
    raise last_err


def simpleclas_forward(x_nchw, consts):
    n = x_nchw.shape[0]
    # C0 == 1: NCHW -> (N, 36) is a pure reshape (no transpose/copy); pad the
    # minor dim to 128 lanes so the per-step LHS block / MXU loads are unmasked.
    x = jnp.reshape(x_nchw, (n, HW)).astype(jnp.float32)
    x = jnp.pad(x, ((0, 0), (0, K_PAD - HW)))
    b = _pick_block(n)
    n_pad = _round_up(n, b)
    if n_pad != n:
        x = jnp.pad(x, ((0, n_pad - n), (0, 0)))
    out = _run(x, consts, n_pad, b)
    return out[:n, :NCLASSES]


# ----------------------------------------------------------- params / reference
def init_params(key):
    ks = jax.random.split(key, 8)
    return {
        'w1_hwio': jax.random.normal(ks[0], (3, 3, C0, C1), jnp.float32) * 0.2,
        'b1': jax.random.normal(ks[1], (C1,), jnp.float32) * 0.1,
        'gamma': 1.0 + 0.1 * jax.random.normal(ks[2], (C1,), jnp.float32),
        'beta': 0.1 * jax.random.normal(ks[3], (C1,), jnp.float32),
        'running_mean': jnp.zeros((C1,), jnp.float32),
        'running_var': jnp.ones((C1,), jnp.float32),
        'w2_hwio': jax.random.normal(ks[4], (3, 3, C1, C2), jnp.float32) * 0.05,
        'b2': jax.random.normal(ks[5], (C2,), jnp.float32) * 0.1,
        'wl': jax.random.normal(ks[6], (C2, NCLASSES), jnp.float32) * 0.1,
        'bl': jax.random.normal(ks[7], (NCLASSES,), jnp.float32) * 0.1,
    }


def reference_forward(x_nchw, p):
    """Pure-JAX f32 reference matching eval-mode PyTorch semantics."""
    x = jnp.transpose(x_nchw, (0, 2, 3, 1)).astype(jnp.float32)     # NHWC
    dn = ('NHWC', 'HWIO', 'NHWC')
    y = lax.conv_general_dilated(x, p['w1_hwio'], (1, 1), 'SAME',
                                 dimension_numbers=dn) + p['b1']
    y = jnp.where(y >= 0, y, NEG_SLOPE * y)
    scale = p['gamma'] / jnp.sqrt(p['running_var'] + BN_EPS)
    y = (y - p['running_mean']) * scale + p['beta']
    y = lax.reduce_window(y, 0.0, lax.add, (1, 2, 2, 1), (1, 2, 2, 1), 'VALID') / 4.0
    y = lax.conv_general_dilated(y, p['w2_hwio'], (1, 1), 'SAME',
                                 dimension_numbers=dn) + p['b2']
    y = jnp.where(y >= 0, y, NEG_SLOPE * y)
    y = lax.reduce_window(y, 0.0, lax.add, (1, 2, 2, 1), (1, 2, 2, 1), 'VALID') / 4.0
    y = y.reshape(y.shape[0], -1)
    logits = y @ p['wl'] + p['bl']
    return jax.nn.log_softmax(logits, axis=1)


if __name__ == "__main__":
    key = jax.random.PRNGKey(0)
    kx, kp = jax.random.split(key)
    N = 2
    x = jax.random.normal(kx, (N, C0, H, W), jnp.float32)           # NCHW, like PyTorch
    params = init_params(kp)
    consts = precompute_constants(params)                            # once, at init

    out = simpleclas_forward(x, consts)
    out = jax.block_until_ready(out)

    ref = reference_forward(x, params)
    assert out.shape == (N, NCLASSES)
    # bf16 MXU operands with f32 accumulation -> slightly looser tolerance than
    # the all-f32 variant.
    np.testing.assert_allclose(np.asarray(out), np.asarray(ref), rtol=1e-2, atol=1e-2)
    print("KERNEL_OK")
</pallas_src>

<mosaic_0001>
module attributes {stable_mosaic.version = 11 : i64} {
  func.func @_simpleclas_kernel(%arg0: i32, %arg1: memref<8x128xf32, #tpu.memory_space<vmem>>, %arg2: memref<128x2560xbf16, #tpu.memory_space<vmem>>, %arg3: memref<1x2560xf32, #tpu.memory_space<vmem>>, %arg4: memref<640x1152xbf16, #tpu.memory_space<vmem>>, %arg5: memref<1x1152xf32, #tpu.memory_space<vmem>>, %arg6: memref<1152x128xbf16, #tpu.memory_space<vmem>>, %arg7: memref<1x128xf32, #tpu.memory_space<vmem>>, %arg8: memref<8x128xf32, #tpu.memory_space<vmem>>) attributes {dimension_semantics = [#tpu.dimension_semantics<parallel>], iteration_bounds = array<i64: 1>, scalar_prefetch = 0 : i64, scratch_operands = 0 : i64, tpu.core_type = #tpu.core_type<tc>, window_params = [{transform_indices = @transform_0, window_bounds = array<i64: 8, 128>}, {pipeline_mode = #tpu.pipeline_mode<synchronous>, transform_indices = @transform_1, window_bounds = array<i64: 128, 2560>}, {pipeline_mode = #tpu.pipeline_mode<synchronous>, transform_indices = @transform_2, window_bounds = array<i64: 1, 2560>}, {pipeline_mode = #tpu.pipeline_mode<synchronous>, transform_indices = @transform_3, window_bounds = array<i64: 640, 1152>}, {pipeline_mode = #tpu.pipeline_mode<synchronous>, transform_indices = @transform_4, window_bounds = array<i64: 1, 1152>}, {pipeline_mode = #tpu.pipeline_mode<synchronous>, transform_indices = @transform_5, window_bounds = array<i64: 1152, 128>}, {pipeline_mode = #tpu.pipeline_mode<synchronous>, transform_indices = @transform_6, window_bounds = array<i64: 1, 128>}, {transform_indices = @transform_7, window_bounds = array<i64: 8, 128>}]} {
    %c0 = arith.constant 0 : index
    %c0_0 = arith.constant 0 : index
    %0 = vector.load %arg1[%c0, %c0_0] : memref<8x128xf32, #tpu.memory_space<vmem>>, vector<8x128xf32>
    %1 = arith.truncf %0 : vector<8x128xf32> to vector<8x128xbf16>
    %c0_1 = arith.constant 0 : index
    %c0_2 = arith.constant 0 : index
    %2 = vector.load %arg2[%c0_1, %c0_2] : memref<128x2560xbf16, #tpu.memory_space<vmem>>, vector<128x2560xbf16>
    %cst = arith.constant dense<0.000000e+00> : vector<8x2560xf32>
    %3 = tpu.matmul %1, %2, %cst {dimension_numbers = #tpu.dot_dimension_numbers<[1], [0], [0], [1], [0, 0, 1, 1], [], []>} : vector<8x128xbf16>, vector<128x2560xbf16>, vector<8x2560xf32> -> vector<8x2560xf32>
    %c0_3 = arith.constant 0 : index
    %c0_4 = arith.constant 0 : index
    %4 = vector.load %arg3[%c0_3, %c0_4] : memref<1x2560xf32, #tpu.memory_space<vmem>>, vector<1x2560xf32>
    %5 = vector.broadcast %4 : vector<1x2560xf32> to vector<8x2560xf32>
    %6 = arith.addf %3, %5 : vector<8x2560xf32>
    %cst_5 = arith.constant 0.000000e+00 : f32
    %7 = vector.broadcast %cst_5 : f32 to vector<8x2560xf32>
    %8 = arith.cmpf oge, %6, %7 : vector<8x2560xf32>
    %cst_6 = arith.constant 2.000000e-02 : f32
    %9 = vector.broadcast %cst_6 : f32 to vector<8x2560xf32>
    %10 = arith.mulf %9, %6 : vector<8x2560xf32>
    %11 = arith.select %8, %6, %10 : vector<8x2560xi1>, vector<8x2560xf32>
    %12 = vector.extract_strided_slice %11 {offsets = [0, 0], sizes = [8, 640], strides = [1, 1]} : vector<8x2560xf32> to vector<8x640xf32>
    %13 = vector.extract_strided_slice %11 {offsets = [0, 640], sizes = [8, 640], strides = [1, 1]} : vector<8x2560xf32> to vector<8x640xf32>
    %14 = arith.addf %12, %13 : vector<8x640xf32>
    %15 = vector.extract_strided_slice %11 {offsets = [0, 1280], sizes = [8, 640], strides = [1, 1]} : vector<8x2560xf32> to vector<8x640xf32>
    %16 = arith.addf %14, %15 : vector<8x640xf32>
    %17 = vector.extract_strided_slice %11 {offsets = [0, 1920], sizes = [8, 640], strides = [1, 1]} : vector<8x2560xf32> to vector<8x640xf32>
    %18 = arith.addf %16, %17 : vector<8x640xf32>
    %cst_7 = arith.constant 2.500000e-01 : f32
    %19 = vector.broadcast %cst_7 : f32 to vector<8x640xf32>
    %20 = arith.mulf %19, %18 : vector<8x640xf32>
    %21 = arith.truncf %20 : vector<8x640xf32> to vector<8x640xbf16>
    %c0_8 = arith.constant 0 : index
    %c0_9 = arith.constant 0 : index
    %22 = vector.load %arg4[%c0_8, %c0_9] : memref<640x1152xbf16, #tpu.memory_space<vmem>>, vector<640x1152xbf16>
    %cst_10 = arith.constant dense<0.000000e+00> : vector<8x1152xf32>
    %23 = tpu.matmul %21, %22, %cst_10 {dimension_numbers = #tpu.dot_dimension_numbers<[1], [0], [0], [1], [0, 0, 1, 1], [], []>} : vector<8x640xbf16>, vector<640x1152xbf16>, vector<8x1152xf32> -> vector<8x1152xf32>
    %c0_11 = arith.constant 0 : index
    %c0_12 = arith.constant 0 : index
    %24 = vector.load %arg5[%c0_11, %c0_12] : memref<1x1152xf32, #tpu.memory_space<vmem>>, vector<1x1152xf32>
    %25 = vector.broadcast %24 : vector<1x1152xf32> to vector<8x1152xf32>
    %26 = arith.addf %23, %25 : vector<8x1152xf32>
    %cst_13 = arith.constant 0.000000e+00 : f32
    %27 = vector.broadcast %cst_13 : f32 to vector<8x1152xf32>
    %28 = arith.cmpf oge, %26, %27 : vector<8x1152xf32>
    %cst_14 = arith.constant 2.000000e-02 : f32
    %29 = vector.broadcast %cst_14 : f32 to vector<8x1152xf32>
    %30 = arith.mulf %29, %26 : vector<8x1152xf32>
    %31 = arith.select %28, %26, %30 : vector<8x1152xi1>, vector<8x1152xf32>
    %32 = arith.truncf %31 : vector<8x1152xf32> to vector<8x1152xbf16>
    %c0_15 = arith.constant 0 : index
    %c0_16 = arith.constant 0 : index
    %33 = vector.load %arg6[%c0_15, %c0_16] : memref<1152x128xbf16, #tpu.memory_space<vmem>>, vector<1152x128xbf16>
    %cst_17 = arith.constant dense<0.000000e+00> : vector<8x128xf32>
    %34 = tpu.matmul %32, %33, %cst_17 {dimension_numbers = #tpu.dot_dimension_numbers<[1], [0], [0], [1], [0, 0, 1, 1], [], []>} : vector<8x1152xbf16>, vector<1152x128xbf16>, vector<8x128xf32> -> vector<8x128xf32>
    %c0_18 = arith.constant 0 : index
    %c0_19 = arith.constant 0 : index
    %35 = vector.load %arg7[%c0_18, %c0_19] : memref<1x128xf32, #tpu.memory_space<vmem>>, vector<1x128xf32>
    %36 = vector.broadcast %35 : vector<1x128xf32> to vector<8x128xf32>
    %37 = arith.addf %34, %36 : vector<8x128xf32>
    %38 = tpu.iota {dimensions = array<i32: 1>} : vector<8x128xi32>
    %c10_i32 = arith.constant 10 : i32
    %39 = vector.broadcast %c10_i32 : i32 to vector<8x128xi32>
    %40 = arith.cmpi slt, %38, %39 : vector<8x128xi32>
    %cst_20 = arith.constant -1.000000e+30 : f32
    %41 = vector.broadcast %cst_20 : f32 to vector<8x128xf32>
    %42 = arith.select %40, %37, %41 : vector<8x128xi1>, vector<8x128xf32>
    %cst_21 = arith.constant dense<0xFF800000> : vector<8xf32>
    %43 = vector.multi_reduction <maximumf>, %42, %cst_21 [1] : vector<8x128xf32> to vector<8xf32>
    %44 = vector.shape_cast %43 : vector<8xf32> to vector<8x1xf32>
    %45 = vector.broadcast %44 : vector<8x1xf32> to vector<8x128xf32>
    %46 = arith.subf %42, %45 : vector<8x128xf32>
    %47 = math.exp %46 : vector<8x128xf32>
    %cst_22 = arith.constant dense<0.000000e+00> : vector<8xf32>
    %48 = vector.multi_reduction <add>, %47, %cst_22 [1] : vector<8x128xf32> to vector<8xf32>
    %49 = vector.shape_cast %48 : vector<8xf32> to vector<8x1xf32>
    %50 = math.log %49 : vector<8x1xf32>
    %51 = arith.addf %50, %44 : vector<8x1xf32>
    %52 = vector.broadcast %51 : vector<8x1xf32> to vector<8x128xf32>
    %53 = arith.subf %37, %52 : vector<8x128xf32>
    %c0_23 = arith.constant 0 : index
    %c0_24 = arith.constant 0 : index
    %54 = vector.load %arg8[%c0_23, %c0_24] : memref<8x128xf32, #tpu.memory_space<vmem>>, vector<8x128xf32>
    tpu.vector_store %arg8[%c0_23, %c0_24], %53 {strides = array<i32>} : memref<8x128xf32, #tpu.memory_space<vmem>>, vector<8x128xf32>,
    return
  }
  func.func @transform_0(%arg0: i32) -> (i32, i32) {
    %c0_i32 = arith.constant 0 : i32
    %c0_i32_0 = arith.constant 0 : i32
    return %arg0, %c0_i32 : i32, i32
  }
  func.func @transform_1(%arg0: i32) -> (i32, i32) {
    %c0_i32 = arith.constant 0 : i32
    %c0_i32_0 = arith.constant 0 : i32
    %c0_i32_1 = arith.constant 0 : i32
    return %c0_i32, %c0_i32_0 : i32, i32
  }
  func.func @transform_2(%arg0: i32) -> (i32, i32) {
    %c0_i32 = arith.constant 0 : i32
    %c0_i32_0 = arith.constant 0 : i32
    %c0_i32_1 = arith.constant 0 : i32
    return %c0_i32, %c0_i32_0 : i32, i32
  }
  func.func @transform_3(%arg0: i32) -> (i32, i32) {
    %c0_i32 = arith.constant 0 : i32
    %c0_i32_0 = arith.constant 0 : i32
    %c0_i32_1 = arith.constant 0 : i32
    return %c0_i32, %c0_i32_0 : i32, i32
  }
  func.func @transform_4(%arg0: i32) -> (i32, i32) {
    %c0_i32 = arith.constant 0 : i32
    %c0_i32_0 = arith.constant 0 : i32
    %c0_i32_1 = arith.constant 0 : i32
    return %c0_i32, %c0_i32_0 : i32, i32
  }
  func.func @transform_5(%arg0: i32) -> (i32, i32) {
    %c0_i32 = arith.constant 0 : i32
    %c0_i32_0 = arith.constant 0 : i32
    %c0_i32_1 = arith.constant 0 : i32
    return %c0_i32, %c0_i32_0 : i32, i32
  }
  func.func @transform_6(%arg0: i32) -> (i32, i32) {
    %c0_i32 = arith.constant 0 : i32
    %c0_i32_0 = arith.constant 0 : i32
    %c0_i32_1 = arith.constant 0 : i32
    return %c0_i32, %c0_i32_0 : i32, i32
  }
  func.func @transform_7(%arg0: i32) -> (i32, i32) {
    %c0_i32 = arith.constant 0 : i32
    %c0_i32_0 = arith.constant 0 : i32
    return %arg0, %c0_i32 : i32, i32
  }
}

module attributes {stable_mosaic.version = 11 : i64} {
  func.func @_simpleclas_kernel(%arg0: i32, %arg1: memref<8x128xf32, #tpu.memory_space<vmem>>, %arg2: memref<128x2560xbf16, #tpu.memory_space<vmem>>, %arg3: memref<1x2560xf32, #tpu.memory_space<vmem>>, %arg4: memref<640x1152xbf16, #tpu.memory_space<vmem>>, %arg5: memref<1x1152xf32, #tpu.memory_space<vmem>>, %arg6: memref<1152x128xbf16, #tpu.memory_space<vmem>>, %arg7: memref<1x128xf32, #tpu.memory_space<vmem>>, %arg8: memref<8x128xf32, #tpu.memory_space<vmem>>) attributes {dimension_semantics = [#tpu.dimension_semantics<parallel>], iteration_bounds = array<i64: 1>, scalar_prefetch = 0 : i64, scratch_operands = 0 : i64, tpu.core_type = #tpu.core_type<tc>, window_params = [{transform_indices = @transform_0, window_bounds = array<i64: 8, 128>}, {pipeline_mode = #tpu.pipeline_mode<synchronous>, transform_indices = @transform_1, window_bounds = array<i64: 128, 2560>}, {pipeline_mode = #tpu.pipeline_mode<synchronous>, transform_indices = @transform_2, window_bounds = array<i64: 1, 2560>}, {pipeline_mode = #tpu.pipeline_mode<synchronous>, transform_indices = @transform_3, window_bounds = array<i64: 640, 1152>}, {pipeline_mode = #tpu.pipeline_mode<synchronous>, transform_indices = @transform_4, window_bounds = array<i64: 1, 1152>}, {pipeline_mode = #tpu.pipeline_mode<synchronous>, transform_indices = @transform_5, window_bounds = array<i64: 1152, 128>}, {pipeline_mode = #tpu.pipeline_mode<synchronous>, transform_indices = @transform_6, window_bounds = array<i64: 1, 128>}, {transform_indices = @transform_7, window_bounds = array<i64: 8, 128>}]} {
    %c0 = arith.constant 0 : index
    %c0_0 = arith.constant 0 : index
    %0 = vector.load %arg1[%c0, %c0_0] : memref<8x128xf32, #tpu.memory_space<vmem>>, vector<8x128xf32>
    %1 = arith.truncf %0 : vector<8x128xf32> to vector<8x128xbf16>
    %c0_1 = arith.constant 0 : index
    %c0_2 = arith.constant 0 : index
    %2 = vector.load %arg2[%c0_1, %c0_2] : memref<128x2560xbf16, #tpu.memory_space<vmem>>, vector<128x2560xbf16>
    %cst = arith.constant dense<0.000000e+00> : vector<8x2560xf32>
    %3 = tpu.matmul %1, %2, %cst {dimension_numbers = #tpu.dot_dimension_numbers<[1], [0], [0], [1], [0, 0, 1, 1], [], []>} : vector<8x128xbf16>, vector<128x2560xbf16>, vector<8x2560xf32> -> vector<8x2560xf32>
    %c0_3 = arith.constant 0 : index
    %c0_4 = arith.constant 0 : index
    %4 = vector.load %arg3[%c0_3, %c0_4] : memref<1x2560xf32, #tpu.memory_space<vmem>>, vector<1x2560xf32>
    %5 = vector.broadcast %4 : vector<1x2560xf32> to vector<8x2560xf32>
    %6 = arith.addf %3, %5 : vector<8x2560xf32>
    %cst_5 = arith.constant 0.000000e+00 : f32
    %7 = vector.broadcast %cst_5 : f32 to vector<8x2560xf32>
    %8 = arith.cmpf oge, %6, %7 : vector<8x2560xf32>
    %cst_6 = arith.constant 2.000000e-02 : f32
    %9 = vector.broadcast %cst_6 : f32 to vector<8x2560xf32>
    %10 = arith.mulf %9, %6 : vector<8x2560xf32>
    %11 = arith.select %8, %6, %10 : vector<8x2560xi1>, vector<8x2560xf32>
    %12 = vector.extract_strided_slice %11 {offsets = [0, 0], sizes = [8, 640], strides = [1, 1]} : vector<8x2560xf32> to vector<8x640xf32>
    %13 = vector.extract_strided_slice %11 {offsets = [0, 640], sizes = [8, 640], strides = [1, 1]} : vector<8x2560xf32> to vector<8x640xf32>
    %14 = arith.addf %12, %13 : vector<8x640xf32>
    %15 = vector.extract_strided_slice %11 {offsets = [0, 1280], sizes = [8, 640], strides = [1, 1]} : vector<8x2560xf32> to vector<8x640xf32>
    %16 = arith.addf %14, %15 : vector<8x640xf32>
    %17 = vector.extract_strided_slice %11 {offsets = [0, 1920], sizes = [8, 640], strides = [1, 1]} : vector<8x2560xf32> to vector<8x640xf32>
    %18 = arith.addf %16, %17 : vector<8x640xf32>
    %cst_7 = arith.constant 2.500000e-01 : f32
    %19 = vector.broadcast %cst_7 : f32 to vector<8x640xf32>
    %20 = arith.mulf %19, %18 : vector<8x640xf32>
    %21 = arith.truncf %20 : vector<8x640xf32> to vector<8x640xbf16>
    %c0_8 = arith.constant 0 : index
    %c0_9 = arith.constant 0 : index
    %22 = vector.load %arg4[%c0_8, %c0_9] : memref<640x1152xbf16, #tpu.memory_space<vmem>>, vector<640x1152xbf16>
    %cst_10 = arith.constant dense<0.000000e+00> : vector<8x1152xf32>
    %23 = tpu.matmul %21, %22, %cst_10 {dimension_numbers = #tpu.dot_dimension_numbers<[1], [0], [0], [1], [0, 0, 1, 1], [], []>} : vector<8x640xbf16>, vector<640x1152xbf16>, vector<8x1152xf32> -> vector<8x1152xf32>
    %c0_11 = arith.constant 0 : index
    %c0_12 = arith.constant 0 : index
    %24 = vector.load %arg5[%c0_11, %c0_12] : memref<1x1152xf32, #tpu.memory_space<vmem>>, vector<1x1152xf32>
    %25 = vector.broadcast %24 : vector<1x1152xf32> to vector<8x1152xf32>
    %26 = arith.addf %23, %25 : vector<8x1152xf32>
    %cst_13 = arith.constant 0.000000e+00 : f32
    %27 = vector.broadcast %cst_13 : f32 to vector<8x1152xf32>
    %28 = arith.cmpf oge, %26, %27 : vector<8x1152xf32>
    %cst_14 = arith.constant 2.000000e-02 : f32
    %29 = vector.broadcast %cst_14 : f32 to vector<8x1152xf32>
    %30 = arith.mulf %29, %26 : vector<8x1152xf32>
    %31 = arith.select %28, %26, %30 : vector<8x1152xi1>, vector<8x1152xf32>
    %32 = arith.truncf %31 : vector<8x1152xf32> to vector<8x1152xbf16>
    %c0_15 = arith.constant 0 : index
    %c0_16 = arith.constant 0 : index
    %33 = vector.load %arg6[%c0_15, %c0_16] : memref<1152x128xbf16, #tpu.memory_space<vmem>>, vector<1152x128xbf16>
    %cst_17 = arith.constant dense<0.000000e+00> : vector<8x128xf32>
    %34 = tpu.matmul %32, %33, %cst_17 {dimension_numbers = #tpu.dot_dimension_numbers<[1], [0], [0], [1], [0, 0, 1, 1], [], []>} : vector<8x1152xbf16>, vector<1152x128xbf16>, vector<8x128xf32> -> vector<8x128xf32>
    %c0_18 = arith.constant 0 : index
    %c0_19 = arith.constant 0 : index
    %35 = vector.load %arg7[%c0_18, %c0_19] : memref<1x128xf32, #tpu.memory_space<vmem>>, vector<1x128xf32>
    %36 = vector.broadcast %35 : vector<1x128xf32> to vector<8x128xf32>
    %37 = arith.addf %34, %36 : vector<8x128xf32>
    %38 = tpu.iota {dimensions = array<i32: 1>} : vector<8x128xi32>
    %c10_i32 = arith.constant 10 : i32
    %39 = vector.broadcast %c10_i32 : i32 to vector<8x128xi32>
    %40 = arith.cmpi slt, %38, %39 : vector<8x128xi32>
    %cst_20 = arith.constant -1.000000e+30 : f32
    %41 = vector.broadcast %cst_20 : f32 to vector<8x128xf32>
    %42 = arith.select %40, %37, %41 : vector<8x128xi1>, vector<8x128xf32>
    %cst_21 = arith.constant dense<0xFF800000> : vector<8xf32>
    %43 = vector.multi_reduction <maximumf>, %42, %cst_21 [1] : vector<8x128xf32> to vector<8xf32>
    %44 = vector.shape_cast %43 : vector<8xf32> to vector<8x1xf32>
    %45 = vector.broadcast %44 : vector<8x1xf32> to vector<8x128xf32>
    %46 = arith.subf %42, %45 : vector<8x128xf32>
    %47 = math.exp %46 : vector<8x128xf32>
    %cst_22 = arith.constant dense<0.000000e+00> : vector<8xf32>
    %48 = vector.multi_reduction <add>, %47, %cst_22 [1] : vector<8x128xf32> to vector<8xf32>
    %49 = vector.shape_cast %48 : vector<8xf32> to vector<8x1xf32>
    %50 = math.log %49 : vector<8x1xf32>
    %51 = arith.addf %50, %44 : vector<8x1xf32>
    %52 = vector.broadcast %51 : vector<8x1xf32> to vector<8x128xf32>
    %53 = arith.subf %37, %52 : vector<8x128xf32>
    %c0_23 = arith.constant 0 : index
    %c0_24 = arith.constant 0 : index
    %54 = vector.load %arg8[%c0_23, %c0_24] : memref<8x128xf32, #tpu.memory_space<vmem>>, vector<8x128xf32>
    tpu.vector_store %arg8[%c0_23, %c0_24], %53 {strides = array<i32>} : memref<8x128xf32, #tpu.memory_space<vmem>>, vector<8x128xf32>,
    return
  }
  func.func @transform_0(%arg0: i32) -> (i32, i32) {
    %c0_i32 = arith.constant 0 : i32
    %c0_i32_0 = arith.constant 0 : i32
    return %arg0, %c0_i32 : i32, i32
  }
  func.func @transform_1(%arg0: i32) -> (i32, i32) {
    %c0_i32 = arith.constant 0 : i32
    %c0_i32_0 = arith.constant 0 : i32
    %c0_i32_1 = arith.constant 0 : i32
    return %c0_i32, %c0_i32_0 : i32, i32
  }
  func.func @transform_2(%arg0: i32) -> (i32, i32) {
    %c0_i32 = arith.constant 0 : i32
    %c0_i32_0 = arith.constant 0 : i32
    %c0_i32_1 = arith.constant 0 : i32
    return %c0_i32, %c0_i32_0 : i32, i32
  }
  func.func @transform_3(%arg0: i32) -> (i32, i32) {
    %c0_i32 = arith.constant 0 : i32
    %c0_i32_0 = arith.constant 0 : i32
    %c0_i32_1 = arith.constant 0 : i32
    return %c0_i32, %c0_i32_0 : i32, i32
  }
  func.func @transform_4(%arg0: i32) -> (i32, i32) {
    %c0_i32 = arith.constant 0 : i32
    %c0_i32_0 = arith.constant 0 : i32
    %c0_i32_1 = arith.constant 0 : i32
    return %c0_i32, %c0_i32_0 : i32, i32
  }
  func.func @transform_5(%arg0: i32) -> (i32, i32) {
    %c0_i32 = arith.constant 0 : i32
    %c0_i32_0 = arith.constant 0 : i32
    %c0_i32_1 = arith.constant 0 : i32
    return %c0_i32, %c0_i32_0 : i32, i32
  }
  func.func @transform_6(%arg0: i32) -> (i32, i32) {
    %c0_i32 = arith.constant 0 : i32
    %c0_i32_0 = arith.constant 0 : i32
    %c0_i32_1 = arith.constant 0 : i32
    return %c0_i32, %c0_i32_0 : i32, i32
  }
  func.func @transform_7(%arg0: i32) -> (i32, i32) {
    %c0_i32 = arith.constant 0 : i32
    %c0_i32_0 = arith.constant 0 : i32
    return %arg0, %c0_i32 : i32, i32
  }
}

</mosaic_0001>

<llo_original>
// kernel: tpu_custom_call.1
$region0: #{tpu_custom_call.1}
  #allocation0 [shape = 'u32[]', space=smem, size = 0x4, offset = 0x4, fixed_abs, tag = 'smem constant byte address 0x4 - core index']
  #allocation1 [shape = 'u32[144,128]{1,0:T(1,128)}', space=vmem, size = 0x12000, scoped, tag = 'internal scratch']
  %s0 = inlined_call_operand.hbm [shape: f32[8,128], index: 0, kind: input, shape index: {}]
  %s1 = inlined_call_operand.hbm [shape: bf16[128,2560], index: 1, kind: input, shape index: {}]
  %s2 = inlined_call_operand.hbm [shape: f32[1,2560], index: 2, kind: input, shape index: {}]
  %s3 = inlined_call_operand.hbm [shape: bf16[640,1152], index: 3, kind: input, shape index: {}]
  %s4 = inlined_call_operand.hbm [shape: f32[1,1152], index: 4, kind: input, shape index: {}]
  %s5 = inlined_call_operand.hbm [shape: bf16[1152,128], index: 5, kind: input, shape index: {}]
  %s6 = inlined_call_operand.hbm [shape: f32[1,128], index: 6, kind: input, shape index: {}]
  %s7 = inlined_call_operand.hbm [shape: f32[8,128], index: 7, kind: output, shape index: {}]
  %s8 = sld [smem:[#allocation0]]
  $region66: #{tpu_custom_call.1} parent=0
    _
  %s10 = ssub.s32 1, %s8
  %s11 = scalar_select 0, %s10, %s8
  $region1: #{tpu_custom_call.1} parent=0
    #allocation2 [shape = 'u8[4096]{0}', space=vmem, size = 0x1000, scoped, tag = 'input window, operand 0, single buffered']
    #allocation3 [shape = 's32[1]{0}', space=sflag, size = 0x4, scoped, tag = 'scoped memory for tpu_custom_call.1']
    #allocation4 [shape = 's32[1]{0}', space=sflag, size = 0x4, scoped, tag = 'scoped memory for tpu_custom_call.1']
    #allocation5 [shape = 'u8[655360]{0}', space=vmem, size = 0xa0000, scoped, tag = 'input window, operand 1, single buffered']
    #allocation6 [shape = 's32[1]{0}', space=sflag, size = 0x4, scoped, tag = 'scoped memory for tpu_custom_call.1']
    #allocation7 [shape = 'u8[10240]{0}', space=vmem, size = 0x2800, scoped, tag = 'input window, operand 2, single buffered']
    #allocation8 [shape = 'u8[1474560]{0}', space=vmem, size = 0x168000, scoped, tag = 'input window, operand 3, single buffered']
    #allocation9 [shape = 's32[1]{0}', space=sflag, size = 0x4, scoped, tag = 'scoped memory for tpu_custom_call.1']
    #allocation10 [shape = 'u8[4608]{0}', space=vmem, size = 0x1400, scoped, tag = 'input window, operand 4, single buffered']
    #allocation11 [shape = 'u8[294912]{0}', space=vmem, size = 0x48000, scoped, tag = 'input window, operand 5, single buffered']
    #allocation12 [shape = 's32[1]{0}', space=sflag, size = 0x4, scoped, tag = 'scoped memory for tpu_custom_call.1']
    #allocation13 [shape = 'u8[512]{0}', space=vmem, size = 0x400, scoped, tag = 'input window, operand 6, single buffered']
    #allocation14 [shape = 'u8[4096]{0}', space=vmem, size = 0x1000, scoped, tag = 'output window, operand 0, single buffered']
    %12 = vsyncpa [#allocation3], 0
    %13 = vsyncpa [#allocation6], 0
    %14 = vsyncpa [#allocation9], 0
    %15 = vsyncpa [#allocation12], 0
    %16 = vsyncpa [#allocation4], 0
    // Predicated region
    $region2: #{tpu_custom_call.1} parent=1 // pred_check
      _
    $region3: #{tpu_custom_call.1} parent=1 // pred_check_branch
      %18 = sbr.rel (0) target = $region5
    $region4: #{tpu_custom_call.1} parent=1 // pred_region
      %s20 = ssub.s32 128, 128
      %21 = vsyncadd [#allocation3], %s20
      %s23 = sshll.u32 [#allocation2], 4
      %s24 = int_to_ptr.vmem [resolvable:$true] %s23
      %26 = dma.hbm_to_vmem [thread:$0]  %s0, 128, %s24, [#allocation3]
    $region5: #{tpu_custom_call.1} parent=1 // pred_fallthru
      _
    // Predicated region
    $region6: #{tpu_custom_call.1} parent=1 // pred_check
      _
    $region7: #{tpu_custom_call.1} parent=1 // pred_check_branch
      %28 = sbr.rel (0) target = $region9
    $region8: #{tpu_custom_call.1} parent=1 // pred_region
      %s30 = ssub.s32 20480, 20480
      %31 = vsyncadd [#allocation6], %s30
      %s32 = sshll.u32 [#allocation5], 4
      %s33 = int_to_ptr.vmem [resolvable:$true] %s32
      %38 = dma.hbm_to_vmem [thread:$0]  %s1, 20480, %s33, [#allocation6], 1280, 1280, 80
    $region9: #{tpu_custom_call.1} parent=1 // pred_fallthru
      _
    // Predicated region
    $region10: #{tpu_custom_call.1} parent=1 // pred_check
      _
    $region11: #{tpu_custom_call.1} parent=1 // pred_check_branch
      %40 = sbr.rel (0) target = $region13
    $region12: #{tpu_custom_call.1} parent=1 // pred_region
      %s42 = ssub.s32 320, 320
      %43 = vsyncadd [#allocation6], %s42
      %s45 = sshll.u32 [#allocation7], 4
      %s46 = int_to_ptr.vmem [resolvable:$true] %s45
      %48 = dma.hbm_to_vmem [thread:$0]  %s2, 320, %s46, [#allocation6]
    $region13: #{tpu_custom_call.1} parent=1 // pred_fallthru
      _
    // Predicated region
    $region14: #{tpu_custom_call.1} parent=1 // pred_check
      _
    $region15: #{tpu_custom_call.1} parent=1 // pred_check_branch
      %50 = sbr.rel (0) target = $region17
    $region16: #{tpu_custom_call.1} parent=1 // pred_region
      %s52 = ssub.s32 46080, 46080
      %53 = vsyncadd [#allocation9], %s52
      %s54 = sshll.u32 [#allocation8], 4
      %s55 = int_to_ptr.vmem [resolvable:$true] %s54
      %60 = dma.hbm_to_vmem [thread:$0]  %s3, 46080, %s55, [#allocation9], 576, 576, 36
    $region17: #{tpu_custom_call.1} parent=1 // pred_fallthru
      _
    // Predicated region
    $region18: #{tpu_custom_call.1} parent=1 // pred_check
      _
    $region19: #{tpu_custom_call.1} parent=1 // pred_check_branch
      %62 = sbr.rel (0) target = $region21
    $region20: #{tpu_custom_call.1} parent=1 // pred_region
      %s64 = ssub.s32 144, 144
      %65 = vsyncadd [#allocation9], %s64
      %s67 = sshll.u32 [#allocation10], 4
      %s68 = int_to_ptr.vmem [resolvable:$true] %s67
      %70 = dma.hbm_to_vmem [thread:$0]  %s4, 144, %s68, [#allocation9]
    $region21: #{tpu_custom_call.1} parent=1 // pred_fallthru
      _
    // Predicated region
    $region22: #{tpu_custom_call.1} parent=1 // pred_check
      _
    $region23: #{tpu_custom_call.1} parent=1 // pred_check_branch
      %72 = sbr.rel (0) target = $region25
    $region24: #{tpu_custom_call.1} parent=1 // pred_region
      %s74 = ssub.s32 9216, 9216
      %75 = vsyncadd [#allocation12], %s74
      %s76 = sshll.u32 [#allocation11], 4
      %s77 = int_to_ptr.vmem [resolvable:$true] %s76
      %82 = dma.hbm_to_vmem [thread:$0]  %s5, 9216, %s77, [#allocation12], 64, 64, 4
    $region25: #{tpu_custom_call.1} parent=1 // pred_fallthru
      _
    // Predicated region
    $region26: #{tpu_custom_call.1} parent=1 // pred_check
      _
    $region27: #{tpu_custom_call.1} parent=1 // pred_check_branch
      %84 = sbr.rel (0) target = $region29
    $region28: #{tpu_custom_call.1} parent=1 // pred_region
      %s86 = ssub.s32 16, 16
      %87 = vsyncadd [#allocation12], %s86
      %s89 = sshll.u32 [#allocation13], 4
      %s90 = int_to_ptr.vmem [resolvable:$true] %s89
      %92 = dma.hbm_to_vmem [thread:$0]  %s6, 16, %s90, [#allocation12]
    $region29: #{tpu_custom_call.1} parent=1 // pred_fallthru
      _
    // Predicated region
    $region30: #{tpu_custom_call.1} parent=1 // pred_check
      _
    $region31: #{tpu_custom_call.1} parent=1 // pred_check_branch
      %94 = sbr.rel (0) target = $region33
    $region32: #{tpu_custom_call.1} parent=1 // pred_region
      %95 = dma.done [#allocation3], 128
    $region33: #{tpu_custom_call.1} parent=1 // pred_fallthru
      _
    // Predicated region
    $region34: #{tpu_custom_call.1} parent=1 // pred_check
      _
    $region35: #{tpu_custom_call.1} parent=1 // pred_check_branch
      %97 = sbr.rel (0) target = $region37
    $region36: #{tpu_custom_call.1} parent=1 // pred_region
      %98 = dma.done [#allocation6], 20480
    $region37: #{tpu_custom_call.1} parent=1 // pred_fallthru
      _
    // Predicated region
    $region38: #{tpu_custom_call.1} parent=1 // pred_check
      _
    $region39: #{tpu_custom_call.1} parent=1 // pred_check_branch
      %100 = sbr.rel (0) target = $region41
    $region40: #{tpu_custom_call.1} parent=1 // pred_region
      %101 = dma.done [#allocation6], 320
    $region41: #{tpu_custom_call.1} parent=1 // pred_fallthru
      _
    // Predicated region
    $region42: #{tpu_custom_call.1} parent=1 // pred_check
      _
    $region43: #{tpu_custom_call.1} parent=1 // pred_check_branch
      %103 = sbr.rel (0) target = $region45
    $region44: #{tpu_custom_call.1} parent=1 // pred_region
      %104 = dma.done [#allocation9], 46080
    $region45: #{tpu_custom_call.1} parent=1 // pred_fallthru
      _
    // Predicated region
    $region46: #{tpu_custom_call.1} parent=1 // pred_check
      _
    $region47: #{tpu_custom_call.1} parent=1 // pred_check_branch
      %106 = sbr.rel (0) target = $region49
    $region48: #{tpu_custom_call.1} parent=1 // pred_region
      %107 = dma.done [#allocation9], 144
    $region49: #{tpu_custom_call.1} parent=1 // pred_fallthru
      _
    // Predicated region
    $region50: #{tpu_custom_call.1} parent=1 // pred_check
      _
    $region51: #{tpu_custom_call.1} parent=1 // pred_check_branch
      %109 = sbr.rel (0) target = $region53
    $region52: #{tpu_custom_call.1} parent=1 // pred_region
      %110 = dma.done [#allocation12], 9216
    $region53: #{tpu_custom_call.1} parent=1 // pred_fallthru
      _
    // Predicated region
    $region54: #{tpu_custom_call.1} parent=1 // pred_check
      _
    $region55: #{tpu_custom_call.1} parent=1 // pred_check_branch
      %112 = sbr.rel (0) target = $region57
    $region56: #{tpu_custom_call.1} parent=1 // pred_region
      %113 = dma.done [#allocation12], 16
    $region57: #{tpu_custom_call.1} parent=1 // pred_fallthru
      _
    %v115 = vld [vmem:[#allocation2] sm:$0xff]
    %v116 = vpack.c.bf16 %v115, %v115
    %v117 = vld [vmem:[#allocation5] sm:$0xff]
    %v118 = vld [vmem:[#allocation5 + $0x8] sm:$0xff]
    %v119 = vld [vmem:[#allocation5 + $0x10] sm:$0xff]
    %v120 = vld [vmem:[#allocation5 + $0x18] sm:$0xff]
    %v121 = vld [vmem:[#allocation5 + $0x20] sm:$0xff]
    %v122 = vld [vmem:[#allocation5 + $0x28] sm:$0xff]
    %v123 = vld [vmem:[#allocation5 + $0x30] sm:$0xff]
    %v124 = vld [vmem:[#allocation5 + $0x38] sm:$0xff]
    %v125 = vld [vmem:[#allocation5 + $0x40] sm:$0xff]
    %v126 = vld [vmem:[#allocation5 + $0x48] sm:$0xff]
    %v127 = vld [vmem:[#allocation5 + $0x50] sm:$0xff]
    %v128 = vld [vmem:[#allocation5 + $0x58] sm:$0xff]
    %v129 = vld [vmem:[#allocation5 + $0x60] sm:$0xff]
    %v130 = vld [vmem:[#allocation5 + $0x68] sm:$0xff]
    %v131 = vld [vmem:[#allocation5 + $0x70] sm:$0xff]
    %v132 = vld [vmem:[#allocation5 + $0x78] sm:$0xff]
    %v133 = vld [vmem:[#allocation5 + $0x80] sm:$0xff]
    %v134 = vld [vmem:[#allocation5 + $0x88] sm:$0xff]
    %v135 = vld [vmem:[#allocation5 + $0x90] sm:$0xff]
    %v136 = vld [vmem:[#allocation5 + $0x98] sm:$0xff]
    %v137 = vld [vmem:[#allocation5 + $0xa0] sm:$0xff]
    %v138 = vld [vmem:[#allocation5 + $0xa8] sm:$0xff]
    %v139 = vld [vmem:[#allocation5 + $0xb0] sm:$0xff]
    %v140 = vld [vmem:[#allocation5 + $0xb8] sm:$0xff]
    %v141 = vld [vmem:[#allocation5 + $0xc0] sm:$0xff]
    %v142 = vld [vmem:[#allocation5 + $0xc8] sm:$0xff]
    %v143 = vld [vmem:[#allocation5 + $0xd0] sm:$0xff]
    %v144 = vld [vmem:[#allocation5 + $0xd8] sm:$0xff]
    %v145 = vld [vmem:[#allocation5 + $0xe0] sm:$0xff]
    %v146 = vld [vmem:[#allocation5 + $0xe8] sm:$0xff]
    %v147 = vld [vmem:[#allocation5 + $0xf0] sm:$0xff]
    %v148 = vld [vmem:[#allocation5 + $0xf8] sm:$0xff]
    %v149 = vld [vmem:[#allocation5 + $0x100] sm:$0xff]
    %v150 = vld [vmem:[#allocation5 + $0x108] sm:$0xff]
    %v151 = vld [vmem:[#allocation5 + $0x110] sm:$0xff]
    %v152 = vld [vmem:[#allocation5 + $0x118] sm:$0xff]
    %v153 = vld [vmem:[#allocation5 + $0x120] sm:$0xff]
    %v154 = vld [vmem:[#allocation5 + $0x128] sm:$0xff]
    %v155 = vld [vmem:[#allocation5 + $0x130] sm:$0xff]
    %v156 = vld [vmem:[#allocation5 + $0x138] sm:$0xff]
    %v157 = vld [vmem:[#allocation5 + $0x140] sm:$0xff]
    %v158 = vld [vmem:[#allocation5 + $0x148] sm:$0xff]
    %v159 = vld [vmem:[#allocation5 + $0x150] sm:$0xff]
    %v160 = vld [vmem:[#allocation5 + $0x158] sm:$0xff]
    %v161 = vld [vmem:[#allocation5 + $0x160] sm:$0xff]
    %v162 = vld [vmem:[#allocation5 + $0x168] sm:$0xff]
    %v163 = vld [vmem:[#allocation5 + $0x170] sm:$0xff]
    %v164 = vld [vmem:[#allocation5 + $0x178] sm:$0xff]
    %v165 = vld [vmem:[#allocation5 + $0x180] sm:$0xff]
    %v166 = vld [vmem:[#allocation5 + $0x188] sm:$0xff]
    %v167 = vld [vmem:[#allocation5 + $0x190] sm:$0xff]
    %v168 = vld [vmem:[#allocation5 + $0x198] sm:$0xff]
    %v169 = vld [vmem:[#allocation5 + $0x1a0] sm:$0xff]
    %v170 = vld [vmem:[#allocation5 + $0x1a8] sm:$0xff]
    %v171 = vld [vmem:[#allocation5 + $0x1b0] sm:$0xff]
    %v172 = vld [vmem:[#allocation5 + $0x1b8] sm:$0xff]
    %v173 = vld [vmem:[#allocation5 + $0x1c0] sm:$0xff]
    %v174 = vld [vmem:[#allocation5 + $0x1c8] sm:$0xff]
    %v175 = vld [vmem:[#allocation5 + $0x1d0] sm:$0xff]
    %v176 = vld [vmem:[#allocation5 + $0x1d8] sm:$0xff]
    %v177 = vld [vmem:[#allocation5 + $0x1e0] sm:$0xff]
    %v178 = vld [vmem:[#allocation5 + $0x1e8] sm:$0xff]
    %v179 = vld [vmem:[#allocation5 + $0x1f0] sm:$0xff]
    %v180 = vld [vmem:[#allocation5 + $0x1f8] sm:$0xff]
    %v181 = vld [vmem:[#allocation5 + $0x200] sm:$0xff]
    %v182 = vld [vmem:[#allocation5 + $0x208] sm:$0xff]
    %v183 = vld [vmem:[#allocation5 + $0x210] sm:$0xff]
    %v184 = vld [vmem:[#allocation5 + $0x218] sm:$0xff]
    %v185 = vld [vmem:[#allocation5 + $0x220] sm:$0xff]
    %v186 = vld [vmem:[#allocation5 + $0x228] sm:$0xff]
    %v187 = vld [vmem:[#allocation5 + $0x230] sm:$0xff]
    %v188 = vld [vmem:[#allocation5 + $0x238] sm:$0xff]
    %v189 = vld [vmem:[#allocation5 + $0x240] sm:$0xff]
    %v190 = vld [vmem:[#allocation5 + $0x248] sm:$0xff]
    %v191 = vld [vmem:[#allocation5 + $0x250] sm:$0xff]
    %v192 = vld [vmem:[#allocation5 + $0x258] sm:$0xff]
    %v193 = vld [vmem:[#allocation5 + $0x260] sm:$0xff]
    %v194 = vld [vmem:[#allocation5 + $0x268] sm:$0xff]
    %v195 = vld [vmem:[#allocation5 + $0x270] sm:$0xff]
    %v196 = vld [vmem:[#allocation5 + $0x278] sm:$0xff]
    %v197 = vld [vmem:[#allocation5 + $0x280] sm:$0xff]
    %v198 = vld [vmem:[#allocation5 + $0x288] sm:$0xff]
    %v199 = vld [vmem:[#allocation5 + $0x290] sm:$0xff]
    %v200 = vld [vmem:[#allocation5 + $0x298] sm:$0xff]
    %v201 = vld [vmem:[#allocation5 + $0x2a0] sm:$0xff]
    %v202 = vld [vmem:[#allocation5 + $0x2a8] sm:$0xff]
    %v203 = vld [vmem:[#allocation5 + $0x2b0] sm:$0xff]
    %v204 = vld [vmem:[#allocation5 + $0x2b8] sm:$0xff]
    %v205 = vld [vmem:[#allocation5 + $0x2c0] sm:$0xff]
    %v206 = vld [vmem:[#allocation5 + $0x2c8] sm:$0xff]
    %v207 = vld [vmem:[#allocation5 + $0x2d0] sm:$0xff]
    %v208 = vld [vmem:[#allocation5 + $0x2d8] sm:$0xff]
    %v209 = vld [vmem:[#allocation5 + $0x2e0] sm:$0xff]
    %v210 = vld [vmem:[#allocation5 + $0x2e8] sm:$0xff]
    %v211 = vld [vmem:[#allocation5 + $0x2f0] sm:$0xff]
    %v212 = vld [vmem:[#allocation5 + $0x2f8] sm:$0xff]
    %v213 = vld [vmem:[#allocation5 + $0x300] sm:$0xff]
    %v214 = vld [vmem:[#allocation5 + $0x308] sm:$0xff]
    %v215 = vld [vmem:[#allocation5 + $0x310] sm:$0xff]
    %v216 = vld [vmem:[#allocation5 + $0x318] sm:$0xff]
    %v217 = vld [vmem:[#allocation5 + $0x320] sm:$0xff]
    %v218 = vld [vmem:[#allocation5 + $0x328] sm:$0xff]
    %v219 = vld [vmem:[#allocation5 + $0x330] sm:$0xff]
    %v220 = vld [vmem:[#allocation5 + $0x338] sm:$0xff]
    %v221 = vld [vmem:[#allocation5 + $0x340] sm:$0xff]
    %v222 = vld [vmem:[#allocation5 + $0x348] sm:$0xff]
    %v223 = vld [vmem:[#allocation5 + $0x350] sm:$0xff]
    %v224 = vld [vmem:[#allocation5 + $0x358] sm:$0xff]
    %v225 = vld [vmem:[#allocation5 + $0x360] sm:$0xff]
    %v226 = vld [vmem:[#allocation5 + $0x368] sm:$0xff]
    %v227 = vld [vmem:[#allocation5 + $0x370] sm:$0xff]
    %v228 = vld [vmem:[#allocation5 + $0x378] sm:$0xff]
    %v229 = vld [vmem:[#allocation5 + $0x380] sm:$0xff]
    %v230 = vld [vmem:[#allocation5 + $0x388] sm:$0xff]
    %v231 = vld [vmem:[#allocation5 + $0x390] sm:$0xff]
    %v232 = vld [vmem:[#allocation5 + $0x398] sm:$0xff]
    %v233 = vld [vmem:[#allocation5 + $0x3a0] sm:$0xff]
    %v234 = vld [vmem:[#allocation5 + $0x3a8] sm:$0xff]
    %v235 = vld [vmem:[#allocation5 + $0x3b0] sm:$0xff]
    %v236 = vld [vmem:[#allocation5 + $0x3b8] sm:$0xff]
    %v237 = vld [vmem:[#allocation5 + $0x3c0] sm:$0xff]
    %v238 = vld [vmem:[#allocation5 + $0x3c8] sm:$0xff]
    %v239 = vld [vmem:[#allocation5 + $0x3d0] sm:$0xff]
    %v240 = vld [vmem:[#allocation5 + $0x3d8] sm:$0xff]
    %v241 = vld [vmem:[#allocation5 + $0x3e0] sm:$0xff]
    %v242 = vld [vmem:[#allocation5 + $0x3e8] sm:$0xff]
    %v243 = vld [vmem:[#allocation5 + $0x3f0] sm:$0xff]
    %v244 = vld [vmem:[#allocation5 + $0x3f8] sm:$0xff]
    %v245 = vld [vmem:[#allocation5 + $0x400] sm:$0xff]
    %v246 = vld [vmem:[#allocation5 + $0x408] sm:$0xff]
    %v247 = vld [vmem:[#allocation5 + $0x410] sm:$0xff]
    %v248 = vld [vmem:[#allocation5 + $0x418] sm:$0xff]
    %v249 = vld [vmem:[#allocation5 + $0x420] sm:$0xff]
    %v250 = vld [vmem:[#allocation5 + $0x428] sm:$0xff]
    %v251 = vld [vmem:[#allocation5 + $0x430] sm:$0xff]
    %v252 = vld [vmem:[#allocation5 + $0x438] sm:$0xff]
    %v253 = vld [vmem:[#allocation5 + $0x440] sm:$0xff]
    %v254 = vld [vmem:[#allocation5 + $0x448] sm:$0xff]
    %v255 = vld [vmem:[#allocation5 + $0x450] sm:$0xff]
    %v256 = vld [vmem:[#allocation5 + $0x458] sm:$0xff]
    %v257 = vld [vmem:[#allocation5 + $0x460] sm:$0xff]
    %v258 = vld [vmem:[#allocation5 + $0x468] sm:$0xff]
    %v259 = vld [vmem:[#allocation5 + $0x470] sm:$0xff]
    %v260 = vld [vmem:[#allocation5 + $0x478] sm:$0xff]
    %v261 = vld [vmem:[#allocation5 + $0x480] sm:$0xff]
    %v262 = vld [vmem:[#allocation5 + $0x488] sm:$0xff]
    %v263 = vld [vmem:[#allocation5 + $0x490] sm:$0xff]
    %v264 = vld [vmem:[#allocation5 + $0x498] sm:$0xff]
    %v265 = vld [vmem:[#allocation5 + $0x4a0] sm:$0xff]
    %v266 = vld [vmem:[#allocation5 + $0x4a8] sm:$0xff]
    %v267 = vld [vmem:[#allocation5 + $0x4b0] sm:$0xff]
    %v268 = vld [vmem:[#allocation5 + $0x4b8] sm:$0xff]
    %v269 = vld [vmem:[#allocation5 + $0x4c0] sm:$0xff]
    %v270 = vld [vmem:[#allocation5 + $0x4c8] sm:$0xff]
    %v271 = vld [vmem:[#allocation5 + $0x4d0] sm:$0xff]
    %v272 = vld [vmem:[#allocation5 + $0x4d8] sm:$0xff]
    %v273 = vld [vmem:[#allocation5 + $0x4e0] sm:$0xff]
    %v274 = vld [vmem:[#allocation5 + $0x4e8] sm:$0xff]
    %v275 = vld [vmem:[#allocation5 + $0x4f0] sm:$0xff]
    %v276 = vld [vmem:[#allocation5 + $0x4f8] sm:$0xff]
    %v277 = vld [vmem:[#allocation7] sm:$0xff]
    %v278 = vld [vmem:[#allocation7 + $0x8] sm:$0xff]
    %v279 = vld [vmem:[#allocation7 + $0x10] sm:$0xf]
    %v283 = vlaneseq
    %v284 = vshrl.u32 %v283, 7
    %v285 = vsub.s32 0, %v284
    %v286 = vrot.slane %v277, %v285
    %v287 = vlaneseq
    %v288 = vshrl.u32 %v287, 7
    %v289 = vsub.s32 1, %v288
    %v290 = vrot.slane %v277, %v289
    %v291 = vlaneseq
    %v292 = vshrl.u32 %v291, 7
    %v293 = vsub.s32 2, %v292
    %v294 = vrot.slane %v277, %v293
    %v295 = vlaneseq
    %v296 = vshrl.u32 %v295, 7
    %v297 = vsub.s32 3, %v296
    %v298 = vrot.slane %v277, %v297
    %v299 = vlaneseq
    %v300 = vshrl.u32 %v299, 7
    %v301 = vsub.s32 4, %v300
    %v302 = vrot.slane %v277, %v301
    %v303 = vlaneseq
    %v304 = vshrl.u32 %v303, 7
    %v305 = vsub.s32 5, %v304
    %v306 = vrot.slane %v277, %v305
    %v307 = vlaneseq
    %v308 = vshrl.u32 %v307, 7
    %v309 = vsub.s32 6, %v308
    %v310 = vrot.slane %v277, %v309
    %v311 = vlaneseq
    %v312 = vshrl.u32 %v311, 7
    %v313 = vsub.s32 7, %v312
    %v314 = vrot.slane %v277, %v313
    %v315 = vlaneseq
    %v316 = vshrl.u32 %v315, 7
    %v317 = vsub.s32 0, %v316
    %v318 = vrot.slane %v278, %v317
    %v319 = vlaneseq
    %v320 = vshrl.u32 %v319, 7
    %v321 = vsub.s32 1, %v320
    %v322 = vrot.slane %v278, %v321
    %v323 = vlaneseq
    %v324 = vshrl.u32 %v323, 7
    %v325 = vsub.s32 2, %v324
    %v326 = vrot.slane %v278, %v325
    %v327 = vlaneseq
    %v328 = vshrl.u32 %v327, 7
    %v329 = vsub.s32 3, %v328
    %v330 = vrot.slane %v278, %v329
    %v331 = vlaneseq
    %v332 = vshrl.u32 %v331, 7
    %v333 = vsub.s32 4, %v332
    %v334 = vrot.slane %v278, %v333
    %v335 = vlaneseq
    %v336 = vshrl.u32 %v335, 7
    %v337 = vsub.s32 5, %v336
    %v338 = vrot.slane %v278, %v337
    %v339 = vlaneseq
    %v340 = vshrl.u32 %v339, 7
    %v341 = vsub.s32 6, %v340
    %v342 = vrot.slane %v278, %v341
    %v343 = vlaneseq
    %v344 = vshrl.u32 %v343, 7
    %v345 = vsub.s32 7, %v344
    %v346 = vrot.slane %v278, %v345
    %v347 = vlaneseq
    %v348 = vshrl.u32 %v347, 7
    %v349 = vsub.s32 0, %v348
    %v350 = vrot.slane %v279, %v349
    %v351 = vlaneseq
    %v352 = vshrl.u32 %v351, 7
    %v353 = vsub.s32 1, %v352
    %v354 = vrot.slane %v279, %v353
    %v355 = vlaneseq
    %v356 = vshrl.u32 %v355, 7
    %v357 = vsub.s32 2, %v356
    %v358 = vrot.slane %v279, %v357
    %v359 = vlaneseq
    %v360 = vshrl.u32 %v359, 7
    %v361 = vsub.s32 3, %v360
    %v362 = vrot.slane %v279, %v361
    %v543 = vunpack.c.l.b16 %v117
    %v544 = vunpack.c.h.b16 %v117
    %v545 = vunpack.c.l.b16 %v118
    %v546 = vunpack.c.h.b16 %v118
    %v547 = vunpack.c.l.b16 %v119
    %v548 = vunpack.c.h.b16 %v119
    %v549 = vunpack.c.l.b16 %v120
    %v550 = vunpack.c.h.b16 %v120
    %v551 = vunpack.c.l.b16 %v121
    %v552 = vunpack.c.h.b16 %v121
    %v553 = vunpack.c.l.b16 %v122
    %v554 = vunpack.c.h.b16 %v122
    %v555 = vunpack.c.l.b16 %v123
    %v556 = vunpack.c.h.b16 %v123
    %v557 = vunpack.c.l.b16 %v124
    %v558 = vunpack.c.h.b16 %v124
    %v559 = vunpack.c.l.b16 %v125
    %v560 = vunpack.c.h.b16 %v125
    %v561 = vunpack.c.l.b16 %v126
    %v562 = vunpack.c.h.b16 %v126
    %v563 = vunpack.c.l.b16 %v127
    %v564 = vunpack.c.h.b16 %v127
    %v565 = vunpack.c.l.b16 %v128
    %v566 = vunpack.c.h.b16 %v128
    %v567 = vunpack.c.l.b16 %v129
    %v568 = vunpack.c.h.b16 %v129
    %v569 = vunpack.c.l.b16 %v130
    %v570 = vunpack.c.h.b16 %v130
    %v571 = vunpack.c.l.b16 %v131
    %v572 = vunpack.c.h.b16 %v131
    %v573 = vunpack.c.l.b16 %v132
    %v574 = vunpack.c.h.b16 %v132
    %v575 = vunpack.c.l.b16 %v133
    %v576 = vunpack.c.h.b16 %v133
    %v577 = vunpack.c.l.b16 %v134
    %v578 = vunpack.c.h.b16 %v134
    %v579 = vunpack.c.l.b16 %v135
    %v580 = vunpack.c.h.b16 %v135
    %v581 = vunpack.c.l.b16 %v136
    %v582 = vunpack.c.h.b16 %v136
    %v583 = vunpack.c.l.b16 %v137
    %v584 = vunpack.c.h.b16 %v137
    %v585 = vunpack.c.l.b16 %v138
    %v586 = vunpack.c.h.b16 %v138
    %v587 = vunpack.c.l.b16 %v139
    %v588 = vunpack.c.h.b16 %v139
    %v589 = vunpack.c.l.b16 %v140
    %v590 = vunpack.c.h.b16 %v140
    %v591 = vunpack.c.l.b16 %v141
    %v592 = vunpack.c.h.b16 %v141
    %v593 = vunpack.c.l.b16 %v142
    %v594 = vunpack.c.h.b16 %v142
    %v595 = vunpack.c.l.b16 %v143
    %v596 = vunpack.c.h.b16 %v143
    %v597 = vunpack.c.l.b16 %v144
    %v598 = vunpack.c.h.b16 %v144
    %v599 = vunpack.c.l.b16 %v145
    %v600 = vunpack.c.h.b16 %v145
    %v601 = vunpack.c.l.b16 %v146
    %v602 = vunpack.c.h.b16 %v146
    %v603 = vunpack.c.l.b16 %v147
    %v604 = vunpack.c.h.b16 %v147
    %v605 = vunpack.c.l.b16 %v148
    %v606 = vunpack.c.h.b16 %v148
    %v607 = vunpack.c.l.b16 %v149
    %v608 = vunpack.c.h.b16 %v149
    %v609 = vunpack.c.l.b16 %v150
    %v610 = vunpack.c.h.b16 %v150
    %v611 = vunpack.c.l.b16 %v151
    %v612 = vunpack.c.h.b16 %v151
    %v613 = vunpack.c.l.b16 %v152
    %v614 = vunpack.c.h.b16 %v152
    %v615 = vunpack.c.l.b16 %v153
    %v616 = vunpack.c.h.b16 %v153
    %v617 = vunpack.c.l.b16 %v154
    %v618 = vunpack.c.h.b16 %v154
    %v619 = vunpack.c.l.b16 %v155
    %v620 = vunpack.c.h.b16 %v155
    %v621 = vunpack.c.l.b16 %v156
    %v622 = vunpack.c.h.b16 %v156
    %v623 = vunpack.c.l.b16 %v157
    %v624 = vunpack.c.h.b16 %v157
    %v625 = vunpack.c.l.b16 %v158
    %v626 = vunpack.c.h.b16 %v158
    %v627 = vunpack.c.l.b16 %v159
    %v628 = vunpack.c.h.b16 %v159
    %v629 = vunpack.c.l.b16 %v160
    %v630 = vunpack.c.h.b16 %v160
    %v631 = vunpack.c.l.b16 %v161
    %v632 = vunpack.c.h.b16 %v161
    %v633 = vunpack.c.l.b16 %v162
    %v634 = vunpack.c.h.b16 %v162
    %v635 = vunpack.c.l.b16 %v163
    %v636 = vunpack.c.h.b16 %v163
    %v637 = vunpack.c.l.b16 %v164
    %v638 = vunpack.c.h.b16 %v164
    %v639 = vunpack.c.l.b16 %v165
    %v640 = vunpack.c.h.b16 %v165
    %v641 = vunpack.c.l.b16 %v166
    %v642 = vunpack.c.h.b16 %v166
    %v643 = vunpack.c.l.b16 %v167
    %v644 = vunpack.c.h.b16 %v167
    %v645 = vunpack.c.l.b16 %v168
    %v646 = vunpack.c.h.b16 %v168
    %v647 = vunpack.c.l.b16 %v169
    %v648 = vunpack.c.h.b16 %v169
    %v649 = vunpack.c.l.b16 %v170
    %v650 = vunpack.c.h.b16 %v170
    %v651 = vunpack.c.l.b16 %v171
    %v652 = vunpack.c.h.b16 %v171
    %v653 = vunpack.c.l.b16 %v172
    %v654 = vunpack.c.h.b16 %v172
    %v655 = vunpack.c.l.b16 %v173
    %v656 = vunpack.c.h.b16 %v173
    %v657 = vunpack.c.l.b16 %v174
    %v658 = vunpack.c.h.b16 %v174
    %v659 = vunpack.c.l.b16 %v175
    %v660 = vunpack.c.h.b16 %v175
    %v661 = vunpack.c.l.b16 %v176
    %v662 = vunpack.c.h.b16 %v176
    %v663 = vunpack.c.l.b16 %v177
    %v664 = vunpack.c.h.b16 %v177
    %v665 = vunpack.c.l.b16 %v178
    %v666 = vunpack.c.h.b16 %v178
    %v667 = vunpack.c.l.b16 %v179
    %v668 = vunpack.c.h.b16 %v179
    %v669 = vunpack.c.l.b16 %v180
    %v670 = vunpack.c.h.b16 %v180
    %v671 = vunpack.c.l.b16 %v181
    %v672 = vunpack.c.h.b16 %v181
    %v673 = vunpack.c.l.b16 %v182
    %v674 = vunpack.c.h.b16 %v182
    %v675 = vunpack.c.l.b16 %v183
    %v676 = vunpack.c.h.b16 %v183
    %v677 = vunpack.c.l.b16 %v184
    %v678 = vunpack.c.h.b16 %v184
    %v679 = vunpack.c.l.b16 %v185
    %v680 = vunpack.c.h.b16 %v185
    %v681 = vunpack.c.l.b16 %v186
    %v682 = vunpack.c.h.b16 %v186
    %v683 = vunpack.c.l.b16 %v187
    %v684 = vunpack.c.h.b16 %v187
    %v685 = vunpack.c.l.b16 %v188
    %v686 = vunpack.c.h.b16 %v188
    %v687 = vunpack.c.l.b16 %v189
    %v688 = vunpack.c.h.b16 %v189
    %v689 = vunpack.c.l.b16 %v190
    %v690 = vunpack.c.h.b16 %v190
    %v691 = vunpack.c.l.b16 %v191
    %v692 = vunpack.c.h.b16 %v191
    %v693 = vunpack.c.l.b16 %v192
    %v694 = vunpack.c.h.b16 %v192
    %v695 = vunpack.c.l.b16 %v193
    %v696 = vunpack.c.h.b16 %v193
    %v697 = vunpack.c.l.b16 %v194
    %v698 = vunpack.c.h.b16 %v194
    %v699 = vunpack.c.l.b16 %v195
    %v700 = vunpack.c.h.b16 %v195
    %v701 = vunpack.c.l.b16 %v196
    %v702 = vunpack.c.h.b16 %v196
    %v703 = vunpack.c.l.b16 %v197
    %v704 = vunpack.c.h.b16 %v197
    %v705 = vunpack.c.l.b16 %v198
    %v706 = vunpack.c.h.b16 %v198
    %v707 = vunpack.c.l.b16 %v199
    %v708 = vunpack.c.h.b16 %v199
    %v709 = vunpack.c.l.b16 %v200
    %v710 = vunpack.c.h.b16 %v200
    %v711 = vunpack.c.l.b16 %v201
    %v712 = vunpack.c.h.b16 %v201
    %v713 = vunpack.c.l.b16 %v202
    %v714 = vunpack.c.h.b16 %v202
    %v715 = vunpack.c.l.b16 %v203
    %v716 = vunpack.c.h.b16 %v203
    %v717 = vunpack.c.l.b16 %v204
    %v718 = vunpack.c.h.b16 %v204
    %v719 = vunpack.c.l.b16 %v205
    %v720 = vunpack.c.h.b16 %v205
    %v721 = vunpack.c.l.b16 %v206
    %v722 = vunpack.c.h.b16 %v206
    %v723 = vunpack.c.l.b16 %v207
    %v724 = vunpack.c.h.b16 %v207
    %v725 = vunpack.c.l.b16 %v208
    %v726 = vunpack.c.h.b16 %v208
    %v727 = vunpack.c.l.b16 %v209
    %v728 = vunpack.c.h.b16 %v209
    %v729 = vunpack.c.l.b16 %v210
    %v730 = vunpack.c.h.b16 %v210
    %v731 = vunpack.c.l.b16 %v211
    %v732 = vunpack.c.h.b16 %v211
    %v733 = vunpack.c.l.b16 %v212
    %v734 = vunpack.c.h.b16 %v212
    %v735 = vunpack.c.l.b16 %v213
    %v736 = vunpack.c.h.b16 %v213
    %v737 = vunpack.c.l.b16 %v214
    %v738 = vunpack.c.h.b16 %v214
    %v739 = vunpack.c.l.b16 %v215
    %v740 = vunpack.c.h.b16 %v215
    %v741 = vunpack.c.l.b16 %v216
    %v742 = vunpack.c.h.b16 %v216
    %v743 = vunpack.c.l.b16 %v217
    %v744 = vunpack.c.h.b16 %v217
    %v745 = vunpack.c.l.b16 %v218
    %v746 = vunpack.c.h.b16 %v218
    %v747 = vunpack.c.l.b16 %v219
    %v748 = vunpack.c.h.b16 %v219
    %v749 = vunpack.c.l.b16 %v220
    %v750 = vunpack.c.h.b16 %v220
    %v751 = vunpack.c.l.b16 %v221
    %v752 = vunpack.c.h.b16 %v221
    %v753 = vunpack.c.l.b16 %v222
    %v754 = vunpack.c.h.b16 %v222
    %v755 = vunpack.c.l.b16 %v223
    %v756 = vunpack.c.h.b16 %v223
    %v757 = vunpack.c.l.b16 %v224
    %v758 = vunpack.c.h.b16 %v224
    %v759 = vunpack.c.l.b16 %v225
    %v760 = vunpack.c.h.b16 %v225
    %v761 = vunpack.c.l.b16 %v226
    %v762 = vunpack.c.h.b16 %v226
    %v763 = vunpack.c.l.b16 %v227
    %v764 = vunpack.c.h.b16 %v227
    %v765 = vunpack.c.l.b16 %v228
    %v766 = vunpack.c.h.b16 %v228
    %v767 = vunpack.c.l.b16 %v229
    %v768 = vunpack.c.h.b16 %v229
    %v769 = vunpack.c.l.b16 %v230
    %v770 = vunpack.c.h.b16 %v230
    %v771 = vunpack.c.l.b16 %v231
    %v772 = vunpack.c.h.b16 %v231
    %v773 = vunpack.c.l.b16 %v232
    %v774 = vunpack.c.h.b16 %v232
    %v775 = vunpack.c.l.b16 %v233
    %v776 = vunpack.c.h.b16 %v233
    %v777 = vunpack.c.l.b16 %v234
    %v778 = vunpack.c.h.b16 %v234
    %v779 = vunpack.c.l.b16 %v235
    %v780 = vunpack.c.h.b16 %v235
    %v781 = vunpack.c.l.b16 %v236
    %v782 = vunpack.c.h.b16 %v236
    %v783 = vunpack.c.l.b16 %v237
    %v784 = vunpack.c.h.b16 %v237
    %v785 = vunpack.c.l.b16 %v238
    %v786 = vunpack.c.h.b16 %v238
    %v787 = vunpack.c.l.b16 %v239
    %v788 = vunpack.c.h.b16 %v239
    %v789 = vunpack.c.l.b16 %v240
    %v790 = vunpack.c.h.b16 %v240
    %v791 = vunpack.c.l.b16 %v241
    %v792 = vunpack.c.h.b16 %v241
    %v793 = vunpack.c.l.b16 %v242
    %v794 = vunpack.c.h.b16 %v242
    %v795 = vunpack.c.l.b16 %v243
    %v796 = vunpack.c.h.b16 %v243
    %v797 = vunpack.c.l.b16 %v244
    %v798 = vunpack.c.h.b16 %v244
    %v799 = vunpack.c.l.b16 %v245
    %v800 = vunpack.c.h.b16 %v245
    %v801 = vunpack.c.l.b16 %v246
    %v802 = vunpack.c.h.b16 %v246
    %v803 = vunpack.c.l.b16 %v247
    %v804 = vunpack.c.h.b16 %v247
    %v805 = vunpack.c.l.b16 %v248
    %v806 = vunpack.c.h.b16 %v248
    %v807 = vunpack.c.l.b16 %v249
    %v808 = vunpack.c.h.b16 %v249
    %v809 = vunpack.c.l.b16 %v250
    %v810 = vunpack.c.h.b16 %v250
    %v811 = vunpack.c.l.b16 %v251
    %v812 = vunpack.c.h.b16 %v251
    %v813 = vunpack.c.l.b16 %v252
    %v814 = vunpack.c.h.b16 %v252
    %v815 = vunpack.c.l.b16 %v253
    %v816 = vunpack.c.h.b16 %v253
    %v817 = vunpack.c.l.b16 %v254
    %v818 = vunpack.c.h.b16 %v254
    %v819 = vunpack.c.l.b16 %v255
    %v820 = vunpack.c.h.b16 %v255
    %v821 = vunpack.c.l.b16 %v256
    %v822 = vunpack.c.h.b16 %v256
    %v823 = vunpack.c.l.b16 %v257
    %v824 = vunpack.c.h.b16 %v257
    %v825 = vunpack.c.l.b16 %v258
    %v826 = vunpack.c.h.b16 %v258
    %v827 = vunpack.c.l.b16 %v259
    %v828 = vunpack.c.h.b16 %v259
    %v829 = vunpack.c.l.b16 %v260
    %v830 = vunpack.c.h.b16 %v260
    %v831 = vunpack.c.l.b16 %v261
    %v832 = vunpack.c.h.b16 %v261
    %v833 = vunpack.c.l.b16 %v262
    %v834 = vunpack.c.h.b16 %v262
    %v835 = vunpack.c.l.b16 %v263
    %v836 = vunpack.c.h.b16 %v263
    %v837 = vunpack.c.l.b16 %v264
    %v838 = vunpack.c.h.b16 %v264
    %v839 = vunpack.c.l.b16 %v265
    %v840 = vunpack.c.h.b16 %v265
    %v841 = vunpack.c.l.b16 %v266
    %v842 = vunpack.c.h.b16 %v266
    %v843 = vunpack.c.l.b16 %v267
    %v844 = vunpack.c.h.b16 %v267
    %v845 = vunpack.c.l.b16 %v268
    %v846 = vunpack.c.h.b16 %v268
    %v847 = vunpack.c.l.b16 %v269
    %v848 = vunpack.c.h.b16 %v269
    %v849 = vunpack.c.l.b16 %v270
    %v850 = vunpack.c.h.b16 %v270
    %v851 = vunpack.c.l.b16 %v271
    %v852 = vunpack.c.h.b16 %v271
    %v853 = vunpack.c.l.b16 %v272
    %v854 = vunpack.c.h.b16 %v272
    %v855 = vunpack.c.l.b16 %v273
    %v856 = vunpack.c.h.b16 %v273
    %v857 = vunpack.c.l.b16 %v274
    %v858 = vunpack.c.h.b16 %v274
    %v859 = vunpack.c.l.b16 %v275
    %v860 = vunpack.c.h.b16 %v275
    %v861 = vunpack.c.l.b16 %v276
    %v862 = vunpack.c.h.b16 %v276
    %v863 = vpack.c.b16 %v563, %v543
    %v864 = vpack.c.b16 %v564, %v544
    %v865 = vpack.c.b16 %v565, %v545
    %v866 = vpack.c.b16 %v566, %v546
    %v867 = vpack.c.b16 %v567, %v547
    %v868 = vpack.c.b16 %v568, %v548
    %v869 = vpack.c.b16 %v569, %v549
    %v870 = vpack.c.b16 %v570, %v550
    %v871 = vpack.c.b16 %v571, %v551
    %v872 = vpack.c.b16 %v572, %v552
    %v873 = vpack.c.b16 %v573, %v553
    %v874 = vpack.c.b16 %v574, %v554
    %v875 = vpack.c.b16 %v575, %v555
    %v876 = vpack.c.b16 %v576, %v556
    %v877 = vpack.c.b16 %v577, %v557
    %v878 = vpack.c.b16 %v578, %v558
    %v879 = vpack.c.b16 %v579, %v559
    %v880 = vpack.c.b16 %v580, %v560
    %v881 = vpack.c.b16 %v581, %v561
    %v882 = vpack.c.b16 %v582, %v562
    %v883 = vpack.c.b16 %v603, %v583
    %v884 = vpack.c.b16 %v604, %v584
    %v885 = vpack.c.b16 %v605, %v585
    %v886 = vpack.c.b16 %v606, %v586
    %v887 = vpack.c.b16 %v607, %v587
    %v888 = vpack.c.b16 %v608, %v588
    %v889 = vpack.c.b16 %v609, %v589
    %v890 = vpack.c.b16 %v610, %v590
    %v891 = vpack.c.b16 %v611, %v591
    %v892 = vpack.c.b16 %v612, %v592
    %v893 = vpack.c.b16 %v613, %v593
    %v894 = vpack.c.b16 %v614, %v594
    %v895 = vpack.c.b16 %v615, %v595
    %v896 = vpack.c.b16 %v616, %v596
    %v897 = vpack.c.b16 %v617, %v597
    %v898 = vpack.c.b16 %v618, %v598
    %v899 = vpack.c.b16 %v619, %v599
    %v900 = vpack.c.b16 %v620, %v600
    %v901 = vpack.c.b16 %v621, %v601
    %v902 = vpack.c.b16 %v622, %v602
    %v903 = vpack.c.b16 %v643, %v623
    %v904 = vpack.c.b16 %v644, %v624
    %v905 = vpack.c.b16 %v645, %v625
    %v906 = vpack.c.b16 %v646, %v626
    %v907 = vpack.c.b16 %v647, %v627
    %v908 = vpack.c.b16 %v648, %v628
    %v909 = vpack.c.b16 %v649, %v629
    %v910 = vpack.c.b16 %v650, %v630
    %v911 = vpack.c.b16 %v651, %v631
    %v912 = vpack.c.b16 %v652, %v632
    %v913 = vpack.c.b16 %v653, %v633
    %v914 = vpack.c.b16 %v654, %v634
    %v915 = vpack.c.b16 %v655, %v635
    %v916 = vpack.c.b16 %v656, %v636
    %v917 = vpack.c.b16 %v657, %v637
    %v918 = vpack.c.b16 %v658, %v638
    %v919 = vpack.c.b16 %v659, %v639
    %v920 = vpack.c.b16 %v660, %v640
    %v921 = vpack.c.b16 %v661, %v641
    %v922 = vpack.c.b16 %v662, %v642
    %v923 = vpack.c.b16 %v683, %v663
    %v924 = vpack.c.b16 %v684, %v664
    %v925 = vpack.c.b16 %v685, %v665
    %v926 = vpack.c.b16 %v686, %v666
    %v927 = vpack.c.b16 %v687, %v667
    %v928 = vpack.c.b16 %v688, %v668
    %v929 = vpack.c.b16 %v689, %v669
    %v930 = vpack.c.b16 %v690, %v670
    %v931 = vpack.c.b16 %v691, %v671
    %v932 = vpack.c.b16 %v692, %v672
    %v933 = vpack.c.b16 %v693, %v673
    %v934 = vpack.c.b16 %v694, %v674
    %v935 = vpack.c.b16 %v695, %v675
    %v936 = vpack.c.b16 %v696, %v676
    %v937 = vpack.c.b16 %v697, %v677
    %v938 = vpack.c.b16 %v698, %v678
    %v939 = vpack.c.b16 %v699, %v679
    %v940 = vpack.c.b16 %v700, %v680
    %v941 = vpack.c.b16 %v701, %v681
    %v942 = vpack.c.b16 %v702, %v682
    %v943 = vpack.c.b16 %v723, %v703
    %v944 = vpack.c.b16 %v724, %v704
    %v945 = vpack.c.b16 %v725, %v705
    %v946 = vpack.c.b16 %v726, %v706
    %v947 = vpack.c.b16 %v727, %v707
    %v948 = vpack.c.b16 %v728, %v708
    %v949 = vpack.c.b16 %v729, %v709
    %v950 = vpack.c.b16 %v730, %v710
    %v951 = vpack.c.b16 %v731, %v711
    %v952 = vpack.c.b16 %v732, %v712
    %v953 = vpack.c.b16 %v733, %v713
    %v954 = vpack.c.b16 %v734, %v714
    %v955 = vpack.c.b16 %v735, %v715
    %v956 = vpack.c.b16 %v736, %v716
    %v957 = vpack.c.b16 %v737, %v717
    %v958 = vpack.c.b16 %v738, %v718
    %v959 = vpack.c.b16 %v739, %v719
    %v960 = vpack.c.b16 %v740, %v720
    %v961 = vpack.c.b16 %v741, %v721
    %v962 = vpack.c.b16 %v742, %v722
    %v963 = vpack.c.b16 %v763, %v743
    %v964 = vpack.c.b16 %v764, %v744
    %v965 = vpack.c.b16 %v765, %v745
    %v966 = vpack.c.b16 %v766, %v746
    %v967 = vpack.c.b16 %v767, %v747
    %v968 = vpack.c.b16 %v768, %v748
    %v969 = vpack.c.b16 %v769, %v749
    %v970 = vpack.c.b16 %v770, %v750
    %v971 = vpack.c.b16 %v771, %v751
    %v972 = vpack.c.b16 %v772, %v752
    %v973 = vpack.c.b16 %v773, %v753
    %v974 = vpack.c.b16 %v774, %v754
    %v975 = vpack.c.b16 %v775, %v755
    %v976 = vpack.c.b16 %v776, %v756
    %v977 = vpack.c.b16 %v777, %v757
    %v978 = vpack.c.b16 %v778, %v758
    %v979 = vpack.c.b16 %v779, %v759
    %v980 = vpack.c.b16 %v780, %v760
    %v981 = vpack.c.b16 %v781, %v761
    %v982 = vpack.c.b16 %v782, %v762
    %v983 = vpack.c.b16 %v803, %v783
    %v984 = vpack.c.b16 %v804, %v784
    %v985 = vpack.c.b16 %v805, %v785
    %v986 = vpack.c.b16 %v806, %v786
    %v987 = vpack.c.b16 %v807, %v787
    %v988 = vpack.c.b16 %v808, %v788
    %v989 = vpack.c.b16 %v809, %v789
    %v990 = vpack.c.b16 %v810, %v790
    %v991 = vpack.c.b16 %v811, %v791
    %v992 = vpack.c.b16 %v812, %v792
    %v993 = vpack.c.b16 %v813, %v793
    %v994 = vpack.c.b16 %v814, %v794
    %v995 = vpack.c.b16 %v815, %v795
    %v996 = vpack.c.b16 %v816, %v796
    %v997 = vpack.c.b16 %v817, %v797
    %v998 = vpack.c.b16 %v818, %v798
    %v999 = vpack.c.b16 %v819, %v799
    %v1000 = vpack.c.b16 %v820, %v800
    %v1001 = vpack.c.b16 %v821, %v801
    %v1002 = vpack.c.b16 %v822, %v802
    %v1003 = vpack.c.b16 %v843, %v823
    %v1004 = vpack.c.b16 %v844, %v824
    %v1005 = vpack.c.b16 %v845, %v825
    %v1006 = vpack.c.b16 %v846, %v826
    %v1007 = vpack.c.b16 %v847, %v827
    %v1008 = vpack.c.b16 %v848, %v828
    %v1009 = vpack.c.b16 %v849, %v829
    %v1010 = vpack.c.b16 %v850, %v830
    %v1011 = vpack.c.b16 %v851, %v831
    %v1012 = vpack.c.b16 %v852, %v832
    %v1013 = vpack.c.b16 %v853, %v833
    %v1014 = vpack.c.b16 %v854, %v834
    %v1015 = vpack.c.b16 %v855, %v835
    %v1016 = vpack.c.b16 %v856, %v836
    %v1017 = vpack.c.b16 %v857, %v837
    %v1018 = vpack.c.b16 %v858, %v838
    %v1019 = vpack.c.b16 %v859, %v839
    %v1020 = vpack.c.b16 %v860, %v840
    %v1021 = vpack.c.b16 %v861, %v841
    %v1022 = vpack.c.b16 %v862, %v842
    %1183 = vmatprep.subr.bf16.mxu0 %v864
    %1184 = vmatpush1.bf16.msra.mxu0 %v863
    %1185 = vmatprep.subr.bf16.mxu0 %v884
    %1186 = vmatpush1.bf16.msra.mxu0 %v883
    %1187 = vmatprep.subr.bf16.mxu0 %v904
    %1188 = vmatpush1.bf16.msra.mxu0 %v903
    %1189 = vmatprep.subr.bf16.mxu0 %v924
    %1190 = vmatpush1.bf16.msra.mxu0 %v923
    %1191 = vmatprep.subr.bf16.mxu0 %v944
    %1192 = vmatpush1.bf16.msra.mxu0 %v943
    %1193 = vmatprep.subr.bf16.mxu0 %v964
    %1194 = vmatpush1.bf16.msra.mxu0 %v963
    %1195 = vmatprep.subr.bf16.mxu0 %v984
    %1196 = vmatpush1.bf16.msra.mxu0 %v983
    %1197 = vmatprep.subr.bf16.mxu0 %v1004
    %1198 = vmatpush1.bf16.msra.mxu0 %v1003
    %1199 = vmatprep.subr.bf16.mxu0 0
    %1200 = vmatpush1.bf16.msra.mxu0 0
    %1201 = vmatprep.subr.bf16.mxu0 0
    %1202 = vmatpush1.bf16.msra.mxu0 0
    %1203 = vmatprep.subr.bf16.mxu0 0
    %1204 = vmatpush1.bf16.msra.mxu0 0
    %1205 = vmatprep.subr.bf16.mxu0 0
    %1206 = vmatpush1.bf16.msra.mxu0 0
    %1207 = vmatprep.subr.bf16.mxu0 0
    %1208 = vmatpush1.bf16.msra.mxu0 0
    %1209 = vmatprep.subr.bf16.mxu0 0
    %1210 = vmatpush1.bf16.msra.mxu0 0
    %1211 = vmatprep.subr.bf16.mxu0 0
    %1212 = vmatpush1.bf16.msra.mxu0 0
    %1213 = vmatprep.subr.bf16.mxu0 0
    %1214 = vmatpush1.bf16.msra.mxu0 0
    %1215 = vmatprep.mubr.bf16.mxu0 0
    %1216 = vmatmul.mubr.bf16.gmra.mrb[0].mxu0 %v116
    %v1217 = vpop.f32.mrb[0].mxu0
    %v1218 = vadd.f32 %v286, %v1217
    %v1219 = vpop.f32.mrb[0].mxu0
    %v1220 = vadd.f32 %v290, %v1219
    %v1221 = vpop.f32.mrb[0].mxu0
    %v1222 = vpop.f32.mrb[0].mxu0
    %1223 = vdwg.mxu0
    %1224 = vmatprep.subr.bf16.mxu0 %v866
    %1225 = vmatpush1.bf16.msra.mxu0 %v865
    %1226 = vmatprep.subr.bf16.mxu0 %v886
    %1227 = vmatpush1.bf16.msra.mxu0 %v885
    %1228 = vmatprep.subr.bf16.mxu0 %v906
    %1229 = vmatpush1.bf16.msra.mxu0 %v905
    %1230 = vmatprep.subr.bf16.mxu0 %v926
    %1231 = vmatpush1.bf16.msra.mxu0 %v925
    %1232 = vmatprep.subr.bf16.mxu0 %v946
    %1233 = vmatpush1.bf16.msra.mxu0 %v945
    %1234 = vmatprep.subr.bf16.mxu0 %v966
    %1235 = vmatpush1.bf16.msra.mxu0 %v965
    %1236 = vmatprep.subr.bf16.mxu0 %v986
    %1237 = vmatpush1.bf16.msra.mxu0 %v985
    %1238 = vmatprep.subr.bf16.mxu0 %v1006
    %1239 = vmatpush1.bf16.msra.mxu0 %v1005
    %1240 = vmatprep.subr.bf16.mxu0 0
    %1241 = vmatpush1.bf16.msra.mxu0 0
    %1242 = vmatprep.subr.bf16.mxu0 0
    %1243 = vmatpush1.bf16.msra.mxu0 0
    %1244 = vmatprep.subr.bf16.mxu0 0
    %1245 = vmatpush1.bf16.msra.mxu0 0
    %1246 = vmatprep.subr.bf16.mxu0 0
    %1247 = vmatpush1.bf16.msra.mxu0 0
    %1248 = vmatprep.subr.bf16.mxu0 0
    %1249 = vmatpush1.bf16.msra.mxu0 0
    %1250 = vmatprep.subr.bf16.mxu0 0
    %1251 = vmatpush1.bf16.msra.mxu0 0
    %1252 = vmatprep.subr.bf16.mxu0 0
    %1253 = vmatpush1.bf16.msra.mxu0 0
    %1254 = vmatprep.subr.bf16.mxu0 0
    %1255 = vmatpush1.bf16.msra.mxu0 0
    %1256 = vmatprep.mubr.bf16.mxu0 0
    %1257 = vmatmul.mubr.bf16.gmra.mrb[0].mxu0 %v116
    %v1258 = vpop.f32.mrb[0].mxu0
    %v1259 = vadd.f32 %v294, %v1258
    %v1260 = vpop.f32.mrb[0].mxu0
    %v1261 = vadd.f32 %v298, %v1260
    %v1262 = vpop.f32.mrb[0].mxu0
    %v1263 = vpop.f32.mrb[0].mxu0
    %1264 = vdwg.mxu0
    %1265 = vmatprep.subr.bf16.mxu0 %v868
    %1266 = vmatpush1.bf16.msra.mxu0 %v867
    %1267 = vmatprep.subr.bf16.mxu0 %v888
    %1268 = vmatpush1.bf16.msra.mxu0 %v887
    %1269 = vmatprep.subr.bf16.mxu0 %v908
    %1270 = vmatpush1.bf16.msra.mxu0 %v907
    %1271 = vmatprep.subr.bf16.mxu0 %v928
    %1272 = vmatpush1.bf16.msra.mxu0 %v927
    %1273 = vmatprep.subr.bf16.mxu0 %v948
    %1274 = vmatpush1.bf16.msra.mxu0 %v947
    %1275 = vmatprep.subr.bf16.mxu0 %v968
    %1276 = vmatpush1.bf16.msra.mxu0 %v967
    %1277 = vmatprep.subr.bf16.mxu0 %v988
    %1278 = vmatpush1.bf16.msra.mxu0 %v987
    %1279 = vmatprep.subr.bf16.mxu0 %v1008
    %1280 = vmatpush1.bf16.msra.mxu0 %v1007
    %1281 = vmatprep.subr.bf16.mxu0 0
    %1282 = vmatpush1.bf16.msra.mxu0 0
    %1283 = vmatprep.subr.bf16.mxu0 0
    %1284 = vmatpush1.bf16.msra.mxu0 0
    %1285 = vmatprep.subr.bf16.mxu0 0
    %1286 = vmatpush1.bf16.msra.mxu0 0
    %1287 = vmatprep.subr.bf16.mxu0 0
    %1288 = vmatpush1.bf16.msra.mxu0 0
    %1289 = vmatprep.subr.bf16.mxu0 0
    %1290 = vmatpush1.bf16.msra.mxu0 0
    %1291 = vmatprep.subr.bf16.mxu0 0
    %1292 = vmatpush1.bf16.msra.mxu0 0
    %1293 = vmatprep.subr.bf16.mxu0 0
    %1294 = vmatpush1.bf16.msra.mxu0 0
    %1295 = vmatprep.subr.bf16.mxu0 0
    %1296 = vmatpush1.bf16.msra.mxu0 0
    %1297 = vmatprep.mubr.bf16.mxu0 0
    %1298 = vmatmul.mubr.bf16.gmra.mrb[0].mxu0 %v116
    %v1299 = vpop.f32.mrb[0].mxu0
    %v1300 = vadd.f32 %v302, %v1299
    %v1301 = vpop.f32.mrb[0].mxu0
    %v1302 = vadd.f32 %v306, %v1301
    %v1303 = vpop.f32.mrb[0].mxu0
    %v1304 = vpop.f32.mrb[0].mxu0
    %1305 = vdwg.mxu0
    %1306 = vmatprep.subr.bf16.mxu0 %v870
    %1307 = vmatpush1.bf16.msra.mxu0 %v869
    %1308 = vmatprep.subr.bf16.mxu0 %v890
    %1309 = vmatpush1.bf16.msra.mxu0 %v889
    %1310 = vmatprep.subr.bf16.mxu0 %v910
    %1311 = vmatpush1.bf16.msra.mxu0 %v909
    %1312 = vmatprep.subr.bf16.mxu0 %v930
    %1313 = vmatpush1.bf16.msra.mxu0 %v929
    %1314 = vmatprep.subr.bf16.mxu0 %v950
    %1315 = vmatpush1.bf16.msra.mxu0 %v949
    %1316 = vmatprep.subr.bf16.mxu0 %v970
    %1317 = vmatpush1.bf16.msra.mxu0 %v969
    %1318 = vmatprep.subr.bf16.mxu0 %v990
    %1319 = vmatpush1.bf16.msra.mxu0 %v989
    %1320 = vmatprep.subr.bf16.mxu0 %v1010
    %1321 = vmatpush1.bf16.msra.mxu0 %v1009
    %1322 = vmatprep.subr.bf16.mxu0 0
    %1323 = vmatpush1.bf16.msra.mxu0 0
    %1324 = vmatprep.subr.bf16.mxu0 0
    %1325 = vmatpush1.bf16.msra.mxu0 0
    %1326 = vmatprep.subr.bf16.mxu0 0
    %1327 = vmatpush1.bf16.msra.mxu0 0
    %1328 = vmatprep.subr.bf16.mxu0 0
    %1329 = vmatpush1.bf16.msra.mxu0 0
    %1330 = vmatprep.subr.bf16.mxu0 0
    %1331 = vmatpush1.bf16.msra.mxu0 0
    %1332 = vmatprep.subr.bf16.mxu0 0
    %1333 = vmatpush1.bf16.msra.mxu0 0
    %1334 = vmatprep.subr.bf16.mxu0 0
    %1335 = vmatpush1.bf16.msra.mxu0 0
    %1336 = vmatprep.subr.bf16.mxu0 0
    %1337 = vmatpush1.bf16.msra.mxu0 0
    %1338 = vmatprep.mubr.bf16.mxu0 0
    %1339 = vmatmul.mubr.bf16.gmra.mrb[0].mxu0 %v116
    %v1340 = vpop.f32.mrb[0].mxu0
    %v1341 = vadd.f32 %v310, %v1340
    %v1342 = vpop.f32.mrb[0].mxu0
    %v1343 = vadd.f32 %v314, %v1342
    %v1344 = vpop.f32.mrb[0].mxu0
    %v1345 = vpop.f32.mrb[0].mxu0
    %1346 = vdwg.mxu0
    %1347 = vmatprep.subr.bf16.mxu0 %v872
    %1348 = vmatpush1.bf16.msra.mxu0 %v871
    %1349 = vmatprep.subr.bf16.mxu0 %v892
    %1350 = vmatpush1.bf16.msra.mxu0 %v891
    %1351 = vmatprep.subr.bf16.mxu0 %v912
    %1352 = vmatpush1.bf16.msra.mxu0 %v911
    %1353 = vmatprep.subr.bf16.mxu0 %v932
    %1354 = vmatpush1.bf16.msra.mxu0 %v931
    %1355 = vmatprep.subr.bf16.mxu0 %v952
    %1356 = vmatpush1.bf16.msra.mxu0 %v951
    %1357 = vmatprep.subr.bf16.mxu0 %v972
    %1358 = vmatpush1.bf16.msra.mxu0 %v971
    %1359 = vmatprep.subr.bf16.mxu0 %v992
    %1360 = vmatpush1.bf16.msra.mxu0 %v991
    %1361 = vmatprep.subr.bf16.mxu0 %v1012
    %1362 = vmatpush1.bf16.msra.mxu0 %v1011
    %1363 = vmatprep.subr.bf16.mxu0 0
    %1364 = vmatpush1.bf16.msra.mxu0 0
    %1365 = vmatprep.subr.bf16.mxu0 0
    %1366 = vmatpush1.bf16.msra.mxu0 0
    %1367 = vmatprep.subr.bf16.mxu0 0
    %1368 = vmatpush1.bf16.msra.mxu0 0
    %1369 = vmatprep.subr.bf16.mxu0 0
    %1370 = vmatpush1.bf16.msra.mxu0 0
    %1371 = vmatprep.subr.bf16.mxu0 0
    %1372 = vmatpush1.bf16.msra.mxu0 0
    %1373 = vmatprep.subr.bf16.mxu0 0
    %1374 = vmatpush1.bf16.msra.mxu0 0
    %1375 = vmatprep.subr.bf16.mxu0 0
    %1376 = vmatpush1.bf16.msra.mxu0 0
    %1377 = vmatprep.subr.bf16.mxu0 0
    %1378 = vmatpush1.bf16.msra.mxu0 0
    %1379 = vmatprep.mubr.bf16.mxu0 0
    %1380 = vmatmul.mubr.bf16.gmra.mrb[0].mxu0 %v116
    %v1381 = vpop.f32.mrb[0].mxu0
    %v1382 = vadd.f32 %v318, %v1381
    %v1383 = vpop.f32.mrb[0].mxu0
    %v1384 = vadd.f32 %v322, %v1383
    %v1385 = vpop.f32.mrb[0].mxu0
    %v1386 = vpop.f32.mrb[0].mxu0
    %1387 = vdwg.mxu0
    %1388 = vmatprep.subr.bf16.mxu0 %v874
    %1389 = vmatpush1.bf16.msra.mxu0 %v873
    %1390 = vmatprep.subr.bf16.mxu0 %v894
    %1391 = vmatpush1.bf16.msra.mxu0 %v893
    %1392 = vmatprep.subr.bf16.mxu0 %v914
    %1393 = vmatpush1.bf16.msra.mxu0 %v913
    %1394 = vmatprep.subr.bf16.mxu0 %v934
    %1395 = vmatpush1.bf16.msra.mxu0 %v933
    %1396 = vmatprep.subr.bf16.mxu0 %v954
    %1397 = vmatpush1.bf16.msra.mxu0 %v953
    %1398 = vmatprep.subr.bf16.mxu0 %v974
    %1399 = vmatpush1.bf16.msra.mxu0 %v973
    %1400 = vmatprep.subr.bf16.mxu0 %v994
    %1401 = vmatpush1.bf16.msra.mxu0 %v993
    %1402 = vmatprep.subr.bf16.mxu0 %v1014
    %1403 = vmatpush1.bf16.msra.mxu0 %v1013
    %1404 = vmatprep.subr.bf16.mxu0 0
    %1405 = vmatpush1.bf16.msra.mxu0 0
    %1406 = vmatprep.subr.bf16.mxu0 0
    %1407 = vmatpush1.bf16.msra.mxu0 0
    %1408 = vmatprep.subr.bf16.mxu0 0
    %1409 = vmatpush1.bf16.msra.mxu0 0
    %1410 = vmatprep.subr.bf16.mxu0 0
    %1411 = vmatpush1.bf16.msra.mxu0 0
    %1412 = vmatprep.subr.bf16.mxu0 0
    %1413 = vmatpush1.bf16.msra.mxu0 0
    %1414 = vmatprep.subr.bf16.mxu0 0
    %1415 = vmatpush1.bf16.msra.mxu0 0
    %1416 = vmatprep.subr.bf16.mxu0 0
    %1417 = vmatpush1.bf16.msra.mxu0 0
    %1418 = vmatprep.subr.bf16.mxu0 0
    %1419 = vmatpush1.bf16.msra.mxu0 0
    %1420 = vmatprep.mubr.bf16.mxu0 0
    %1421 = vmatmul.mubr.bf16.gmra.mrb[0].mxu0 %v116
    %v1422 = vpop.f32.mrb[0].mxu0
    %v1423 = vadd.f32 %v326, %v1422
    %v1424 = vpop.f32.mrb[0].mxu0
    %v1425 = vadd.f32 %v330, %v1424
    %v1426 = vpop.f32.mrb[0].mxu0
    %v1427 = vpop.f32.mrb[0].mxu0
    %1428 = vdwg.mxu0
    %1429 = vmatprep.subr.bf16.mxu0 %v876
    %1430 = vmatpush1.bf16.msra.mxu0 %v875
    %1431 = vmatprep.subr.bf16.mxu0 %v896
    %1432 = vmatpush1.bf16.msra.mxu0 %v895
    %1433 = vmatprep.subr.bf16.mxu0 %v916
    %1434 = vmatpush1.bf16.msra.mxu0 %v915
    %1435 = vmatprep.subr.bf16.mxu0 %v936
    %1436 = vmatpush1.bf16.msra.mxu0 %v935
    %1437 = vmatprep.subr.bf16.mxu0 %v956
    %1438 = vmatpush1.bf16.msra.mxu0 %v955
    %1439 = vmatprep.subr.bf16.mxu0 %v976
    %1440 = vmatpush1.bf16.msra.mxu0 %v975
    %1441 = vmatprep.subr.bf16.mxu0 %v996
    %1442 = vmatpush1.bf16.msra.mxu0 %v995
    %1443 = vmatprep.subr.bf16.mxu0 %v1016
    %1444 = vmatpush1.bf16.msra.mxu0 %v1015
    %1445 = vmatprep.subr.bf16.mxu0 0
    %1446 = vmatpush1.bf16.msra.mxu0 0
    %1447 = vmatprep.subr.bf16.mxu0 0
    %1448 = vmatpush1.bf16.msra.mxu0 0
    %1449 = vmatprep.subr.bf16.mxu0 0
    %1450 = vmatpush1.bf16.msra.mxu0 0
    %1451 = vmatprep.subr.bf16.mxu0 0
    %1452 = vmatpush1.bf16.msra.mxu0 0
    %1453 = vmatprep.subr.bf16.mxu0 0
    %1454 = vmatpush1.bf16.msra.mxu0 0
    %1455 = vmatprep.subr.bf16.mxu0 0
    %1456 = vmatpush1.bf16.msra.mxu0 0
    %1457 = vmatprep.subr.bf16.mxu0 0
    %1458 = vmatpush1.bf16.msra.mxu0 0
    %1459 = vmatprep.subr.bf16.mxu0 0
    %1460 = vmatpush1.bf16.msra.mxu0 0
    %1461 = vmatprep.mubr.bf16.mxu0 0
    %1462 = vmatmul.mubr.bf16.gmra.mrb[0].mxu0 %v116
    %v1463 = vpop.f32.mrb[0].mxu0
    %v1464 = vadd.f32 %v334, %v1463
    %v1465 = vpop.f32.mrb[0].mxu0
    %v1466 = vadd.f32 %v338, %v1465
    %v1467 = vpop.f32.mrb[0].mxu0
    %v1468 = vpop.f32.mrb[0].mxu0
    %1469 = vdwg.mxu0
    %1470 = vmatprep.subr.bf16.mxu0 %v878
    %1471 = vmatpush1.bf16.msra.mxu0 %v877
    %1472 = vmatprep.subr.bf16.mxu0 %v898
    %1473 = vmatpush1.bf16.msra.mxu0 %v897
    %1474 = vmatprep.subr.bf16.mxu0 %v918
    %1475 = vmatpush1.bf16.msra.mxu0 %v917
    %1476 = vmatprep.subr.bf16.mxu0 %v938
    %1477 = vmatpush1.bf16.msra.mxu0 %v937
    %1478 = vmatprep.subr.bf16.mxu0 %v958
    %1479 = vmatpush1.bf16.msra.mxu0 %v957
    %1480 = vmatprep.subr.bf16.mxu0 %v978
    %1481 = vmatpush1.bf16.msra.mxu0 %v977
    %1482 = vmatprep.subr.bf16.mxu0 %v998
    %1483 = vmatpush1.bf16.msra.mxu0 %v997
    %1484 = vmatprep.subr.bf16.mxu0 %v1018
    %1485 = vmatpush1.bf16.msra.mxu0 %v1017
    %1486 = vmatprep.subr.bf16.mxu0 0
    %1487 = vmatpush1.bf16.msra.mxu0 0
    %1488 = vmatprep.subr.bf16.mxu0 0
    %1489 = vmatpush1.bf16.msra.mxu0 0
    %1490 = vmatprep.subr.bf16.mxu0 0
    %1491 = vmatpush1.bf16.msra.mxu0 0
    %1492 = vmatprep.subr.bf16.mxu0 0
    %1493 = vmatpush1.bf16.msra.mxu0 0
    %1494 = vmatprep.subr.bf16.mxu0 0
    %1495 = vmatpush1.bf16.msra.mxu0 0
    %1496 = vmatprep.subr.bf16.mxu0 0
    %1497 = vmatpush1.bf16.msra.mxu0 0
    %1498 = vmatprep.subr.bf16.mxu0 0
    %1499 = vmatpush1.bf16.msra.mxu0 0
    %1500 = vmatprep.subr.bf16.mxu0 0
    %1501 = vmatpush1.bf16.msra.mxu0 0
    %1502 = vmatprep.mubr.bf16.mxu0 0
    %1503 = vmatmul.mubr.bf16.gmra.mrb[0].mxu0 %v116
    %v1504 = vpop.f32.mrb[0].mxu0
    %v1505 = vadd.f32 %v342, %v1504
    %v1506 = vpop.f32.mrb[0].mxu0
    %v1507 = vadd.f32 %v346, %v1506
    %v1508 = vpop.f32.mrb[0].mxu0
    %v1509 = vpop.f32.mrb[0].mxu0
    %1510 = vdwg.mxu0
    %1511 = vmatprep.subr.bf16.mxu0 %v880
    %1512 = vmatpush1.bf16.msra.mxu0 %v879
    %1513 = vmatprep.subr.bf16.mxu0 %v900
    %1514 = vmatpush1.bf16.msra.mxu0 %v899
    %1515 = vmatprep.subr.bf16.mxu0 %v920
    %1516 = vmatpush1.bf16.msra.mxu0 %v919
    %1517 = vmatprep.subr.bf16.mxu0 %v940
    %1518 = vmatpush1.bf16.msra.mxu0 %v939
    %1519 = vmatprep.subr.bf16.mxu0 %v960
    %1520 = vmatpush1.bf16.msra.mxu0 %v959
    %1521 = vmatprep.subr.bf16.mxu0 %v980
    %1522 = vmatpush1.bf16.msra.mxu0 %v979
    %1523 = vmatprep.subr.bf16.mxu0 %v1000
    %1524 = vmatpush1.bf16.msra.mxu0 %v999
    %1525 = vmatprep.subr.bf16.mxu0 %v1020
    %1526 = vmatpush1.bf16.msra.mxu0 %v1019
    %1527 = vmatprep.subr.bf16.mxu0 0
    %1528 = vmatpush1.bf16.msra.mxu0 0
    %1529 = vmatprep.subr.bf16.mxu0 0
    %1530 = vmatpush1.bf16.msra.mxu0 0
    %1531 = vmatprep.subr.bf16.mxu0 0
    %1532 = vmatpush1.bf16.msra.mxu0 0
    %1533 = vmatprep.subr.bf16.mxu0 0
    %1534 = vmatpush1.bf16.msra.mxu0 0
    %1535 = vmatprep.subr.bf16.mxu0 0
    %1536 = vmatpush1.bf16.msra.mxu0 0
    %1537 = vmatprep.subr.bf16.mxu0 0
    %1538 = vmatpush1.bf16.msra.mxu0 0
    %1539 = vmatprep.subr.bf16.mxu0 0
    %1540 = vmatpush1.bf16.msra.mxu0 0
    %1541 = vmatprep.subr.bf16.mxu0 0
    %1542 = vmatpush1.bf16.msra.mxu0 0
    %1543 = vmatprep.mubr.bf16.mxu0 0
    %1544 = vmatmul.mubr.bf16.gmra.mrb[0].mxu0 %v116
    %v1545 = vpop.f32.mrb[0].mxu0
    %v1546 = vadd.f32 %v350, %v1545
    %v1547 = vpop.f32.mrb[0].mxu0
    %v1548 = vadd.f32 %v354, %v1547
    %v1549 = vpop.f32.mrb[0].mxu0
    %v1550 = vpop.f32.mrb[0].mxu0
    %1551 = vdwg.mxu0
    %1552 = vmatprep.subr.bf16.mxu0 %v882
    %1553 = vmatpush1.bf16.msra.mxu0 %v881
    %1554 = vmatprep.subr.bf16.mxu0 %v902
    %1555 = vmatpush1.bf16.msra.mxu0 %v901
    %1556 = vmatprep.subr.bf16.mxu0 %v922
    %1557 = vmatpush1.bf16.msra.mxu0 %v921
    %1558 = vmatprep.subr.bf16.mxu0 %v942
    %1559 = vmatpush1.bf16.msra.mxu0 %v941
    %1560 = vmatprep.subr.bf16.mxu0 %v962
    %1561 = vmatpush1.bf16.msra.mxu0 %v961
    %1562 = vmatprep.subr.bf16.mxu0 %v982
    %1563 = vmatpush1.bf16.msra.mxu0 %v981
    %1564 = vmatprep.subr.bf16.mxu0 %v1002
    %1565 = vmatpush1.bf16.msra.mxu0 %v1001
    %1566 = vmatprep.subr.bf16.mxu0 %v1022
    %1567 = vmatpush1.bf16.msra.mxu0 %v1021
    %1568 = vmatprep.subr.bf16.mxu0 0
    %1569 = vmatpush1.bf16.msra.mxu0 0
    %1570 = vmatprep.subr.bf16.mxu0 0
    %1571 = vmatpush1.bf16.msra.mxu0 0
    %1572 = vmatprep.subr.bf16.mxu0 0
    %1573 = vmatpush1.bf16.msra.mxu0 0
    %1574 = vmatprep.subr.bf16.mxu0 0
    %1575 = vmatpush1.bf16.msra.mxu0 0
    %1576 = vmatprep.subr.bf16.mxu0 0
    %1577 = vmatpush1.bf16.msra.mxu0 0
    %1578 = vmatprep.subr.bf16.mxu0 0
    %1579 = vmatpush1.bf16.msra.mxu0 0
    %1580 = vmatprep.subr.bf16.mxu0 0
    %1581 = vmatpush1.bf16.msra.mxu0 0
    %1582 = vmatprep.subr.bf16.mxu0 0
    %1583 = vmatpush1.bf16.msra.mxu0 0
    %1584 = vmatprep.mubr.bf16.mxu0 0
    %1585 = vmatmul.mubr.bf16.gmra.mrb[0].mxu0 %v116
    %v1586 = vpop.f32.mrb[0].mxu0
    %v1587 = vadd.f32 %v358, %v1586
    %v1588 = vpop.f32.mrb[0].mxu0
    %v1589 = vadd.f32 %v362, %v1588
    %v1590 = vpop.f32.mrb[0].mxu0
    %v1591 = vpop.f32.mrb[0].mxu0
    %1592 = vdwg.mxu0
    %vm1593 = vcmp.ge.f32.partialorder %v1218, 0.0
    %vm1594 = vcmp.ge.f32.partialorder %v1220, 0.0
    %vm1595 = vcmp.ge.f32.partialorder %v1259, 0.0
    %vm1596 = vcmp.ge.f32.partialorder %v1261, 0.0
    %vm1597 = vcmp.ge.f32.partialorder %v1300, 0.0
    %vm1598 = vcmp.ge.f32.partialorder %v1302, 0.0
    %vm1599 = vcmp.ge.f32.partialorder %v1341, 0.0
    %vm1600 = vcmp.ge.f32.partialorder %v1343, 0.0
    %vm1601 = vcmp.ge.f32.partialorder %v1382, 0.0
    %vm1602 = vcmp.ge.f32.partialorder %v1384, 0.0
    %vm1603 = vcmp.ge.f32.partialorder %v1423, 0.0
    %vm1604 = vcmp.ge.f32.partialorder %v1425, 0.0
    %vm1605 = vcmp.ge.f32.partialorder %v1464, 0.0
    %vm1606 = vcmp.ge.f32.partialorder %v1466, 0.0
    %vm1607 = vcmp.ge.f32.partialorder %v1505, 0.0
    %vm1608 = vcmp.ge.f32.partialorder %v1507, 0.0
    %vm1609 = vcmp.ge.f32.partialorder %v1546, 0.0
    %vm1610 = vcmp.ge.f32.partialorder %v1548, 0.0
    %vm1611 = vcmp.ge.f32.partialorder %v1587, 0.0
    %vm1612 = vcmp.ge.f32.partialorder %v1589, 0.0
    %v1613 = vmul.f32 %v1218, 0.02
    %v1614 = vmul.f32 %v1220, 0.02
    %v1615 = vmul.f32 %v1259, 0.02
    %v1616 = vmul.f32 %v1261, 0.02
    %v1617 = vmul.f32 %v1300, 0.02
    %v1618 = vmul.f32 %v1302, 0.02
    %v1619 = vmul.f32 %v1341, 0.02
    %v1620 = vmul.f32 %v1343, 0.02
    %v1621 = vmul.f32 %v1382, 0.02
    %v1622 = vmul.f32 %v1384, 0.02
    %v1623 = vmul.f32 %v1423, 0.02
    %v1624 = vmul.f32 %v1425, 0.02
    %v1625 = vmul.f32 %v1464, 0.02
    %v1626 = vmul.f32 %v1466, 0.02
    %v1627 = vmul.f32 %v1505, 0.02
    %v1628 = vmul.f32 %v1507, 0.02
    %v1629 = vmul.f32 %v1546, 0.02
    %v1630 = vmul.f32 %v1548, 0.02
    %v1631 = vmul.f32 %v1587, 0.02
    %v1632 = vmul.f32 %v1589, 0.02
    %v1633 = vsel %vm1593, %v1218, %v1613
    %v1634 = vsel %vm1594, %v1220, %v1614
    %v1635 = vsel %vm1595, %v1259, %v1615
    %v1636 = vsel %vm1596, %v1261, %v1616
    %v1637 = vsel %vm1597, %v1300, %v1617
    %v1638 = vsel %vm1598, %v1302, %v1618
    %v1639 = vsel %vm1599, %v1341, %v1619
    %v1640 = vsel %vm1600, %v1343, %v1620
    %v1641 = vsel %vm1601, %v1382, %v1621
    %v1642 = vsel %vm1602, %v1384, %v1622
    %v1643 = vsel %vm1603, %v1423, %v1623
    %v1644 = vsel %vm1604, %v1425, %v1624
    %v1645 = vsel %vm1605, %v1464, %v1625
    %v1646 = vsel %vm1606, %v1466, %v1626
    %v1647 = vsel %vm1607, %v1505, %v1627
    %v1648 = vsel %vm1608, %v1507, %v1628
    %v1649 = vsel %vm1609, %v1546, %v1629
    %v1650 = vsel %vm1610, %v1548, %v1630
    %v1651 = vsel %vm1611, %v1587, %v1631
    %v1652 = vsel %vm1612, %v1589, %v1632
    %v1653 = vadd.f32 %v1633, %v1638
    %v1654 = vadd.f32 %v1634, %v1639
    %v1655 = vadd.f32 %v1635, %v1640
    %v1656 = vadd.f32 %v1636, %v1641
    %v1657 = vadd.f32 %v1637, %v1642
    %v1658 = vadd.f32 %v1653, %v1643
    %v1659 = vadd.f32 %v1654, %v1644
    %v1660 = vadd.f32 %v1655, %v1645
    %v1661 = vadd.f32 %v1656, %v1646
    %v1662 = vadd.f32 %v1657, %v1647
    %v1663 = vadd.f32 %v1658, %v1648
    %v1664 = vadd.f32 %v1659, %v1649
    %v1665 = vadd.f32 %v1660, %v1650
    %v1666 = vadd.f32 %v1661, %v1651
    %v1667 = vadd.f32 %v1662, %v1652
    %v1668 = vmul.f32 %v1663, 0.25
    %v1669 = vmul.f32 %v1664, 0.25
    %v1670 = vmul.f32 %v1665, 0.25
    %v1671 = vmul.f32 %v1666, 0.25
    %v1672 = vmul.f32 %v1667, 0.25
    %v1673 = vpack.c.bf16 %v1668, %v1668
    %v1674 = vpack.c.bf16 %v1669, %v1669
    %v1675 = vpack.c.bf16 %v1670, %v1670
    %v1676 = vpack.c.bf16 %v1671, %v1671
    %v1677 = vpack.c.bf16 %v1672, %v1672
    %v1678 = vld [vmem:[#allocation8] sm:$0xff]
    %v1679 = vld [vmem:[#allocation8 + $0x8] sm:$0xff]
    %v1680 = vld [vmem:[#allocation8 + $0x10] sm:$0xff]
    %v1681 = vld [vmem:[#allocation8 + $0x18] sm:$0xff]
    %v1682 = vld [vmem:[#allocation8 + $0x20] sm:$0xf]
    %v1683 = vld [vmem:[#allocation8 + $0x24] sm:$0xff]
    %v1684 = vld [vmem:[#allocation8 + $0x2c] sm:$0xff]
    %v1685 = vld [vmem:[#allocation8 + $0x34] sm:$0xff]
    %v1686 = vld [vmem:[#allocation8 + $0x3c] sm:$0xff]
    %v1687 = vld [vmem:[#allocation8 + $0x44] sm:$0xf]
    %v1688 = vld [vmem:[#allocation8 + $0x48] sm:$0xff]
    %v1689 = vld [vmem:[#allocation8 + $0x50] sm:$0xff]
    %v1690 = vld [vmem:[#allocation8 + $0x58] sm:$0xff]
    %v1691 = vld [vmem:[#allocation8 + $0x60] sm:$0xff]
    %v1692 = vld [vmem:[#allocation8 + $0x68] sm:$0xf]
    %v1693 = vld [vmem:[#allocation8 + $0x6c] sm:$0xff]
    %v1694 = vld [vmem:[#allocation8 + $0x74] sm:$0xff]
    %v1695 = vld [vmem:[#allocation8 + $0x7c] sm:$0xff]
    %v1696 = vld [vmem:[#allocation8 + $0x84] sm:$0xff]
    %v1697 = vld [vmem:[#allocation8 + $0x8c] sm:$0xf]
    %v1698 = vld [vmem:[#allocation8 + $0x90] sm:$0xff]
    %v1699 = vld [vmem:[#allocation8 + $0x98] sm:$0xff]
    %v1700 = vld [vmem:[#allocation8 + $0xa0] sm:$0xff]
    %v1701 = vld [vmem:[#allocation8 + $0xa8] sm:$0xff]
    %v1702 = vld [vmem:[#allocation8 + $0xb0] sm:$0xf]
    %v1703 = vld [vmem:[#allocation8 + $0xb4] sm:$0xff]
    %v1704 = vld [vmem:[#allocation8 + $0xbc] sm:$0xff]
    %v1705 = vld [vmem:[#allocation8 + $0xc4] sm:$0xff]
    %v1706 = vld [vmem:[#allocation8 + $0xcc] sm:$0xff]
    %v1707 = vld [vmem:[#allocation8 + $0xd4] sm:$0xf]
    %v1708 = vld [vmem:[#allocation8 + $0xd8] sm:$0xff]
    %v1709 = vld [vmem:[#allocation8 + $0xe0] sm:$0xff]
    %v1710 = vld [vmem:[#allocation8 + $0xe8] sm:$0xff]
    %v1711 = vld [vmem:[#allocation8 + $0xf0] sm:$0xff]
    %v1712 = vld [vmem:[#allocation8 + $0xf8] sm:$0xf]
    %v1713 = vld [vmem:[#allocation8 + $0xfc] sm:$0xff]
    %v1714 = vld [vmem:[#allocation8 + $0x104] sm:$0xff]
    %v1715 = vld [vmem:[#allocation8 + $0x10c] sm:$0xff]
    %v1716 = vld [vmem:[#allocation8 + $0x114] sm:$0xff]
    %v1717 = vld [vmem:[#allocation8 + $0x11c] sm:$0xf]
    %v1718 = vld [vmem:[#allocation8 + $0x120] sm:$0xff]
    %v1719 = vld [vmem:[#allocation8 + $0x128] sm:$0xff]
    %v1720 = vld [vmem:[#allocation8 + $0x130] sm:$0xff]
    %v1721 = vld [vmem:[#allocation8 + $0x138] sm:$0xff]
    %v1722 = vld [vmem:[#allocation8 + $0x140] sm:$0xf]
    %v1723 = vld [vmem:[#allocation8 + $0x144] sm:$0xff]
    %v1724 = vld [vmem:[#allocation8 + $0x14c] sm:$0xff]
    %v1725 = vld [vmem:[#allocation8 + $0x154] sm:$0xff]
    %v1726 = vld [vmem:[#allocation8 + $0x15c] sm:$0xff]
    %v1727 = vld [vmem:[#allocation8 + $0x164] sm:$0xf]
    %v1728 = vld [vmem:[#allocation8 + $0x168] sm:$0xff]
    %v1729 = vld [vmem:[#allocation8 + $0x170] sm:$0xff]
    %v1730 = vld [vmem:[#allocation8 + $0x178] sm:$0xff]
    %v1731 = vld [vmem:[#allocation8 + $0x180] sm:$0xff]
    %v1732 = vld [vmem:[#allocation8 + $0x188] sm:$0xf]
    %v1733 = vld [vmem:[#allocation8 + $0x18c] sm:$0xff]
    %v1734 = vld [vmem:[#allocation8 + $0x194] sm:$0xff]
    %v1735 = vld [vmem:[#allocation8 + $0x19c] sm:$0xff]
    %v1736 = vld [vmem:[#allocation8 + $0x1a4] sm:$0xff]
    %v1737 = vld [vmem:[#allocation8 + $0x1ac] sm:$0xf]
    %v1738 = vld [vmem:[#allocation8 + $0x1b0] sm:$0xff]
    %v1739 = vld [vmem:[#allocation8 + $0x1b8] sm:$0xff]
    %v1740 = vld [vmem:[#allocation8 + $0x1c0] sm:$0xff]
    %v1741 = vld [vmem:[#allocation8 + $0x1c8] sm:$0xff]
    %v1742 = vld [vmem:[#allocation8 + $0x1d0] sm:$0xf]
    %v1743 = vld [vmem:[#allocation8 + $0x1d4] sm:$0xff]
    %v1744 = vld [vmem:[#allocation8 + $0x1dc] sm:$0xff]
    %v1745 = vld [vmem:[#allocation8 + $0x1e4] sm:$0xff]
    %v1746 = vld [vmem:[#allocation8 + $0x1ec] sm:$0xff]
    %v1747 = vld [vmem:[#allocation8 + $0x1f4] sm:$0xf]
    %v1748 = vld [vmem:[#allocation8 + $0x1f8] sm:$0xff]
    %v1749 = vld [vmem:[#allocation8 + $0x200] sm:$0xff]
    %v1750 = vld [vmem:[#allocation8 + $0x208] sm:$0xff]
    %v1751 = vld [vmem:[#allocation8 + $0x210] sm:$0xff]
    %v1752 = vld [vmem:[#allocation8 + $0x218] sm:$0xf]
    %v1753 = vld [vmem:[#allocation8 + $0x21c] sm:$0xff]
    %v1754 = vld [vmem:[#allocation8 + $0x224] sm:$0xff]
    %v1755 = vld [vmem:[#allocation8 + $0x22c] sm:$0xff]
    %v1756 = vld [vmem:[#allocation8 + $0x234] sm:$0xff]
    %v1757 = vld [vmem:[#allocation8 + $0x23c] sm:$0xf]
    %v1758 = vld [vmem:[#allocation8 + $0x240] sm:$0xff]
    %v1759 = vld [vmem:[#allocation8 + $0x248] sm:$0xff]
    %v1760 = vld [vmem:[#allocation8 + $0x250] sm:$0xff]
    %v1761 = vld [vmem:[#allocation8 + $0x258] sm:$0xff]
    %v1762 = vld [vmem:[#allocation8 + $0x260] sm:$0xf]
    %v1763 = vld [vmem:[#allocation8 + $0x264] sm:$0xff]
    %v1764 = vld [vmem:[#allocation8 + $0x26c] sm:$0xff]
    %v1765 = vld [vmem:[#allocation8 + $0x274] sm:$0xff]
    %v1766 = vld [vmem:[#allocation8 + $0x27c] sm:$0xff]
    %v1767 = vld [vmem:[#allocation8 + $0x284] sm:$0xf]
    %v1768 = vld [vmem:[#allocation8 + $0x288] sm:$0xff]
    %v1769 = vld [vmem:[#allocation8 + $0x290] sm:$0xff]
    %v1770 = vld [vmem:[#allocation8 + $0x298] sm:$0xff]
    %v1771 = vld [vmem:[#allocation8 + $0x2a0] sm:$0xff]
    %v1772 = vld [vmem:[#allocation8 + $0x2a8] sm:$0xf]
    %v1773 = vld [vmem:[#allocation8 + $0x2ac] sm:$0xff]
    %v1774 = vld [vmem:[#allocation8 + $0x2b4] sm:$0xff]
    %v1775 = vld [vmem:[#allocation8 + $0x2bc] sm:$0xff]
    %v1776 = vld [vmem:[#allocation8 + $0x2c4] sm:$0xff]
    %v1777 = vld [vmem:[#allocation8 + $0x2cc] sm:$0xf]
    %v1778 = vld [vmem:[#allocation8 + $0x2d0] sm:$0xff]
    %v1779 = vld [vmem:[#allocation8 + $0x2d8] sm:$0xff]
    %v1780 = vld [vmem:[#allocation8 + $0x2e0] sm:$0xff]
    %v1781 = vld [vmem:[#allocation8 + $0x2e8] sm:$0xff]
    %v1782 = vld [vmem:[#allocation8 + $0x2f0] sm:$0xf]
    %v1783 = vld [vmem:[#allocation8 + $0x2f4] sm:$0xff]
    %v1784 = vld [vmem:[#allocation8 + $0x2fc] sm:$0xff]
    %v1785 = vld [vmem:[#allocation8 + $0x304] sm:$0xff]
    %v1786 = vld [vmem:[#allocation8 + $0x30c] sm:$0xff]
    %v1787 = vld [vmem:[#allocation8 + $0x314] sm:$0xf]
    %v1788 = vld [vmem:[#allocation8 + $0x318] sm:$0xff]
    %v1789 = vld [vmem:[#allocation8 + $0x320] sm:$0xff]
    %v1790 = vld [vmem:[#allocation8 + $0x328] sm:$0xff]
    %v1791 = vld [vmem:[#allocation8 + $0x330] sm:$0xff]
    %v1792 = vld [vmem:[#allocation8 + $0x338] sm:$0xf]
    %v1793 = vld [vmem:[#allocation8 + $0x33c] sm:$0xff]
    %v1794 = vld [vmem:[#allocation8 + $0x344] sm:$0xff]
    %v1795 = vld [vmem:[#allocation8 + $0x34c] sm:$0xff]
    %v1796 = vld [vmem:[#allocation8 + $0x354] sm:$0xff]
    %v1797 = vld [vmem:[#allocation8 + $0x35c] sm:$0xf]
    %v1798 = vld [vmem:[#allocation8 + $0x360] sm:$0xff]
    %v1799 = vld [vmem:[#allocation8 + $0x368] sm:$0xff]
    %v1800 = vld [vmem:[#allocation8 + $0x370] sm:$0xff]
    %v1801 = vld [vmem:[#allocation8 + $0x378] sm:$0xff]
    %v1802 = vld [vmem:[#allocation8 + $0x380] sm:$0xf]
    %v1803 = vld [vmem:[#allocation8 + $0x384] sm:$0xff]
    %v1804 = vld [vmem:[#allocation8 + $0x38c] sm:$0xff]
    %v1805 = vld [vmem:[#allocation8 + $0x394] sm:$0xff]
    %v1806 = vld [vmem:[#allocation8 + $0x39c] sm:$0xff]
    %v1807 = vld [vmem:[#allocation8 + $0x3a4] sm:$0xf]
    %v1808 = vld [vmem:[#allocation8 + $0x3a8] sm:$0xff]
    %v1809 = vld [vmem:[#allocation8 + $0x3b0] sm:$0xff]
    %v1810 = vld [vmem:[#allocation8 + $0x3b8] sm:$0xff]
    %v1811 = vld [vmem:[#allocation8 + $0x3c0] sm:$0xff]
    %v1812 = vld [vmem:[#allocation8 + $0x3c8] sm:$0xf]
    %v1813 = vld [vmem:[#allocation8 + $0x3cc] sm:$0xff]
    %v1814 = vld [vmem:[#allocation8 + $0x3d4] sm:$0xff]
    %v1815 = vld [vmem:[#allocation8 + $0x3dc] sm:$0xff]
    %v1816 = vld [vmem:[#allocation8 + $0x3e4] sm:$0xff]
    %v1817 = vld [vmem:[#allocation8 + $0x3ec] sm:$0xf]
    %v1818 = vld [vmem:[#allocation8 + $0x3f0] sm:$0xff]
    %v1819 = vld [vmem:[#allocation8 + $0x3f8] sm:$0xff]
    %v1820 = vld [vmem:[#allocation8 + $0x400] sm:$0xff]
    %v1821 = vld [vmem:[#allocation8 + $0x408] sm:$0xff]
    %v1822 = vld [vmem:[#allocation8 + $0x410] sm:$0xf]
    %v1823 = vld [vmem:[#allocation8 + $0x414] sm:$0xff]
    %v1824 = vld [vmem:[#allocation8 + $0x41c] sm:$0xff]
    %v1825 = vld [vmem:[#allocation8 + $0x424] sm:$0xff]
    %v1826 = vld [vmem:[#allocation8 + $0x42c] sm:$0xff]
    %v1827 = vld [vmem:[#allocation8 + $0x434] sm:$0xf]
    %v1828 = vld [vmem:[#allocation8 + $0x438] sm:$0xff]
    %v1829 = vld [vmem:[#allocation8 + $0x440] sm:$0xff]
    %v1830 = vld [vmem:[#allocation8 + $0x448] sm:$0xff]
    %v1831 = vld [vmem:[#allocation8 + $0x450] sm:$0xff]
    %v1832 = vld [vmem:[#allocation8 + $0x458] sm:$0xf]
    %v1833 = vld [vmem:[#allocation8 + $0x45c] sm:$0xff]
    %v1834 = vld [vmem:[#allocation8 + $0x464] sm:$0xff]
    %v1835 = vld [vmem:[#allocation8 + $0x46c] sm:$0xff]
    %v1836 = vld [vmem:[#allocation8 + $0x474] sm:$0xff]
    %v1837 = vld [vmem:[#allocation8 + $0x47c] sm:$0xf]
    %v1838 = vld [vmem:[#allocation8 + $0x480] sm:$0xff]
    %v1839 = vld [vmem:[#allocation8 + $0x488] sm:$0xff]
    %v1840 = vld [vmem:[#allocation8 + $0x490] sm:$0xff]
    %v1841 = vld [vmem:[#allocation8 + $0x498] sm:$0xff]
    %v1842 = vld [vmem:[#allocation8 + $0x4a0] sm:$0xf]
    %v1843 = vld [vmem:[#allocation8 + $0x4a4] sm:$0xff]
    %v1844 = vld [vmem:[#allocation8 + $0x4ac] sm:$0xff]
    %v1845 = vld [vmem:[#allocation8 + $0x4b4] sm:$0xff]
    %v1846 = vld [vmem:[#allocation8 + $0x4bc] sm:$0xff]
    %v1847 = vld [vmem:[#allocation8 + $0x4c4] sm:$0xf]
    %v1848 = vld [vmem:[#allocation8 + $0x4c8] sm:$0xff]
    %v1849 = vld [vmem:[#allocation8 + $0x4d0] sm:$0xff]
    %v1850 = vld [vmem:[#allocation8 + $0x4d8] sm:$0xff]
    %v1851 = vld [vmem:[#allocation8 + $0x4e0] sm:$0xff]
    %v1852 = vld [vmem:[#allocation8 + $0x4e8] sm:$0xf]
    %v1853 = vld [vmem:[#allocation8 + $0x4ec] sm:$0xff]
    %v1854 = vld [vmem:[#allocation8 + $0x4f4] sm:$0xff]
    %v1855 = vld [vmem:[#allocation8 + $0x4fc] sm:$0xff]
    %v1856 = vld [vmem:[#allocation8 + $0x504] sm:$0xff]
    %v1857 = vld [vmem:[#allocation8 + $0x50c] sm:$0xf]
    %v1858 = vld [vmem:[#allocation8 + $0x510] sm:$0xff]
    %v1859 = vld [vmem:[#allocation8 + $0x518] sm:$0xff]
    %v1860 = vld [vmem:[#allocation8 + $0x520] sm:$0xff]
    %v1861 = vld [vmem:[#allocation8 + $0x528] sm:$0xff]
    %v1862 = vld [vmem:[#allocation8 + $0x530] sm:$0xf]
    %v1863 = vld [vmem:[#allocation8 + $0x534] sm:$0xff]
    %v1864 = vld [vmem:[#allocation8 + $0x53c] sm:$0xff]
    %v1865 = vld [vmem:[#allocation8 + $0x544] sm:$0xff]
    %v1866 = vld [vmem:[#allocation8 + $0x54c] sm:$0xff]
    %v1867 = vld [vmem:[#allocation8 + $0x554] sm:$0xf]
    %v1868 = vld [vmem:[#allocation8 + $0x558] sm:$0xff]
    %v1869 = vld [vmem:[#allocation8 + $0x560] sm:$0xff]
    %v1870 = vld [vmem:[#allocation8 + $0x568] sm:$0xff]
    %v1871 = vld [vmem:[#allocation8 + $0x570] sm:$0xff]
    %v1872 = vld [vmem:[#allocation8 + $0x578] sm:$0xf]
    %v1873 = vld [vmem:[#allocation8 + $0x57c] sm:$0xff]
    %v1874 = vld [vmem:[#allocation8 + $0x584] sm:$0xff]
    %v1875 = vld [vmem:[#allocation8 + $0x58c] sm:$0xff]
    %v1876 = vld [vmem:[#allocation8 + $0x594] sm:$0xff]
    %v1877 = vld [vmem:[#allocation8 + $0x59c] sm:$0xf]
    %v1878 = vld [vmem:[#allocation8 + $0x5a0] sm:$0xff]
    %v1879 = vld [vmem:[#allocation8 + $0x5a8] sm:$0xff]
    %v1880 = vld [vmem:[#allocation8 + $0x5b0] sm:$0xff]
    %v1881 = vld [vmem:[#allocation8 + $0x5b8] sm:$0xff]
    %v1882 = vld [vmem:[#allocation8 + $0x5c0] sm:$0xf]
    %v1883 = vld [vmem:[#allocation8 + $0x5c4] sm:$0xff]
    %v1884 = vld [vmem:[#allocation8 + $0x5cc] sm:$0xff]
    %v1885 = vld [vmem:[#allocation8 + $0x5d4] sm:$0xff]
    %v1886 = vld [vmem:[#allocation8 + $0x5dc] sm:$0xff]
    %v1887 = vld [vmem:[#allocation8 + $0x5e4] sm:$0xf]
    %v1888 = vld [vmem:[#allocation8 + $0x5e8] sm:$0xff]
    %v1889 = vld [vmem:[#allocation8 + $0x5f0] sm:$0xff]
    %v1890 = vld [vmem:[#allocation8 + $0x5f8] sm:$0xff]
    %v1891 = vld [vmem:[#allocation8 + $0x600] sm:$0xff]
    %v1892 = vld [vmem:[#allocation8 + $0x608] sm:$0xf]
    %v1893 = vld [vmem:[#allocation8 + $0x60c] sm:$0xff]
    %v1894 = vld [vmem:[#allocation8 + $0x614] sm:$0xff]
    %v1895 = vld [vmem:[#allocation8 + $0x61c] sm:$0xff]
    %v1896 = vld [vmem:[#allocation8 + $0x624] sm:$0xff]
    %v1897 = vld [vmem:[#allocation8 + $0x62c] sm:$0xf]
    %v1898 = vld [vmem:[#allocation8 + $0x630] sm:$0xff]
    %v1899 = vld [vmem:[#allocation8 + $0x638] sm:$0xff]
    %v1900 = vld [vmem:[#allocation8 + $0x640] sm:$0xff]
    %v1901 = vld [vmem:[#allocation8 + $0x648] sm:$0xff]
    %v1902 = vld [vmem:[#allocation8 + $0x650] sm:$0xf]
    %v1903 = vld [vmem:[#allocation8 + $0x654] sm:$0xff]
    %v1904 = vld [vmem:[#allocation8 + $0x65c] sm:$0xff]
    %v1905 = vld [vmem:[#allocation8 + $0x664] sm:$0xff]
    %v1906 = vld [vmem:[#allocation8 + $0x66c] sm:$0xff]
    %v1907 = vld [vmem:[#allocation8 + $0x674] sm:$0xf]
    %v1908 = vld [vmem:[#allocation8 + $0x678] sm:$0xff]
    %v1909 = vld [vmem:[#allocation8 + $0x680] sm:$0xff]
    %v1910 = vld [vmem:[#allocation8 + $0x688] sm:$0xff]
    %v1911 = vld [vmem:[#allocation8 + $0x690] sm:$0xff]
    %v1912 = vld [vmem:[#allocation8 + $0x698] sm:$0xf]
    %v1913 = vld [vmem:[#allocation8 + $0x69c] sm:$0xff]
    %v1914 = vld [vmem:[#allocation8 + $0x6a4] sm:$0xff]
    %v1915 = vld [vmem:[#allocation8 + $0x6ac] sm:$0xff]
    %v1916 = vld [vmem:[#allocation8 + $0x6b4] sm:$0xff]
    %v1917 = vld [vmem:[#allocation8 + $0x6bc] sm:$0xf]
    %v1918 = vld [vmem:[#allocation8 + $0x6c0] sm:$0xff]
    %v1919 = vld [vmem:[#allocation8 + $0x6c8] sm:$0xff]
    %v1920 = vld [vmem:[#allocation8 + $0x6d0] sm:$0xff]
    %v1921 = vld [vmem:[#allocation8 + $0x6d8] sm:$0xff]
    %v1922 = vld [vmem:[#allocation8 + $0x6e0] sm:$0xf]
    %v1923 = vld [vmem:[#allocation8 + $0x6e4] sm:$0xff]
    %v1924 = vld [vmem:[#allocation8 + $0x6ec] sm:$0xff]
    %v1925 = vld [vmem:[#allocation8 + $0x6f4] sm:$0xff]
    %v1926 = vld [vmem:[#allocation8 + $0x6fc] sm:$0xff]
    %v1927 = vld [vmem:[#allocation8 + $0x704] sm:$0xf]
    %v1928 = vld [vmem:[#allocation8 + $0x708] sm:$0xff]
    %v1929 = vld [vmem:[#allocation8 + $0x710] sm:$0xff]
    %v1930 = vld [vmem:[#allocation8 + $0x718] sm:$0xff]
    %v1931 = vld [vmem:[#allocation8 + $0x720] sm:$0xff]
    %v1932 = vld [vmem:[#allocation8 + $0x728] sm:$0xf]
    %v1933 = vld [vmem:[#allocation8 + $0x72c] sm:$0xff]
    %v1934 = vld [vmem:[#allocation8 + $0x734] sm:$0xff]
    %v1935 = vld [vmem:[#allocation8 + $0x73c] sm:$0xff]
    %v1936 = vld [vmem:[#allocation8 + $0x744] sm:$0xff]
    %v1937 = vld [vmem:[#allocation8 + $0x74c] sm:$0xf]
    %v1938 = vld [vmem:[#allocation8 + $0x750] sm:$0xff]
    %v1939 = vld [vmem:[#allocation8 + $0x758] sm:$0xff]
    %v1940 = vld [vmem:[#allocation8 + $0x760] sm:$0xff]
    %v1941 = vld [vmem:[#allocation8 + $0x768] sm:$0xff]
    %v1942 = vld [vmem:[#allocation8 + $0x770] sm:$0xf]
    %v1943 = vld [vmem:[#allocation8 + $0x774] sm:$0xff]
    %v1944 = vld [vmem:[#allocation8 + $0x77c] sm:$0xff]
    %v1945 = vld [vmem:[#allocation8 + $0x784] sm:$0xff]
    %v1946 = vld [vmem:[#allocation8 + $0x78c] sm:$0xff]
    %v1947 = vld [vmem:[#allocation8 + $0x794] sm:$0xf]
    %v1948 = vld [vmem:[#allocation8 + $0x798] sm:$0xff]
    %v1949 = vld [vmem:[#allocation8 + $0x7a0] sm:$0xff]
    %v1950 = vld [vmem:[#allocation8 + $0x7a8] sm:$0xff]
    %v1951 = vld [vmem:[#allocation8 + $0x7b0] sm:$0xff]
    %v1952 = vld [vmem:[#allocation8 + $0x7b8] sm:$0xf]
    %v1953 = vld [vmem:[#allocation8 + $0x7bc] sm:$0xff]
    %v1954 = vld [vmem:[#allocation8 + $0x7c4] sm:$0xff]
    %v1955 = vld [vmem:[#allocation8 + $0x7cc] sm:$0xff]
    %v1956 = vld [vmem:[#allocation8 + $0x7d4] sm:$0xff]
    %v1957 = vld [vmem:[#allocation8 + $0x7dc] sm:$0xf]
    %v1958 = vld [vmem:[#allocation8 + $0x7e0] sm:$0xff]
    %v1959 = vld [vmem:[#allocation8 + $0x7e8] sm:$0xff]
    %v1960 = vld [vmem:[#allocation8 + $0x7f0] sm:$0xff]
    %v1961 = vld [vmem:[#allocation8 + $0x7f8] sm:$0xff]
    %v1962 = vld [vmem:[#allocation8 + $0x800] sm:$0xf]
    %v1963 = vld [vmem:[#allocation8 + $0x804] sm:$0xff]
    %v1964 = vld [vmem:[#allocation8 + $0x80c] sm:$0xff]
    %v1965 = vld [vmem:[#allocation8 + $0x814] sm:$0xff]
    %v1966 = vld [vmem:[#allocation8 + $0x81c] sm:$0xff]
    %v1967 = vld [vmem:[#allocation8 + $0x824] sm:$0xf]
    %v1968 = vld [vmem:[#allocation8 + $0x828] sm:$0xff]
    %v1969 = vld [vmem:[#allocation8 + $0x830] sm:$0xff]
    %v1970 = vld [vmem:[#allocation8 + $0x838] sm:$0xff]
    %v1971 = vld [vmem:[#allocation8 + $0x840] sm:$0xff]
    %v1972 = vld [vmem:[#allocation8 + $0x848] sm:$0xf]
    %v1973 = vld [vmem:[#allocation8 + $0x84c] sm:$0xff]
    %v1974 = vld [vmem:[#allocation8 + $0x854] sm:$0xff]
    %v1975 = vld [vmem:[#allocation8 + $0x85c] sm:$0xff]
    %v1976 = vld [vmem:[#allocation8 + $0x864] sm:$0xff]
    %v1977 = vld [vmem:[#allocation8 + $0x86c] sm:$0xf]
    %v1978 = vld [vmem:[#allocation8 + $0x870] sm:$0xff]
    %v1979 = vld [vmem:[#allocation8 + $0x878] sm:$0xff]
    %v1980 = vld [vmem:[#allocation8 + $0x880] sm:$0xff]
    %v1981 = vld [vmem:[#allocation8 + $0x888] sm:$0xff]
    %v1982 = vld [vmem:[#allocation8 + $0x890] sm:$0xf]
    %v1983 = vld [vmem:[#allocation8 + $0x894] sm:$0xff]
    %v1984 = vld [vmem:[#allocation8 + $0x89c] sm:$0xff]
    %v1985 = vld [vmem:[#allocation8 + $0x8a4] sm:$0xff]
    %v1986 = vld [vmem:[#allocation8 + $0x8ac] sm:$0xff]
    %v1987 = vld [vmem:[#allocation8 + $0x8b4] sm:$0xf]
    %v1988 = vld [vmem:[#allocation8 + $0x8b8] sm:$0xff]
    %v1989 = vld [vmem:[#allocation8 + $0x8c0] sm:$0xff]
    %v1990 = vld [vmem:[#allocation8 + $0x8c8] sm:$0xff]
    %v1991 = vld [vmem:[#allocation8 + $0x8d0] sm:$0xff]
    %v1992 = vld [vmem:[#allocation8 + $0x8d8] sm:$0xf]
    %v1993 = vld [vmem:[#allocation8 + $0x8dc] sm:$0xff]
    %v1994 = vld [vmem:[#allocation8 + $0x8e4] sm:$0xff]
    %v1995 = vld [vmem:[#allocation8 + $0x8ec] sm:$0xff]
    %v1996 = vld [vmem:[#allocation8 + $0x8f4] sm:$0xff]
    %v1997 = vld [vmem:[#allocation8 + $0x8fc] sm:$0xf]
    %v1998 = vld [vmem:[#allocation8 + $0x900] sm:$0xff]
    %v1999 = vld [vmem:[#allocation8 + $0x908] sm:$0xff]
    %v2000 = vld [vmem:[#allocation8 + $0x910] sm:$0xff]
    %v2001 = vld [vmem:[#allocation8 + $0x918] sm:$0xff]
    %v2002 = vld [vmem:[#allocation8 + $0x920] sm:$0xf]
    %v2003 = vld [vmem:[#allocation8 + $0x924] sm:$0xff]
    %v2004 = vld [vmem:[#allocation8 + $0x92c] sm:$0xff]
    %v2005 = vld [vmem:[#allocation8 + $0x934] sm:$0xff]
    %v2006 = vld [vmem:[#allocation8 + $0x93c] sm:$0xff]
    %v2007 = vld [vmem:[#allocation8 + $0x944] sm:$0xf]
    %v2008 = vld [vmem:[#allocation8 + $0x948] sm:$0xff]
    %v2009 = vld [vmem:[#allocation8 + $0x950] sm:$0xff]
    %v2010 = vld [vmem:[#allocation8 + $0x958] sm:$0xff]
    %v2011 = vld [vmem:[#allocation8 + $0x960] sm:$0xff]
    %v2012 = vld [vmem:[#allocation8 + $0x968] sm:$0xf]
    %v2013 = vld [vmem:[#allocation8 + $0x96c] sm:$0xff]
    %v2014 = vld [vmem:[#allocation8 + $0x974] sm:$0xff]
    %v2015 = vld [vmem:[#allocation8 + $0x97c] sm:$0xff]
    %v2016 = vld [vmem:[#allocation8 + $0x984] sm:$0xff]
    %v2017 = vld [vmem:[#allocation8 + $0x98c] sm:$0xf]
    %v2018 = vld [vmem:[#allocation8 + $0x990] sm:$0xff]
    %v2019 = vld [vmem:[#allocation8 + $0x998] sm:$0xff]
    %v2020 = vld [vmem:[#allocation8 + $0x9a0] sm:$0xff]
    %v2021 = vld [vmem:[#allocation8 + $0x9a8] sm:$0xff]
    %v2022 = vld [vmem:[#allocation8 + $0x9b0] sm:$0xf]
    %v2023 = vld [vmem:[#allocation8 + $0x9b4] sm:$0xff]
    %v2024 = vld [vmem:[#allocation8 + $0x9bc] sm:$0xff]
    %v2025 = vld [vmem:[#allocation8 + $0x9c4] sm:$0xff]
    %v2026 = vld [vmem:[#allocation8 + $0x9cc] sm:$0xff]
    %v2027 = vld [vmem:[#allocation8 + $0x9d4] sm:$0xf]
    %v2028 = vld [vmem:[#allocation8 + $0x9d8] sm:$0xff]
    %v2029 = vld [vmem:[#allocation8 + $0x9e0] sm:$0xff]
    %v2030 = vld [vmem:[#allocation8 + $0x9e8] sm:$0xff]
    %v2031 = vld [vmem:[#allocation8 + $0x9f0] sm:$0xff]
    %v2032 = vld [vmem:[#allocation8 + $0x9f8] sm:$0xf]
    %v2033 = vld [vmem:[#allocation8 + $0x9fc] sm:$0xff]
    %v2034 = vld [vmem:[#allocation8 + $0xa04] sm:$0xff]
    %v2035 = vld [vmem:[#allocation8 + $0xa0c] sm:$0xff]
    %v2036 = vld [vmem:[#allocation8 + $0xa14] sm:$0xff]
    %v2037 = vld [vmem:[#allocation8 + $0xa1c] sm:$0xf]
    %v2038 = vld [vmem:[#allocation8 + $0xa20] sm:$0xff]
    %v2039 = vld [vmem:[#allocation8 + $0xa28] sm:$0xff]
    %v2040 = vld [vmem:[#allocation8 + $0xa30] sm:$0xff]
    %v2041 = vld [vmem:[#allocation8 + $0xa38] sm:$0xff]
    %v2042 = vld [vmem:[#allocation8 + $0xa40] sm:$0xf]
    %v2043 = vld [vmem:[#allocation8 + $0xa44] sm:$0xff]
    %v2044 = vld [vmem:[#allocation8 + $0xa4c] sm:$0xff]
    %v2045 = vld [vmem:[#allocation8 + $0xa54] sm:$0xff]
    %v2046 = vld [vmem:[#allocation8 + $0xa5c] sm:$0xff]
    %v2047 = vld [vmem:[#allocation8 + $0xa64] sm:$0xf]
    %v2048 = vld [vmem:[#allocation8 + $0xa68] sm:$0xff]
    %v2049 = vld [vmem:[#allocation8 + $0xa70] sm:$0xff]
    %v2050 = vld [vmem:[#allocation8 + $0xa78] sm:$0xff]
    %v2051 = vld [vmem:[#allocation8 + $0xa80] sm:$0xff]
    %v2052 = vld [vmem:[#allocation8 + $0xa88] sm:$0xf]
    %v2053 = vld [vmem:[#allocation8 + $0xa8c] sm:$0xff]
    %v2054 = vld [vmem:[#allocation8 + $0xa94] sm:$0xff]
    %v2055 = vld [vmem:[#allocation8 + $0xa9c] sm:$0xff]
    %v2056 = vld [vmem:[#allocation8 + $0xaa4] sm:$0xff]
    %v2057 = vld [vmem:[#allocation8 + $0xaac] sm:$0xf]
    %v2058 = vld [vmem:[#allocation8 + $0xab0] sm:$0xff]
    %v2059 = vld [vmem:[#allocation8 + $0xab8] sm:$0xff]
    %v2060 = vld [vmem:[#allocation8 + $0xac0] sm:$0xff]
    %v2061 = vld [vmem:[#allocation8 + $0xac8] sm:$0xff]
    %v2062 = vld [vmem:[#allocation8 + $0xad0] sm:$0xf]
    %v2063 = vld [vmem:[#allocation8 + $0xad4] sm:$0xff]
    %v2064 = vld [vmem:[#allocation8 + $0xadc] sm:$0xff]
    %v2065 = vld [vmem:[#allocation8 + $0xae4] sm:$0xff]
    %v2066 = vld [vmem:[#allocation8 + $0xaec] sm:$0xff]
    %v2067 = vld [vmem:[#allocation8 + $0xaf4] sm:$0xf]
    %v2068 = vld [vmem:[#allocation8 + $0xaf8] sm:$0xff]
    %v2069 = vld [vmem:[#allocation8 + $0xb00] sm:$0xff]
    %v2070 = vld [vmem:[#allocation8 + $0xb08] sm:$0xff]
    %v2071 = vld [vmem:[#allocation8 + $0xb10] sm:$0xff]
    %v2072 = vld [vmem:[#allocation8 + $0xb18] sm:$0xf]
    %v2073 = vld [vmem:[#allocation8 + $0xb1c] sm:$0xff]
    %v2074 = vld [vmem:[#allocation8 + $0xb24] sm:$0xff]
    %v2075 = vld [vmem:[#allocation8 + $0xb2c] sm:$0xff]
    %v2076 = vld [vmem:[#allocation8 + $0xb34] sm:$0xff]
    %v2077 = vld [vmem:[#allocation8 + $0xb3c] sm:$0xf]
    %v2078 = vld [vmem:[#allocation10] sm:$0xff]
    %v2079 = vld [vmem:[#allocation10 + $0x8] sm:$0x1]
    %v2082 = vlaneseq
    %v2083 = vshrl.u32 %v2082, 7
    %v2084 = vsub.s32 0, %v2083
    %v2085 = vrot.slane %v2078, %v2084
    %v2086 = vlaneseq
    %v2087 = vshrl.u32 %v2086, 7
    %v2088 = vsub.s32 1, %v2087
    %v2089 = vrot.slane %v2078, %v2088
    %v2090 = vlaneseq
    %v2091 = vshrl.u32 %v2090, 7
    %v2092 = vsub.s32 2, %v2091
    %v2093 = vrot.slane %v2078, %v2092
    %v2094 = vlaneseq
    %v2095 = vshrl.u32 %v2094, 7
    %v2096 = vsub.s32 3, %v2095
    %v2097 = vrot.slane %v2078, %v2096
    %v2098 = vlaneseq
    %v2099 = vshrl.u32 %v2098, 7
    %v2100 = vsub.s32 4, %v2099
    %v2101 = vrot.slane %v2078, %v2100
    %v2102 = vlaneseq
    %v2103 = vshrl.u32 %v2102, 7
    %v2104 = vsub.s32 5, %v2103
    %v2105 = vrot.slane %v2078, %v2104
    %v2106 = vlaneseq
    %v2107 = vshrl.u32 %v2106, 7
    %v2108 = vsub.s32 6, %v2107
    %v2109 = vrot.slane %v2078, %v2108
    %v2110 = vlaneseq
    %v2111 = vshrl.u32 %v2110, 7
    %v2112 = vsub.s32 7, %v2111
    %v2113 = vrot.slane %v2078, %v2112
    %v2114 = vlaneseq
    %v2115 = vshrl.u32 %v2114, 7
    %v2116 = vsub.s32 0, %v2115
    %v2117 = vrot.slane %v2079, %v2116
    %v2527 = vunpack.c.l.b16 %v1678
    %v2528 = vunpack.c.h.b16 %v1678
    %v2529 = vunpack.c.l.b16 %v1679
    %v2530 = vunpack.c.h.b16 %v1679
    %v2531 = vunpack.c.l.b16 %v1680
    %v2532 = vunpack.c.h.b16 %v1680
    %v2533 = vunpack.c.l.b16 %v1681
    %v2534 = vunpack.c.h.b16 %v1681
    %v2535 = vunpack.c.l.b16 %v1682
    %v2536 = vunpack.c.l.b16 %v1683
    %v2537 = vunpack.c.h.b16 %v1683
    %v2538 = vunpack.c.l.b16 %v1684
    %v2539 = vunpack.c.h.b16 %v1684
    %v2540 = vunpack.c.l.b16 %v1685
    %v2541 = vunpack.c.h.b16 %v1685
    %v2542 = vunpack.c.l.b16 %v1686
    %v2543 = vunpack.c.h.b16 %v1686
    %v2544 = vunpack.c.l.b16 %v1687
    %v2545 = vunpack.c.l.b16 %v1688
    %v2546 = vunpack.c.h.b16 %v1688
    %v2547 = vunpack.c.l.b16 %v1689
    %v2548 = vunpack.c.h.b16 %v1689
    %v2549 = vunpack.c.l.b16 %v1690
    %v2550 = vunpack.c.h.b16 %v1690
    %v2551 = vunpack.c.l.b16 %v1691
    %v2552 = vunpack.c.h.b16 %v1691
    %v2553 = vunpack.c.l.b16 %v1692
    %v2554 = vunpack.c.l.b16 %v1693
    %v2555 = vunpack.c.h.b16 %v1693
    %v2556 = vunpack.c.l.b16 %v1694
    %v2557 = vunpack.c.h.b16 %v1694
    %v2558 = vunpack.c.l.b16 %v1695
    %v2559 = vunpack.c.h.b16 %v1695
    %v2560 = vunpack.c.l.b16 %v1696
    %v2561 = vunpack.c.h.b16 %v1696
    %v2562 = vunpack.c.l.b16 %v1697
    %v2563 = vunpack.c.l.b16 %v1698
    %v2564 = vunpack.c.h.b16 %v1698
    %v2565 = vunpack.c.l.b16 %v1699
    %v2566 = vunpack.c.h.b16 %v1699
    %v2567 = vunpack.c.l.b16 %v1700
    %v2568 = vunpack.c.h.b16 %v1700
    %v2569 = vunpack.c.l.b16 %v1701
    %v2570 = vunpack.c.h.b16 %v1701
    %v2571 = vunpack.c.l.b16 %v1702
    %v2572 = vunpack.c.l.b16 %v1703
    %v2573 = vunpack.c.h.b16 %v1703
    %v2574 = vunpack.c.l.b16 %v1704
    %v2575 = vunpack.c.h.b16 %v1704
    %v2576 = vunpack.c.l.b16 %v1705
    %v2577 = vunpack.c.h.b16 %v1705
    %v2578 = vunpack.c.l.b16 %v1706
    %v2579 = vunpack.c.h.b16 %v1706
    %v2580 = vunpack.c.l.b16 %v1707
    %v2581 = vunpack.c.l.b16 %v1708
    %v2582 = vunpack.c.h.b16 %v1708
    %v2583 = vunpack.c.l.b16 %v1709
    %v2584 = vunpack.c.h.b16 %v1709
    %v2585 = vunpack.c.l.b16 %v1710
    %v2586 = vunpack.c.h.b16 %v1710
    %v2587 = vunpack.c.l.b16 %v1711
    %v2588 = vunpack.c.h.b16 %v1711
    %v2589 = vunpack.c.l.b16 %v1712
    %v2590 = vunpack.c.l.b16 %v1713
    %v2591 = vunpack.c.h.b16 %v1713
    %v2592 = vunpack.c.l.b16 %v1714
    %v2593 = vunpack.c.h.b16 %v1714
    %v2594 = vunpack.c.l.b16 %v1715
    %v2595 = vunpack.c.h.b16 %v1715
    %v2596 = vunpack.c.l.b16 %v1716
    %v2597 = vunpack.c.h.b16 %v1716
    %v2598 = vunpack.c.l.b16 %v1717
    %v2599 = vunpack.c.l.b16 %v1718
    %v2600 = vunpack.c.h.b16 %v1718
    %v2601 = vunpack.c.l.b16 %v1719
    %v2602 = vunpack.c.h.b16 %v1719
    %v2603 = vunpack.c.l.b16 %v1720
    %v2604 = vunpack.c.h.b16 %v1720
    %v2605 = vunpack.c.l.b16 %v1721
    %v2606 = vunpack.c.h.b16 %v1721
    %v2607 = vunpack.c.l.b16 %v1722
    %v2608 = vunpack.c.l.b16 %v1723
    %v2609 = vunpack.c.h.b16 %v1723
    %v2610 = vunpack.c.l.b16 %v1724
    %v2611 = vunpack.c.h.b16 %v1724
    %v2612 = vunpack.c.l.b16 %v1725
    %v2613 = vunpack.c.h.b16 %v1725
    %v2614 = vunpack.c.l.b16 %v1726
    %v2615 = vunpack.c.h.b16 %v1726
    %v2616 = vunpack.c.l.b16 %v1727
    %v2617 = vunpack.c.l.b16 %v1728
    %v2618 = vunpack.c.h.b16 %v1728
    %v2619 = vunpack.c.l.b16 %v1729
    %v2620 = vunpack.c.h.b16 %v1729
    %v2621 = vunpack.c.l.b16 %v1730
    %v2622 = vunpack.c.h.b16 %v1730
    %v2623 = vunpack.c.l.b16 %v1731
    %v2624 = vunpack.c.h.b16 %v1731
    %v2625 = vunpack.c.l.b16 %v1732
    %v2626 = vunpack.c.l.b16 %v1733
    %v2627 = vunpack.c.h.b16 %v1733
    %v2628 = vunpack.c.l.b16 %v1734
    %v2629 = vunpack.c.h.b16 %v1734
    %v2630 = vunpack.c.l.b16 %v1735
    %v2631 = vunpack.c.h.b16 %v1735
    %v2632 = vunpack.c.l.b16 %v1736
    %v2633 = vunpack.c.h.b16 %v1736
    %v2634 = vunpack.c.l.b16 %v1737
    %v2635 = vunpack.c.l.b16 %v1738
    %v2636 = vunpack.c.h.b16 %v1738
    %v2637 = vunpack.c.l.b16 %v1739
    %v2638 = vunpack.c.h.b16 %v1739
    %v2639 = vunpack.c.l.b16 %v1740
    %v2640 = vunpack.c.h.b16 %v1740
    %v2641 = vunpack.c.l.b16 %v1741
    %v2642 = vunpack.c.h.b16 %v1741
    %v2643 = vunpack.c.l.b16 %v1742
    %v2644 = vunpack.c.l.b16 %v1743
    %v2645 = vunpack.c.h.b16 %v1743
    %v2646 = vunpack.c.l.b16 %v1744
    %v2647 = vunpack.c.h.b16 %v1744
    %v2648 = vunpack.c.l.b16 %v1745
    %v2649 = vunpack.c.h.b16 %v1745
    %v2650 = vunpack.c.l.b16 %v1746
    %v2651 = vunpack.c.h.b16 %v1746
    %v2652 = vunpack.c.l.b16 %v1747
    %v2653 = vunpack.c.l.b16 %v1748
    %v2654 = vunpack.c.h.b16 %v1748
    %v2655 = vunpack.c.l.b16 %v1749
    %v2656 = vunpack.c.h.b16 %v1749
    %v2657 = vunpack.c.l.b16 %v1750
    %v2658 = vunpack.c.h.b16 %v1750
    %v2659 = vunpack.c.l.b16 %v1751
    %v2660 = vunpack.c.h.b16 %v1751
    %v2661 = vunpack.c.l.b16 %v1752
    %v2662 = vunpack.c.l.b16 %v1753
    %v2663 = vunpack.c.h.b16 %v1753
    %v2664 = vunpack.c.l.b16 %v1754
    %v2665 = vunpack.c.h.b16 %v1754
    %v2666 = vunpack.c.l.b16 %v1755
    %v2667 = vunpack.c.h.b16 %v1755
    %v2668 = vunpack.c.l.b16 %v1756
    %v2669 = vunpack.c.h.b16 %v1756
    %v2670 = vunpack.c.l.b16 %v1757
    %v2671 = vunpack.c.l.b16 %v1758
    %v2672 = vunpack.c.h.b16 %v1758
    %v2673 = vunpack.c.l.b16 %v1759
    %v2674 = vunpack.c.h.b16 %v1759
    %v2675 = vunpack.c.l.b16 %v1760
    %v2676 = vunpack.c.h.b16 %v1760
    %v2677 = vunpack.c.l.b16 %v1761
    %v2678 = vunpack.c.h.b16 %v1761
    %v2679 = vunpack.c.l.b16 %v1762
    %v2680 = vunpack.c.l.b16 %v1763
    %v2681 = vunpack.c.h.b16 %v1763
    %v2682 = vunpack.c.l.b16 %v1764
    %v2683 = vunpack.c.h.b16 %v1764
    %v2684 = vunpack.c.l.b16 %v1765
    %v2685 = vunpack.c.h.b16 %v1765
    %v2686 = vunpack.c.l.b16 %v1766
    %v2687 = vunpack.c.h.b16 %v1766
    %v2688 = vunpack.c.l.b16 %v1767
    %v2689 = vunpack.c.l.b16 %v1768
    %v2690 = vunpack.c.h.b16 %v1768
    %v2691 = vunpack.c.l.b16 %v1769
    %v2692 = vunpack.c.h.b16 %v1769
    %v2693 = vunpack.c.l.b16 %v1770
    %v2694 = vunpack.c.h.b16 %v1770
    %v2695 = vunpack.c.l.b16 %v1771
    %v2696 = vunpack.c.h.b16 %v1771
    %v2697 = vunpack.c.l.b16 %v1772
    %v2698 = vunpack.c.l.b16 %v1773
    %v2699 = vunpack.c.h.b16 %v1773
    %v2700 = vunpack.c.l.b16 %v1774
    %v2701 = vunpack.c.h.b16 %v1774
    %v2702 = vunpack.c.l.b16 %v1775
    %v2703 = vunpack.c.h.b16 %v1775
    %v2704 = vunpack.c.l.b16 %v1776
    %v2705 = vunpack.c.h.b16 %v1776
    %v2706 = vunpack.c.l.b16 %v1777
    %v2707 = vunpack.c.l.b16 %v1778
    %v2708 = vunpack.c.h.b16 %v1778
    %v2709 = vunpack.c.l.b16 %v1779
    %v2710 = vunpack.c.h.b16 %v1779
    %v2711 = vunpack.c.l.b16 %v1780
    %v2712 = vunpack.c.h.b16 %v1780
    %v2713 = vunpack.c.l.b16 %v1781
    %v2714 = vunpack.c.h.b16 %v1781
    %v2715 = vunpack.c.l.b16 %v1782
    %v2716 = vunpack.c.l.b16 %v1783
    %v2717 = vunpack.c.h.b16 %v1783
    %v2718 = vunpack.c.l.b16 %v1784
    %v2719 = vunpack.c.h.b16 %v1784
    %v2720 = vunpack.c.l.b16 %v1785
    %v2721 = vunpack.c.h.b16 %v1785
    %v2722 = vunpack.c.l.b16 %v1786
    %v2723 = vunpack.c.h.b16 %v1786
    %v2724 = vunpack.c.l.b16 %v1787
    %v2725 = vunpack.c.l.b16 %v1788
    %v2726 = vunpack.c.h.b16 %v1788
    %v2727 = vunpack.c.l.b16 %v1789
    %v2728 = vunpack.c.h.b16 %v1789
    %v2729 = vunpack.c.l.b16 %v1790
    %v2730 = vunpack.c.h.b16 %v1790
    %v2731 = vunpack.c.l.b16 %v1791
    %v2732 = vunpack.c.h.b16 %v1791
    %v2733 = vunpack.c.l.b16 %v1792
    %v2734 = vunpack.c.l.b16 %v1793
    %v2735 = vunpack.c.h.b16 %v1793
    %v2736 = vunpack.c.l.b16 %v1794
    %v2737 = vunpack.c.h.b16 %v1794
    %v2738 = vunpack.c.l.b16 %v1795
    %v2739 = vunpack.c.h.b16 %v1795
    %v2740 = vunpack.c.l.b16 %v1796
    %v2741 = vunpack.c.h.b16 %v1796
    %v2742 = vunpack.c.l.b16 %v1797
    %v2743 = vunpack.c.l.b16 %v1798
    %v2744 = vunpack.c.h.b16 %v1798
    %v2745 = vunpack.c.l.b16 %v1799
    %v2746 = vunpack.c.h.b16 %v1799
    %v2747 = vunpack.c.l.b16 %v1800
    %v2748 = vunpack.c.h.b16 %v1800
    %v2749 = vunpack.c.l.b16 %v1801
    %v2750 = vunpack.c.h.b16 %v1801
    %v2751 = vunpack.c.l.b16 %v1802
    %v2752 = vunpack.c.l.b16 %v1803
    %v2753 = vunpack.c.h.b16 %v1803
    %v2754 = vunpack.c.l.b16 %v1804
    %v2755 = vunpack.c.h.b16 %v1804
    %v2756 = vunpack.c.l.b16 %v1805
    %v2757 = vunpack.c.h.b16 %v1805
    %v2758 = vunpack.c.l.b16 %v1806
    %v2759 = vunpack.c.h.b16 %v1806
    %v2760 = vunpack.c.l.b16 %v1807
    %v2761 = vunpack.c.l.b16 %v1808
    %v2762 = vunpack.c.h.b16 %v1808
    %v2763 = vunpack.c.l.b16 %v1809
    %v2764 = vunpack.c.h.b16 %v1809
    %v2765 = vunpack.c.l.b16 %v1810
    %v2766 = vunpack.c.h.b16 %v1810
    %v2767 = vunpack.c.l.b16 %v1811
    %v2768 = vunpack.c.h.b16 %v1811
    %v2769 = vunpack.c.l.b16 %v1812
    %v2770 = vunpack.c.l.b16 %v1813
    %v2771 = vunpack.c.h.b16 %v1813
    %v2772 = vunpack.c.l.b16 %v1814
    %v2773 = vunpack.c.h.b16 %v1814
    %v2774 = vunpack.c.l.b16 %v1815
    %v2775 = vunpack.c.h.b16 %v1815
    %v2776 = vunpack.c.l.b16 %v1816
    %v2777 = vunpack.c.h.b16 %v1816
    %v2778 = vunpack.c.l.b16 %v1817
    %v2779 = vunpack.c.l.b16 %v1818
    %v2780 = vunpack.c.h.b16 %v1818
    %v2781 = vunpack.c.l.b16 %v1819
    %v2782 = vunpack.c.h.b16 %v1819
    %v2783 = vunpack.c.l.b16 %v1820
    %v2784 = vunpack.c.h.b16 %v1820
    %v2785 = vunpack.c.l.b16 %v1821
    %v2786 = vunpack.c.h.b16 %v1821
    %v2787 = vunpack.c.l.b16 %v1822
    %v2788 = vunpack.c.l.b16 %v1823
    %v2789 = vunpack.c.h.b16 %v1823
    %v2790 = vunpack.c.l.b16 %v1824
    %v2791 = vunpack.c.h.b16 %v1824
    %v2792 = vunpack.c.l.b16 %v1825
    %v2793 = vunpack.c.h.b16 %v1825
    %v2794 = vunpack.c.l.b16 %v1826
    %v2795 = vunpack.c.h.b16 %v1826
    %v2796 = vunpack.c.l.b16 %v1827
    %v2797 = vunpack.c.l.b16 %v1828
    %v2798 = vunpack.c.h.b16 %v1828
    %v2799 = vunpack.c.l.b16 %v1829
    %v2800 = vunpack.c.h.b16 %v1829
    %v2801 = vunpack.c.l.b16 %v1830
    %v2802 = vunpack.c.h.b16 %v1830
    %v2803 = vunpack.c.l.b16 %v1831
    %v2804 = vunpack.c.h.b16 %v1831
    %v2805 = vunpack.c.l.b16 %v1832
    %v2806 = vunpack.c.l.b16 %v1833
    %v2807 = vunpack.c.h.b16 %v1833
    %v2808 = vunpack.c.l.b16 %v1834
    %v2809 = vunpack.c.h.b16 %v1834
    %v2810 = vunpack.c.l.b16 %v1835
    %v2811 = vunpack.c.h.b16 %v1835
    %v2812 = vunpack.c.l.b16 %v1836
    %v2813 = vunpack.c.h.b16 %v1836
    %v2814 = vunpack.c.l.b16 %v1837
    %v2815 = vunpack.c.l.b16 %v1838
    %v2816 = vunpack.c.h.b16 %v1838
    %v2817 = vunpack.c.l.b16 %v1839
    %v2818 = vunpack.c.h.b16 %v1839
    %v2819 = vunpack.c.l.b16 %v1840
    %v2820 = vunpack.c.h.b16 %v1840
    %v2821 = vunpack.c.l.b16 %v1841
    %v2822 = vunpack.c.h.b16 %v1841
    %v2823 = vunpack.c.l.b16 %v1842
    %v2824 = vunpack.c.l.b16 %v1843
    %v2825 = vunpack.c.h.b16 %v1843
    %v2826 = vunpack.c.l.b16 %v1844
    %v2827 = vunpack.c.h.b16 %v1844
    %v2828 = vunpack.c.l.b16 %v1845
    %v2829 = vunpack.c.h.b16 %v1845
    %v2830 = vunpack.c.l.b16 %v1846
    %v2831 = vunpack.c.h.b16 %v1846
    %v2832 = vunpack.c.l.b16 %v1847
    %v2833 = vunpack.c.l.b16 %v1848
    %v2834 = vunpack.c.h.b16 %v1848
    %v2835 = vunpack.c.l.b16 %v1849
    %v2836 = vunpack.c.h.b16 %v1849
    %v2837 = vunpack.c.l.b16 %v1850
    %v2838 = vunpack.c.h.b16 %v1850
    %v2839 = vunpack.c.l.b16 %v1851
    %v2840 = vunpack.c.h.b16 %v1851
    %v2841 = vunpack.c.l.b16 %v1852
    %v2842 = vunpack.c.l.b16 %v1853
    %v2843 = vunpack.c.h.b16 %v1853
    %v2844 = vunpack.c.l.b16 %v1854
    %v2845 = vunpack.c.h.b16 %v1854
    %v2846 = vunpack.c.l.b16 %v1855
    %v2847 = vunpack.c.h.b16 %v1855
    %v2848 = vunpack.c.l.b16 %v1856
    %v2849 = vunpack.c.h.b16 %v1856
    %v2850 = vunpack.c.l.b16 %v1857
    %v2851 = vunpack.c.l.b16 %v1858
    %v2852 = vunpack.c.h.b16 %v1858
    %v2853 = vunpack.c.l.b16 %v1859
    %v2854 = vunpack.c.h.b16 %v1859
    %v2855 = vunpack.c.l.b16 %v1860
    %v2856 = vunpack.c.h.b16 %v1860
    %v2857 = vunpack.c.l.b16 %v1861
    %v2858 = vunpack.c.h.b16 %v1861
    %v2859 = vunpack.c.l.b16 %v1862
    %v2860 = vunpack.c.l.b16 %v1863
    %v2861 = vunpack.c.h.b16 %v1863
    %v2862 = vunpack.c.l.b16 %v1864
    %v2863 = vunpack.c.h.b16 %v1864
    %v2864 = vunpack.c.l.b16 %v1865
    %v2865 = vunpack.c.h.b16 %v1865
    %v2866 = vunpack.c.l.b16 %v1866
    %v2867 = vunpack.c.h.b16 %v1866
    %v2868 = vunpack.c.l.b16 %v1867
    %v2869 = vunpack.c.l.b16 %v1868
    %v2870 = vunpack.c.h.b16 %v1868
    %v2871 = vunpack.c.l.b16 %v1869
    %v2872 = vunpack.c.h.b16 %v1869
    %v2873 = vunpack.c.l.b16 %v1870
    %v2874 = vunpack.c.h.b16 %v1870
    %v2875 = vunpack.c.l.b16 %v1871
    %v2876 = vunpack.c.h.b16 %v1871
    %v2877 = vunpack.c.l.b16 %v1872
    %v2878 = vunpack.c.l.b16 %v1873
    %v2879 = vunpack.c.h.b16 %v1873
    %v2880 = vunpack.c.l.b16 %v1874
    %v2881 = vunpack.c.h.b16 %v1874
    %v2882 = vunpack.c.l.b16 %v1875
    %v2883 = vunpack.c.h.b16 %v1875
    %v2884 = vunpack.c.l.b16 %v1876
    %v2885 = vunpack.c.h.b16 %v1876
    %v2886 = vunpack.c.l.b16 %v1877
    %v2887 = vunpack.c.l.b16 %v1878
    %v2888 = vunpack.c.h.b16 %v1878
    %v2889 = vunpack.c.l.b16 %v1879
    %v2890 = vunpack.c.h.b16 %v1879
    %v2891 = vunpack.c.l.b16 %v1880
    %v2892 = vunpack.c.h.b16 %v1880
    %v2893 = vunpack.c.l.b16 %v1881
    %v2894 = vunpack.c.h.b16 %v1881
    %v2895 = vunpack.c.l.b16 %v1882
    %v2896 = vunpack.c.l.b16 %v1883
    %v2897 = vunpack.c.h.b16 %v1883
    %v2898 = vunpack.c.l.b16 %v1884
    %v2899 = vunpack.c.h.b16 %v1884
    %v2900 = vunpack.c.l.b16 %v1885
    %v2901 = vunpack.c.h.b16 %v1885
    %v2902 = vunpack.c.l.b16 %v1886
    %v2903 = vunpack.c.h.b16 %v1886
    %v2904 = vunpack.c.l.b16 %v1887
    %v2905 = vunpack.c.l.b16 %v1888
    %v2906 = vunpack.c.h.b16 %v1888
    %v2907 = vunpack.c.l.b16 %v1889
    %v2908 = vunpack.c.h.b16 %v1889
    %v2909 = vunpack.c.l.b16 %v1890
    %v2910 = vunpack.c.h.b16 %v1890
    %v2911 = vunpack.c.l.b16 %v1891
    %v2912 = vunpack.c.h.b16 %v1891
    %v2913 = vunpack.c.l.b16 %v1892
    %v2914 = vunpack.c.l.b16 %v1893
    %v2915 = vunpack.c.h.b16 %v1893
    %v2916 = vunpack.c.l.b16 %v1894
    %v2917 = vunpack.c.h.b16 %v1894
    %v2918 = vunpack.c.l.b16 %v1895
    %v2919 = vunpack.c.h.b16 %v1895
    %v2920 = vunpack.c.l.b16 %v1896
    %v2921 = vunpack.c.h.b16 %v1896
    %v2922 = vunpack.c.l.b16 %v1897
    %v2923 = vunpack.c.l.b16 %v1898
    %v2924 = vunpack.c.h.b16 %v1898
    %v2925 = vunpack.c.l.b16 %v1899
    %v2926 = vunpack.c.h.b16 %v1899
    %v2927 = vunpack.c.l.b16 %v1900
    %v2928 = vunpack.c.h.b16 %v1900
    %v2929 = vunpack.c.l.b16 %v1901
    %v2930 = vunpack.c.h.b16 %v1901
    %v2931 = vunpack.c.l.b16 %v1902
    %v2932 = vunpack.c.l.b16 %v1903
    %v2933 = vunpack.c.h.b16 %v1903
    %v2934 = vunpack.c.l.b16 %v1904
    %v2935 = vunpack.c.h.b16 %v1904
    %v2936 = vunpack.c.l.b16 %v1905
    %v2937 = vunpack.c.h.b16 %v1905
    %v2938 = vunpack.c.l.b16 %v1906
    %v2939 = vunpack.c.h.b16 %v1906
    %v2940 = vunpack.c.l.b16 %v1907
    %v2941 = vunpack.c.l.b16 %v1908
    %v2942 = vunpack.c.h.b16 %v1908
    %v2943 = vunpack.c.l.b16 %v1909
    %v2944 = vunpack.c.h.b16 %v1909
    %v2945 = vunpack.c.l.b16 %v1910
    %v2946 = vunpack.c.h.b16 %v1910
    %v2947 = vunpack.c.l.b16 %v1911
    %v2948 = vunpack.c.h.b16 %v1911
    %v2949 = vunpack.c.l.b16 %v1912
    %v2950 = vunpack.c.l.b16 %v1913
    %v2951 = vunpack.c.h.b16 %v1913
    %v2952 = vunpack.c.l.b16 %v1914
    %v2953 = vunpack.c.h.b16 %v1914
    %v2954 = vunpack.c.l.b16 %v1915
    %v2955 = vunpack.c.h.b16 %v1915
    %v2956 = vunpack.c.l.b16 %v1916
    %v2957 = vunpack.c.h.b16 %v1916
    %v2958 = vunpack.c.l.b16 %v1917
    %v2959 = vunpack.c.l.b16 %v1918
    %v2960 = vunpack.c.h.b16 %v1918
    %v2961 = vunpack.c.l.b16 %v1919
    %v2962 = vunpack.c.h.b16 %v1919
    %v2963 = vunpack.c.l.b16 %v1920
    %v2964 = vunpack.c.h.b16 %v1920
    %v2965 = vunpack.c.l.b16 %v1921
    %v2966 = vunpack.c.h.b16 %v1921
    %v2967 = vunpack.c.l.b16 %v1922
    %v2968 = vunpack.c.l.b16 %v1923
    %v2969 = vunpack.c.h.b16 %v1923
    %v2970 = vunpack.c.l.b16 %v1924
    %v2971 = vunpack.c.h.b16 %v1924
    %v2972 = vunpack.c.l.b16 %v1925
    %v2973 = vunpack.c.h.b16 %v1925
    %v2974 = vunpack.c.l.b16 %v1926
    %v2975 = vunpack.c.h.b16 %v1926
    %v2976 = vunpack.c.l.b16 %v1927
    %v2977 = vunpack.c.l.b16 %v1928
    %v2978 = vunpack.c.h.b16 %v1928
    %v2979 = vunpack.c.l.b16 %v1929
    %v2980 = vunpack.c.h.b16 %v1929
    %v2981 = vunpack.c.l.b16 %v1930
    %v2982 = vunpack.c.h.b16 %v1930
    %v2983 = vunpack.c.l.b16 %v1931
    %v2984 = vunpack.c.h.b16 %v1931
    %v2985 = vunpack.c.l.b16 %v1932
    %v2986 = vunpack.c.l.b16 %v1933
    %v2987 = vunpack.c.h.b16 %v1933
    %v2988 = vunpack.c.l.b16 %v1934
    %v2989 = vunpack.c.h.b16 %v1934
    %v2990 = vunpack.c.l.b16 %v1935
    %v2991 = vunpack.c.h.b16 %v1935
    %v2992 = vunpack.c.l.b16 %v1936
    %v2993 = vunpack.c.h.b16 %v1936
    %v2994 = vunpack.c.l.b16 %v1937
    %v2995 = vunpack.c.l.b16 %v1938
    %v2996 = vunpack.c.h.b16 %v1938
    %v2997 = vunpack.c.l.b16 %v1939
    %v2998 = vunpack.c.h.b16 %v1939
    %v2999 = vunpack.c.l.b16 %v1940
    %v3000 = vunpack.c.h.b16 %v1940
    %v3001 = vunpack.c.l.b16 %v1941
    %v3002 = vunpack.c.h.b16 %v1941
    %v3003 = vunpack.c.l.b16 %v1942
    %v3004 = vunpack.c.l.b16 %v1943
    %v3005 = vunpack.c.h.b16 %v1943
    %v3006 = vunpack.c.l.b16 %v1944
    %v3007 = vunpack.c.h.b16 %v1944
    %v3008 = vunpack.c.l.b16 %v1945
    %v3009 = vunpack.c.h.b16 %v1945
    %v3010 = vunpack.c.l.b16 %v1946
    %v3011 = vunpack.c.h.b16 %v1946
    %v3012 = vunpack.c.l.b16 %v1947
    %v3013 = vunpack.c.l.b16 %v1948
    %v3014 = vunpack.c.h.b16 %v1948
    %v3015 = vunpack.c.l.b16 %v1949
    %v3016 = vunpack.c.h.b16 %v1949
    %v3017 = vunpack.c.l.b16 %v1950
    %v3018 = vunpack.c.h.b16 %v1950
    %v3019 = vunpack.c.l.b16 %v1951
    %v3020 = vunpack.c.h.b16 %v1951
    %v3021 = vunpack.c.l.b16 %v1952
    %v3022 = vunpack.c.l.b16 %v1953
    %v3023 = vunpack.c.h.b16 %v1953
    %v3024 = vunpack.c.l.b16 %v1954
    %v3025 = vunpack.c.h.b16 %v1954
    %v3026 = vunpack.c.l.b16 %v1955
    %v3027 = vunpack.c.h.b16 %v1955
    %v3028 = vunpack.c.l.b16 %v1956
    %v3029 = vunpack.c.h.b16 %v1956
    %v3030 = vunpack.c.l.b16 %v1957
    %v3031 = vunpack.c.l.b16 %v1958
    %v3032 = vunpack.c.h.b16 %v1958
    %v3033 = vunpack.c.l.b16 %v1959
    %v3034 = vunpack.c.h.b16 %v1959
    %v3035 = vunpack.c.l.b16 %v1960
    %v3036 = vunpack.c.h.b16 %v1960
    %v3037 = vunpack.c.l.b16 %v1961
    %v3038 = vunpack.c.h.b16 %v1961
    %v3039 = vunpack.c.l.b16 %v1962
    %v3040 = vunpack.c.l.b16 %v1963
    %v3041 = vunpack.c.h.b16 %v1963
    %v3042 = vunpack.c.l.b16 %v1964
    %v3043 = vunpack.c.h.b16 %v1964
    %v3044 = vunpack.c.l.b16 %v1965
    %v3045 = vunpack.c.h.b16 %v1965
    %v3046 = vunpack.c.l.b16 %v1966
    %v3047 = vunpack.c.h.b16 %v1966
    %v3048 = vunpack.c.l.b16 %v1967
    %v3049 = vunpack.c.l.b16 %v1968
    %v3050 = vunpack.c.h.b16 %v1968
    %v3051 = vunpack.c.l.b16 %v1969
    %v3052 = vunpack.c.h.b16 %v1969
    %v3053 = vunpack.c.l.b16 %v1970
    %v3054 = vunpack.c.h.b16 %v1970
    %v3055 = vunpack.c.l.b16 %v1971
    %v3056 = vunpack.c.h.b16 %v1971
    %v3057 = vunpack.c.l.b16 %v1972
    %v3058 = vunpack.c.l.b16 %v1973
    %v3059 = vunpack.c.h.b16 %v1973
    %v3060 = vunpack.c.l.b16 %v1974
    %v3061 = vunpack.c.h.b16 %v1974
    %v3062 = vunpack.c.l.b16 %v1975
    %v3063 = vunpack.c.h.b16 %v1975
    %v3064 = vunpack.c.l.b16 %v1976
    %v3065 = vunpack.c.h.b16 %v1976
    %v3066 = vunpack.c.l.b16 %v1977
    %v3067 = vunpack.c.l.b16 %v1978
    %v3068 = vunpack.c.h.b16 %v1978
    %v3069 = vunpack.c.l.b16 %v1979
    %v3070 = vunpack.c.h.b16 %v1979
    %v3071 = vunpack.c.l.b16 %v1980
    %v3072 = vunpack.c.h.b16 %v1980
    %v3073 = vunpack.c.l.b16 %v1981
    %v3074 = vunpack.c.h.b16 %v1981
    %v3075 = vunpack.c.l.b16 %v1982
    %v3076 = vunpack.c.l.b16 %v1983
    %v3077 = vunpack.c.h.b16 %v1983
    %v3078 = vunpack.c.l.b16 %v1984
    %v3079 = vunpack.c.h.b16 %v1984
    %v3080 = vunpack.c.l.b16 %v1985
    %v3081 = vunpack.c.h.b16 %v1985
    %v3082 = vunpack.c.l.b16 %v1986
    %v3083 = vunpack.c.h.b16 %v1986
    %v3084 = vunpack.c.l.b16 %v1987
    %v3085 = vunpack.c.l.b16 %v1988
    %v3086 = vunpack.c.h.b16 %v1988
    %v3087 = vunpack.c.l.b16 %v1989
    %v3088 = vunpack.c.h.b16 %v1989
    %v3089 = vunpack.c.l.b16 %v1990
    %v3090 = vunpack.c.h.b16 %v1990
    %v3091 = vunpack.c.l.b16 %v1991
    %v3092 = vunpack.c.h.b16 %v1991
    %v3093 = vunpack.c.l.b16 %v1992
    %v3094 = vunpack.c.l.b16 %v1993
    %v3095 = vunpack.c.h.b16 %v1993
    %v3096 = vunpack.c.l.b16 %v1994
    %v3097 = vunpack.c.h.b16 %v1994
    %v3098 = vunpack.c.l.b16 %v1995
    %v3099 = vunpack.c.h.b16 %v1995
    %v3100 = vunpack.c.l.b16 %v1996
    %v3101 = vunpack.c.h.b16 %v1996
    %v3102 = vunpack.c.l.b16 %v1997
    %v3103 = vunpack.c.l.b16 %v1998
    %v3104 = vunpack.c.h.b16 %v1998
    %v3105 = vunpack.c.l.b16 %v1999
    %v3106 = vunpack.c.h.b16 %v1999
    %v3107 = vunpack.c.l.b16 %v2000
    %v3108 = vunpack.c.h.b16 %v2000
    %v3109 = vunpack.c.l.b16 %v2001
    %v3110 = vunpack.c.h.b16 %v2001
    %v3111 = vunpack.c.l.b16 %v2002
    %v3112 = vunpack.c.l.b16 %v2003
    %v3113 = vunpack.c.h.b16 %v2003
    %v3114 = vunpack.c.l.b16 %v2004
    %v3115 = vunpack.c.h.b16 %v2004
    %v3116 = vunpack.c.l.b16 %v2005
    %v3117 = vunpack.c.h.b16 %v2005
    %v3118 = vunpack.c.l.b16 %v2006
    %v3119 = vunpack.c.h.b16 %v2006
    %v3120 = vunpack.c.l.b16 %v2007
    %v3121 = vunpack.c.l.b16 %v2008
    %v3122 = vunpack.c.h.b16 %v2008
    %v3123 = vunpack.c.l.b16 %v2009
    %v3124 = vunpack.c.h.b16 %v2009
    %v3125 = vunpack.c.l.b16 %v2010
    %v3126 = vunpack.c.h.b16 %v2010
    %v3127 = vunpack.c.l.b16 %v2011
    %v3128 = vunpack.c.h.b16 %v2011
    %v3129 = vunpack.c.l.b16 %v2012
    %v3130 = vunpack.c.l.b16 %v2013
    %v3131 = vunpack.c.h.b16 %v2013
    %v3132 = vunpack.c.l.b16 %v2014
    %v3133 = vunpack.c.h.b16 %v2014
    %v3134 = vunpack.c.l.b16 %v2015
    %v3135 = vunpack.c.h.b16 %v2015
    %v3136 = vunpack.c.l.b16 %v2016
    %v3137 = vunpack.c.h.b16 %v2016
    %v3138 = vunpack.c.l.b16 %v2017
    %v3139 = vunpack.c.l.b16 %v2018
    %v3140 = vunpack.c.h.b16 %v2018
    %v3141 = vunpack.c.l.b16 %v2019
    %v3142 = vunpack.c.h.b16 %v2019
    %v3143 = vunpack.c.l.b16 %v2020
    %v3144 = vunpack.c.h.b16 %v2020
    %v3145 = vunpack.c.l.b16 %v2021
    %v3146 = vunpack.c.h.b16 %v2021
    %v3147 = vunpack.c.l.b16 %v2022
    %v3148 = vunpack.c.l.b16 %v2023
    %v3149 = vunpack.c.h.b16 %v2023
    %v3150 = vunpack.c.l.b16 %v2024
    %v3151 = vunpack.c.h.b16 %v2024
    %v3152 = vunpack.c.l.b16 %v2025
    %v3153 = vunpack.c.h.b16 %v2025
    %v3154 = vunpack.c.l.b16 %v2026
    %v3155 = vunpack.c.h.b16 %v2026
    %v3156 = vunpack.c.l.b16 %v2027
    %v3157 = vunpack.c.l.b16 %v2028
    %v3158 = vunpack.c.h.b16 %v2028
    %v3159 = vunpack.c.l.b16 %v2029
    %v3160 = vunpack.c.h.b16 %v2029
    %v3161 = vunpack.c.l.b16 %v2030
    %v3162 = vunpack.c.h.b16 %v2030
    %v3163 = vunpack.c.l.b16 %v2031
    %v3164 = vunpack.c.h.b16 %v2031
    %v3165 = vunpack.c.l.b16 %v2032
    %v3166 = vunpack.c.l.b16 %v2033
    %v3167 = vunpack.c.h.b16 %v2033
    %v3168 = vunpack.c.l.b16 %v2034
    %v3169 = vunpack.c.h.b16 %v2034
    %v3170 = vunpack.c.l.b16 %v2035
    %v3171 = vunpack.c.h.b16 %v2035
    %v3172 = vunpack.c.l.b16 %v2036
    %v3173 = vunpack.c.h.b16 %v2036
    %v3174 = vunpack.c.l.b16 %v2037
    %v3175 = vunpack.c.l.b16 %v2038
    %v3176 = vunpack.c.h.b16 %v2038
    %v3177 = vunpack.c.l.b16 %v2039
    %v3178 = vunpack.c.h.b16 %v2039
    %v3179 = vunpack.c.l.b16 %v2040
    %v3180 = vunpack.c.h.b16 %v2040
    %v3181 = vunpack.c.l.b16 %v2041
    %v3182 = vunpack.c.h.b16 %v2041
    %v3183 = vunpack.c.l.b16 %v2042
    %v3184 = vunpack.c.l.b16 %v2043
    %v3185 = vunpack.c.h.b16 %v2043
    %v3186 = vunpack.c.l.b16 %v2044
    %v3187 = vunpack.c.h.b16 %v2044
    %v3188 = vunpack.c.l.b16 %v2045
    %v3189 = vunpack.c.h.b16 %v2045
    %v3190 = vunpack.c.l.b16 %v2046
    %v3191 = vunpack.c.h.b16 %v2046
    %v3192 = vunpack.c.l.b16 %v2047
    %v3193 = vunpack.c.l.b16 %v2048
    %v3194 = vunpack.c.h.b16 %v2048
    %v3195 = vunpack.c.l.b16 %v2049
    %v3196 = vunpack.c.h.b16 %v2049
    %v3197 = vunpack.c.l.b16 %v2050
    %v3198 = vunpack.c.h.b16 %v2050
    %v3199 = vunpack.c.l.b16 %v2051
    %v3200 = vunpack.c.h.b16 %v2051
    %v3201 = vunpack.c.l.b16 %v2052
    %v3202 = vunpack.c.l.b16 %v2053
    %v3203 = vunpack.c.h.b16 %v2053
    %v3204 = vunpack.c.l.b16 %v2054
    %v3205 = vunpack.c.h.b16 %v2054
    %v3206 = vunpack.c.l.b16 %v2055
    %v3207 = vunpack.c.h.b16 %v2055
    %v3208 = vunpack.c.l.b16 %v2056
    %v3209 = vunpack.c.h.b16 %v2056
    %v3210 = vunpack.c.l.b16 %v2057
    %v3211 = vunpack.c.l.b16 %v2058
    %v3212 = vunpack.c.h.b16 %v2058
    %v3213 = vunpack.c.l.b16 %v2059
    %v3214 = vunpack.c.h.b16 %v2059
    %v3215 = vunpack.c.l.b16 %v2060
    %v3216 = vunpack.c.h.b16 %v2060
    %v3217 = vunpack.c.l.b16 %v2061
    %v3218 = vunpack.c.h.b16 %v2061
    %v3219 = vunpack.c.l.b16 %v2062
    %v3220 = vunpack.c.l.b16 %v2063
    %v3221 = vunpack.c.h.b16 %v2063
    %v3222 = vunpack.c.l.b16 %v2064
    %v3223 = vunpack.c.h.b16 %v2064
    %v3224 = vunpack.c.l.b16 %v2065
    %v3225 = vunpack.c.h.b16 %v2065
    %v3226 = vunpack.c.l.b16 %v2066
    %v3227 = vunpack.c.h.b16 %v2066
    %v3228 = vunpack.c.l.b16 %v2067
    %v3229 = vunpack.c.l.b16 %v2068
    %v3230 = vunpack.c.h.b16 %v2068
    %v3231 = vunpack.c.l.b16 %v2069
    %v3232 = vunpack.c.h.b16 %v2069
    %v3233 = vunpack.c.l.b16 %v2070
    %v3234 = vunpack.c.h.b16 %v2070
    %v3235 = vunpack.c.l.b16 %v2071
    %v3236 = vunpack.c.h.b16 %v2071
    %v3237 = vunpack.c.l.b16 %v2072
    %v3238 = vunpack.c.l.b16 %v2073
    %v3239 = vunpack.c.h.b16 %v2073
    %v3240 = vunpack.c.l.b16 %v2074
    %v3241 = vunpack.c.h.b16 %v2074
    %v3242 = vunpack.c.l.b16 %v2075
    %v3243 = vunpack.c.h.b16 %v2075
    %v3244 = vunpack.c.l.b16 %v2076
    %v3245 = vunpack.c.h.b16 %v2076
    %v3246 = vunpack.c.l.b16 %v2077
    %v3247 = vpack.c.b16 %v2536, %v2527
    %v3248 = vpack.c.b16 %v2537, %v2528
    %v3249 = vpack.c.b16 %v2538, %v2529
    %v3250 = vpack.c.b16 %v2539, %v2530
    %v3251 = vpack.c.b16 %v2540, %v2531
    %v3252 = vpack.c.b16 %v2541, %v2532
    %v3253 = vpack.c.b16 %v2542, %v2533
    %v3254 = vpack.c.b16 %v2543, %v2534
    %v3255 = vpack.c.b16 %v2544, %v2535
    %v3256 = vpack.c.b16 %v2554, %v2545
    %v3257 = vpack.c.b16 %v2555, %v2546
    %v3258 = vpack.c.b16 %v2556, %v2547
    %v3259 = vpack.c.b16 %v2557, %v2548
    %v3260 = vpack.c.b16 %v2558, %v2549
    %v3261 = vpack.c.b16 %v2559, %v2550
    %v3262 = vpack.c.b16 %v2560, %v2551
    %v3263 = vpack.c.b16 %v2561, %v2552
    %v3264 = vpack.c.b16 %v2562, %v2553
    %v3265 = vpack.c.b16 %v2572, %v2563
    %v3266 = vpack.c.b16 %v2573, %v2564
    %v3267 = vpack.c.b16 %v2574, %v2565
    %v3268 = vpack.c.b16 %v2575, %v2566
    %v3269 = vpack.c.b16 %v2576, %v2567
    %v3270 = vpack.c.b16 %v2577, %v2568
    %v3271 = vpack.c.b16 %v2578, %v2569
    %v3272 = vpack.c.b16 %v2579, %v2570
    %v3273 = vpack.c.b16 %v2580, %v2571
    %v3274 = vpack.c.b16 %v2590, %v2581
    %v3275 = vpack.c.b16 %v2591, %v2582
    %v3276 = vpack.c.b16 %v2592, %v2583
    %v3277 = vpack.c.b16 %v2593, %v2584
    %v3278 = vpack.c.b16 %v2594, %v2585
    %v3279 = vpack.c.b16 %v2595, %v2586
    %v3280 = vpack.c.b16 %v2596, %v2587
    %v3281 = vpack.c.b16 %v2597, %v2588
    %v3282 = vpack.c.b16 %v2598, %v2589
    %v3283 = vpack.c.b16 %v2608, %v2599
    %v3284 = vpack.c.b16 %v2609, %v2600
    %v3285 = vpack.c.b16 %v2610, %v2601
    %v3286 = vpack.c.b16 %v2611, %v2602
    %v3287 = vpack.c.b16 %v2612, %v2603
    %v3288 = vpack.c.b16 %v2613, %v2604
    %v3289 = vpack.c.b16 %v2614, %v2605
    %v3290 = vpack.c.b16 %v2615, %v2606
    %v3291 = vpack.c.b16 %v2616, %v2607
    %v3292 = vpack.c.b16 %v2626, %v2617
    %v3293 = vpack.c.b16 %v2627, %v2618
    %v3294 = vpack.c.b16 %v2628, %v2619
    %v3295 = vpack.c.b16 %v2629, %v2620
    %v3296 = vpack.c.b16 %v2630, %v2621
    %v3297 = vpack.c.b16 %v2631, %v2622
    %v3298 = vpack.c.b16 %v2632, %v2623
    %v3299 = vpack.c.b16 %v2633, %v2624
    %v3300 = vpack.c.b16 %v2634, %v2625
    %v3301 = vpack.c.b16 %v2644, %v2635
    %v3302 = vpack.c.b16 %v2645, %v2636
    %v3303 = vpack.c.b16 %v2646, %v2637
    %v3304 = vpack.c.b16 %v2647, %v2638
    %v3305 = vpack.c.b16 %v2648, %v2639
    %v3306 = vpack.c.b16 %v2649, %v2640
    %v3307 = vpack.c.b16 %v2650, %v2641
    %v3308 = vpack.c.b16 %v2651, %v2642
    %v3309 = vpack.c.b16 %v2652, %v2643
    %v3310 = vpack.c.b16 %v2662, %v2653
    %v3311 = vpack.c.b16 %v2663, %v2654
    %v3312 = vpack.c.b16 %v2664, %v2655
    %v3313 = vpack.c.b16 %v2665, %v2656
    %v3314 = vpack.c.b16 %v2666, %v2657
    %v3315 = vpack.c.b16 %v2667, %v2658
    %v3316 = vpack.c.b16 %v2668, %v2659
    %v3317 = vpack.c.b16 %v2669, %v2660
    %v3318 = vpack.c.b16 %v2670, %v2661
    %v3319 = vpack.c.b16 %v2680, %v2671
    %v3320 = vpack.c.b16 %v2681, %v2672
    %v3321 = vpack.c.b16 %v2682, %v2673
    %v3322 = vpack.c.b16 %v2683, %v2674
    %v3323 = vpack.c.b16 %v2684, %v2675
    %v3324 = vpack.c.b16 %v2685, %v2676
    %v3325 = vpack.c.b16 %v2686, %v2677
    %v3326 = vpack.c.b16 %v2687, %v2678
    %v3327 = vpack.c.b16 %v2688, %v2679
    %v3328 = vpack.c.b16 %v2698, %v2689
    %v3329 = vpack.c.b16 %v2699, %v2690
    %v3330 = vpack.c.b16 %v2700, %v2691
    %v3331 = vpack.c.b16 %v2701, %v2692
    %v3332 = vpack.c.b16 %v2702, %v2693
    %v3333 = vpack.c.b16 %v2703, %v2694
    %v3334 = vpack.c.b16 %v2704, %v2695
    %v3335 = vpack.c.b16 %v2705, %v2696
    %v3336 = vpack.c.b16 %v2706, %v2697
    %v3337 = vpack.c.b16 %v2716, %v2707
    %v3338 = vpack.c.b16 %v2717, %v2708
    %v3339 = vpack.c.b16 %v2718, %v2709
    %v3340 = vpack.c.b16 %v2719, %v2710
    %v3341 = vpack.c.b16 %v2720, %v2711
    %v3342 = vpack.c.b16 %v2721, %v2712
    %v3343 = vpack.c.b16 %v2722, %v2713
    %v3344 = vpack.c.b16 %v2723, %v2714
    %v3345 = vpack.c.b16 %v2724, %v2715
    %v3346 = vpack.c.b16 %v2734, %v2725
    %v3347 = vpack.c.b16 %v2735, %v2726
    %v3348 = vpack.c.b16 %v2736, %v2727
    %v3349 = vpack.c.b16 %v2737, %v2728
    %v3350 = vpack.c.b16 %v2738, %v2729
    %v3351 = vpack.c.b16 %v2739, %v2730
    %v3352 = vpack.c.b16 %v2740, %v2731
    %v3353 = vpack.c.b16 %v2741, %v2732
    %v3354 = vpack.c.b16 %v2742, %v2733
    %v3355 = vpack.c.b16 %v2752, %v2743
    %v3356 = vpack.c.b16 %v2753, %v2744
    %v3357 = vpack.c.b16 %v2754, %v2745
    %v3358 = vpack.c.b16 %v2755, %v2746
    %v3359 = vpack.c.b16 %v2756, %v2747
    %v3360 = vpack.c.b16 %v2757, %v2748
    %v3361 = vpack.c.b16 %v2758, %v2749
    %v3362 = vpack.c.b16 %v2759, %v2750
    %v3363 = vpack.c.b16 %v2760, %v2751
    %v3364 = vpack.c.b16 %v2770, %v2761
    %v3365 = vpack.c.b16 %v2771, %v2762
    %v3366 = vpack.c.b16 %v2772, %v2763
    %v3367 = vpack.c.b16 %v2773, %v2764
    %v3368 = vpack.c.b16 %v2774, %v2765
    %v3369 = vpack.c.b16 %v2775, %v2766
    %v3370 = vpack.c.b16 %v2776, %v2767
    %v3371 = vpack.c.b16 %v2777, %v2768
    %v3372 = vpack.c.b16 %v2778, %v2769
    %v3373 = vpack.c.b16 %v2788, %v2779
    %v3374 = vpack.c.b16 %v2789, %v2780
    %v3375 = vpack.c.b16 %v2790, %v2781
    %v3376 = vpack.c.b16 %v2791, %v2782
    %v3377 = vpack.c.b16 %v2792, %v2783
    %v3378 = vpack.c.b16 %v2793, %v2784
    %v3379 = vpack.c.b16 %v2794, %v2785
    %v3380 = vpack.c.b16 %v2795, %v2786
    %v3381 = vpack.c.b16 %v2796, %v2787
    %v3382 = vpack.c.b16 %v2806, %v2797
    %v3383 = vpack.c.b16 %v2807, %v2798
    %v3384 = vpack.c.b16 %v2808, %v2799
    %v3385 = vpack.c.b16 %v2809, %v2800
    %v3386 = vpack.c.b16 %v2810, %v2801
    %v3387 = vpack.c.b16 %v2811, %v2802
    %v3388 = vpack.c.b16 %v2812, %v2803
    %v3389 = vpack.c.b16 %v2813, %v2804
    %v3390 = vpack.c.b16 %v2814, %v2805
    %v3391 = vpack.c.b16 %v2824, %v2815
    %v3392 = vpack.c.b16 %v2825, %v2816
    %v3393 = vpack.c.b16 %v2826, %v2817
    %v3394 = vpack.c.b16 %v2827, %v2818
    %v3395 = vpack.c.b16 %v2828, %v2819
    %v3396 = vpack.c.b16 %v2829, %v2820
    %v3397 = vpack.c.b16 %v2830, %v2821
    %v3398 = vpack.c.b16 %v2831, %v2822
    %v3399 = vpack.c.b16 %v2832, %v2823
    %v3400 = vpack.c.b16 %v2842, %v2833
    %v3401 = vpack.c.b16 %v2843, %v2834
    %v3402 = vpack.c.b16 %v2844, %v2835
    %v3403 = vpack.c.b16 %v2845, %v2836
    %v3404 = vpack.c.b16 %v2846, %v2837
    %v3405 = vpack.c.b16 %v2847, %v2838
    %v3406 = vpack.c.b16 %v2848, %v2839
    %v3407 = vpack.c.b16 %v2849, %v2840
    %v3408 = vpack.c.b16 %v2850, %v2841
    %v3409 = vpack.c.b16 %v2860, %v2851
    %v3410 = vpack.c.b16 %v2861, %v2852
    %v3411 = vpack.c.b16 %v2862, %v2853
    %v3412 = vpack.c.b16 %v2863, %v2854
    %v3413 = vpack.c.b16 %v2864, %v2855
    %v3414 = vpack.c.b16 %v2865, %v2856
    %v3415 = vpack.c.b16 %v2866, %v2857
    %v3416 = vpack.c.b16 %v2867, %v2858
    %v3417 = vpack.c.b16 %v2868, %v2859
    %v3418 = vpack.c.b16 %v2878, %v2869
    %v3419 = vpack.c.b16 %v2879, %v2870
    %v3420 = vpack.c.b16 %v2880, %v2871
    %v3421 = vpack.c.b16 %v2881, %v2872
    %v3422 = vpack.c.b16 %v2882, %v2873
    %v3423 = vpack.c.b16 %v2883, %v2874
    %v3424 = vpack.c.b16 %v2884, %v2875
    %v3425 = vpack.c.b16 %v2885, %v2876
    %v3426 = vpack.c.b16 %v2886, %v2877
    %v3427 = vpack.c.b16 %v2896, %v2887
    %v3428 = vpack.c.b16 %v2897, %v2888
    %v3429 = vpack.c.b16 %v2898, %v2889
    %v3430 = vpack.c.b16 %v2899, %v2890
    %v3431 = vpack.c.b16 %v2900, %v2891
    %v3432 = vpack.c.b16 %v2901, %v2892
    %v3433 = vpack.c.b16 %v2902, %v2893
    %v3434 = vpack.c.b16 %v2903, %v2894
    %v3435 = vpack.c.b16 %v2904, %v2895
    %v3436 = vpack.c.b16 %v2914, %v2905
    %v3437 = vpack.c.b16 %v2915, %v2906
    %v3438 = vpack.c.b16 %v2916, %v2907
    %v3439 = vpack.c.b16 %v2917, %v2908
    %v3440 = vpack.c.b16 %v2918, %v2909
    %v3441 = vpack.c.b16 %v2919, %v2910
    %v3442 = vpack.c.b16 %v2920, %v2911
    %v3443 = vpack.c.b16 %v2921, %v2912
    %v3444 = vpack.c.b16 %v2922, %v2913
    %v3445 = vpack.c.b16 %v2932, %v2923
    %v3446 = vpack.c.b16 %v2933, %v2924
    %v3447 = vpack.c.b16 %v2934, %v2925
    %v3448 = vpack.c.b16 %v2935, %v2926
    %v3449 = vpack.c.b16 %v2936, %v2927
    %v3450 = vpack.c.b16 %v2937, %v2928
    %v3451 = vpack.c.b16 %v2938, %v2929
    %v3452 = vpack.c.b16 %v2939, %v2930
    %v3453 = vpack.c.b16 %v2940, %v2931
    %v3454 = vpack.c.b16 %v2950, %v2941
    %v3455 = vpack.c.b16 %v2951, %v2942
    %v3456 = vpack.c.b16 %v2952, %v2943
    %v3457 = vpack.c.b16 %v2953, %v2944
    %v3458 = vpack.c.b16 %v2954, %v2945
    %v3459 = vpack.c.b16 %v2955, %v2946
    %v3460 = vpack.c.b16 %v2956, %v2947
    %v3461 = vpack.c.b16 %v2957, %v2948
    %v3462 = vpack.c.b16 %v2958, %v2949
    %v3463 = vpack.c.b16 %v2968, %v2959
    %v3464 = vpack.c.b16 %v2969, %v2960
    %v3465 = vpack.c.b16 %v2970, %v2961
    %v3466 = vpack.c.b16 %v2971, %v2962
    %v3467 = vpack.c.b16 %v2972, %v2963
    %v3468 = vpack.c.b16 %v2973, %v2964
    %v3469 = vpack.c.b16 %v2974, %v2965
    %v3470 = vpack.c.b16 %v2975, %v2966
    %v3471 = vpack.c.b16 %v2976, %v2967
    %v3472 = vpack.c.b16 %v2986, %v2977
    %v3473 = vpack.c.b16 %v2987, %v2978
    %v3474 = vpack.c.b16 %v2988, %v2979
    %v3475 = vpack.c.b16 %v2989, %v2980
    %v3476 = vpack.c.b16 %v2990, %v2981
    %v3477 = vpack.c.b16 %v2991, %v2982
    %v3478 = vpack.c.b16 %v2992, %v2983
    %v3479 = vpack.c.b16 %v2993, %v2984
    %v3480 = vpack.c.b16 %v2994, %v2985
    %v3481 = vpack.c.b16 %v3004, %v2995
    %v3482 = vpack.c.b16 %v3005, %v2996
    %v3483 = vpack.c.b16 %v3006, %v2997
    %v3484 = vpack.c.b16 %v3007, %v2998
    %v3485 = vpack.c.b16 %v3008, %v2999
    %v3486 = vpack.c.b16 %v3009, %v3000
    %v3487 = vpack.c.b16 %v3010, %v3001
    %v3488 = vpack.c.b16 %v3011, %v3002
    %v3489 = vpack.c.b16 %v3012, %v3003
    %v3490 = vpack.c.b16 %v3022, %v3013
    %v3491 = vpack.c.b16 %v3023, %v3014
    %v3492 = vpack.c.b16 %v3024, %v3015
    %v3493 = vpack.c.b16 %v3025, %v3016
    %v3494 = vpack.c.b16 %v3026, %v3017
    %v3495 = vpack.c.b16 %v3027, %v3018
    %v3496 = vpack.c.b16 %v3028, %v3019
    %v3497 = vpack.c.b16 %v3029, %v3020
    %v3498 = vpack.c.b16 %v3030, %v3021
    %v3499 = vpack.c.b16 %v3040, %v3031
    %v3500 = vpack.c.b16 %v3041, %v3032
    %v3501 = vpack.c.b16 %v3042, %v3033
    %v3502 = vpack.c.b16 %v3043, %v3034
    %v3503 = vpack.c.b16 %v3044, %v3035
    %v3504 = vpack.c.b16 %v3045, %v3036
    %v3505 = vpack.c.b16 %v3046, %v3037
    %v3506 = vpack.c.b16 %v3047, %v3038
    %v3507 = vpack.c.b16 %v3048, %v3039
    %v3508 = vpack.c.b16 %v3058, %v3049
    %v3509 = vpack.c.b16 %v3059, %v3050
    %v3510 = vpack.c.b16 %v3060, %v3051
    %v3511 = vpack.c.b16 %v3061, %v3052
    %v3512 = vpack.c.b16 %v3062, %v3053
    %v3513 = vpack.c.b16 %v3063, %v3054
    %v3514 = vpack.c.b16 %v3064, %v3055
    %v3515 = vpack.c.b16 %v3065, %v3056
    %v3516 = vpack.c.b16 %v3066, %v3057
    %v3517 = vpack.c.b16 %v3076, %v3067
    %v3518 = vpack.c.b16 %v3077, %v3068
    %v3519 = vpack.c.b16 %v3078, %v3069
    %v3520 = vpack.c.b16 %v3079, %v3070
    %v3521 = vpack.c.b16 %v3080, %v3071
    %v3522 = vpack.c.b16 %v3081, %v3072
    %v3523 = vpack.c.b16 %v3082, %v3073
    %v3524 = vpack.c.b16 %v3083, %v3074
    %v3525 = vpack.c.b16 %v3084, %v3075
    %v3526 = vpack.c.b16 %v3094, %v3085
    %v3527 = vpack.c.b16 %v3095, %v3086
    %v3528 = vpack.c.b16 %v3096, %v3087
    %v3529 = vpack.c.b16 %v3097, %v3088
    %v3530 = vpack.c.b16 %v3098, %v3089
    %v3531 = vpack.c.b16 %v3099, %v3090
    %v3532 = vpack.c.b16 %v3100, %v3091
    %v3533 = vpack.c.b16 %v3101, %v3092
    %v3534 = vpack.c.b16 %v3102, %v3093
    %v3535 = vpack.c.b16 %v3112, %v3103
    %v3536 = vpack.c.b16 %v3113, %v3104
    %v3537 = vpack.c.b16 %v3114, %v3105
    %v3538 = vpack.c.b16 %v3115, %v3106
    %v3539 = vpack.c.b16 %v3116, %v3107
    %v3540 = vpack.c.b16 %v3117, %v3108
    %v3541 = vpack.c.b16 %v3118, %v3109
    %v3542 = vpack.c.b16 %v3119, %v3110
    %v3543 = vpack.c.b16 %v3120, %v3111
    %v3544 = vpack.c.b16 %v3130, %v3121
    %v3545 = vpack.c.b16 %v3131, %v3122
    %v3546 = vpack.c.b16 %v3132, %v3123
    %v3547 = vpack.c.b16 %v3133, %v3124
    %v3548 = vpack.c.b16 %v3134, %v3125
    %v3549 = vpack.c.b16 %v3135, %v3126
    %v3550 = vpack.c.b16 %v3136, %v3127
    %v3551 = vpack.c.b16 %v3137, %v3128
    %v3552 = vpack.c.b16 %v3138, %v3129
    %v3553 = vpack.c.b16 %v3148, %v3139
    %v3554 = vpack.c.b16 %v3149, %v3140
    %v3555 = vpack.c.b16 %v3150, %v3141
    %v3556 = vpack.c.b16 %v3151, %v3142
    %v3557 = vpack.c.b16 %v3152, %v3143
    %v3558 = vpack.c.b16 %v3153, %v3144
    %v3559 = vpack.c.b16 %v3154, %v3145
    %v3560 = vpack.c.b16 %v3155, %v3146
    %v3561 = vpack.c.b16 %v3156, %v3147
    %v3562 = vpack.c.b16 %v3166, %v3157
    %v3563 = vpack.c.b16 %v3167, %v3158
    %v3564 = vpack.c.b16 %v3168, %v3159
    %v3565 = vpack.c.b16 %v3169, %v3160
    %v3566 = vpack.c.b16 %v3170, %v3161
    %v3567 = vpack.c.b16 %v3171, %v3162
    %v3568 = vpack.c.b16 %v3172, %v3163
    %v3569 = vpack.c.b16 %v3173, %v3164
    %v3570 = vpack.c.b16 %v3174, %v3165
    %v3571 = vpack.c.b16 %v3184, %v3175
    %v3572 = vpack.c.b16 %v3185, %v3176
    %v3573 = vpack.c.b16 %v3186, %v3177
    %v3574 = vpack.c.b16 %v3187, %v3178
    %v3575 = vpack.c.b16 %v3188, %v3179
    %v3576 = vpack.c.b16 %v3189, %v3180
    %v3577 = vpack.c.b16 %v3190, %v3181
    %v3578 = vpack.c.b16 %v3191, %v3182
    %v3579 = vpack.c.b16 %v3192, %v3183
    %v3580 = vpack.c.b16 %v3202, %v3193
    %v3581 = vpack.c.b16 %v3203, %v3194
    %v3582 = vpack.c.b16 %v3204, %v3195
    %v3583 = vpack.c.b16 %v3205, %v3196
    %v3584 = vpack.c.b16 %v3206, %v3197
    %v3585 = vpack.c.b16 %v3207, %v3198
    %v3586 = vpack.c.b16 %v3208, %v3199
    %v3587 = vpack.c.b16 %v3209, %v3200
    %v3588 = vpack.c.b16 %v3210, %v3201
    %v3589 = vpack.c.b16 %v3220, %v3211
    %v3590 = vpack.c.b16 %v3221, %v3212
    %v3591 = vpack.c.b16 %v3222, %v3213
    %v3592 = vpack.c.b16 %v3223, %v3214
    %v3593 = vpack.c.b16 %v3224, %v3215
    %v3594 = vpack.c.b16 %v3225, %v3216
    %v3595 = vpack.c.b16 %v3226, %v3217
    %v3596 = vpack.c.b16 %v3227, %v3218
    %v3597 = vpack.c.b16 %v3228, %v3219
    %v3598 = vpack.c.b16 %v3238, %v3229
    %v3599 = vpack.c.b16 %v3239, %v3230
    %v3600 = vpack.c.b16 %v3240, %v3231
    %v3601 = vpack.c.b16 %v3241, %v3232
    %v3602 = vpack.c.b16 %v3242, %v3233
    %v3603 = vpack.c.b16 %v3243, %v3234
    %v3604 = vpack.c.b16 %v3244, %v3235
    %v3605 = vpack.c.b16 %v3245, %v3236
    %v3606 = vpack.c.b16 %v3246, %v3237
    %3967 = vmatprep.subr.bf16.mxu0 %v3248
    %3968 = vmatpush1.bf16.msra.mxu0 %v3247
    %3969 = vmatprep.subr.bf16.mxu0 %v3257
    %3970 = vmatpush1.bf16.msra.mxu0 %v3256
    %3971 = vmatprep.subr.bf16.mxu0 %v3266
    %3972 = vmatpush1.bf16.msra.mxu0 %v3265
    %3973 = vmatprep.subr.bf16.mxu0 %v3275
    %3974 = vmatpush1.bf16.msra.mxu0 %v3274
    %3975 = vmatprep.subr.bf16.mxu0 %v3284
    %3976 = vmatpush1.bf16.msra.mxu0 %v3283
    %3977 = vmatprep.subr.bf16.mxu0 %v3293
    %3978 = vmatpush1.bf16.msra.mxu0 %v3292
    %3979 = vmatprep.subr.bf16.mxu0 %v3302
    %3980 = vmatpush1.bf16.msra.mxu0 %v3301
    %3981 = vmatprep.subr.bf16.mxu0 %v3311
    %3982 = vmatpush1.bf16.msra.mxu0 %v3310
    %3983 = vmatprep.subr.bf16.mxu0 %v3320
    %3984 = vmatpush1.bf16.msra.mxu0 %v3319
    %3985 = vmatprep.subr.bf16.mxu0 %v3329
    %3986 = vmatpush1.bf16.msra.mxu0 %v3328
    %3987 = vmatprep.subr.bf16.mxu0 %v3338
    %3988 = vmatpush1.bf16.msra.mxu0 %v3337
    %3989 = vmatprep.subr.bf16.mxu0 %v3347
    %3990 = vmatpush1.bf16.msra.mxu0 %v3346
    %3991 = vmatprep.subr.bf16.mxu0 %v3356
    %3992 = vmatpush1.bf16.msra.mxu0 %v3355
    %3993 = vmatprep.subr.bf16.mxu0 %v3365
    %3994 = vmatpush1.bf16.msra.mxu0 %v3364
    %3995 = vmatprep.subr.bf16.mxu0 %v3374
    %3996 = vmatpush1.bf16.msra.mxu0 %v3373
    %3997 = vmatprep.subr.bf16.mxu0 %v3383
    %3998 = vmatpush1.bf16.msra.mxu0 %v3382
    %3999 = vmatprep.mubr.bf16.mxu0 %v1674
    %4000 = vmatmul.mubr.bf16.gmra.mrb[0].mxu0 %v1673
    %v4001 = vpop.f32.mrb[0].mxu0
    %v4002 = vadd.f32 %v2085, %v4001
    %v4003 = vpop.f32.mrb[0].mxu0
    %v4004 = vadd.f32 %v2089, %v4003
    %v4005 = vpop.f32.mrb[0].mxu0
    %v4006 = vpop.f32.mrb[0].mxu0
    %4007 = vdwg.mxu0
    %4008 = vmatprep.subr.bf16.mxu0 %v3392
    %4009 = vmatpush1.bf16.msra.mxu0 %v3391
    %4010 = vmatprep.subr.bf16.mxu0 %v3401
    %4011 = vmatpush1.bf16.msra.mxu0 %v3400
    %4012 = vmatprep.subr.bf16.mxu0 %v3410
    %4013 = vmatpush1.bf16.msra.mxu0 %v3409
    %4014 = vmatprep.subr.bf16.mxu0 %v3419
    %4015 = vmatpush1.bf16.msra.mxu0 %v3418
    %4016 = vmatprep.subr.bf16.mxu0 %v3428
    %4017 = vmatpush1.bf16.msra.mxu0 %v3427
    %4018 = vmatprep.subr.bf16.mxu0 %v3437
    %4019 = vmatpush1.bf16.msra.mxu0 %v3436
    %4020 = vmatprep.subr.bf16.mxu0 %v3446
    %4021 = vmatpush1.bf16.msra.mxu0 %v3445
    %4022 = vmatprep.subr.bf16.mxu0 %v3455
    %4023 = vmatpush1.bf16.msra.mxu0 %v3454
    %4024 = vmatprep.subr.bf16.mxu0 %v3464
    %4025 = vmatpush1.bf16.msra.mxu0 %v3463
    %4026 = vmatprep.subr.bf16.mxu0 %v3473
    %4027 = vmatpush1.bf16.msra.mxu0 %v3472
    %4028 = vmatprep.subr.bf16.mxu0 %v3482
    %4029 = vmatpush1.bf16.msra.mxu0 %v3481
    %4030 = vmatprep.subr.bf16.mxu0 %v3491
    %4031 = vmatpush1.bf16.msra.mxu0 %v3490
    %4032 = vmatprep.subr.bf16.mxu0 %v3500
    %4033 = vmatpush1.bf16.msra.mxu0 %v3499
    %4034 = vmatprep.subr.bf16.mxu0 %v3509
    %4035 = vmatpush1.bf16.msra.mxu0 %v3508
    %4036 = vmatprep.subr.bf16.mxu0 %v3518
    %4037 = vmatpush1.bf16.msra.mxu0 %v3517
    %4038 = vmatprep.subr.bf16.mxu0 %v3527
    %4039 = vmatpush1.bf16.msra.mxu0 %v3526
    %4040 = vmatprep.mubr.bf16.mxu0 %v1676
    %4041 = vmatmul.mubr.bf16.gmra.mrb[0].mxu0 %v1675
    %v4042 = vpop.f32.mrb[0].mxu0
    %v4043 = vadd.f32 %v4002, %v4042
    %v4044 = vpop.f32.mrb[0].mxu0
    %v4045 = vadd.f32 %v4004, %v4044
    %v4046 = vpop.f32.mrb[0].mxu0
    %v4047 = vpop.f32.mrb[0].mxu0
    %4048 = vdwg.mxu0
    %4049 = vmatprep.subr.bf16.mxu0 %v3536
    %4050 = vmatpush1.bf16.msra.mxu0 %v3535
    %4051 = vmatprep.subr.bf16.mxu0 %v3545
    %4052 = vmatpush1.bf16.msra.mxu0 %v3544
    %4053 = vmatprep.subr.bf16.mxu0 %v3554
    %4054 = vmatpush1.bf16.msra.mxu0 %v3553
    %4055 = vmatprep.subr.bf16.mxu0 %v3563
    %4056 = vmatpush1.bf16.msra.mxu0 %v3562
    %4057 = vmatprep.subr.bf16.mxu0 %v3572
    %4058 = vmatpush1.bf16.msra.mxu0 %v3571
    %4059 = vmatprep.subr.bf16.mxu0 %v3581
    %4060 = vmatpush1.bf16.msra.mxu0 %v3580
    %4061 = vmatprep.subr.bf16.mxu0 %v3590
    %4062 = vmatpush1.bf16.msra.mxu0 %v3589
    %4063 = vmatprep.subr.bf16.mxu0 %v3599
    %4064 = vmatpush1.bf16.msra.mxu0 %v3598
    %4065 = vmatprep.subr.bf16.mxu0 0
    %4066 = vmatpush1.bf16.msra.mxu0 0
    %4067 = vmatprep.subr.bf16.mxu0 0
    %4068 = vmatpush1.bf16.msra.mxu0 0
    %4069 = vmatprep.subr.bf16.mxu0 0
    %4070 = vmatpush1.bf16.msra.mxu0 0
    %4071 = vmatprep.subr.bf16.mxu0 0
    %4072 = vmatpush1.bf16.msra.mxu0 0
    %4073 = vmatprep.subr.bf16.mxu0 0
    %4074 = vmatpush1.bf16.msra.mxu0 0
    %4075 = vmatprep.subr.bf16.mxu0 0
    %4076 = vmatpush1.bf16.msra.mxu0 0
    %4077 = vmatprep.subr.bf16.mxu0 0
    %4078 = vmatpush1.bf16.msra.mxu0 0
    %4079 = vmatprep.subr.bf16.mxu0 0
    %4080 = vmatpush1.bf16.msra.mxu0 0
    %4081 = vmatprep.mubr.bf16.mxu0 0
    %4082 = vmatmul.mubr.bf16.gmra.mrb[0].mxu0 %v1677
    %v4083 = vpop.f32.mrb[0].mxu0
    %v4084 = vadd.f32 %v4043, %v4083
    %v4085 = vpop.f32.mrb[0].mxu0
    %v4086 = vadd.f32 %v4045, %v4085
    %v4087 = vpop.f32.mrb[0].mxu0
    %v4088 = vpop.f32.mrb[0].mxu0
    %4089 = vdwg.mxu0
    %4090 = vmatprep.subr.bf16.mxu0 %v3250
    %4091 = vmatpush1.bf16.msra.mxu0 %v3249
    %4092 = vmatprep.subr.bf16.mxu0 %v3259
    %4093 = vmatpush1.bf16.msra.mxu0 %v3258
    %4094 = vmatprep.subr.bf16.mxu0 %v3268
    %4095 = vmatpush1.bf16.msra.mxu0 %v3267
    %4096 = vmatprep.subr.bf16.mxu0 %v3277
    %4097 = vmatpush1.bf16.msra.mxu0 %v3276
    %4098 = vmatprep.subr.bf16.mxu0 %v3286
    %4099 = vmatpush1.bf16.msra.mxu0 %v3285
    %4100 = vmatprep.subr.bf16.mxu0 %v3295
    %4101 = vmatpush1.bf16.msra.mxu0 %v3294
    %4102 = vmatprep.subr.bf16.mxu0 %v3304
    %4103 = vmatpush1.bf16.msra.mxu0 %v3303
    %4104 = vmatprep.subr.bf16.mxu0 %v3313
    %4105 = vmatpush1.bf16.msra.mxu0 %v3312
    %4106 = vmatprep.subr.bf16.mxu0 %v3322
    %4107 = vmatpush1.bf16.msra.mxu0 %v3321
    %4108 = vmatprep.subr.bf16.mxu0 %v3331
    %4109 = vmatpush1.bf16.msra.mxu0 %v3330
    %4110 = vmatprep.subr.bf16.mxu0 %v3340
    %4111 = vmatpush1.bf16.msra.mxu0 %v3339
    %4112 = vmatprep.subr.bf16.mxu0 %v3349
    %4113 = vmatpush1.bf16.msra.mxu0 %v3348
    %4114 = vmatprep.subr.bf16.mxu0 %v3358
    %4115 = vmatpush1.bf16.msra.mxu0 %v3357
    %4116 = vmatprep.subr.bf16.mxu0 %v3367
    %4117 = vmatpush1.bf16.msra.mxu0 %v3366
    %4118 = vmatprep.subr.bf16.mxu0 %v3376
    %4119 = vmatpush1.bf16.msra.mxu0 %v3375
    %4120 = vmatprep.subr.bf16.mxu0 %v3385
    %4121 = vmatpush1.bf16.msra.mxu0 %v3384
    %4122 = vmatprep.mubr.bf16.mxu0 %v1674
    %4123 = vmatmul.mubr.bf16.gmra.mrb[0].mxu0 %v1673
    %v4124 = vpop.f32.mrb[0].mxu0
    %v4125 = vadd.f32 %v2093, %v4124
    %v4126 = vpop.f32.mrb[0].mxu0
    %v4127 = vadd.f32 %v2097, %v4126
    %v4128 = vpop.f32.mrb[0].mxu0
    %v4129 = vpop.f32.mrb[0].mxu0
    %4130 = vdwg.mxu0
    %4131 = vmatprep.subr.bf16.mxu0 %v3394
    %4132 = vmatpush1.bf16.msra.mxu0 %v3393
    %4133 = vmatprep.subr.bf16.mxu0 %v3403
    %4134 = vmatpush1.bf16.msra.mxu0 %v3402
    %4135 = vmatprep.subr.bf16.mxu0 %v3412
    %4136 = vmatpush1.bf16.msra.mxu0 %v3411
    %4137 = vmatprep.subr.bf16.mxu0 %v3421
    %4138 = vmatpush1.bf16.msra.mxu0 %v3420
    %4139 = vmatprep.subr.bf16.mxu0 %v3430
    %4140 = vmatpush1.bf16.msra.mxu0 %v3429
    %4141 = vmatprep.subr.bf16.mxu0 %v3439
    %4142 = vmatpush1.bf16.msra.mxu0 %v3438
    %4143 = vmatprep.subr.bf16.mxu0 %v3448
    %4144 = vmatpush1.bf16.msra.mxu0 %v3447
    %4145 = vmatprep.subr.bf16.mxu0 %v3457
    %4146 = vmatpush1.bf16.msra.mxu0 %v3456
    %4147 = vmatprep.subr.bf16.mxu0 %v3466
    %4148 = vmatpush1.bf16.msra.mxu0 %v3465
    %4149 = vmatprep.subr.bf16.mxu0 %v3475
    %4150 = vmatpush1.bf16.msra.mxu0 %v3474
    %4151 = vmatprep.subr.bf16.mxu0 %v3484
    %4152 = vmatpush1.bf16.msra.mxu0 %v3483
    %4153 = vmatprep.subr.bf16.mxu0 %v3493
    %4154 = vmatpush1.bf16.msra.mxu0 %v3492
    %4155 = vmatprep.subr.bf16.mxu0 %v3502
    %4156 = vmatpush1.bf16.msra.mxu0 %v3501
    %4157 = vmatprep.subr.bf16.mxu0 %v3511
    %4158 = vmatpush1.bf16.msra.mxu0 %v3510
    %4159 = vmatprep.subr.bf16.mxu0 %v3520
    %4160 = vmatpush1.bf16.msra.mxu0 %v3519
    %4161 = vmatprep.subr.bf16.mxu0 %v3529
    %4162 = vmatpush1.bf16.msra.mxu0 %v3528
    %4163 = vmatprep.mubr.bf16.mxu0 %v1676
    %4164 = vmatmul.mubr.bf16.gmra.mrb[0].mxu0 %v1675
    %v4165 = vpop.f32.mrb[0].mxu0
    %v4166 = vadd.f32 %v4125, %v4165
    %v4167 = vpop.f32.mrb[0].mxu0
    %v4168 = vadd.f32 %v4127, %v4167
    %v4169 = vpop.f32.mrb[0].mxu0
    %v4170 = vpop.f32.mrb[0].mxu0
    %4171 = vdwg.mxu0
    %4172 = vmatprep.subr.bf16.mxu0 %v3538
    %4173 = vmatpush1.bf16.msra.mxu0 %v3537
    %4174 = vmatprep.subr.bf16.mxu0 %v3547
    %4175 = vmatpush1.bf16.msra.mxu0 %v3546
    %4176 = vmatprep.subr.bf16.mxu0 %v3556
    %4177 = vmatpush1.bf16.msra.mxu0 %v3555
    %4178 = vmatprep.subr.bf16.mxu0 %v3565
    %4179 = vmatpush1.bf16.msra.mxu0 %v3564
    %4180 = vmatprep.subr.bf16.mxu0 %v3574
    %4181 = vmatpush1.bf16.msra.mxu0 %v3573
    %4182 = vmatprep.subr.bf16.mxu0 %v3583
    %4183 = vmatpush1.bf16.msra.mxu0 %v3582
    %4184 = vmatprep.subr.bf16.mxu0 %v3592
    %4185 = vmatpush1.bf16.msra.mxu0 %v3591
    %4186 = vmatprep.subr.bf16.mxu0 %v3601
    %4187 = vmatpush1.bf16.msra.mxu0 %v3600
    %4188 = vmatprep.subr.bf16.mxu0 0
    %4189 = vmatpush1.bf16.msra.mxu0 0
    %4190 = vmatprep.subr.bf16.mxu0 0
    %4191 = vmatpush1.bf16.msra.mxu0 0
    %4192 = vmatprep.subr.bf16.mxu0 0
    %4193 = vmatpush1.bf16.msra.mxu0 0
    %4194 = vmatprep.subr.bf16.mxu0 0
    %4195 = vmatpush1.bf16.msra.mxu0 0
    %4196 = vmatprep.subr.bf16.mxu0 0
    %4197 = vmatpush1.bf16.msra.mxu0 0
    %4198 = vmatprep.subr.bf16.mxu0 0
    %4199 = vmatpush1.bf16.msra.mxu0 0
    %4200 = vmatprep.subr.bf16.mxu0 0
    %4201 = vmatpush1.bf16.msra.mxu0 0
    %4202 = vmatprep.subr.bf16.mxu0 0
    %4203 = vmatpush1.bf16.msra.mxu0 0
    %4204 = vmatprep.mubr.bf16.mxu0 0
    %4205 = vmatmul.mubr.bf16.gmra.mrb[0].mxu0 %v1677
    %v4206 = vpop.f32.mrb[0].mxu0
    %v4207 = vadd.f32 %v4166, %v4206
    %v4208 = vpop.f32.mrb[0].mxu0
    %v4209 = vadd.f32 %v4168, %v4208
    %v4210 = vpop.f32.mrb[0].mxu0
    %v4211 = vpop.f32.mrb[0].mxu0
    %4212 = vdwg.mxu0
    %4213 = vmatprep.subr.bf16.mxu0 %v3252
    %4214 = vmatpush1.bf16.msra.mxu0 %v3251
    %4215 = vmatprep.subr.bf16.mxu0 %v3261
    %4216 = vmatpush1.bf16.msra.mxu0 %v3260
    %4217 = vmatprep.subr.bf16.mxu0 %v3270
    %4218 = vmatpush1.bf16.msra.mxu0 %v3269
    %4219 = vmatprep.subr.bf16.mxu0 %v3279
    %4220 = vmatpush1.bf16.msra.mxu0 %v3278
    %4221 = vmatprep.subr.bf16.mxu0 %v3288
    %4222 = vmatpush1.bf16.msra.mxu0 %v3287
    %4223 = vmatprep.subr.bf16.mxu0 %v3297
    %4224 = vmatpush1.bf16.msra.mxu0 %v3296
    %4225 = vmatprep.subr.bf16.mxu0 %v3306
    %4226 = vmatpush1.bf16.msra.mxu0 %v3305
    %4227 = vmatprep.subr.bf16.mxu0 %v3315
    %4228 = vmatpush1.bf16.msra.mxu0 %v3314
    %4229 = vmatprep.subr.bf16.mxu0 %v3324
    %4230 = vmatpush1.bf16.msra.mxu0 %v3323
    %4231 = vmatprep.subr.bf16.mxu0 %v3333
    %4232 = vmatpush1.bf16.msra.mxu0 %v3332
    %4233 = vmatprep.subr.bf16.mxu0 %v3342
    %4234 = vmatpush1.bf16.msra.mxu0 %v3341
    %4235 = vmatprep.subr.bf16.mxu0 %v3351
    %4236 = vmatpush1.bf16.msra.mxu0 %v3350
    %4237 = vmatprep.subr.bf16.mxu0 %v3360
    %4238 = vmatpush1.bf16.msra.mxu0 %v3359
    %4239 = vmatprep.subr.bf16.mxu0 %v3369
    %4240 = vmatpush1.bf16.msra.mxu0 %v3368
    %4241 = vmatprep.subr.bf16.mxu0 %v3378
    %4242 = vmatpush1.bf16.msra.mxu0 %v3377
    %4243 = vmatprep.subr.bf16.mxu0 %v3387
    %4244 = vmatpush1.bf16.msra.mxu0 %v3386
    %4245 = vmatprep.mubr.bf16.mxu0 %v1674
    %4246 = vmatmul.mubr.bf16.gmra.mrb[0].mxu0 %v1673
    %v4247 = vpop.f32.mrb[0].mxu0
    %v4248 = vadd.f32 %v2101, %v4247
    %v4249 = vpop.f32.mrb[0].mxu0
    %v4250 = vadd.f32 %v2105, %v4249
    %v4251 = vpop.f32.mrb[0].mxu0
    %v4252 = vpop.f32.mrb[0].mxu0
    %4253 = vdwg.mxu0
    %4254 = vmatprep.subr.bf16.mxu0 %v3396
    %4255 = vmatpush1.bf16.msra.mxu0 %v3395
    %4256 = vmatprep.subr.bf16.mxu0 %v3405
    %4257 = vmatpush1.bf16.msra.mxu0 %v3404
    %4258 = vmatprep.subr.bf16.mxu0 %v3414
    %4259 = vmatpush1.bf16.msra.mxu0 %v3413
    %4260 = vmatprep.subr.bf16.mxu0 %v3423
    %4261 = vmatpush1.bf16.msra.mxu0 %v3422
    %4262 = vmatprep.subr.bf16.mxu0 %v3432
    %4263 = vmatpush1.bf16.msra.mxu0 %v3431
    %4264 = vmatprep.subr.bf16.mxu0 %v3441
    %4265 = vmatpush1.bf16.msra.mxu0 %v3440
    %4266 = vmatprep.subr.bf16.mxu0 %v3450
    %4267 = vmatpush1.bf16.msra.mxu0 %v3449
    %4268 = vmatprep.subr.bf16.mxu0 %v3459
    %4269 = vmatpush1.bf16.msra.mxu0 %v3458
    %4270 = vmatprep.subr.bf16.mxu0 %v3468
    %4271 = vmatpush1.bf16.msra.mxu0 %v3467
    %4272 = vmatprep.subr.bf16.mxu0 %v3477
    %4273 = vmatpush1.bf16.msra.mxu0 %v3476
    %4274 = vmatprep.subr.bf16.mxu0 %v3486
    %4275 = vmatpush1.bf16.msra.mxu0 %v3485
    %4276 = vmatprep.subr.bf16.mxu0 %v3495
    %4277 = vmatpush1.bf16.msra.mxu0 %v3494
    %4278 = vmatprep.subr.bf16.mxu0 %v3504
    %4279 = vmatpush1.bf16.msra.mxu0 %v3503
    %4280 = vmatprep.subr.bf16.mxu0 %v3513
    %4281 = vmatpush1.bf16.msra.mxu0 %v3512
    %4282 = vmatprep.subr.bf16.mxu0 %v3522
    %4283 = vmatpush1.bf16.msra.mxu0 %v3521
    %4284 = vmatprep.subr.bf16.mxu0 %v3531
    %4285 = vmatpush1.bf16.msra.mxu0 %v3530
    %4286 = vmatprep.mubr.bf16.mxu0 %v1676
    %4287 = vmatmul.mubr.bf16.gmra.mrb[0].mxu0 %v1675
    %v4288 = vpop.f32.mrb[0].mxu0
    %v4289 = vadd.f32 %v4248, %v4288
    %v4290 = vpop.f32.mrb[0].mxu0
    %v4291 = vadd.f32 %v4250, %v4290
    %v4292 = vpop.f32.mrb[0].mxu0
    %v4293 = vpop.f32.mrb[0].mxu0
    %4294 = vdwg.mxu0
    %4295 = vmatprep.subr.bf16.mxu0 %v3540
    %4296 = vmatpush1.bf16.msra.mxu0 %v3539
    %4297 = vmatprep.subr.bf16.mxu0 %v3549
    %4298 = vmatpush1.bf16.msra.mxu0 %v3548
    %4299 = vmatprep.subr.bf16.mxu0 %v3558
    %4300 = vmatpush1.bf16.msra.mxu0 %v3557
    %4301 = vmatprep.subr.bf16.mxu0 %v3567
    %4302 = vmatpush1.bf16.msra.mxu0 %v3566
    %4303 = vmatprep.subr.bf16.mxu0 %v3576
    %4304 = vmatpush1.bf16.msra.mxu0 %v3575
    %4305 = vmatprep.subr.bf16.mxu0 %v3585
    %4306 = vmatpush1.bf16.msra.mxu0 %v3584
    %4307 = vmatprep.subr.bf16.mxu0 %v3594
    %4308 = vmatpush1.bf16.msra.mxu0 %v3593
    %4309 = vmatprep.subr.bf16.mxu0 %v3603
    %4310 = vmatpush1.bf16.msra.mxu0 %v3602
    %4311 = vmatprep.subr.bf16.mxu0 0
    %4312 = vmatpush1.bf16.msra.mxu0 0
    %4313 = vmatprep.subr.bf16.mxu0 0
    %4314 = vmatpush1.bf16.msra.mxu0 0
    %4315 = vmatprep.subr.bf16.mxu0 0
    %4316 = vmatpush1.bf16.msra.mxu0 0
    %4317 = vmatprep.subr.bf16.mxu0 0
    %4318 = vmatpush1.bf16.msra.mxu0 0
    %4319 = vmatprep.subr.bf16.mxu0 0
    %4320 = vmatpush1.bf16.msra.mxu0 0
    %4321 = vmatprep.subr.bf16.mxu0 0
    %4322 = vmatpush1.bf16.msra.mxu0 0
    %4323 = vmatprep.subr.bf16.mxu0 0
    %4324 = vmatpush1.bf16.msra.mxu0 0
    %4325 = vmatprep.subr.bf16.mxu0 0
    %4326 = vmatpush1.bf16.msra.mxu0 0
    %4327 = vmatprep.mubr.bf16.mxu0 0
    %4328 = vmatmul.mubr.bf16.gmra.mrb[0].mxu0 %v1677
    %v4329 = vpop.f32.mrb[0].mxu0
    %v4330 = vadd.f32 %v4289, %v4329
    %v4331 = vpop.f32.mrb[0].mxu0
    %v4332 = vadd.f32 %v4291, %v4331
    %v4333 = vpop.f32.mrb[0].mxu0
    %v4334 = vpop.f32.mrb[0].mxu0
    %4335 = vdwg.mxu0
    %4336 = vmatprep.subr.bf16.mxu0 %v3254
    %4337 = vmatpush1.bf16.msra.mxu0 %v3253
    %4338 = vmatprep.subr.bf16.mxu0 %v3263
    %4339 = vmatpush1.bf16.msra.mxu0 %v3262
    %4340 = vmatprep.subr.bf16.mxu0 %v3272
    %4341 = vmatpush1.bf16.msra.mxu0 %v3271
    %4342 = vmatprep.subr.bf16.mxu0 %v3281
    %4343 = vmatpush1.bf16.msra.mxu0 %v3280
    %4344 = vmatprep.subr.bf16.mxu0 %v3290
    %4345 = vmatpush1.bf16.msra.mxu0 %v3289
    %4346 = vmatprep.subr.bf16.mxu0 %v3299
    %4347 = vmatpush1.bf16.msra.mxu0 %v3298
    %4348 = vmatprep.subr.bf16.mxu0 %v3308
    %4349 = vmatpush1.bf16.msra.mxu0 %v3307
    %4350 = vmatprep.subr.bf16.mxu0 %v3317
    %4351 = vmatpush1.bf16.msra.mxu0 %v3316
    %4352 = vmatprep.subr.bf16.mxu0 %v3326
    %4353 = vmatpush1.bf16.msra.mxu0 %v3325
    %4354 = vmatprep.subr.bf16.mxu0 %v3335
    %4355 = vmatpush1.bf16.msra.mxu0 %v3334
    %4356 = vmatprep.subr.bf16.mxu0 %v3344
    %4357 = vmatpush1.bf16.msra.mxu0 %v3343
    %4358 = vmatprep.subr.bf16.mxu0 %v3353
    %4359 = vmatpush1.bf16.msra.mxu0 %v3352
    %4360 = vmatprep.subr.bf16.mxu0 %v3362
    %4361 = vmatpush1.bf16.msra.mxu0 %v3361
    %4362 = vmatprep.subr.bf16.mxu0 %v3371
    %4363 = vmatpush1.bf16.msra.mxu0 %v3370
    %4364 = vmatprep.subr.bf16.mxu0 %v3380
    %4365 = vmatpush1.bf16.msra.mxu0 %v3379
    %4366 = vmatprep.subr.bf16.mxu0 %v3389
    %4367 = vmatpush1.bf16.msra.mxu0 %v3388
    %4368 = vmatprep.mubr.bf16.mxu0 %v1674
    %4369 = vmatmul.mubr.bf16.gmra.mrb[0].mxu0 %v1673
    %v4370 = vpop.f32.mrb[0].mxu0
    %v4371 = vadd.f32 %v2109, %v4370
    %v4372 = vpop.f32.mrb[0].mxu0
    %v4373 = vadd.f32 %v2113, %v4372
    %v4374 = vpop.f32.mrb[0].mxu0
    %v4375 = vpop.f32.mrb[0].mxu0
    %4376 = vdwg.mxu0
    %4377 = vmatprep.subr.bf16.mxu0 %v3398
    %4378 = vmatpush1.bf16.msra.mxu0 %v3397
    %4379 = vmatprep.subr.bf16.mxu0 %v3407
    %4380 = vmatpush1.bf16.msra.mxu0 %v3406
    %4381 = vmatprep.subr.bf16.mxu0 %v3416
    %4382 = vmatpush1.bf16.msra.mxu0 %v3415
    %4383 = vmatprep.subr.bf16.mxu0 %v3425
    %4384 = vmatpush1.bf16.msra.mxu0 %v3424
    %4385 = vmatprep.subr.bf16.mxu0 %v3434
    %4386 = vmatpush1.bf16.msra.mxu0 %v3433
    %4387 = vmatprep.subr.bf16.mxu0 %v3443
    %4388 = vmatpush1.bf16.msra.mxu0 %v3442
    %4389 = vmatprep.subr.bf16.mxu0 %v3452
    %4390 = vmatpush1.bf16.msra.mxu0 %v3451
    %4391 = vmatprep.subr.bf16.mxu0 %v3461
    %4392 = vmatpush1.bf16.msra.mxu0 %v3460
    %4393 = vmatprep.subr.bf16.mxu0 %v3470
    %4394 = vmatpush1.bf16.msra.mxu0 %v3469
    %4395 = vmatprep.subr.bf16.mxu0 %v3479
    %4396 = vmatpush1.bf16.msra.mxu0 %v3478
    %4397 = vmatprep.subr.bf16.mxu0 %v3488
    %4398 = vmatpush1.bf16.msra.mxu0 %v3487
    %4399 = vmatprep.subr.bf16.mxu0 %v3497
    %4400 = vmatpush1.bf16.msra.mxu0 %v3496
    %4401 = vmatprep.subr.bf16.mxu0 %v3506
    %4402 = vmatpush1.bf16.msra.mxu0 %v3505
    %4403 = vmatprep.subr.bf16.mxu0 %v3515
    %4404 = vmatpush1.bf16.msra.mxu0 %v3514
    %4405 = vmatprep.subr.bf16.mxu0 %v3524
    %4406 = vmatpush1.bf16.msra.mxu0 %v3523
    %4407 = vmatprep.subr.bf16.mxu0 %v3533
    %4408 = vmatpush1.bf16.msra.mxu0 %v3532
    %4409 = vmatprep.mubr.bf16.mxu0 %v1676
    %4410 = vmatmul.mubr.bf16.gmra.mrb[0].mxu0 %v1675
    %v4411 = vpop.f32.mrb[0].mxu0
    %v4412 = vadd.f32 %v4371, %v4411
    %v4413 = vpop.f32.mrb[0].mxu0
    %v4414 = vadd.f32 %v4373, %v4413
    %v4415 = vpop.f32.mrb[0].mxu0
    %v4416 = vpop.f32.mrb[0].mxu0
    %4417 = vdwg.mxu0
    %4418 = vmatprep.subr.bf16.mxu0 %v3542
    %4419 = vmatpush1.bf16.msra.mxu0 %v3541
    %4420 = vmatprep.subr.bf16.mxu0 %v3551
    %4421 = vmatpush1.bf16.msra.mxu0 %v3550
    %4422 = vmatprep.subr.bf16.mxu0 %v3560
    %4423 = vmatpush1.bf16.msra.mxu0 %v3559
    %4424 = vmatprep.subr.bf16.mxu0 %v3569
    %4425 = vmatpush1.bf16.msra.mxu0 %v3568
    %4426 = vmatprep.subr.bf16.mxu0 %v3578
    %4427 = vmatpush1.bf16.msra.mxu0 %v3577
    %4428 = vmatprep.subr.bf16.mxu0 %v3587
    %4429 = vmatpush1.bf16.msra.mxu0 %v3586
    %4430 = vmatprep.subr.bf16.mxu0 %v3596
    %4431 = vmatpush1.bf16.msra.mxu0 %v3595
    %4432 = vmatprep.subr.bf16.mxu0 %v3605
    %4433 = vmatpush1.bf16.msra.mxu0 %v3604
    %4434 = vmatprep.subr.bf16.mxu0 0
    %4435 = vmatpush1.bf16.msra.mxu0 0
    %4436 = vmatprep.subr.bf16.mxu0 0
    %4437 = vmatpush1.bf16.msra.mxu0 0
    %4438 = vmatprep.subr.bf16.mxu0 0
    %4439 = vmatpush1.bf16.msra.mxu0 0
    %4440 = vmatprep.subr.bf16.mxu0 0
    %4441 = vmatpush1.bf16.msra.mxu0 0
    %4442 = vmatprep.subr.bf16.mxu0 0
    %4443 = vmatpush1.bf16.msra.mxu0 0
    %4444 = vmatprep.subr.bf16.mxu0 0
    %4445 = vmatpush1.bf16.msra.mxu0 0
    %4446 = vmatprep.subr.bf16.mxu0 0
    %4447 = vmatpush1.bf16.msra.mxu0 0
    %4448 = vmatprep.subr.bf16.mxu0 0
    %4449 = vmatpush1.bf16.msra.mxu0 0
    %4450 = vmatprep.mubr.bf16.mxu0 0
    %4451 = vmatmul.mubr.bf16.gmra.mrb[0].mxu0 %v1677
    %v4452 = vpop.f32.mrb[0].mxu0
    %v4453 = vadd.f32 %v4412, %v4452
    %v4454 = vpop.f32.mrb[0].mxu0
    %v4455 = vadd.f32 %v4414, %v4454
    %v4456 = vpop.f32.mrb[0].mxu0
    %v4457 = vpop.f32.mrb[0].mxu0
    %4458 = vdwg.mxu0
    %4459 = vmatprep.subr.bf16.mxu0 0
    %4460 = vmatpush1.bf16.msra.mxu0 %v3255
    %4461 = vmatprep.subr.bf16.mxu0 0
    %4462 = vmatpush1.bf16.msra.mxu0 %v3264
    %4463 = vmatprep.subr.bf16.mxu0 0
    %4464 = vmatpush1.bf16.msra.mxu0 %v3273
    %4465 = vmatprep.subr.bf16.mxu0 0
    %4466 = vmatpush1.bf16.msra.mxu0 %v3282
    %4467 = vmatprep.subr.bf16.mxu0 0
    %4468 = vmatpush1.bf16.msra.mxu0 %v3291
    %4469 = vmatprep.subr.bf16.mxu0 0
    %4470 = vmatpush1.bf16.msra.mxu0 %v3300
    %4471 = vmatprep.subr.bf16.mxu0 0
    %4472 = vmatpush1.bf16.msra.mxu0 %v3309
    %4473 = vmatprep.subr.bf16.mxu0 0
    %4474 = vmatpush1.bf16.msra.mxu0 %v3318
    %4475 = vmatprep.subr.bf16.mxu0 0
    %4476 = vmatpush1.bf16.msra.mxu0 %v3327
    %4477 = vmatprep.subr.bf16.mxu0 0
    %4478 = vmatpush1.bf16.msra.mxu0 %v3336
    %4479 = vmatprep.subr.bf16.mxu0 0
    %4480 = vmatpush1.bf16.msra.mxu0 %v3345
    %4481 = vmatprep.subr.bf16.mxu0 0
    %4482 = vmatpush1.bf16.msra.mxu0 %v3354
    %4483 = vmatprep.subr.bf16.mxu0 0
    %4484 = vmatpush1.bf16.msra.mxu0 %v3363
    %4485 = vmatprep.subr.bf16.mxu0 0
    %4486 = vmatpush1.bf16.msra.mxu0 %v3372
    %4487 = vmatprep.subr.bf16.mxu0 0
    %4488 = vmatpush1.bf16.msra.mxu0 %v3381
    %4489 = vmatprep.subr.bf16.mxu0 0
    %4490 = vmatpush1.bf16.msra.mxu0 %v3390
    %4491 = vmatprep.mubr.bf16.mxu0 %v1674
    %4492 = vmatmul.mubr.bf16.gmra.mrb[0].mxu0 %v1673
    %v4493 = vpop.f32.mrb[0].mxu0
    %v4494 = vadd.f32 %v2117, %v4493
    %v4495 = vpop.f32.mrb[0].mxu0
    %v4496 = vpop.f32.mrb[0].mxu0
    %v4497 = vpop.f32.mrb[0].mxu0
    %4498 = vdwg.mxu0
    %4499 = vmatprep.subr.bf16.mxu0 0
    %4500 = vmatpush1.bf16.msra.mxu0 %v3399
    %4501 = vmatprep.subr.bf16.mxu0 0
    %4502 = vmatpush1.bf16.msra.mxu0 %v3408
    %4503 = vmatprep.subr.bf16.mxu0 0
    %4504 = vmatpush1.bf16.msra.mxu0 %v3417
    %4505 = vmatprep.subr.bf16.mxu0 0
    %4506 = vmatpush1.bf16.msra.mxu0 %v3426
    %4507 = vmatprep.subr.bf16.mxu0 0
    %4508 = vmatpush1.bf16.msra.mxu0 %v3435
    %4509 = vmatprep.subr.bf16.mxu0 0
    %4510 = vmatpush1.bf16.msra.mxu0 %v3444
    %4511 = vmatprep.subr.bf16.mxu0 0
    %4512 = vmatpush1.bf16.msra.mxu0 %v3453
    %4513 = vmatprep.subr.bf16.mxu0 0
    %4514 = vmatpush1.bf16.msra.mxu0 %v3462
    %4515 = vmatprep.subr.bf16.mxu0 0
    %4516 = vmatpush1.bf16.msra.mxu0 %v3471
    %4517 = vmatprep.subr.bf16.mxu0 0
    %4518 = vmatpush1.bf16.msra.mxu0 %v3480
    %4519 = vmatprep.subr.bf16.mxu0 0
    %4520 = vmatpush1.bf16.msra.mxu0 %v3489
    %4521 = vmatprep.subr.bf16.mxu0 0
    %4522 = vmatpush1.bf16.msra.mxu0 %v3498
    %4523 = vmatprep.subr.bf16.mxu0 0
    %4524 = vmatpush1.bf16.msra.mxu0 %v3507
    %4525 = vmatprep.subr.bf16.mxu0 0
    %4526 = vmatpush1.bf16.msra.mxu0 %v3516
    %4527 = vmatprep.subr.bf16.mxu0 0
    %4528 = vmatpush1.bf16.msra.mxu0 %v3525
    %4529 = vmatprep.subr.bf16.mxu0 0
    %4530 = vmatpush1.bf16.msra.mxu0 %v3534
    %4531 = vmatprep.mubr.bf16.mxu0 %v1676
    %4532 = vmatmul.mubr.bf16.gmra.mrb[0].mxu0 %v1675
    %v4533 = vpop.f32.mrb[0].mxu0
    %v4534 = vadd.f32 %v4494, %v4533
    %v4535 = vpop.f32.mrb[0].mxu0
    %v4536 = vpop.f32.mrb[0].mxu0
    %v4537 = vpop.f32.mrb[0].mxu0
    %4538 = vdwg.mxu0
    %4539 = vmatprep.subr.bf16.mxu0 0
    %4540 = vmatpush1.bf16.msra.mxu0 %v3543
    %4541 = vmatprep.subr.bf16.mxu0 0
    %4542 = vmatpush1.bf16.msra.mxu0 %v3552
    %4543 = vmatprep.subr.bf16.mxu0 0
    %4544 = vmatpush1.bf16.msra.mxu0 %v3561
    %4545 = vmatprep.subr.bf16.mxu0 0
    %4546 = vmatpush1.bf16.msra.mxu0 %v3570
    %4547 = vmatprep.subr.bf16.mxu0 0
    %4548 = vmatpush1.bf16.msra.mxu0 %v3579
    %4549 = vmatprep.subr.bf16.mxu0 0
    %4550 = vmatpush1.bf16.msra.mxu0 %v3588
    %4551 = vmatprep.subr.bf16.mxu0 0
    %4552 = vmatpush1.bf16.msra.mxu0 %v3597
    %4553 = vmatprep.subr.bf16.mxu0 0
    %4554 = vmatpush1.bf16.msra.mxu0 %v3606
    %4555 = vmatprep.subr.bf16.mxu0 0
    %4556 = vmatpush1.bf16.msra.mxu0 0
    %4557 = vmatprep.subr.bf16.mxu0 0
    %4558 = vmatpush1.bf16.msra.mxu0 0
    %4559 = vmatprep.subr.bf16.mxu0 0
    %4560 = vmatpush1.bf16.msra.mxu0 0
    %4561 = vmatprep.subr.bf16.mxu0 0
    %4562 = vmatpush1.bf16.msra.mxu0 0
    %4563 = vmatprep.subr.bf16.mxu0 0
    %4564 = vmatpush1.bf16.msra.mxu0 0
    %4565 = vmatprep.subr.bf16.mxu0 0
    %4566 = vmatpush1.bf16.msra.mxu0 0
    %4567 = vmatprep.subr.bf16.mxu0 0
    %4568 = vmatpush1.bf16.msra.mxu0 0
    %4569 = vmatprep.subr.bf16.mxu0 0
    %4570 = vmatpush1.bf16.msra.mxu0 0
    %4571 = vmatprep.mubr.bf16.mxu0 0
    %4572 = vmatmul.mubr.bf16.gmra.mrb[0].mxu0 %v1677
    %v4573 = vpop.f32.mrb[0].mxu0
    %v4574 = vadd.f32 %v4534, %v4573
    %v4575 = vpop.f32.mrb[0].mxu0
    %v4576 = vpop.f32.mrb[0].mxu0
    %v4577 = vpop.f32.mrb[0].mxu0
    %4578 = vdwg.mxu0
    %vm4579 = vcmp.ge.f32.partialorder %v4084, 0.0
    %vm4580 = vcmp.ge.f32.partialorder %v4086, 0.0
    %vm4581 = vcmp.ge.f32.partialorder %v4207, 0.0
    %vm4582 = vcmp.ge.f32.partialorder %v4209, 0.0
    %vm4583 = vcmp.ge.f32.partialorder %v4330, 0.0
    %vm4584 = vcmp.ge.f32.partialorder %v4332, 0.0
    %vm4585 = vcmp.ge.f32.partialorder %v4453, 0.0
    %vm4586 = vcmp.ge.f32.partialorder %v4455, 0.0
    %vm4587 = vcmp.ge.f32.partialorder %v4574, 0.0
    %v4588 = vmul.f32 %v4084, 0.02
    %v4589 = vmul.f32 %v4086, 0.02
    %v4590 = vmul.f32 %v4207, 0.02
    %v4591 = vmul.f32 %v4209, 0.02
    %v4592 = vmul.f32 %v4330, 0.02
    %v4593 = vmul.f32 %v4332, 0.02
    %v4594 = vmul.f32 %v4453, 0.02
    %v4595 = vmul.f32 %v4455, 0.02
    %v4596 = vmul.f32 %v4574, 0.02
    %v4597 = vsel %vm4579, %v4084, %v4588
    %v4598 = vsel %vm4580, %v4086, %v4589
    %v4599 = vsel %vm4581, %v4207, %v4590
    %v4600 = vsel %vm4582, %v4209, %v4591
    %v4601 = vsel %vm4583, %v4330, %v4592
    %v4602 = vsel %vm4584, %v4332, %v4593
    %v4603 = vsel %vm4585, %v4453, %v4594
    %v4604 = vsel %vm4586, %v4455, %v4595
    %v4605 = vsel %vm4587, %v4574, %v4596
    %v4606 = vpack.c.bf16 %v4597, %v4597
    %v4607 = vpack.c.bf16 %v4598, %v4598
    %v4608 = vpack.c.bf16 %v4599, %v4599
    %v4609 = vpack.c.bf16 %v4600, %v4600
    %v4610 = vpack.c.bf16 %v4601, %v4601
    %v4611 = vpack.c.bf16 %v4602, %v4602
    %v4612 = vpack.c.bf16 %v4603, %v4603
    %v4613 = vpack.c.bf16 %v4604, %v4604
    %v4614 = vpack.c.bf16 %v4605, %v4605
    %v4615 = vld [vmem:[#allocation11] sm:$0xf]
    %v4616 = vld [vmem:[#allocation11 + $0x4] sm:$0xf]
    %v4617 = vld [vmem:[#allocation11 + $0x8] sm:$0xf]
    %v4618 = vld [vmem:[#allocation11 + $0xc] sm:$0xf]
    %v4619 = vld [vmem:[#allocation11 + $0x10] sm:$0xf]
    %v4620 = vld [vmem:[#allocation11 + $0x14] sm:$0xf]
    %v4621 = vld [vmem:[#allocation11 + $0x18] sm:$0xf]
    %v4622 = vld [vmem:[#allocation11 + $0x1c] sm:$0xf]
    %v4623 = vld [vmem:[#allocation11 + $0x20] sm:$0xf]
    %v4624 = vld [vmem:[#allocation11 + $0x24] sm:$0xf]
    %v4625 = vld [vmem:[#allocation11 + $0x28] sm:$0xf]
    %v4626 = vld [vmem:[#allocation11 + $0x2c] sm:$0xf]
    %v4627 = vld [vmem:[#allocation11 + $0x30] sm:$0xf]
    %v4628 = vld [vmem:[#allocation11 + $0x34] sm:$0xf]
    %v4629 = vld [vmem:[#allocation11 + $0x38] sm:$0xf]
    %v4630 = vld [vmem:[#allocation11 + $0x3c] sm:$0xf]
    %v4631 = vld [vmem:[#allocation11 + $0x40] sm:$0xf]
    %v4632 = vld [vmem:[#allocation11 + $0x44] sm:$0xf]
    %v4633 = vld [vmem:[#allocation11 + $0x48] sm:$0xf]
    %v4634 = vld [vmem:[#allocation11 + $0x4c] sm:$0xf]
    %v4635 = vld [vmem:[#allocation11 + $0x50] sm:$0xf]
    %v4636 = vld [vmem:[#allocation11 + $0x54] sm:$0xf]
    %v4637 = vld [vmem:[#allocation11 + $0x58] sm:$0xf]
    %v4638 = vld [vmem:[#allocation11 + $0x5c] sm:$0xf]
    %v4639 = vld [vmem:[#allocation11 + $0x60] sm:$0xf]
    %v4640 = vld [vmem:[#allocation11 + $0x64] sm:$0xf]
    %v4641 = vld [vmem:[#allocation11 + $0x68] sm:$0xf]
    %v4642 = vld [vmem:[#allocation11 + $0x6c] sm:$0xf]
    %v4643 = vld [vmem:[#allocation11 + $0x70] sm:$0xf]
    %v4644 = vld [vmem:[#allocation11 + $0x74] sm:$0xf]
    %v4645 = vld [vmem:[#allocation11 + $0x78] sm:$0xf]
    %v4646 = vld [vmem:[#allocation11 + $0x7c] sm:$0xf]
    %v4647 = vld [vmem:[#allocation11 + $0x80] sm:$0xf]
    %v4648 = vld [vmem:[#allocation11 + $0x84] sm:$0xf]
    %v4649 = vld [vmem:[#allocation11 + $0x88] sm:$0xf]
    %v4650 = vld [vmem:[#allocation11 + $0x8c] sm:$0xf]
    %v4651 = vld [vmem:[#allocation11 + $0x90] sm:$0xf]
    %v4652 = vld [vmem:[#allocation11 + $0x94] sm:$0xf]
    %v4653 = vld [vmem:[#allocation11 + $0x98] sm:$0xf]
    %v4654 = vld [vmem:[#allocation11 + $0x9c] sm:$0xf]
    %v4655 = vld [vmem:[#allocation11 + $0xa0] sm:$0xf]
    %v4656 = vld [vmem:[#allocation11 + $0xa4] sm:$0xf]
    %v4657 = vld [vmem:[#allocation11 + $0xa8] sm:$0xf]
    %v4658 = vld [vmem:[#allocation11 + $0xac] sm:$0xf]
    %v4659 = vld [vmem:[#allocation11 + $0xb0] sm:$0xf]
    %v4660 = vld [vmem:[#allocation11 + $0xb4] sm:$0xf]
    %v4661 = vld [vmem:[#allocation11 + $0xb8] sm:$0xf]
    %v4662 = vld [vmem:[#allocation11 + $0xbc] sm:$0xf]
    %v4663 = vld [vmem:[#allocation11 + $0xc0] sm:$0xf]
    %v4664 = vld [vmem:[#allocation11 + $0xc4] sm:$0xf]
    %v4665 = vld [vmem:[#allocation11 + $0xc8] sm:$0xf]
    %v4666 = vld [vmem:[#allocation11 + $0xcc] sm:$0xf]
    %v4667 = vld [vmem:[#allocation11 + $0xd0] sm:$0xf]
    %v4668 = vld [vmem:[#allocation11 + $0xd4] sm:$0xf]
    %v4669 = vld [vmem:[#allocation11 + $0xd8] sm:$0xf]
    %v4670 = vld [vmem:[#allocation11 + $0xdc] sm:$0xf]
    %v4671 = vld [vmem:[#allocation11 + $0xe0] sm:$0xf]
    %v4672 = vld [vmem:[#allocation11 + $0xe4] sm:$0xf]
    %v4673 = vld [vmem:[#allocation11 + $0xe8] sm:$0xf]
    %v4674 = vld [vmem:[#allocation11 + $0xec] sm:$0xf]
    %v4675 = vld [vmem:[#allocation11 + $0xf0] sm:$0xf]
    %v4676 = vld [vmem:[#allocation11 + $0xf4] sm:$0xf]
    %v4677 = vld [vmem:[#allocation11 + $0xf8] sm:$0xf]
    %v4678 = vld [vmem:[#allocation11 + $0xfc] sm:$0xf]
    %v4679 = vld [vmem:[#allocation11 + $0x100] sm:$0xf]
    %v4680 = vld [vmem:[#allocation11 + $0x104] sm:$0xf]
    %v4681 = vld [vmem:[#allocation11 + $0x108] sm:$0xf]
    %v4682 = vld [vmem:[#allocation11 + $0x10c] sm:$0xf]
    %v4683 = vld [vmem:[#allocation11 + $0x110] sm:$0xf]
    %v4684 = vld [vmem:[#allocation11 + $0x114] sm:$0xf]
    %v4685 = vld [vmem:[#allocation11 + $0x118] sm:$0xf]
    %v4686 = vld [vmem:[#allocation11 + $0x11c] sm:$0xf]
    %v4687 = vld [vmem:[#allocation11 + $0x120] sm:$0xf]
    %v4688 = vld [vmem:[#allocation11 + $0x124] sm:$0xf]
    %v4689 = vld [vmem:[#allocation11 + $0x128] sm:$0xf]
    %v4690 = vld [vmem:[#allocation11 + $0x12c] sm:$0xf]
    %v4691 = vld [vmem:[#allocation11 + $0x130] sm:$0xf]
    %v4692 = vld [vmem:[#allocation11 + $0x134] sm:$0xf]
    %v4693 = vld [vmem:[#allocation11 + $0x138] sm:$0xf]
    %v4694 = vld [vmem:[#allocation11 + $0x13c] sm:$0xf]
    %v4695 = vld [vmem:[#allocation11 + $0x140] sm:$0xf]
    %v4696 = vld [vmem:[#allocation11 + $0x144] sm:$0xf]
    %v4697 = vld [vmem:[#allocation11 + $0x148] sm:$0xf]
    %v4698 = vld [vmem:[#allocation11 + $0x14c] sm:$0xf]
    %v4699 = vld [vmem:[#allocation11 + $0x150] sm:$0xf]
    %v4700 = vld [vmem:[#allocation11 + $0x154] sm:$0xf]
    %v4701 = vld [vmem:[#allocation11 + $0x158] sm:$0xf]
    %v4702 = vld [vmem:[#allocation11 + $0x15c] sm:$0xf]
    %v4703 = vld [vmem:[#allocation11 + $0x160] sm:$0xf]
    %v4704 = vld [vmem:[#allocation11 + $0x164] sm:$0xf]
    %v4705 = vld [vmem:[#allocation11 + $0x168] sm:$0xf]
    %v4706 = vld [vmem:[#allocation11 + $0x16c] sm:$0xf]
    %v4707 = vld [vmem:[#allocation11 + $0x170] sm:$0xf]
    %v4708 = vld [vmem:[#allocation11 + $0x174] sm:$0xf]
    %v4709 = vld [vmem:[#allocation11 + $0x178] sm:$0xf]
    %v4710 = vld [vmem:[#allocation11 + $0x17c] sm:$0xf]
    %v4711 = vld [vmem:[#allocation11 + $0x180] sm:$0xf]
    %v4712 = vld [vmem:[#allocation11 + $0x184] sm:$0xf]
    %v4713 = vld [vmem:[#allocation11 + $0x188] sm:$0xf]
    %v4714 = vld [vmem:[#allocation11 + $0x18c] sm:$0xf]
    %v4715 = vld [vmem:[#allocation11 + $0x190] sm:$0xf]
    %v4716 = vld [vmem:[#allocation11 + $0x194] sm:$0xf]
    %v4717 = vld [vmem:[#allocation11 + $0x198] sm:$0xf]
    %v4718 = vld [vmem:[#allocation11 + $0x19c] sm:$0xf]
    %v4719 = vld [vmem:[#allocation11 + $0x1a0] sm:$0xf]
    %v4720 = vld [vmem:[#allocation11 + $0x1a4] sm:$0xf]
    %v4721 = vld [vmem:[#allocation11 + $0x1a8] sm:$0xf]
    %v4722 = vld [vmem:[#allocation11 + $0x1ac] sm:$0xf]
    %v4723 = vld [vmem:[#allocation11 + $0x1b0] sm:$0xf]
    %v4724 = vld [vmem:[#allocation11 + $0x1b4] sm:$0xf]
    %v4725 = vld [vmem:[#allocation11 + $0x1b8] sm:$0xf]
    %v4726 = vld [vmem:[#allocation11 + $0x1bc] sm:$0xf]
    %v4727 = vld [vmem:[#allocation11 + $0x1c0] sm:$0xf]
    %v4728 = vld [vmem:[#allocation11 + $0x1c4] sm:$0xf]
    %v4729 = vld [vmem:[#allocation11 + $0x1c8] sm:$0xf]
    %v4730 = vld [vmem:[#allocation11 + $0x1cc] sm:$0xf]
    %v4731 = vld [vmem:[#allocation11 + $0x1d0] sm:$0xf]
    %v4732 = vld [vmem:[#allocation11 + $0x1d4] sm:$0xf]
    %v4733 = vld [vmem:[#allocation11 + $0x1d8] sm:$0xf]
    %v4734 = vld [vmem:[#allocation11 + $0x1dc] sm:$0xf]
    %v4735 = vld [vmem:[#allocation11 + $0x1e0] sm:$0xf]
    %v4736 = vld [vmem:[#allocation11 + $0x1e4] sm:$0xf]
    %v4737 = vld [vmem:[#allocation11 + $0x1e8] sm:$0xf]
    %v4738 = vld [vmem:[#allocation11 + $0x1ec] sm:$0xf]
    %v4739 = vld [vmem:[#allocation11 + $0x1f0] sm:$0xf]
    %v4740 = vld [vmem:[#allocation11 + $0x1f4] sm:$0xf]
    %v4741 = vld [vmem:[#allocation11 + $0x1f8] sm:$0xf]
    %v4742 = vld [vmem:[#allocation11 + $0x1fc] sm:$0xf]
    %v4743 = vld [vmem:[#allocation11 + $0x200] sm:$0xf]
    %v4744 = vld [vmem:[#allocation11 + $0x204] sm:$0xf]
    %v4745 = vld [vmem:[#allocation11 + $0x208] sm:$0xf]
    %v4746 = vld [vmem:[#allocation11 + $0x20c] sm:$0xf]
    %v4747 = vld [vmem:[#allocation11 + $0x210] sm:$0xf]
    %v4748 = vld [vmem:[#allocation11 + $0x214] sm:$0xf]
    %v4749 = vld [vmem:[#allocation11 + $0x218] sm:$0xf]
    %v4750 = vld [vmem:[#allocation11 + $0x21c] sm:$0xf]
    %v4751 = vld [vmem:[#allocation11 + $0x220] sm:$0xf]
    %v4752 = vld [vmem:[#allocation11 + $0x224] sm:$0xf]
    %v4753 = vld [vmem:[#allocation11 + $0x228] sm:$0xf]
    %v4754 = vld [vmem:[#allocation11 + $0x22c] sm:$0xf]
    %v4755 = vld [vmem:[#allocation11 + $0x230] sm:$0xf]
    %v4756 = vld [vmem:[#allocation11 + $0x234] sm:$0xf]
    %v4757 = vld [vmem:[#allocation11 + $0x238] sm:$0xf]
    %v4758 = vld [vmem:[#allocation11 + $0x23c] sm:$0xf]
    %v4759 = vld [vmem:[#allocation13] sm:$0x1]
    %v4761 = vlaneseq
    %v4762 = vshrl.u32 %v4761, 7
    %v4763 = vsub.s32 0, %v4762
    %v4764 = vrot.slane %v4759, %v4763
    %v4910 = vunpack.c.l.b16 %v4615
    %v4911 = vunpack.c.l.b16 %v4616
    %v4912 = vunpack.c.l.b16 %v4617
    %v4913 = vunpack.c.l.b16 %v4618
    %v4914 = vunpack.c.l.b16 %v4619
    %v4915 = vunpack.c.l.b16 %v4620
    %v4916 = vunpack.c.l.b16 %v4621
    %v4917 = vunpack.c.l.b16 %v4622
    %v4918 = vunpack.c.l.b16 %v4623
    %v4919 = vunpack.c.l.b16 %v4624
    %v4920 = vunpack.c.l.b16 %v4625
    %v4921 = vunpack.c.l.b16 %v4626
    %v4922 = vunpack.c.l.b16 %v4627
    %v4923 = vunpack.c.l.b16 %v4628
    %v4924 = vunpack.c.l.b16 %v4629
    %v4925 = vunpack.c.l.b16 %v4630
    %v4926 = vunpack.c.l.b16 %v4631
    %v4927 = vunpack.c.l.b16 %v4632
    %v4928 = vunpack.c.l.b16 %v4633
    %v4929 = vunpack.c.l.b16 %v4634
    %v4930 = vunpack.c.l.b16 %v4635
    %v4931 = vunpack.c.l.b16 %v4636
    %v4932 = vunpack.c.l.b16 %v4637
    %v4933 = vunpack.c.l.b16 %v4638
    %v4934 = vunpack.c.l.b16 %v4639
    %v4935 = vunpack.c.l.b16 %v4640
    %v4936 = vunpack.c.l.b16 %v4641
    %v4937 = vunpack.c.l.b16 %v4642
    %v4938 = vunpack.c.l.b16 %v4643
    %v4939 = vunpack.c.l.b16 %v4644
    %v4940 = vunpack.c.l.b16 %v4645
    %v4941 = vunpack.c.l.b16 %v4646
    %v4942 = vunpack.c.l.b16 %v4647
    %v4943 = vunpack.c.l.b16 %v4648
    %v4944 = vunpack.c.l.b16 %v4649
    %v4945 = vunpack.c.l.b16 %v4650
    %v4946 = vunpack.c.l.b16 %v4651
    %v4947 = vunpack.c.l.b16 %v4652
    %v4948 = vunpack.c.l.b16 %v4653
    %v4949 = vunpack.c.l.b16 %v4654
    %v4950 = vunpack.c.l.b16 %v4655
    %v4951 = vunpack.c.l.b16 %v4656
    %v4952 = vunpack.c.l.b16 %v4657
    %v4953 = vunpack.c.l.b16 %v4658
    %v4954 = vunpack.c.l.b16 %v4659
    %v4955 = vunpack.c.l.b16 %v4660
    %v4956 = vunpack.c.l.b16 %v4661
    %v4957 = vunpack.c.l.b16 %v4662
    %v4958 = vunpack.c.l.b16 %v4663
    %v4959 = vunpack.c.l.b16 %v4664
    %v4960 = vunpack.c.l.b16 %v4665
    %v4961 = vunpack.c.l.b16 %v4666
    %v4962 = vunpack.c.l.b16 %v4667
    %v4963 = vunpack.c.l.b16 %v4668
    %v4964 = vunpack.c.l.b16 %v4669
    %v4965 = vunpack.c.l.b16 %v4670
    %v4966 = vunpack.c.l.b16 %v4671
    %v4967 = vunpack.c.l.b16 %v4672
    %v4968 = vunpack.c.l.b16 %v4673
    %v4969 = vunpack.c.l.b16 %v4674
    %v4970 = vunpack.c.l.b16 %v4675
    %v4971 = vunpack.c.l.b16 %v4676
    %v4972 = vunpack.c.l.b16 %v4677
    %v4973 = vunpack.c.l.b16 %v4678
    %v4974 = vunpack.c.l.b16 %v4679
    %v4975 = vunpack.c.l.b16 %v4680
    %v4976 = vunpack.c.l.b16 %v4681
    %v4977 = vunpack.c.l.b16 %v4682
    %v4978 = vunpack.c.l.b16 %v4683
    %v4979 = vunpack.c.l.b16 %v4684
    %v4980 = vunpack.c.l.b16 %v4685
    %v4981 = vunpack.c.l.b16 %v4686
    %v4982 = vunpack.c.l.b16 %v4687
    %v4983 = vunpack.c.l.b16 %v4688
    %v4984 = vunpack.c.l.b16 %v4689
    %v4985 = vunpack.c.l.b16 %v4690
    %v4986 = vunpack.c.l.b16 %v4691
    %v4987 = vunpack.c.l.b16 %v4692
    %v4988 = vunpack.c.l.b16 %v4693
    %v4989 = vunpack.c.l.b16 %v4694
    %v4990 = vunpack.c.l.b16 %v4695
    %v4991 = vunpack.c.l.b16 %v4696
    %v4992 = vunpack.c.l.b16 %v4697
    %v4993 = vunpack.c.l.b16 %v4698
    %v4994 = vunpack.c.l.b16 %v4699
    %v4995 = vunpack.c.l.b16 %v4700
    %v4996 = vunpack.c.l.b16 %v4701
    %v4997 = vunpack.c.l.b16 %v4702
    %v4998 = vunpack.c.l.b16 %v4703
    %v4999 = vunpack.c.l.b16 %v4704
    %v5000 = vunpack.c.l.b16 %v4705
    %v5001 = vunpack.c.l.b16 %v4706
    %v5002 = vunpack.c.l.b16 %v4707
    %v5003 = vunpack.c.l.b16 %v4708
    %v5004 = vunpack.c.l.b16 %v4709
    %v5005 = vunpack.c.l.b16 %v4710
    %v5006 = vunpack.c.l.b16 %v4711
    %v5007 = vunpack.c.l.b16 %v4712
    %v5008 = vunpack.c.l.b16 %v4713
    %v5009 = vunpack.c.l.b16 %v4714
    %v5010 = vunpack.c.l.b16 %v4715
    %v5011 = vunpack.c.l.b16 %v4716
    %v5012 = vunpack.c.l.b16 %v4717
    %v5013 = vunpack.c.l.b16 %v4718
    %v5014 = vunpack.c.l.b16 %v4719
    %v5015 = vunpack.c.l.b16 %v4720
    %v5016 = vunpack.c.l.b16 %v4721
    %v5017 = vunpack.c.l.b16 %v4722
    %v5018 = vunpack.c.l.b16 %v4723
    %v5019 = vunpack.c.l.b16 %v4724
    %v5020 = vunpack.c.l.b16 %v4725
    %v5021 = vunpack.c.l.b16 %v4726
    %v5022 = vunpack.c.l.b16 %v4727
    %v5023 = vunpack.c.l.b16 %v4728
    %v5024 = vunpack.c.l.b16 %v4729
    %v5025 = vunpack.c.l.b16 %v4730
    %v5026 = vunpack.c.l.b16 %v4731
    %v5027 = vunpack.c.l.b16 %v4732
    %v5028 = vunpack.c.l.b16 %v4733
    %v5029 = vunpack.c.l.b16 %v4734
    %v5030 = vunpack.c.l.b16 %v4735
    %v5031 = vunpack.c.l.b16 %v4736
    %v5032 = vunpack.c.l.b16 %v4737
    %v5033 = vunpack.c.l.b16 %v4738
    %v5034 = vunpack.c.l.b16 %v4739
    %v5035 = vunpack.c.l.b16 %v4740
    %v5036 = vunpack.c.l.b16 %v4741
    %v5037 = vunpack.c.l.b16 %v4742
    %v5038 = vunpack.c.l.b16 %v4743
    %v5039 = vunpack.c.l.b16 %v4744
    %v5040 = vunpack.c.l.b16 %v4745
    %v5041 = vunpack.c.l.b16 %v4746
    %v5042 = vunpack.c.l.b16 %v4747
    %v5043 = vunpack.c.l.b16 %v4748
    %v5044 = vunpack.c.l.b16 %v4749
    %v5045 = vunpack.c.l.b16 %v4750
    %v5046 = vunpack.c.l.b16 %v4751
    %v5047 = vunpack.c.l.b16 %v4752
    %v5048 = vunpack.c.l.b16 %v4753
    %v5049 = vunpack.c.l.b16 %v4754
    %v5050 = vunpack.c.l.b16 %v4755
    %v5051 = vunpack.c.l.b16 %v4756
    %v5052 = vunpack.c.l.b16 %v4757
    %v5053 = vunpack.c.l.b16 %v4758
    %v5054 = vpack.c.b16 %v4911, %v4910
    %v5055 = vpack.c.b16 %v4913, %v4912
    %v5056 = vpack.c.b16 %v4915, %v4914
    %v5057 = vpack.c.b16 %v4917, %v4916
    %v5058 = vpack.c.b16 %v4919, %v4918
    %v5059 = vpack.c.b16 %v4921, %v4920
    %v5060 = vpack.c.b16 %v4923, %v4922
    %v5061 = vpack.c.b16 %v4925, %v4924
    %v5062 = vpack.c.b16 %v4927, %v4926
    %v5063 = vpack.c.b16 %v4929, %v4928
    %v5064 = vpack.c.b16 %v4931, %v4930
    %v5065 = vpack.c.b16 %v4933, %v4932
    %v5066 = vpack.c.b16 %v4935, %v4934
    %v5067 = vpack.c.b16 %v4937, %v4936
    %v5068 = vpack.c.b16 %v4939, %v4938
    %v5069 = vpack.c.b16 %v4941, %v4940
    %v5070 = vpack.c.b16 %v4943, %v4942
    %v5071 = vpack.c.b16 %v4945, %v4944
    %v5072 = vpack.c.b16 %v4947, %v4946
    %v5073 = vpack.c.b16 %v4949, %v4948
    %v5074 = vpack.c.b16 %v4951, %v4950
    %v5075 = vpack.c.b16 %v4953, %v4952
    %v5076 = vpack.c.b16 %v4955, %v4954
    %v5077 = vpack.c.b16 %v4957, %v4956
    %v5078 = vpack.c.b16 %v4959, %v4958
    %v5079 = vpack.c.b16 %v4961, %v4960
    %v5080 = vpack.c.b16 %v4963, %v4962
    %v5081 = vpack.c.b16 %v4965, %v4964
    %v5082 = vpack.c.b16 %v4967, %v4966
    %v5083 = vpack.c.b16 %v4969, %v4968
    %v5084 = vpack.c.b16 %v4971, %v4970
    %v5085 = vpack.c.b16 %v4973, %v4972
    %v5086 = vpack.c.b16 %v4975, %v4974
    %v5087 = vpack.c.b16 %v4977, %v4976
    %v5088 = vpack.c.b16 %v4979, %v4978
    %v5089 = vpack.c.b16 %v4981, %v4980
    %v5090 = vpack.c.b16 %v4983, %v4982
    %v5091 = vpack.c.b16 %v4985, %v4984
    %v5092 = vpack.c.b16 %v4987, %v4986
    %v5093 = vpack.c.b16 %v4989, %v4988
    %v5094 = vpack.c.b16 %v4991, %v4990
    %v5095 = vpack.c.b16 %v4993, %v4992
    %v5096 = vpack.c.b16 %v4995, %v4994
    %v5097 = vpack.c.b16 %v4997, %v4996
    %v5098 = vpack.c.b16 %v4999, %v4998
    %v5099 = vpack.c.b16 %v5001, %v5000
    %v5100 = vpack.c.b16 %v5003, %v5002
    %v5101 = vpack.c.b16 %v5005, %v5004
    %v5102 = vpack.c.b16 %v5007, %v5006
    %v5103 = vpack.c.b16 %v5009, %v5008
    %v5104 = vpack.c.b16 %v5011, %v5010
    %v5105 = vpack.c.b16 %v5013, %v5012
    %v5106 = vpack.c.b16 %v5015, %v5014
    %v5107 = vpack.c.b16 %v5017, %v5016
    %v5108 = vpack.c.b16 %v5019, %v5018
    %v5109 = vpack.c.b16 %v5021, %v5020
    %v5110 = vpack.c.b16 %v5023, %v5022
    %v5111 = vpack.c.b16 %v5025, %v5024
    %v5112 = vpack.c.b16 %v5027, %v5026
    %v5113 = vpack.c.b16 %v5029, %v5028
    %v5114 = vpack.c.b16 %v5031, %v5030
    %v5115 = vpack.c.b16 %v5033, %v5032
    %v5116 = vpack.c.b16 %v5035, %v5034
    %v5117 = vpack.c.b16 %v5037, %v5036
    %v5118 = vpack.c.b16 %v5039, %v5038
    %v5119 = vpack.c.b16 %v5041, %v5040
    %v5120 = vpack.c.b16 %v5043, %v5042
    %v5121 = vpack.c.b16 %v5045, %v5044
    %v5122 = vpack.c.b16 %v5047, %v5046
    %v5123 = vpack.c.b16 %v5049, %v5048
    %v5124 = vpack.c.b16 %v5051, %v5050
    %v5125 = vpack.c.b16 %v5053, %v5052
    %5198 = vmatprep.subr.bf16.mxu0 0
    %5199 = vmatpush1.bf16.msra.mxu0 %v5054
    %5200 = vmatprep.subr.bf16.mxu0 0
    %5201 = vmatpush1.bf16.msra.mxu0 %v5055
    %5202 = vmatprep.subr.bf16.mxu0 0
    %5203 = vmatpush1.bf16.msra.mxu0 %v5056
    %5204 = vmatprep.subr.bf16.mxu0 0
    %5205 = vmatpush1.bf16.msra.mxu0 %v5057
    %5206 = vmatprep.subr.bf16.mxu0 0
    %5207 = vmatpush1.bf16.msra.mxu0 %v5058
    %5208 = vmatprep.subr.bf16.mxu0 0
    %5209 = vmatpush1.bf16.msra.mxu0 %v5059
    %5210 = vmatprep.subr.bf16.mxu0 0
    %5211 = vmatpush1.bf16.msra.mxu0 %v5060
    %5212 = vmatprep.subr.bf16.mxu0 0
    %5213 = vmatpush1.bf16.msra.mxu0 %v5061
    %5214 = vmatprep.subr.bf16.mxu0 0
    %5215 = vmatpush1.bf16.msra.mxu0 %v5062
    %5216 = vmatprep.subr.bf16.mxu0 0
    %5217 = vmatpush1.bf16.msra.mxu0 %v5063
    %5218 = vmatprep.subr.bf16.mxu0 0
    %5219 = vmatpush1.bf16.msra.mxu0 %v5064
    %5220 = vmatprep.subr.bf16.mxu0 0
    %5221 = vmatpush1.bf16.msra.mxu0 %v5065
    %5222 = vmatprep.subr.bf16.mxu0 0
    %5223 = vmatpush1.bf16.msra.mxu0 %v5066
    %5224 = vmatprep.subr.bf16.mxu0 0
    %5225 = vmatpush1.bf16.msra.mxu0 %v5067
    %5226 = vmatprep.subr.bf16.mxu0 0
    %5227 = vmatpush1.bf16.msra.mxu0 %v5068
    %5228 = vmatprep.subr.bf16.mxu0 0
    %5229 = vmatpush1.bf16.msra.mxu0 %v5069
    %5230 = vmatprep.mubr.bf16.mxu0 %v4607
    %5231 = vmatmul.mubr.bf16.gmra.mrb[0].mxu0 %v4606
    %v5232 = vpop.f32.mrb[0].mxu0
    %v5233 = vadd.f32 %v4764, %v5232
    %v5234 = vpop.f32.mrb[0].mxu0
    %v5235 = vpop.f32.mrb[0].mxu0
    %v5236 = vpop.f32.mrb[0].mxu0
    %5237 = vdwg.mxu0
    %5238 = vmatprep.subr.bf16.mxu0 0
    %5239 = vmatpush1.bf16.msra.mxu0 %v5070
    %5240 = vmatprep.subr.bf16.mxu0 0
    %5241 = vmatpush1.bf16.msra.mxu0 %v5071
    %5242 = vmatprep.subr.bf16.mxu0 0
    %5243 = vmatpush1.bf16.msra.mxu0 %v5072
    %5244 = vmatprep.subr.bf16.mxu0 0
    %5245 = vmatpush1.bf16.msra.mxu0 %v5073
    %5246 = vmatprep.subr.bf16.mxu0 0
    %5247 = vmatpush1.bf16.msra.mxu0 %v5074
    %5248 = vmatprep.subr.bf16.mxu0 0
    %5249 = vmatpush1.bf16.msra.mxu0 %v5075
    %5250 = vmatprep.subr.bf16.mxu0 0
    %5251 = vmatpush1.bf16.msra.mxu0 %v5076
    %5252 = vmatprep.subr.bf16.mxu0 0
    %5253 = vmatpush1.bf16.msra.mxu0 %v5077
    %5254 = vmatprep.subr.bf16.mxu0 0
    %5255 = vmatpush1.bf16.msra.mxu0 %v5078
    %5256 = vmatprep.subr.bf16.mxu0 0
    %5257 = vmatpush1.bf16.msra.mxu0 %v5079
    %5258 = vmatprep.subr.bf16.mxu0 0
    %5259 = vmatpush1.bf16.msra.mxu0 %v5080
    %5260 = vmatprep.subr.bf16.mxu0 0
    %5261 = vmatpush1.bf16.msra.mxu0 %v5081
    %5262 = vmatprep.subr.bf16.mxu0 0
    %5263 = vmatpush1.bf16.msra.mxu0 %v5082
    %5264 = vmatprep.subr.bf16.mxu0 0
    %5265 = vmatpush1.bf16.msra.mxu0 %v5083
    %5266 = vmatprep.subr.bf16.mxu0 0
    %5267 = vmatpush1.bf16.msra.mxu0 %v5084
    %5268 = vmatprep.subr.bf16.mxu0 0
    %5269 = vmatpush1.bf16.msra.mxu0 %v5085
    %5270 = vmatprep.mubr.bf16.mxu0 %v4609
    %5271 = vmatmul.mubr.bf16.gmra.mrb[0].mxu0 %v4608
    %v5272 = vpop.f32.mrb[0].mxu0
    %v5273 = vadd.f32 %v5233, %v5272
    %v5274 = vpop.f32.mrb[0].mxu0
    %v5275 = vpop.f32.mrb[0].mxu0
    %v5276 = vpop.f32.mrb[0].mxu0
    %5277 = vdwg.mxu0
    %5278 = vmatprep.subr.bf16.mxu0 0
    %5279 = vmatpush1.bf16.msra.mxu0 %v5086
    %5280 = vmatprep.subr.bf16.mxu0 0
    %5281 = vmatpush1.bf16.msra.mxu0 %v5087
    %5282 = vmatprep.subr.bf16.mxu0 0
    %5283 = vmatpush1.bf16.msra.mxu0 %v5088
    %5284 = vmatprep.subr.bf16.mxu0 0
    %5285 = vmatpush1.bf16.msra.mxu0 %v5089
    %5286 = vmatprep.subr.bf16.mxu0 0
    %5287 = vmatpush1.bf16.msra.mxu0 %v5090
    %5288 = vmatprep.subr.bf16.mxu0 0
    %5289 = vmatpush1.bf16.msra.mxu0 %v5091
    %5290 = vmatprep.subr.bf16.mxu0 0
    %5291 = vmatpush1.bf16.msra.mxu0 %v5092
    %5292 = vmatprep.subr.bf16.mxu0 0
    %5293 = vmatpush1.bf16.msra.mxu0 %v5093
    %5294 = vmatprep.subr.bf16.mxu0 0
    %5295 = vmatpush1.bf16.msra.mxu0 %v5094
    %5296 = vmatprep.subr.bf16.mxu0 0
    %5297 = vmatpush1.bf16.msra.mxu0 %v5095
    %5298 = vmatprep.subr.bf16.mxu0 0
    %5299 = vmatpush1.bf16.msra.mxu0 %v5096
    %5300 = vmatprep.subr.bf16.mxu0 0
    %5301 = vmatpush1.bf16.msra.mxu0 %v5097
    %5302 = vmatprep.subr.bf16.mxu0 0
    %5303 = vmatpush1.bf16.msra.mxu0 %v5098
    %5304 = vmatprep.subr.bf16.mxu0 0
    %5305 = vmatpush1.bf16.msra.mxu0 %v5099
    %5306 = vmatprep.subr.bf16.mxu0 0
    %5307 = vmatpush1.bf16.msra.mxu0 %v5100
    %5308 = vmatprep.subr.bf16.mxu0 0
    %5309 = vmatpush1.bf16.msra.mxu0 %v5101
    %5310 = vmatprep.mubr.bf16.mxu0 %v4611
    %5311 = vmatmul.mubr.bf16.gmra.mrb[0].mxu0 %v4610
    %v5312 = vpop.f32.mrb[0].mxu0
    %v5313 = vadd.f32 %v5273, %v5312
    %v5314 = vpop.f32.mrb[0].mxu0
    %v5315 = vpop.f32.mrb[0].mxu0
    %v5316 = vpop.f32.mrb[0].mxu0
    %5317 = vdwg.mxu0
    %5318 = vmatprep.subr.bf16.mxu0 0
    %5319 = vmatpush1.bf16.msra.mxu0 %v5102
    %5320 = vmatprep.subr.bf16.mxu0 0
    %5321 = vmatpush1.bf16.msra.mxu0 %v5103
    %5322 = vmatprep.subr.bf16.mxu0 0
    %5323 = vmatpush1.bf16.msra.mxu0 %v5104
    %5324 = vmatprep.subr.bf16.mxu0 0
    %5325 = vmatpush1.bf16.msra.mxu0 %v5105
    %5326 = vmatprep.subr.bf16.mxu0 0
    %5327 = vmatpush1.bf16.msra.mxu0 %v5106
    %5328 = vmatprep.subr.bf16.mxu0 0
    %5329 = vmatpush1.bf16.msra.mxu0 %v5107
    %5330 = vmatprep.subr.bf16.mxu0 0
    %5331 = vmatpush1.bf16.msra.mxu0 %v5108
    %5332 = vmatprep.subr.bf16.mxu0 0
    %5333 = vmatpush1.bf16.msra.mxu0 %v5109
    %5334 = vmatprep.subr.bf16.mxu0 0
    %5335 = vmatpush1.bf16.msra.mxu0 %v5110
    %5336 = vmatprep.subr.bf16.mxu0 0
    %5337 = vmatpush1.bf16.msra.mxu0 %v5111
    %5338 = vmatprep.subr.bf16.mxu0 0
    %5339 = vmatpush1.bf16.msra.mxu0 %v5112
    %5340 = vmatprep.subr.bf16.mxu0 0
    %5341 = vmatpush1.bf16.msra.mxu0 %v5113
    %5342 = vmatprep.subr.bf16.mxu0 0
    %5343 = vmatpush1.bf16.msra.mxu0 %v5114
    %5344 = vmatprep.subr.bf16.mxu0 0
    %5345 = vmatpush1.bf16.msra.mxu0 %v5115
    %5346 = vmatprep.subr.bf16.mxu0 0
    %5347 = vmatpush1.bf16.msra.mxu0 %v5116
    %5348 = vmatprep.subr.bf16.mxu0 0
    %5349 = vmatpush1.bf16.msra.mxu0 %v5117
    %5350 = vmatprep.mubr.bf16.mxu0 %v4613
    %5351 = vmatmul.mubr.bf16.gmra.mrb[0].mxu0 %v4612
    %v5352 = vpop.f32.mrb[0].mxu0
    %v5353 = vadd.f32 %v5313, %v5352
    %v5354 = vpop.f32.mrb[0].mxu0
    %v5355 = vpop.f32.mrb[0].mxu0
    %v5356 = vpop.f32.mrb[0].mxu0
    %5357 = vdwg.mxu0
    %5358 = vmatprep.subr.bf16.mxu0 0
    %5359 = vmatpush1.bf16.msra.mxu0 %v5118
    %5360 = vmatprep.subr.bf16.mxu0 0
    %5361 = vmatpush1.bf16.msra.mxu0 %v5119
    %5362 = vmatprep.subr.bf16.mxu0 0
    %5363 = vmatpush1.bf16.msra.mxu0 %v5120
    %5364 = vmatprep.subr.bf16.mxu0 0
    %5365 = vmatpush1.bf16.msra.mxu0 %v5121
    %5366 = vmatprep.subr.bf16.mxu0 0
    %5367 = vmatpush1.bf16.msra.mxu0 %v5122
    %5368 = vmatprep.subr.bf16.mxu0 0
    %5369 = vmatpush1.bf16.msra.mxu0 %v5123
    %5370 = vmatprep.subr.bf16.mxu0 0
    %5371 = vmatpush1.bf16.msra.mxu0 %v5124
    %5372 = vmatprep.subr.bf16.mxu0 0
    %5373 = vmatpush1.bf16.msra.mxu0 %v5125
    %5374 = vmatprep.subr.bf16.mxu0 0
    %5375 = vmatpush1.bf16.msra.mxu0 0
    %5376 = vmatprep.subr.bf16.mxu0 0
    %5377 = vmatpush1.bf16.msra.mxu0 0
    %5378 = vmatprep.subr.bf16.mxu0 0
    %5379 = vmatpush1.bf16.msra.mxu0 0
    %5380 = vmatprep.subr.bf16.mxu0 0
    %5381 = vmatpush1.bf16.msra.mxu0 0
    %5382 = vmatprep.subr.bf16.mxu0 0
    %5383 = vmatpush1.bf16.msra.mxu0 0
    %5384 = vmatprep.subr.bf16.mxu0 0
    %5385 = vmatpush1.bf16.msra.mxu0 0
    %5386 = vmatprep.subr.bf16.mxu0 0
    %5387 = vmatpush1.bf16.msra.mxu0 0
    %5388 = vmatprep.subr.bf16.mxu0 0
    %5389 = vmatpush1.bf16.msra.mxu0 0
    %5390 = vmatprep.mubr.bf16.mxu0 0
    %5391 = vmatmul.mubr.bf16.gmra.mrb[0].mxu0 %v4614
    %v5392 = vpop.f32.mrb[0].mxu0
    %v5393 = vadd.f32 %v5353, %v5392
    %v5394 = vpop.f32.mrb[0].mxu0
    %v5395 = vpop.f32.mrb[0].mxu0
    %v5396 = vpop.f32.mrb[0].mxu0
    %5397 = vdwg.mxu0
    %v5398 = vlaneseq
    %v5399 = vand.u32 %v5398, 127
    %vm5400 = vcmp.lt.s32.totalorder %v5399, 10
    %v5401 = vsel %vm5400, %v5393, -1e+30
    %5402 = vmax.xlane.f32.xlu0 %v5401
    %v5403 = vpop.xlane.xlu0 %5402
    %v5404 = vsub.f32 %v5401, %v5403
    %v5405 = vmul.f32 %v5404, 1.442695
    %v5406 = vpow.pop %v5405
    %5407 = vadd.xlane.f32.xlu0 %v5406
    %v5408 = vpop.xlane.xlu0 %5407
    %v5409 = vlog2.pop %v5408
    %v5410 = vmul.f32 %v5409, 0.6931472
    %v5411 = vadd.f32 %v5410, %v5403
    %v5412 = vsub.f32 %v5393, %v5411
    %5413 = vst [vmem:[#allocation14] sm:$0xff] %v5412
    // Predicated region
    $region58: #{tpu_custom_call.1} parent=1 // pred_check
      _
    $region59: #{tpu_custom_call.1} parent=1 // pred_check_branch
      %5415 = sbr.rel (0) target = $region61
    $region60: #{tpu_custom_call.1} parent=1 // pred_region
      %s5417 = ssub.s32 128, 128
      %5418 = vsyncadd [#allocation4], %s5417
      %s5420 = sshll.u32 [#allocation14], 4
      %s5421 = int_to_ptr.vmem [resolvable:$true] %s5420
      %5423 = dma.vmem_to_hbm [thread:$0]  %s5421, 128, %s7, [#allocation4]
    $region61: #{tpu_custom_call.1} parent=1 // pred_fallthru
      _
    // Predicated region
    $region62: #{tpu_custom_call.1} parent=1 // pred_check
      _
    $region63: #{tpu_custom_call.1} parent=1 // pred_check_branch
      %5425 = sbr.rel (0) target = $region65
    $region64: #{tpu_custom_call.1} parent=1 // pred_region
      %5426 = dma.done [#allocation4], 128
    $region65: #{tpu_custom_call.1} parent=1 // pred_fallthru
      _
    %5427 = vsyncpa [#allocation3], 1
    %5428 = vsyncpa [#allocation6], 1
    %5429 = vsyncpa [#allocation9], 1
    %5430 = vsyncpa [#allocation12], 1
    %5431 = vsyncpa [#allocation4], 1

// kernel: tpu_custom_call.1
$region0: #{tpu_custom_call.1}
  #allocation0 [shape = 'u32[]', space=smem, size = 0x4, offset = 0x4, fixed_abs, tag = 'smem constant byte address 0x4 - core index']
  #allocation1 [shape = 'u32[144,128]{1,0:T(1,128)}', space=vmem, size = 0x12000, scoped, tag = 'internal scratch']
  %s0 = inlined_call_operand.hbm [shape: f32[8,128], index: 0, kind: input, shape index: {}]
  %s1 = inlined_call_operand.hbm [shape: bf16[128,2560], index: 1, kind: input, shape index: {}]
  %s2 = inlined_call_operand.hbm [shape: f32[1,2560], index: 2, kind: input, shape index: {}]
  %s3 = inlined_call_operand.hbm [shape: bf16[640,1152], index: 3, kind: input, shape index: {}]
  %s4 = inlined_call_operand.hbm [shape: f32[1,1152], index: 4, kind: input, shape index: {}]
  %s5 = inlined_call_operand.hbm [shape: bf16[1152,128], index: 5, kind: input, shape index: {}]
  %s6 = inlined_call_operand.hbm [shape: f32[1,128], index: 6, kind: input, shape index: {}]
  %s7 = inlined_call_operand.hbm [shape: f32[8,128], index: 7, kind: output, shape index: {}]
  %s8 = sld [smem:[#allocation0]]
  $region66: #{tpu_custom_call.1} parent=0
    _
  %s10 = ssub.s32 1, %s8
  %s11 = scalar_select 0, %s10, %s8
  $region1: #{tpu_custom_call.1} parent=0
    #allocation2 [shape = 'u8[4096]{0}', space=vmem, size = 0x1000, scoped, tag = 'input window, operand 0, single buffered']
    #allocation3 [shape = 's32[1]{0}', space=sflag, size = 0x4, scoped, tag = 'scoped memory for tpu_custom_call.1']
    #allocation4 [shape = 's32[1]{0}', space=sflag, size = 0x4, scoped, tag = 'scoped memory for tpu_custom_call.1']
    #allocation5 [shape = 'u8[655360]{0}', space=vmem, size = 0xa0000, scoped, tag = 'input window, operand 1, single buffered']
    #allocation6 [shape = 's32[1]{0}', space=sflag, size = 0x4, scoped, tag = 'scoped memory for tpu_custom_call.1']
    #allocation7 [shape = 'u8[10240]{0}', space=vmem, size = 0x2800, scoped, tag = 'input window, operand 2, single buffered']
    #allocation8 [shape = 'u8[1474560]{0}', space=vmem, size = 0x168000, scoped, tag = 'input window, operand 3, single buffered']
    #allocation9 [shape = 's32[1]{0}', space=sflag, size = 0x4, scoped, tag = 'scoped memory for tpu_custom_call.1']
    #allocation10 [shape = 'u8[4608]{0}', space=vmem, size = 0x1400, scoped, tag = 'input window, operand 4, single buffered']
    #allocation11 [shape = 'u8[294912]{0}', space=vmem, size = 0x48000, scoped, tag = 'input window, operand 5, single buffered']
    #allocation12 [shape = 's32[1]{0}', space=sflag, size = 0x4, scoped, tag = 'scoped memory for tpu_custom_call.1']
    #allocation13 [shape = 'u8[512]{0}', space=vmem, size = 0x400, scoped, tag = 'input window, operand 6, single buffered']
    #allocation14 [shape = 'u8[4096]{0}', space=vmem, size = 0x1000, scoped, tag = 'output window, operand 0, single buffered']
    %12 = vsyncpa [#allocation3], 0
    %13 = vsyncpa [#allocation6], 0
    %14 = vsyncpa [#allocation9], 0
    %15 = vsyncpa [#allocation12], 0
    %16 = vsyncpa [#allocation4], 0
    // Predicated region
    $region2: #{tpu_custom_call.1} parent=1 // pred_check
      _
    $region3: #{tpu_custom_call.1} parent=1 // pred_check_branch
      %18 = sbr.rel (0) target = $region5
    $region4: #{tpu_custom_call.1} parent=1 // pred_region
      %s20 = ssub.s32 128, 128
      %21 = vsyncadd [#allocation3], %s20
      %s23 = sshll.u32 [#allocation2], 4
      %s24 = int_to_ptr.vmem [resolvable:$true] %s23
      %26 = dma.hbm_to_vmem [thread:$0]  %s0, 128, %s24, [#allocation3]
    $region5: #{tpu_custom_call.1} parent=1 // pred_fallthru
      _
    // Predicated region
    $region6: #{tpu_custom_call.1} parent=1 // pred_check
      _
    $region7: #{tpu_custom_call.1} parent=1 // pred_check_branch
      %28 = sbr.rel (0) target = $region9
    $region8: #{tpu_custom_call.1} parent=1 // pred_region
      %s30 = ssub.s32 20480, 20480
      %31 = vsyncadd [#allocation6], %s30
      %s32 = sshll.u32 [#allocation5], 4
      %s33 = int_to_ptr.vmem [resolvable:$true] %s32
      %38 = dma.hbm_to_vmem [thread:$0]  %s1, 20480, %s33, [#allocation6], 1280, 1280, 80
    $region9: #{tpu_custom_call.1} parent=1 // pred_fallthru
      _
    // Predicated region
    $region10: #{tpu_custom_call.1} parent=1 // pred_check
      _
    $region11: #{tpu_custom_call.1} parent=1 // pred_check_branch
      %40 = sbr.rel (0) target = $region13
    $region12: #{tpu_custom_call.1} parent=1 // pred_region
      %s42 = ssub.s32 320, 320
      %43 = vsyncadd [#allocation6], %s42
      %s45 = sshll.u32 [#allocation7], 4
      %s46 = int_to_ptr.vmem [resolvable:$true] %s45
      %48 = dma.hbm_to_vmem [thread:$0]  %s2, 320, %s46, [#allocation6]
    $region13: #{tpu_custom_call.1} parent=1 // pred_fallthru
      _
    // Predicated region
    $region14: #{tpu_custom_call.1} parent=1 // pred_check
      _
    $region15: #{tpu_custom_call.1} parent=1 // pred_check_branch
      %50 = sbr.rel (0) target = $region17
    $region16: #{tpu_custom_call.1} parent=1 // pred_region
      %s52 = ssub.s32 46080, 46080
      %53 = vsyncadd [#allocation9], %s52
      %s54 = sshll.u32 [#allocation8], 4
      %s55 = int_to_ptr.vmem [resolvable:$true] %s54
      %60 = dma.hbm_to_vmem [thread:$0]  %s3, 46080, %s55, [#allocation9], 576, 576, 36
    $region17: #{tpu_custom_call.1} parent=1 // pred_fallthru
      _
    // Predicated region
    $region18: #{tpu_custom_call.1} parent=1 // pred_check
      _
    $region19: #{tpu_custom_call.1} parent=1 // pred_check_branch
      %62 = sbr.rel (0) target = $region21
    $region20: #{tpu_custom_call.1} parent=1 // pred_region
      %s64 = ssub.s32 144, 144
      %65 = vsyncadd [#allocation9], %s64
      %s67 = sshll.u32 [#allocation10], 4
      %s68 = int_to_ptr.vmem [resolvable:$true] %s67
      %70 = dma.hbm_to_vmem [thread:$0]  %s4, 144, %s68, [#allocation9]
    $region21: #{tpu_custom_call.1} parent=1 // pred_fallthru
      _
    // Predicated region
    $region22: #{tpu_custom_call.1} parent=1 // pred_check
      _
    $region23: #{tpu_custom_call.1} parent=1 // pred_check_branch
      %72 = sbr.rel (0) target = $region25
    $region24: #{tpu_custom_call.1} parent=1 // pred_region
      %s74 = ssub.s32 9216, 9216
      %75 = vsyncadd [#allocation12], %s74
      %s76 = sshll.u32 [#allocation11], 4
      %s77 = int_to_ptr.vmem [resolvable:$true] %s76
      %82 = dma.hbm_to_vmem [thread:$0]  %s5, 9216, %s77, [#allocation12], 64, 64, 4
    $region25: #{tpu_custom_call.1} parent=1 // pred_fallthru
      _
    // Predicated region
    $region26: #{tpu_custom_call.1} parent=1 // pred_check
      _
    $region27: #{tpu_custom_call.1} parent=1 // pred_check_branch
      %84 = sbr.rel (0) target = $region29
    $region28: #{tpu_custom_call.1} parent=1 // pred_region
      %s86 = ssub.s32 16, 16
      %87 = vsyncadd [#allocation12], %s86
      %s89 = sshll.u32 [#allocation13], 4
      %s90 = int_to_ptr.vmem [resolvable:$true] %s89
      %92 = dma.hbm_to_vmem [thread:$0]  %s6, 16, %s90, [#allocation12]
    $region29: #{tpu_custom_call.1} parent=1 // pred_fallthru
      _
    // Predicated region
    $region30: #{tpu_custom_call.1} parent=1 // pred_check
      _
    $region31: #{tpu_custom_call.1} parent=1 // pred_check_branch
      %94 = sbr.rel (0) target = $region33
    $region32: #{tpu_custom_call.1} parent=1 // pred_region
      %95 = dma.done [#allocation3], 128
    $region33: #{tpu_custom_call.1} parent=1 // pred_fallthru
      _
    // Predicated region
    $region34: #{tpu_custom_call.1} parent=1 // pred_check
      _
    $region35: #{tpu_custom_call.1} parent=1 // pred_check_branch
      %97 = sbr.rel (0) target = $region37
    $region36: #{tpu_custom_call.1} parent=1 // pred_region
      %98 = dma.done [#allocation6], 20480
    $region37: #{tpu_custom_call.1} parent=1 // pred_fallthru
      _
    // Predicated region
    $region38: #{tpu_custom_call.1} parent=1 // pred_check
      _
    $region39: #{tpu_custom_call.1} parent=1 // pred_check_branch
      %100 = sbr.rel (0) target = $region41
    $region40: #{tpu_custom_call.1} parent=1 // pred_region
      %101 = dma.done [#allocation6], 320
    $region41: #{tpu_custom_call.1} parent=1 // pred_fallthru
      _
    // Predicated region
    $region42: #{tpu_custom_call.1} parent=1 // pred_check
      _
    $region43: #{tpu_custom_call.1} parent=1 // pred_check_branch
      %103 = sbr.rel (0) target = $region45
    $region44: #{tpu_custom_call.1} parent=1 // pred_region
      %104 = dma.done [#allocation9], 46080
    $region45: #{tpu_custom_call.1} parent=1 // pred_fallthru
      _
    // Predicated region
    $region46: #{tpu_custom_call.1} parent=1 // pred_check
      _
    $region47: #{tpu_custom_call.1} parent=1 // pred_check_branch
      %106 = sbr.rel (0) target = $region49
    $region48: #{tpu_custom_call.1} parent=1 // pred_region
      %107 = dma.done [#allocation9], 144
    $region49: #{tpu_custom_call.1} parent=1 // pred_fallthru
      _
    // Predicated region
    $region50: #{tpu_custom_call.1} parent=1 // pred_check
      _
    $region51: #{tpu_custom_call.1} parent=1 // pred_check_branch
      %109 = sbr.rel (0) target = $region53
    $region52: #{tpu_custom_call.1} parent=1 // pred_region
      %110 = dma.done [#allocation12], 9216
    $region53: #{tpu_custom_call.1} parent=1 // pred_fallthru
      _
    // Predicated region
    $region54: #{tpu_custom_call.1} parent=1 // pred_check
      _
    $region55: #{tpu_custom_call.1} parent=1 // pred_check_branch
      %112 = sbr.rel (0) target = $region57
    $region56: #{tpu_custom_call.1} parent=1 // pred_region
      %113 = dma.done [#allocation12], 16
    $region57: #{tpu_custom_call.1} parent=1 // pred_fallthru
      _
    %v115 = vld [vmem:[#allocation2] sm:$0xff]
    %v116 = vpack.c.bf16 %v115, %v115
    %v117 = vld [vmem:[#allocation5] sm:$0xff]
    %v118 = vld [vmem:[#allocation5 + $0x8] sm:$0xff]
    %v119 = vld [vmem:[#allocation5 + $0x10] sm:$0xff]
    %v120 = vld [vmem:[#allocation5 + $0x18] sm:$0xff]
    %v121 = vld [vmem:[#allocation5 + $0x20] sm:$0xff]
    %v122 = vld [vmem:[#allocation5 + $0x28] sm:$0xff]
    %v123 = vld [vmem:[#allocation5 + $0x30] sm:$0xff]
    %v124 = vld [vmem:[#allocation5 + $0x38] sm:$0xff]
    %v125 = vld [vmem:[#allocation5 + $0x40] sm:$0xff]
    %v126 = vld [vmem:[#allocation5 + $0x48] sm:$0xff]
    %v127 = vld [vmem:[#allocation5 + $0x50] sm:$0xff]
    %v128 = vld [vmem:[#allocation5 + $0x58] sm:$0xff]
    %v129 = vld [vmem:[#allocation5 + $0x60] sm:$0xff]
    %v130 = vld [vmem:[#allocation5 + $0x68] sm:$0xff]
    %v131 = vld [vmem:[#allocation5 + $0x70] sm:$0xff]
    %v132 = vld [vmem:[#allocation5 + $0x78] sm:$0xff]
    %v133 = vld [vmem:[#allocation5 + $0x80] sm:$0xff]
    %v134 = vld [vmem:[#allocation5 + $0x88] sm:$0xff]
    %v135 = vld [vmem:[#allocation5 + $0x90] sm:$0xff]
    %v136 = vld [vmem:[#allocation5 + $0x98] sm:$0xff]
    %v137 = vld [vmem:[#allocation5 + $0xa0] sm:$0xff]
    %v138 = vld [vmem:[#allocation5 + $0xa8] sm:$0xff]
    %v139 = vld [vmem:[#allocation5 + $0xb0] sm:$0xff]
    %v140 = vld [vmem:[#allocation5 + $0xb8] sm:$0xff]
    %v141 = vld [vmem:[#allocation5 + $0xc0] sm:$0xff]
    %v142 = vld [vmem:[#allocation5 + $0xc8] sm:$0xff]
    %v143 = vld [vmem:[#allocation5 + $0xd0] sm:$0xff]
    %v144 = vld [vmem:[#allocation5 + $0xd8] sm:$0xff]
    %v145 = vld [vmem:[#allocation5 + $0xe0] sm:$0xff]
    %v146 = vld [vmem:[#allocation5 + $0xe8] sm:$0xff]
    %v147 = vld [vmem:[#allocation5 + $0xf0] sm:$0xff]
    %v148 = vld [vmem:[#allocation5 + $0xf8] sm:$0xff]
    %v149 = vld [vmem:[#allocation5 + $0x100] sm:$0xff]
    %v150 = vld [vmem:[#allocation5 + $0x108] sm:$0xff]
    %v151 = vld [vmem:[#allocation5 + $0x110] sm:$0xff]
    %v152 = vld [vmem:[#allocation5 + $0x118] sm:$0xff]
    %v153 = vld [vmem:[#allocation5 + $0x120] sm:$0xff]
    %v154 = vld [vmem:[#allocation5 + $0x128] sm:$0xff]
    %v155 = vld [vmem:[#allocation5 + $0x130] sm:$0xff]
    %v156 = vld [vmem:[#allocation5 + $0x138] sm:$0xff]
    %v157 = vld [vmem:[#allocation5 + $0x140] sm:$0xff]
    %v158 = vld [vmem:[#allocation5 + $0x148] sm:$0xff]
    %v159 = vld [vmem:[#allocation5 + $0x150] sm:$0xff]
    %v160 = vld [vmem:[#allocation5 + $0x158] sm:$0xff]
    %v161 = vld [vmem:[#allocation5 + $0x160] sm:$0xff]
    %v162 = vld [vmem:[#allocation5 + $0x168] sm:$0xff]
    %v163 = vld [vmem:[#allocation5 + $0x170] sm:$0xff]
    %v164 = vld [vmem:[#allocation5 + $0x178] sm:$0xff]
    %v165 = vld [vmem:[#allocation5 + $0x180] sm:$0xff]
    %v166 = vld [vmem:[#allocation5 + $0x188] sm:$0xff]
    %v167 = vld [vmem:[#allocation5 + $0x190] sm:$0xff]
    %v168 = vld [vmem:[#allocation5 + $0x198] sm:$0xff]
    %v169 = vld [vmem:[#allocation5 + $0x1a0] sm:$0xff]
    %v170 = vld [vmem:[#allocation5 + $0x1a8] sm:$0xff]
    %v171 = vld [vmem:[#allocation5 + $0x1b0] sm:$0xff]
    %v172 = vld [vmem:[#allocation5 + $0x1b8] sm:$0xff]
    %v173 = vld [vmem:[#allocation5 + $0x1c0] sm:$0xff]
    %v174 = vld [vmem:[#allocation5 + $0x1c8] sm:$0xff]
    %v175 = vld [vmem:[#allocation5 + $0x1d0] sm:$0xff]
    %v176 = vld [vmem:[#allocation5 + $0x1d8] sm:$0xff]
    %v177 = vld [vmem:[#allocation5 + $0x1e0] sm:$0xff]
    %v178 = vld [vmem:[#allocation5 + $0x1e8] sm:$0xff]
    %v179 = vld [vmem:[#allocation5 + $0x1f0] sm:$0xff]
    %v180 = vld [vmem:[#allocation5 + $0x1f8] sm:$0xff]
    %v181 = vld [vmem:[#allocation5 + $0x200] sm:$0xff]
    %v182 = vld [vmem:[#allocation5 + $0x208] sm:$0xff]
    %v183 = vld [vmem:[#allocation5 + $0x210] sm:$0xff]
    %v184 = vld [vmem:[#allocation5 + $0x218] sm:$0xff]
    %v185 = vld [vmem:[#allocation5 + $0x220] sm:$0xff]
    %v186 = vld [vmem:[#allocation5 + $0x228] sm:$0xff]
    %v187 = vld [vmem:[#allocation5 + $0x230] sm:$0xff]
    %v188 = vld [vmem:[#allocation5 + $0x238] sm:$0xff]
    %v189 = vld [vmem:[#allocation5 + $0x240] sm:$0xff]
    %v190 = vld [vmem:[#allocation5 + $0x248] sm:$0xff]
    %v191 = vld [vmem:[#allocation5 + $0x250] sm:$0xff]
    %v192 = vld [vmem:[#allocation5 + $0x258] sm:$0xff]
    %v193 = vld [vmem:[#allocation5 + $0x260] sm:$0xff]
    %v194 = vld [vmem:[#allocation5 + $0x268] sm:$0xff]
    %v195 = vld [vmem:[#allocation5 + $0x270] sm:$0xff]
    %v196 = vld [vmem:[#allocation5 + $0x278] sm:$0xff]
    %v197 = vld [vmem:[#allocation5 + $0x280] sm:$0xff]
    %v198 = vld [vmem:[#allocation5 + $0x288] sm:$0xff]
    %v199 = vld [vmem:[#allocation5 + $0x290] sm:$0xff]
    %v200 = vld [vmem:[#allocation5 + $0x298] sm:$0xff]
    %v201 = vld [vmem:[#allocation5 + $0x2a0] sm:$0xff]
    %v202 = vld [vmem:[#allocation5 + $0x2a8] sm:$0xff]
    %v203 = vld [vmem:[#allocation5 + $0x2b0] sm:$0xff]
    %v204 = vld [vmem:[#allocation5 + $0x2b8] sm:$0xff]
    %v205 = vld [vmem:[#allocation5 + $0x2c0] sm:$0xff]
    %v206 = vld [vmem:[#allocation5 + $0x2c8] sm:$0xff]
    %v207 = vld [vmem:[#allocation5 + $0x2d0] sm:$0xff]
    %v208 = vld [vmem:[#allocation5 + $0x2d8] sm:$0xff]
    %v209 = vld [vmem:[#allocation5 + $0x2e0] sm:$0xff]
    %v210 = vld [vmem:[#allocation5 + $0x2e8] sm:$0xff]
    %v211 = vld [vmem:[#allocation5 + $0x2f0] sm:$0xff]
    %v212 = vld [vmem:[#allocation5 + $0x2f8] sm:$0xff]
    %v213 = vld [vmem:[#allocation5 + $0x300] sm:$0xff]
    %v214 = vld [vmem:[#allocation5 + $0x308] sm:$0xff]
    %v215 = vld [vmem:[#allocation5 + $0x310] sm:$0xff]
    %v216 = vld [vmem:[#allocation5 + $0x318] sm:$0xff]
    %v217 = vld [vmem:[#allocation5 + $0x320] sm:$0xff]
    %v218 = vld [vmem:[#allocation5 + $0x328] sm:$0xff]
    %v219 = vld [vmem:[#allocation5 + $0x330] sm:$0xff]
    %v220 = vld [vmem:[#allocation5 + $0x338] sm:$0xff]
    %v221 = vld [vmem:[#allocation5 + $0x340] sm:$0xff]
    %v222 = vld [vmem:[#allocation5 + $0x348] sm:$0xff]
    %v223 = vld [vmem:[#allocation5 + $0x350] sm:$0xff]
    %v224 = vld [vmem:[#allocation5 + $0x358] sm:$0xff]
    %v225 = vld [vmem:[#allocation5 + $0x360] sm:$0xff]
    %v226 = vld [vmem:[#allocation5 + $0x368] sm:$0xff]
    %v227 = vld [vmem:[#allocation5 + $0x370] sm:$0xff]
    %v228 = vld [vmem:[#allocation5 + $0x378] sm:$0xff]
    %v229 = vld [vmem:[#allocation5 + $0x380] sm:$0xff]
    %v230 = vld [vmem:[#allocation5 + $0x388] sm:$0xff]
    %v231 = vld [vmem:[#allocation5 + $0x390] sm:$0xff]
    %v232 = vld [vmem:[#allocation5 + $0x398] sm:$0xff]
    %v233 = vld [vmem:[#allocation5 + $0x3a0] sm:$0xff]
    %v234 = vld [vmem:[#allocation5 + $0x3a8] sm:$0xff]
    %v235 = vld [vmem:[#allocation5 + $0x3b0] sm:$0xff]
    %v236 = vld [vmem:[#allocation5 + $0x3b8] sm:$0xff]
    %v237 = vld [vmem:[#allocation5 + $0x3c0] sm:$0xff]
    %v238 = vld [vmem:[#allocation5 + $0x3c8] sm:$0xff]
    %v239 = vld [vmem:[#allocation5 + $0x3d0] sm:$0xff]
    %v240 = vld [vmem:[#allocation5 + $0x3d8] sm:$0xff]
    %v241 = vld [vmem:[#allocation5 + $0x3e0] sm:$0xff]
    %v242 = vld [vmem:[#allocation5 + $0x3e8] sm:$0xff]
    %v243 = vld [vmem:[#allocation5 + $0x3f0] sm:$0xff]
    %v244 = vld [vmem:[#allocation5 + $0x3f8] sm:$0xff]
    %v245 = vld [vmem:[#allocation5 + $0x400] sm:$0xff]
    %v246 = vld [vmem:[#allocation5 + $0x408] sm:$0xff]
    %v247 = vld [vmem:[#allocation5 + $0x410] sm:$0xff]
    %v248 = vld [vmem:[#allocation5 + $0x418] sm:$0xff]
    %v249 = vld [vmem:[#allocation5 + $0x420] sm:$0xff]
    %v250 = vld [vmem:[#allocation5 + $0x428] sm:$0xff]
    %v251 = vld [vmem:[#allocation5 + $0x430] sm:$0xff]
    %v252 = vld [vmem:[#allocation5 + $0x438] sm:$0xff]
    %v253 = vld [vmem:[#allocation5 + $0x440] sm:$0xff]
    %v254 = vld [vmem:[#allocation5 + $0x448] sm:$0xff]
    %v255 = vld [vmem:[#allocation5 + $0x450] sm:$0xff]
    %v256 = vld [vmem:[#allocation5 + $0x458] sm:$0xff]
    %v257 = vld [vmem:[#allocation5 + $0x460] sm:$0xff]
    %v258 = vld [vmem:[#allocation5 + $0x468] sm:$0xff]
    %v259 = vld [vmem:[#allocation5 + $0x470] sm:$0xff]
    %v260 = vld [vmem:[#allocation5 + $0x478] sm:$0xff]
    %v261 = vld [vmem:[#allocation5 + $0x480] sm:$0xff]
    %v262 = vld [vmem:[#allocation5 + $0x488] sm:$0xff]
    %v263 = vld [vmem:[#allocation5 + $0x490] sm:$0xff]
    %v264 = vld [vmem:[#allocation5 + $0x498] sm:$0xff]
    %v265 = vld [vmem:[#allocation5 + $0x4a0] sm:$0xff]
    %v266 = vld [vmem:[#allocation5 + $0x4a8] sm:$0xff]
    %v267 = vld [vmem:[#allocation5 + $0x4b0] sm:$0xff]
    %v268 = vld [vmem:[#allocation5 + $0x4b8] sm:$0xff]
    %v269 = vld [vmem:[#allocation5 + $0x4c0] sm:$0xff]
    %v270 = vld [vmem:[#allocation5 + $0x4c8] sm:$0xff]
    %v271 = vld [vmem:[#allocation5 + $0x4d0] sm:$0xff]
    %v272 = vld [vmem:[#allocation5 + $0x4d8] sm:$0xff]
    %v273 = vld [vmem:[#allocation5 + $0x4e0] sm:$0xff]
    %v274 = vld [vmem:[#allocation5 + $0x4e8] sm:$0xff]
    %v275 = vld [vmem:[#allocation5 + $0x4f0] sm:$0xff]
    %v276 = vld [vmem:[#allocation5 + $0x4f8] sm:$0xff]
    %v277 = vld [vmem:[#allocation7] sm:$0xff]
    %v278 = vld [vmem:[#allocation7 + $0x8] sm:$0xff]
    %v279 = vld [vmem:[#allocation7 + $0x10] sm:$0xf]
    %v283 = vlaneseq
    %v284 = vshrl.u32 %v283, 7
    %v285 = vsub.s32 0, %v284
    %v286 = vrot.slane %v277, %v285
    %v287 = vlaneseq
    %v288 = vshrl.u32 %v287, 7
    %v289 = vsub.s32 1, %v288
    %v290 = vrot.slane %v277, %v289
    %v291 = vlaneseq
    %v292 = vshrl.u32 %v291, 7
    %v293 = vsub.s32 2, %v292
    %v294 = vrot.slane %v277, %v293
    %v295 = vlaneseq
    %v296 = vshrl.u32 %v295, 7
    %v297 = vsub.s32 3, %v296
    %v298 = vrot.slane %v277, %v297
    %v299 = vlaneseq
    %v300 = vshrl.u32 %v299, 7
    %v301 = vsub.s32 4, %v300
    %v302 = vrot.slane %v277, %v301
    %v303 = vlaneseq
    %v304 = vshrl.u32 %v303, 7
    %v305 = vsub.s32 5, %v304
    %v306 = vrot.slane %v277, %v305
    %v307 = vlaneseq
    %v308 = vshrl.u32 %v307, 7
    %v309 = vsub.s32 6, %v308
    %v310 = vrot.slane %v277, %v309
    %v311 = vlaneseq
    %v312 = vshrl.u32 %v311, 7
    %v313 = vsub.s32 7, %v312
    %v314 = vrot.slane %v277, %v313
    %v315 = vlaneseq
    %v316 = vshrl.u32 %v315, 7
    %v317 = vsub.s32 0, %v316
    %v318 = vrot.slane %v278, %v317
    %v319 = vlaneseq
    %v320 = vshrl.u32 %v319, 7
    %v321 = vsub.s32 1, %v320
    %v322 = vrot.slane %v278, %v321
    %v323 = vlaneseq
    %v324 = vshrl.u32 %v323, 7
    %v325 = vsub.s32 2, %v324
    %v326 = vrot.slane %v278, %v325
    %v327 = vlaneseq
    %v328 = vshrl.u32 %v327, 7
    %v329 = vsub.s32 3, %v328
    %v330 = vrot.slane %v278, %v329
    %v331 = vlaneseq
    %v332 = vshrl.u32 %v331, 7
    %v333 = vsub.s32 4, %v332
    %v334 = vrot.slane %v278, %v333
    %v335 = vlaneseq
    %v336 = vshrl.u32 %v335, 7
    %v337 = vsub.s32 5, %v336
    %v338 = vrot.slane %v278, %v337
    %v339 = vlaneseq
    %v340 = vshrl.u32 %v339, 7
    %v341 = vsub.s32 6, %v340
    %v342 = vrot.slane %v278, %v341
    %v343 = vlaneseq
    %v344 = vshrl.u32 %v343, 7
    %v345 = vsub.s32 7, %v344
    %v346 = vrot.slane %v278, %v345
    %v347 = vlaneseq
    %v348 = vshrl.u32 %v347, 7
    %v349 = vsub.s32 0, %v348
    %v350 = vrot.slane %v279, %v349
    %v351 = vlaneseq
    %v352 = vshrl.u32 %v351, 7
    %v353 = vsub.s32 1, %v352
    %v354 = vrot.slane %v279, %v353
    %v355 = vlaneseq
    %v356 = vshrl.u32 %v355, 7
    %v357 = vsub.s32 2, %v356
    %v358 = vrot.slane %v279, %v357
    %v359 = vlaneseq
    %v360 = vshrl.u32 %v359, 7
    %v361 = vsub.s32 3, %v360
    %v362 = vrot.slane %v279, %v361
    %v543 = vunpack.c.l.b16 %v117
    %v544 = vunpack.c.h.b16 %v117
    %v545 = vunpack.c.l.b16 %v118
    %v546 = vunpack.c.h.b16 %v118
    %v547 = vunpack.c.l.b16 %v119
    %v548 = vunpack.c.h.b16 %v119
    %v549 = vunpack.c.l.b16 %v120
    %v550 = vunpack.c.h.b16 %v120
    %v551 = vunpack.c.l.b16 %v121
    %v552 = vunpack.c.h.b16 %v121
    %v553 = vunpack.c.l.b16 %v122
    %v554 = vunpack.c.h.b16 %v122
    %v555 = vunpack.c.l.b16 %v123
    %v556 = vunpack.c.h.b16 %v123
    %v557 = vunpack.c.l.b16 %v124
    %v558 = vunpack.c.h.b16 %v124
    %v559 = vunpack.c.l.b16 %v125
    %v560 = vunpack.c.h.b16 %v125
    %v561 = vunpack.c.l.b16 %v126
    %v562 = vunpack.c.h.b16 %v126
    %v563 = vunpack.c.l.b16 %v127
    %v564 = vunpack.c.h.b16 %v127
    %v565 = vunpack.c.l.b16 %v128
    %v566 = vunpack.c.h.b16 %v128
    %v567 = vunpack.c.l.b16 %v129
    %v568 = vunpack.c.h.b16 %v129
    %v569 = vunpack.c.l.b16 %v130
    %v570 = vunpack.c.h.b16 %v130
    %v571 = vunpack.c.l.b16 %v131
    %v572 = vunpack.c.h.b16 %v131
    %v573 = vunpack.c.l.b16 %v132
    %v574 = vunpack.c.h.b16 %v132
    %v575 = vunpack.c.l.b16 %v133
    %v576 = vunpack.c.h.b16 %v133
    %v577 = vunpack.c.l.b16 %v134
    %v578 = vunpack.c.h.b16 %v134
    %v579 = vunpack.c.l.b16 %v135
    %v580 = vunpack.c.h.b16 %v135
    %v581 = vunpack.c.l.b16 %v136
    %v582 = vunpack.c.h.b16 %v136
    %v583 = vunpack.c.l.b16 %v137
    %v584 = vunpack.c.h.b16 %v137
    %v585 = vunpack.c.l.b16 %v138
    %v586 = vunpack.c.h.b16 %v138
    %v587 = vunpack.c.l.b16 %v139
    %v588 = vunpack.c.h.b16 %v139
    %v589 = vunpack.c.l.b16 %v140
    %v590 = vunpack.c.h.b16 %v140
    %v591 = vunpack.c.l.b16 %v141
    %v592 = vunpack.c.h.b16 %v141
    %v593 = vunpack.c.l.b16 %v142
    %v594 = vunpack.c.h.b16 %v142
    %v595 = vunpack.c.l.b16 %v143
    %v596 = vunpack.c.h.b16 %v143
    %v597 = vunpack.c.l.b16 %v144
    %v598 = vunpack.c.h.b16 %v144
    %v599 = vunpack.c.l.b16 %v145
    %v600 = vunpack.c.h.b16 %v145
    %v601 = vunpack.c.l.b16 %v146
    %v602 = vunpack.c.h.b16 %v146
    %v603 = vunpack.c.l.b16 %v147
    %v604 = vunpack.c.h.b16 %v147
    %v605 = vunpack.c.l.b16 %v148
    %v606 = vunpack.c.h.b16 %v148
    %v607 = vunpack.c.l.b16 %v149
    %v608 = vunpack.c.h.b16 %v149
    %v609 = vunpack.c.l.b16 %v150
    %v610 = vunpack.c.h.b16 %v150
    %v611 = vunpack.c.l.b16 %v151
    %v612 = vunpack.c.h.b16 %v151
    %v613 = vunpack.c.l.b16 %v152
    %v614 = vunpack.c.h.b16 %v152
    %v615 = vunpack.c.l.b16 %v153
    %v616 = vunpack.c.h.b16 %v153
    %v617 = vunpack.c.l.b16 %v154
    %v618 = vunpack.c.h.b16 %v154
    %v619 = vunpack.c.l.b16 %v155
    %v620 = vunpack.c.h.b16 %v155
    %v621 = vunpack.c.l.b16 %v156
    %v622 = vunpack.c.h.b16 %v156
    %v623 = vunpack.c.l.b16 %v157
    %v624 = vunpack.c.h.b16 %v157
    %v625 = vunpack.c.l.b16 %v158
    %v626 = vunpack.c.h.b16 %v158
    %v627 = vunpack.c.l.b16 %v159
    %v628 = vunpack.c.h.b16 %v159
    %v629 = vunpack.c.l.b16 %v160
    %v630 = vunpack.c.h.b16 %v160
    %v631 = vunpack.c.l.b16 %v161
    %v632 = vunpack.c.h.b16 %v161
    %v633 = vunpack.c.l.b16 %v162
    %v634 = vunpack.c.h.b16 %v162
    %v635 = vunpack.c.l.b16 %v163
    %v636 = vunpack.c.h.b16 %v163
    %v637 = vunpack.c.l.b16 %v164
    %v638 = vunpack.c.h.b16 %v164
    %v639 = vunpack.c.l.b16 %v165
    %v640 = vunpack.c.h.b16 %v165
    %v641 = vunpack.c.l.b16 %v166
    %v642 = vunpack.c.h.b16 %v166
    %v643 = vunpack.c.l.b16 %v167
    %v644 = vunpack.c.h.b16 %v167
    %v645 = vunpack.c.l.b16 %v168
    %v646 = vunpack.c.h.b16 %v168
    %v647 = vunpack.c.l.b16 %v169
    %v648 = vunpack.c.h.b16 %v169
    %v649 = vunpack.c.l.b16 %v170
    %v650 = vunpack.c.h.b16 %v170
    %v651 = vunpack.c.l.b16 %v171
    %v652 = vunpack.c.h.b16 %v171
    %v653 = vunpack.c.l.b16 %v172
    %v654 = vunpack.c.h.b16 %v172
    %v655 = vunpack.c.l.b16 %v173
    %v656 = vunpack.c.h.b16 %v173
    %v657 = vunpack.c.l.b16 %v174
    %v658 = vunpack.c.h.b16 %v174
    %v659 = vunpack.c.l.b16 %v175
    %v660 = vunpack.c.h.b16 %v175
    %v661 = vunpack.c.l.b16 %v176
    %v662 = vunpack.c.h.b16 %v176
    %v663 = vunpack.c.l.b16 %v177
    %v664 = vunpack.c.h.b16 %v177
    %v665 = vunpack.c.l.b16 %v178
    %v666 = vunpack.c.h.b16 %v178
    %v667 = vunpack.c.l.b16 %v179
    %v668 = vunpack.c.h.b16 %v179
    %v669 = vunpack.c.l.b16 %v180
    %v670 = vunpack.c.h.b16 %v180
    %v671 = vunpack.c.l.b16 %v181
    %v672 = vunpack.c.h.b16 %v181
    %v673 = vunpack.c.l.b16 %v182
    %v674 = vunpack.c.h.b16 %v182
    %v675 = vunpack.c.l.b16 %v183
    %v676 = vunpack.c.h.b16 %v183
    %v677 = vunpack.c.l.b16 %v184
    %v678 = vunpack.c.h.b16 %v184
    %v679 = vunpack.c.l.b16 %v185
    %v680 = vunpack.c.h.b16 %v185
    %v681 = vunpack.c.l.b16 %v186
    %v682 = vunpack.c.h.b16 %v186
    %v683 = vunpack.c.l.b16 %v187
    %v684 = vunpack.c.h.b16 %v187
    %v685 = vunpack.c.l.b16 %v188
    %v686 = vunpack.c.h.b16 %v188
    %v687 = vunpack.c.l.b16 %v189
    %v688 = vunpack.c.h.b16 %v189
    %v689 = vunpack.c.l.b16 %v190
    %v690 = vunpack.c.h.b16 %v190
    %v691 = vunpack.c.l.b16 %v191
    %v692 = vunpack.c.h.b16 %v191
    %v693 = vunpack.c.l.b16 %v192
    %v694 = vunpack.c.h.b16 %v192
    %v695 = vunpack.c.l.b16 %v193
    %v696 = vunpack.c.h.b16 %v193
    %v697 = vunpack.c.l.b16 %v194
    %v698 = vunpack.c.h.b16 %v194
    %v699 = vunpack.c.l.b16 %v195
    %v700 = vunpack.c.h.b16 %v195
    %v701 = vunpack.c.l.b16 %v196
    %v702 = vunpack.c.h.b16 %v196
    %v703 = vunpack.c.l.b16 %v197
    %v704 = vunpack.c.h.b16 %v197
    %v705 = vunpack.c.l.b16 %v198
    %v706 = vunpack.c.h.b16 %v198
    %v707 = vunpack.c.l.b16 %v199
    %v708 = vunpack.c.h.b16 %v199
    %v709 = vunpack.c.l.b16 %v200
    %v710 = vunpack.c.h.b16 %v200
    %v711 = vunpack.c.l.b16 %v201
    %v712 = vunpack.c.h.b16 %v201
    %v713 = vunpack.c.l.b16 %v202
    %v714 = vunpack.c.h.b16 %v202
    %v715 = vunpack.c.l.b16 %v203
    %v716 = vunpack.c.h.b16 %v203
    %v717 = vunpack.c.l.b16 %v204
    %v718 = vunpack.c.h.b16 %v204
    %v719 = vunpack.c.l.b16 %v205
    %v720 = vunpack.c.h.b16 %v205
    %v721 = vunpack.c.l.b16 %v206
    %v722 = vunpack.c.h.b16 %v206
    %v723 = vunpack.c.l.b16 %v207
    %v724 = vunpack.c.h.b16 %v207
    %v725 = vunpack.c.l.b16 %v208
    %v726 = vunpack.c.h.b16 %v208
    %v727 = vunpack.c.l.b16 %v209
    %v728 = vunpack.c.h.b16 %v209
    %v729 = vunpack.c.l.b16 %v210
    %v730 = vunpack.c.h.b16 %v210
    %v731 = vunpack.c.l.b16 %v211
    %v732 = vunpack.c.h.b16 %v211
    %v733 = vunpack.c.l.b16 %v212
    %v734 = vunpack.c.h.b16 %v212
    %v735 = vunpack.c.l.b16 %v213
    %v736 = vunpack.c.h.b16 %v213
    %v737 = vunpack.c.l.b16 %v214
    %v738 = vunpack.c.h.b16 %v214
    %v739 = vunpack.c.l.b16 %v215
    %v740 = vunpack.c.h.b16 %v215
    %v741 = vunpack.c.l.b16 %v216
    %v742 = vunpack.c.h.b16 %v216
    %v743 = vunpack.c.l.b16 %v217
    %v744 = vunpack.c.h.b16 %v217
    %v745 = vunpack.c.l.b16 %v218
    %v746 = vunpack.c.h.b16 %v218
    %v747 = vunpack.c.l.b16 %v219
    %v748 = vunpack.c.h.b16 %v219
    %v749 = vunpack.c.l.b16 %v220
    %v750 = vunpack.c.h.b16 %v220
    %v751 = vunpack.c.l.b16 %v221
    %v752 = vunpack.c.h.b16 %v221
    %v753 = vunpack.c.l.b16 %v222
    %v754 = vunpack.c.h.b16 %v222
    %v755 = vunpack.c.l.b16 %v223
    %v756 = vunpack.c.h.b16 %v223
    %v757 = vunpack.c.l.b16 %v224
    %v758 = vunpack.c.h.b16 %v224
    %v759 = vunpack.c.l.b16 %v225
    %v760 = vunpack.c.h.b16 %v225
    %v761 = vunpack.c.l.b16 %v226
    %v762 = vunpack.c.h.b16 %v226
    %v763 = vunpack.c.l.b16 %v227
    %v764 = vunpack.c.h.b16 %v227
    %v765 = vunpack.c.l.b16 %v228
    %v766 = vunpack.c.h.b16 %v228
    %v767 = vunpack.c.l.b16 %v229
    %v768 = vunpack.c.h.b16 %v229
    %v769 = vunpack.c.l.b16 %v230
    %v770 = vunpack.c.h.b16 %v230
    %v771 = vunpack.c.l.b16 %v231
    %v772 = vunpack.c.h.b16 %v231
    %v773 = vunpack.c.l.b16 %v232
    %v774 = vunpack.c.h.b16 %v232
    %v775 = vunpack.c.l.b16 %v233
    %v776 = vunpack.c.h.b16 %v233
    %v777 = vunpack.c.l.b16 %v234
    %v778 = vunpack.c.h.b16 %v234
    %v779 = vunpack.c.l.b16 %v235
    %v780 = vunpack.c.h.b16 %v235
    %v781 = vunpack.c.l.b16 %v236
    %v782 = vunpack.c.h.b16 %v236
    %v783 = vunpack.c.l.b16 %v237
    %v784 = vunpack.c.h.b16 %v237
    %v785 = vunpack.c.l.b16 %v238
    %v786 = vunpack.c.h.b16 %v238
    %v787 = vunpack.c.l.b16 %v239
    %v788 = vunpack.c.h.b16 %v239
    %v789 = vunpack.c.l.b16 %v240
    %v790 = vunpack.c.h.b16 %v240
    %v791 = vunpack.c.l.b16 %v241
    %v792 = vunpack.c.h.b16 %v241
    %v793 = vunpack.c.l.b16 %v242
    %v794 = vunpack.c.h.b16 %v242
    %v795 = vunpack.c.l.b16 %v243
    %v796 = vunpack.c.h.b16 %v243
    %v797 = vunpack.c.l.b16 %v244
    %v798 = vunpack.c.h.b16 %v244
    %v799 = vunpack.c.l.b16 %v245
    %v800 = vunpack.c.h.b16 %v245
    %v801 = vunpack.c.l.b16 %v246
    %v802 = vunpack.c.h.b16 %v246
    %v803 = vunpack.c.l.b16 %v247
    %v804 = vunpack.c.h.b16 %v247
    %v805 = vunpack.c.l.b16 %v248
    %v806 = vunpack.c.h.b16 %v248
    %v807 = vunpack.c.l.b16 %v249
    %v808 = vunpack.c.h.b16 %v249
    %v809 = vunpack.c.l.b16 %v250
    %v810 = vunpack.c.h.b16 %v250
    %v811 = vunpack.c.l.b16 %v251
    %v812 = vunpack.c.h.b16 %v251
    %v813 = vunpack.c.l.b16 %v252
    %v814 = vunpack.c.h.b16 %v252
    %v815 = vunpack.c.l.b16 %v253
    %v816 = vunpack.c.h.b16 %v253
    %v817 = vunpack.c.l.b16 %v254
    %v818 = vunpack.c.h.b16 %v254
    %v819 = vunpack.c.l.b16 %v255
    %v820 = vunpack.c.h.b16 %v255
    %v821 = vunpack.c.l.b16 %v256
    %v822 = vunpack.c.h.b16 %v256
    %v823 = vunpack.c.l.b16 %v257
    %v824 = vunpack.c.h.b16 %v257
    %v825 = vunpack.c.l.b16 %v258
    %v826 = vunpack.c.h.b16 %v258
    %v827 = vunpack.c.l.b16 %v259
    %v828 = vunpack.c.h.b16 %v259
    %v829 = vunpack.c.l.b16 %v260
    %v830 = vunpack.c.h.b16 %v260
    %v831 = vunpack.c.l.b16 %v261
    %v832 = vunpack.c.h.b16 %v261
    %v833 = vunpack.c.l.b16 %v262
    %v834 = vunpack.c.h.b16 %v262
    %v835 = vunpack.c.l.b16 %v263
    %v836 = vunpack.c.h.b16 %v263
    %v837 = vunpack.c.l.b16 %v264
    %v838 = vunpack.c.h.b16 %v264
    %v839 = vunpack.c.l.b16 %v265
    %v840 = vunpack.c.h.b16 %v265
    %v841 = vunpack.c.l.b16 %v266
    %v842 = vunpack.c.h.b16 %v266
    %v843 = vunpack.c.l.b16 %v267
    %v844 = vunpack.c.h.b16 %v267
    %v845 = vunpack.c.l.b16 %v268
    %v846 = vunpack.c.h.b16 %v268
    %v847 = vunpack.c.l.b16 %v269
    %v848 = vunpack.c.h.b16 %v269
    %v849 = vunpack.c.l.b16 %v270
    %v850 = vunpack.c.h.b16 %v270
    %v851 = vunpack.c.l.b16 %v271
    %v852 = vunpack.c.h.b16 %v271
    %v853 = vunpack.c.l.b16 %v272
    %v854 = vunpack.c.h.b16 %v272
    %v855 = vunpack.c.l.b16 %v273
    %v856 = vunpack.c.h.b16 %v273
    %v857 = vunpack.c.l.b16 %v274
    %v858 = vunpack.c.h.b16 %v274
    %v859 = vunpack.c.l.b16 %v275
    %v860 = vunpack.c.h.b16 %v275
    %v861 = vunpack.c.l.b16 %v276
    %v862 = vunpack.c.h.b16 %v276
    %v863 = vpack.c.b16 %v563, %v543
    %v864 = vpack.c.b16 %v564, %v544
    %v865 = vpack.c.b16 %v565, %v545
    %v866 = vpack.c.b16 %v566, %v546
    %v867 = vpack.c.b16 %v567, %v547
    %v868 = vpack.c.b16 %v568, %v548
    %v869 = vpack.c.b16 %v569, %v549
    %v870 = vpack.c.b16 %v570, %v550
    %v871 = vpack.c.b16 %v571, %v551
    %v872 = vpack.c.b16 %v572, %v552
    %v873 = vpack.c.b16 %v573, %v553
    %v874 = vpack.c.b16 %v574, %v554
    %v875 = vpack.c.b16 %v575, %v555
    %v876 = vpack.c.b16 %v576, %v556
    %v877 = vpack.c.b16 %v577, %v557
    %v878 = vpack.c.b16 %v578, %v558
    %v879 = vpack.c.b16 %v579, %v559
    %v880 = vpack.c.b16 %v580, %v560
    %v881 = vpack.c.b16 %v581, %v561
    %v882 = vpack.c.b16 %v582, %v562
    %v883 = vpack.c.b16 %v603, %v583
    %v884 = vpack.c.b16 %v604, %v584
    %v885 = vpack.c.b16 %v605, %v585
    %v886 = vpack.c.b16 %v606, %v586
    %v887 = vpack.c.b16 %v607, %v587
    %v888 = vpack.c.b16 %v608, %v588
    %v889 = vpack.c.b16 %v609, %v589
    %v890 = vpack.c.b16 %v610, %v590
    %v891 = vpack.c.b16 %v611, %v591
    %v892 = vpack.c.b16 %v612, %v592
    %v893 = vpack.c.b16 %v613, %v593
    %v894 = vpack.c.b16 %v614, %v594
    %v895 = vpack.c.b16 %v615, %v595
    %v896 = vpack.c.b16 %v616, %v596
    %v897 = vpack.c.b16 %v617, %v597
    %v898 = vpack.c.b16 %v618, %v598
    %v899 = vpack.c.b16 %v619, %v599
    %v900 = vpack.c.b16 %v620, %v600
    %v901 = vpack.c.b16 %v621, %v601
    %v902 = vpack.c.b16 %v622, %v602
    %v903 = vpack.c.b16 %v643, %v623
    %v904 = vpack.c.b16 %v644, %v624
    %v905 = vpack.c.b16 %v645, %v625
    %v906 = vpack.c.b16 %v646, %v626
    %v907 = vpack.c.b16 %v647, %v627
    %v908 = vpack.c.b16 %v648, %v628
    %v909 = vpack.c.b16 %v649, %v629
    %v910 = vpack.c.b16 %v650, %v630
    %v911 = vpack.c.b16 %v651, %v631
    %v912 = vpack.c.b16 %v652, %v632
    %v913 = vpack.c.b16 %v653, %v633
    %v914 = vpack.c.b16 %v654, %v634
    %v915 = vpack.c.b16 %v655, %v635
    %v916 = vpack.c.b16 %v656, %v636
    %v917 = vpack.c.b16 %v657, %v637
    %v918 = vpack.c.b16 %v658, %v638
    %v919 = vpack.c.b16 %v659, %v639
    %v920 = vpack.c.b16 %v660, %v640
    %v921 = vpack.c.b16 %v661, %v641
    %v922 = vpack.c.b16 %v662, %v642
    %v923 = vpack.c.b16 %v683, %v663
    %v924 = vpack.c.b16 %v684, %v664
    %v925 = vpack.c.b16 %v685, %v665
    %v926 = vpack.c.b16 %v686, %v666
    %v927 = vpack.c.b16 %v687, %v667
    %v928 = vpack.c.b16 %v688, %v668
    %v929 = vpack.c.b16 %v689, %v669
    %v930 = vpack.c.b16 %v690, %v670
    %v931 = vpack.c.b16 %v691, %v671
    %v932 = vpack.c.b16 %v692, %v672
    %v933 = vpack.c.b16 %v693, %v673
    %v934 = vpack.c.b16 %v694, %v674
    %v935 = vpack.c.b16 %v695, %v675
    %v936 = vpack.c.b16 %v696, %v676
    %v937 = vpack.c.b16 %v697, %v677
    %v938 = vpack.c.b16 %v698, %v678
    %v939 = vpack.c.b16 %v699, %v679
    %v940 = vpack.c.b16 %v700, %v680
    %v941 = vpack.c.b16 %v701, %v681
    %v942 = vpack.c.b16 %v702, %v682
    %v943 = vpack.c.b16 %v723, %v703
    %v944 = vpack.c.b16 %v724, %v704
    %v945 = vpack.c.b16 %v725, %v705
    %v946 = vpack.c.b16 %v726, %v706
    %v947 = vpack.c.b16 %v727, %v707
    %v948 = vpack.c.b16 %v728, %v708
    %v949 = vpack.c.b16 %v729, %v709
    %v950 = vpack.c.b16 %v730, %v710
    %v951 = vpack.c.b16 %v731, %v711
    %v952 = vpack.c.b16 %v732, %v712
    %v953 = vpack.c.b16 %v733, %v713
    %v954 = vpack.c.b16 %v734, %v714
    %v955 = vpack.c.b16 %v735, %v715
    %v956 = vpack.c.b16 %v736, %v716
    %v957 = vpack.c.b16 %v737, %v717
    %v958 = vpack.c.b16 %v738, %v718
    %v959 = vpack.c.b16 %v739, %v719
    %v960 = vpack.c.b16 %v740, %v720
    %v961 = vpack.c.b16 %v741, %v721
    %v962 = vpack.c.b16 %v742, %v722
    %v963 = vpack.c.b16 %v763, %v743
    %v964 = vpack.c.b16 %v764, %v744
    %v965 = vpack.c.b16 %v765, %v745
    %v966 = vpack.c.b16 %v766, %v746
    %v967 = vpack.c.b16 %v767, %v747
    %v968 = vpack.c.b16 %v768, %v748
    %v969 = vpack.c.b16 %v769, %v749
    %v970 = vpack.c.b16 %v770, %v750
    %v971 = vpack.c.b16 %v771, %v751
    %v972 = vpack.c.b16 %v772, %v752
    %v973 = vpack.c.b16 %v773, %v753
    %v974 = vpack.c.b16 %v774, %v754
    %v975 = vpack.c.b16 %v775, %v755
    %v976 = vpack.c.b16 %v776, %v756
    %v977 = vpack.c.b16 %v777, %v757
    %v978 = vpack.c.b16 %v778, %v758
    %v979 = vpack.c.b16 %v779, %v759
    %v980 = vpack.c.b16 %v780, %v760
    %v981 = vpack.c.b16 %v781, %v761
    %v982 = vpack.c.b16 %v782, %v762
    %v983 = vpack.c.b16 %v803, %v783
    %v984 = vpack.c.b16 %v804, %v784
    %v985 = vpack.c.b16 %v805, %v785
    %v986 = vpack.c.b16 %v806, %v786
    %v987 = vpack.c.b16 %v807, %v787
    %v988 = vpack.c.b16 %v808, %v788
    %v989 = vpack.c.b16 %v809, %v789
    %v990 = vpack.c.b16 %v810, %v790
    %v991 = vpack.c.b16 %v811, %v791
    %v992 = vpack.c.b16 %v812, %v792
    %v993 = vpack.c.b16 %v813, %v793
    %v994 = vpack.c.b16 %v814, %v794
    %v995 = vpack.c.b16 %v815, %v795
    %v996 = vpack.c.b16 %v816, %v796
    %v997 = vpack.c.b16 %v817, %v797
    %v998 = vpack.c.b16 %v818, %v798
    %v999 = vpack.c.b16 %v819, %v799
    %v1000 = vpack.c.b16 %v820, %v800
    %v1001 = vpack.c.b16 %v821, %v801
    %v1002 = vpack.c.b16 %v822, %v802
    %v1003 = vpack.c.b16 %v843, %v823
    %v1004 = vpack.c.b16 %v844, %v824
    %v1005 = vpack.c.b16 %v845, %v825
    %v1006 = vpack.c.b16 %v846, %v826
    %v1007 = vpack.c.b16 %v847, %v827
    %v1008 = vpack.c.b16 %v848, %v828
    %v1009 = vpack.c.b16 %v849, %v829
    %v1010 = vpack.c.b16 %v850, %v830
    %v1011 = vpack.c.b16 %v851, %v831
    %v1012 = vpack.c.b16 %v852, %v832
    %v1013 = vpack.c.b16 %v853, %v833
    %v1014 = vpack.c.b16 %v854, %v834
    %v1015 = vpack.c.b16 %v855, %v835
    %v1016 = vpack.c.b16 %v856, %v836
    %v1017 = vpack.c.b16 %v857, %v837
    %v1018 = vpack.c.b16 %v858, %v838
    %v1019 = vpack.c.b16 %v859, %v839
    %v1020 = vpack.c.b16 %v860, %v840
    %v1021 = vpack.c.b16 %v861, %v841
    %v1022 = vpack.c.b16 %v862, %v842
    %1183 = vmatprep.subr.bf16.mxu0 %v864
    %1184 = vmatpush1.bf16.msra.mxu0 %v863
    %1185 = vmatprep.subr.bf16.mxu0 %v884
    %1186 = vmatpush1.bf16.msra.mxu0 %v883
    %1187 = vmatprep.subr.bf16.mxu0 %v904
    %1188 = vmatpush1.bf16.msra.mxu0 %v903
    %1189 = vmatprep.subr.bf16.mxu0 %v924
    %1190 = vmatpush1.bf16.msra.mxu0 %v923
    %1191 = vmatprep.subr.bf16.mxu0 %v944
    %1192 = vmatpush1.bf16.msra.mxu0 %v943
    %1193 = vmatprep.subr.bf16.mxu0 %v964
    %1194 = vmatpush1.bf16.msra.mxu0 %v963
    %1195 = vmatprep.subr.bf16.mxu0 %v984
    %1196 = vmatpush1.bf16.msra.mxu0 %v983
    %1197 = vmatprep.subr.bf16.mxu0 %v1004
    %1198 = vmatpush1.bf16.msra.mxu0 %v1003
    %1199 = vmatprep.subr.bf16.mxu0 0
    %1200 = vmatpush1.bf16.msra.mxu0 0
    %1201 = vmatprep.subr.bf16.mxu0 0
    %1202 = vmatpush1.bf16.msra.mxu0 0
    %1203 = vmatprep.subr.bf16.mxu0 0
    %1204 = vmatpush1.bf16.msra.mxu0 0
    %1205 = vmatprep.subr.bf16.mxu0 0
    %1206 = vmatpush1.bf16.msra.mxu0 0
    %1207 = vmatprep.subr.bf16.mxu0 0
    %1208 = vmatpush1.bf16.msra.mxu0 0
    %1209 = vmatprep.subr.bf16.mxu0 0
    %1210 = vmatpush1.bf16.msra.mxu0 0
    %1211 = vmatprep.subr.bf16.mxu0 0
    %1212 = vmatpush1.bf16.msra.mxu0 0
    %1213 = vmatprep.subr.bf16.mxu0 0
    %1214 = vmatpush1.bf16.msra.mxu0 0
    %1215 = vmatprep.mubr.bf16.mxu0 0
    %1216 = vmatmul.mubr.bf16.gmra.mrb[0].mxu0 %v116
    %v1217 = vpop.f32.mrb[0].mxu0
    %v1218 = vadd.f32 %v286, %v1217
    %v1219 = vpop.f32.mrb[0].mxu0
    %v1220 = vadd.f32 %v290, %v1219
    %v1221 = vpop.f32.mrb[0].mxu0
    %v1222 = vpop.f32.mrb[0].mxu0
    %1223 = vdwg.mxu0
    %1224 = vmatprep.subr.bf16.mxu0 %v866
    %1225 = vmatpush1.bf16.msra.mxu0 %v865
    %1226 = vmatprep.subr.bf16.mxu0 %v886
    %1227 = vmatpush1.bf16.msra.mxu0 %v885
    %1228 = vmatprep.subr.bf16.mxu0 %v906
    %1229 = vmatpush1.bf16.msra.mxu0 %v905
    %1230 = vmatprep.subr.bf16.mxu0 %v926
    %1231 = vmatpush1.bf16.msra.mxu0 %v925
    %1232 = vmatprep.subr.bf16.mxu0 %v946
    %1233 = vmatpush1.bf16.msra.mxu0 %v945
    %1234 = vmatprep.subr.bf16.mxu0 %v966
    %1235 = vmatpush1.bf16.msra.mxu0 %v965
    %1236 = vmatprep.subr.bf16.mxu0 %v986
    %1237 = vmatpush1.bf16.msra.mxu0 %v985
    %1238 = vmatprep.subr.bf16.mxu0 %v1006
    %1239 = vmatpush1.bf16.msra.mxu0 %v1005
    %1240 = vmatprep.subr.bf16.mxu0 0
    %1241 = vmatpush1.bf16.msra.mxu0 0
    %1242 = vmatprep.subr.bf16.mxu0 0
    %1243 = vmatpush1.bf16.msra.mxu0 0
    %1244 = vmatprep.subr.bf16.mxu0 0
    %1245 = vmatpush1.bf16.msra.mxu0 0
    %1246 = vmatprep.subr.bf16.mxu0 0
    %1247 = vmatpush1.bf16.msra.mxu0 0
    %1248 = vmatprep.subr.bf16.mxu0 0
    %1249 = vmatpush1.bf16.msra.mxu0 0
    %1250 = vmatprep.subr.bf16.mxu0 0
    %1251 = vmatpush1.bf16.msra.mxu0 0
    %1252 = vmatprep.subr.bf16.mxu0 0
    %1253 = vmatpush1.bf16.msra.mxu0 0
    %1254 = vmatprep.subr.bf16.mxu0 0
    %1255 = vmatpush1.bf16.msra.mxu0 0
    %1256 = vmatprep.mubr.bf16.mxu0 0
    %1257 = vmatmul.mubr.bf16.gmra.mrb[0].mxu0 %v116
    %v1258 = vpop.f32.mrb[0].mxu0
    %v1259 = vadd.f32 %v294, %v1258
    %v1260 = vpop.f32.mrb[0].mxu0
    %v1261 = vadd.f32 %v298, %v1260
    %v1262 = vpop.f32.mrb[0].mxu0
    %v1263 = vpop.f32.mrb[0].mxu0
    %1264 = vdwg.mxu0
    %1265 = vmatprep.subr.bf16.mxu0 %v868
    %1266 = vmatpush1.bf16.msra.mxu0 %v867
    %1267 = vmatprep.subr.bf16.mxu0 %v888
    %1268 = vmatpush1.bf16.msra.mxu0 %v887
    %1269 = vmatprep.subr.bf16.mxu0 %v908
    %1270 = vmatpush1.bf16.msra.mxu0 %v907
    %1271 = vmatprep.subr.bf16.mxu0 %v928
    %1272 = vmatpush1.bf16.msra.mxu0 %v927
    %1273 = vmatprep.subr.bf16.mxu0 %v948
    %1274 = vmatpush1.bf16.msra.mxu0 %v947
    %1275 = vmatprep.subr.bf16.mxu0 %v968
    %1276 = vmatpush1.bf16.msra.mxu0 %v967
    %1277 = vmatprep.subr.bf16.mxu0 %v988
    %1278 = vmatpush1.bf16.msra.mxu0 %v987
    %1279 = vmatprep.subr.bf16.mxu0 %v1008
    %1280 = vmatpush1.bf16.msra.mxu0 %v1007
    %1281 = vmatprep.subr.bf16.mxu0 0
    %1282 = vmatpush1.bf16.msra.mxu0 0
    %1283 = vmatprep.subr.bf16.mxu0 0
    %1284 = vmatpush1.bf16.msra.mxu0 0
    %1285 = vmatprep.subr.bf16.mxu0 0
    %1286 = vmatpush1.bf16.msra.mxu0 0
    %1287 = vmatprep.subr.bf16.mxu0 0
    %1288 = vmatpush1.bf16.msra.mxu0 0
    %1289 = vmatprep.subr.bf16.mxu0 0
    %1290 = vmatpush1.bf16.msra.mxu0 0
    %1291 = vmatprep.subr.bf16.mxu0 0
    %1292 = vmatpush1.bf16.msra.mxu0 0
    %1293 = vmatprep.subr.bf16.mxu0 0
    %1294 = vmatpush1.bf16.msra.mxu0 0
    %1295 = vmatprep.subr.bf16.mxu0 0
    %1296 = vmatpush1.bf16.msra.mxu0 0
    %1297 = vmatprep.mubr.bf16.mxu0 0
    %1298 = vmatmul.mubr.bf16.gmra.mrb[0].mxu0 %v116
    %v1299 = vpop.f32.mrb[0].mxu0
    %v1300 = vadd.f32 %v302, %v1299
    %v1301 = vpop.f32.mrb[0].mxu0
    %v1302 = vadd.f32 %v306, %v1301
    %v1303 = vpop.f32.mrb[0].mxu0
    %v1304 = vpop.f32.mrb[0].mxu0
    %1305 = vdwg.mxu0
    %1306 = vmatprep.subr.bf16.mxu0 %v870
    %1307 = vmatpush1.bf16.msra.mxu0 %v869
    %1308 = vmatprep.subr.bf16.mxu0 %v890
    %1309 = vmatpush1.bf16.msra.mxu0 %v889
    %1310 = vmatprep.subr.bf16.mxu0 %v910
    %1311 = vmatpush1.bf16.msra.mxu0 %v909
    %1312 = vmatprep.subr.bf16.mxu0 %v930
    %1313 = vmatpush1.bf16.msra.mxu0 %v929
    %1314 = vmatprep.subr.bf16.mxu0 %v950
    %1315 = vmatpush1.bf16.msra.mxu0 %v949
    %1316 = vmatprep.subr.bf16.mxu0 %v970
    %1317 = vmatpush1.bf16.msra.mxu0 %v969
    %1318 = vmatprep.subr.bf16.mxu0 %v990
    %1319 = vmatpush1.bf16.msra.mxu0 %v989
    %1320 = vmatprep.subr.bf16.mxu0 %v1010
    %1321 = vmatpush1.bf16.msra.mxu0 %v1009
    %1322 = vmatprep.subr.bf16.mxu0 0
    %1323 = vmatpush1.bf16.msra.mxu0 0
    %1324 = vmatprep.subr.bf16.mxu0 0
    %1325 = vmatpush1.bf16.msra.mxu0 0
    %1326 = vmatprep.subr.bf16.mxu0 0
    %1327 = vmatpush1.bf16.msra.mxu0 0
    %1328 = vmatprep.subr.bf16.mxu0 0
    %1329 = vmatpush1.bf16.msra.mxu0 0
    %1330 = vmatprep.subr.bf16.mxu0 0
    %1331 = vmatpush1.bf16.msra.mxu0 0
    %1332 = vmatprep.subr.bf16.mxu0 0
    %1333 = vmatpush1.bf16.msra.mxu0 0
    %1334 = vmatprep.subr.bf16.mxu0 0
    %1335 = vmatpush1.bf16.msra.mxu0 0
    %1336 = vmatprep.subr.bf16.mxu0 0
    %1337 = vmatpush1.bf16.msra.mxu0 0
    %1338 = vmatprep.mubr.bf16.mxu0 0
    %1339 = vmatmul.mubr.bf16.gmra.mrb[0].mxu0 %v116
    %v1340 = vpop.f32.mrb[0].mxu0
    %v1341 = vadd.f32 %v310, %v1340
    %v1342 = vpop.f32.mrb[0].mxu0
    %v1343 = vadd.f32 %v314, %v1342
    %v1344 = vpop.f32.mrb[0].mxu0
    %v1345 = vpop.f32.mrb[0].mxu0
    %1346 = vdwg.mxu0
    %1347 = vmatprep.subr.bf16.mxu0 %v872
    %1348 = vmatpush1.bf16.msra.mxu0 %v871
    %1349 = vmatprep.subr.bf16.mxu0 %v892
    %1350 = vmatpush1.bf16.msra.mxu0 %v891
    %1351 = vmatprep.subr.bf16.mxu0 %v912
    %1352 = vmatpush1.bf16.msra.mxu0 %v911
    %1353 = vmatprep.subr.bf16.mxu0 %v932
    %1354 = vmatpush1.bf16.msra.mxu0 %v931
    %1355 = vmatprep.subr.bf16.mxu0 %v952
    %1356 = vmatpush1.bf16.msra.mxu0 %v951
    %1357 = vmatprep.subr.bf16.mxu0 %v972
    %1358 = vmatpush1.bf16.msra.mxu0 %v971
    %1359 = vmatprep.subr.bf16.mxu0 %v992
    %1360 = vmatpush1.bf16.msra.mxu0 %v991
    %1361 = vmatprep.subr.bf16.mxu0 %v1012
    %1362 = vmatpush1.bf16.msra.mxu0 %v1011
    %1363 = vmatprep.subr.bf16.mxu0 0
    %1364 = vmatpush1.bf16.msra.mxu0 0
    %1365 = vmatprep.subr.bf16.mxu0 0
    %1366 = vmatpush1.bf16.msra.mxu0 0
    %1367 = vmatprep.subr.bf16.mxu0 0
    %1368 = vmatpush1.bf16.msra.mxu0 0
    %1369 = vmatprep.subr.bf16.mxu0 0
    %1370 = vmatpush1.bf16.msra.mxu0 0
    %1371 = vmatprep.subr.bf16.mxu0 0
    %1372 = vmatpush1.bf16.msra.mxu0 0
    %1373 = vmatprep.subr.bf16.mxu0 0
    %1374 = vmatpush1.bf16.msra.mxu0 0
    %1375 = vmatprep.subr.bf16.mxu0 0
    %1376 = vmatpush1.bf16.msra.mxu0 0
    %1377 = vmatprep.subr.bf16.mxu0 0
    %1378 = vmatpush1.bf16.msra.mxu0 0
    %1379 = vmatprep.mubr.bf16.mxu0 0
    %1380 = vmatmul.mubr.bf16.gmra.mrb[0].mxu0 %v116
    %v1381 = vpop.f32.mrb[0].mxu0
    %v1382 = vadd.f32 %v318, %v1381
    %v1383 = vpop.f32.mrb[0].mxu0
    %v1384 = vadd.f32 %v322, %v1383
    %v1385 = vpop.f32.mrb[0].mxu0
    %v1386 = vpop.f32.mrb[0].mxu0
    %1387 = vdwg.mxu0
    %1388 = vmatprep.subr.bf16.mxu0 %v874
    %1389 = vmatpush1.bf16.msra.mxu0 %v873
    %1390 = vmatprep.subr.bf16.mxu0 %v894
    %1391 = vmatpush1.bf16.msra.mxu0 %v893
    %1392 = vmatprep.subr.bf16.mxu0 %v914
    %1393 = vmatpush1.bf16.msra.mxu0 %v913
    %1394 = vmatprep.subr.bf16.mxu0 %v934
    %1395 = vmatpush1.bf16.msra.mxu0 %v933
    %1396 = vmatprep.subr.bf16.mxu0 %v954
    %1397 = vmatpush1.bf16.msra.mxu0 %v953
    %1398 = vmatprep.subr.bf16.mxu0 %v974
    %1399 = vmatpush1.bf16.msra.mxu0 %v973
    %1400 = vmatprep.subr.bf16.mxu0 %v994
    %1401 = vmatpush1.bf16.msra.mxu0 %v993
    %1402 = vmatprep.subr.bf16.mxu0 %v1014
    %1403 = vmatpush1.bf16.msra.mxu0 %v1013
    %1404 = vmatprep.subr.bf16.mxu0 0
    %1405 = vmatpush1.bf16.msra.mxu0 0
    %1406 = vmatprep.subr.bf16.mxu0 0
    %1407 = vmatpush1.bf16.msra.mxu0 0
    %1408 = vmatprep.subr.bf16.mxu0 0
    %1409 = vmatpush1.bf16.msra.mxu0 0
    %1410 = vmatprep.subr.bf16.mxu0 0
    %1411 = vmatpush1.bf16.msra.mxu0 0
    %1412 = vmatprep.subr.bf16.mxu0 0
    %1413 = vmatpush1.bf16.msra.mxu0 0
    %1414 = vmatprep.subr.bf16.mxu0 0
    %1415 = vmatpush1.bf16.msra.mxu0 0
    %1416 = vmatprep.subr.bf16.mxu0 0
    %1417 = vmatpush1.bf16.msra.mxu0 0
    %1418 = vmatprep.subr.bf16.mxu0 0
    %1419 = vmatpush1.bf16.msra.mxu0 0
    %1420 = vmatprep.mubr.bf16.mxu0 0
    %1421 = vmatmul.mubr.bf16.gmra.mrb[0].mxu0 %v116
    %v1422 = vpop.f32.mrb[0].mxu0
    %v1423 = vadd.f32 %v326, %v1422
    %v1424 = vpop.f32.mrb[0].mxu0
    %v1425 = vadd.f32 %v330, %v1424
    %v1426 = vpop.f32.mrb[0].mxu0
    %v1427 = vpop.f32.mrb[0].mxu0
    %1428 = vdwg.mxu0
    %1429 = vmatprep.subr.bf16.mxu0 %v876
    %1430 = vmatpush1.bf16.msra.mxu0 %v875
    %1431 = vmatprep.subr.bf16.mxu0 %v896
    %1432 = vmatpush1.bf16.msra.mxu0 %v895
    %1433 = vmatprep.subr.bf16.mxu0 %v916
    %1434 = vmatpush1.bf16.msra.mxu0 %v915
    %1435 = vmatprep.subr.bf16.mxu0 %v936
    %1436 = vmatpush1.bf16.msra.mxu0 %v935
    %1437 = vmatprep.subr.bf16.mxu0 %v956
    %1438 = vmatpush1.bf16.msra.mxu0 %v955
    %1439 = vmatprep.subr.bf16.mxu0 %v976
    %1440 = vmatpush1.bf16.msra.mxu0 %v975
    %1441 = vmatprep.subr.bf16.mxu0 %v996
    %1442 = vmatpush1.bf16.msra.mxu0 %v995
    %1443 = vmatprep.subr.bf16.mxu0 %v1016
    %1444 = vmatpush1.bf16.msra.mxu0 %v1015
    %1445 = vmatprep.subr.bf16.mxu0 0
    %1446 = vmatpush1.bf16.msra.mxu0 0
    %1447 = vmatprep.subr.bf16.mxu0 0
    %1448 = vmatpush1.bf16.msra.mxu0 0
    %1449 = vmatprep.subr.bf16.mxu0 0
    %1450 = vmatpush1.bf16.msra.mxu0 0
    %1451 = vmatprep.subr.bf16.mxu0 0
    %1452 = vmatpush1.bf16.msra.mxu0 0
    %1453 = vmatprep.subr.bf16.mxu0 0
    %1454 = vmatpush1.bf16.msra.mxu0 0
    %1455 = vmatprep.subr.bf16.mxu0 0
    %1456 = vmatpush1.bf16.msra.mxu0 0
    %1457 = vmatprep.subr.bf16.mxu0 0
    %1458 = vmatpush1.bf16.msra.mxu0 0
    %1459 = vmatprep.subr.bf16.mxu0 0
    %1460 = vmatpush1.bf16.msra.mxu0 0
    %1461 = vmatprep.mubr.bf16.mxu0 0
    %1462 = vmatmul.mubr.bf16.gmra.mrb[0].mxu0 %v116
    %v1463 = vpop.f32.mrb[0].mxu0
    %v1464 = vadd.f32 %v334, %v1463
    %v1465 = vpop.f32.mrb[0].mxu0
    %v1466 = vadd.f32 %v338, %v1465
    %v1467 = vpop.f32.mrb[0].mxu0
    %v1468 = vpop.f32.mrb[0].mxu0
    %1469 = vdwg.mxu0
    %1470 = vmatprep.subr.bf16.mxu0 %v878
    %1471 = vmatpush1.bf16.msra.mxu0 %v877
    %1472 = vmatprep.subr.bf16.mxu0 %v898
    %1473 = vmatpush1.bf16.msra.mxu0 %v897
    %1474 = vmatprep.subr.bf16.mxu0 %v918
    %1475 = vmatpush1.bf16.msra.mxu0 %v917
    %1476 = vmatprep.subr.bf16.mxu0 %v938
    %1477 = vmatpush1.bf16.msra.mxu0 %v937
    %1478 = vmatprep.subr.bf16.mxu0 %v958
    %1479 = vmatpush1.bf16.msra.mxu0 %v957
    %1480 = vmatprep.subr.bf16.mxu0 %v978
    %1481 = vmatpush1.bf16.msra.mxu0 %v977
    %1482 = vmatprep.subr.bf16.mxu0 %v998
    %1483 = vmatpush1.bf16.msra.mxu0 %v997
    %1484 = vmatprep.subr.bf16.mxu0 %v1018
    %1485 = vmatpush1.bf16.msra.mxu0 %v1017
    %1486 = vmatprep.subr.bf16.mxu0 0
    %1487 = vmatpush1.bf16.msra.mxu0 0
    %1488 = vmatprep.subr.bf16.mxu0 0
    %1489 = vmatpush1.bf16.msra.mxu0 0
    %1490 = vmatprep.subr.bf16.mxu0 0
    %1491 = vmatpush1.bf16.msra.mxu0 0
    %1492 = vmatprep.subr.bf16.mxu0 0
    %1493 = vmatpush1.bf16.msra.mxu0 0
    %1494 = vmatprep.subr.bf16.mxu0 0
    %1495 = vmatpush1.bf16.msra.mxu0 0
    %1496 = vmatprep.subr.bf16.mxu0 0
    %1497 = vmatpush1.bf16.msra.mxu0 0
    %1498 = vmatprep.subr.bf16.mxu0 0
    %1499 = vmatpush1.bf16.msra.mxu0 0
    %1500 = vmatprep.subr.bf16.mxu0 0
    %1501 = vmatpush1.bf16.msra.mxu0 0
    %1502 = vmatprep.mubr.bf16.mxu0 0
    %1503 = vmatmul.mubr.bf16.gmra.mrb[0].mxu0 %v116
    %v1504 = vpop.f32.mrb[0].mxu0
    %v1505 = vadd.f32 %v342, %v1504
    %v1506 = vpop.f32.mrb[0].mxu0
    %v1507 = vadd.f32 %v346, %v1506
    %v1508 = vpop.f32.mrb[0].mxu0
    %v1509 = vpop.f32.mrb[0].mxu0
    %1510 = vdwg.mxu0
    %1511 = vmatprep.subr.bf16.mxu0 %v880
    %1512 = vmatpush1.bf16.msra.mxu0 %v879
    %1513 = vmatprep.subr.bf16.mxu0 %v900
    %1514 = vmatpush1.bf16.msra.mxu0 %v899
    %1515 = vmatprep.subr.bf16.mxu0 %v920
    %1516 = vmatpush1.bf16.msra.mxu0 %v919
    %1517 = vmatprep.subr.bf16.mxu0 %v940
    %1518 = vmatpush1.bf16.msra.mxu0 %v939
    %1519 = vmatprep.subr.bf16.mxu0 %v960
    %1520 = vmatpush1.bf16.msra.mxu0 %v959
    %1521 = vmatprep.subr.bf16.mxu0 %v980
    %1522 = vmatpush1.bf16.msra.mxu0 %v979
    %1523 = vmatprep.subr.bf16.mxu0 %v1000
    %1524 = vmatpush1.bf16.msra.mxu0 %v999
    %1525 = vmatprep.subr.bf16.mxu0 %v1020
    %1526 = vmatpush1.bf16.msra.mxu0 %v1019
    %1527 = vmatprep.subr.bf16.mxu0 0
    %1528 = vmatpush1.bf16.msra.mxu0 0
    %1529 = vmatprep.subr.bf16.mxu0 0
    %1530 = vmatpush1.bf16.msra.mxu0 0
    %1531 = vmatprep.subr.bf16.mxu0 0
    %1532 = vmatpush1.bf16.msra.mxu0 0
    %1533 = vmatprep.subr.bf16.mxu0 0
    %1534 = vmatpush1.bf16.msra.mxu0 0
    %1535 = vmatprep.subr.bf16.mxu0 0
    %1536 = vmatpush1.bf16.msra.mxu0 0
    %1537 = vmatprep.subr.bf16.mxu0 0
    %1538 = vmatpush1.bf16.msra.mxu0 0
    %1539 = vmatprep.subr.bf16.mxu0 0
    %1540 = vmatpush1.bf16.msra.mxu0 0
    %1541 = vmatprep.subr.bf16.mxu0 0
    %1542 = vmatpush1.bf16.msra.mxu0 0
    %1543 = vmatprep.mubr.bf16.mxu0 0
    %1544 = vmatmul.mubr.bf16.gmra.mrb[0].mxu0 %v116
    %v1545 = vpop.f32.mrb[0].mxu0
    %v1546 = vadd.f32 %v350, %v1545
    %v1547 = vpop.f32.mrb[0].mxu0
    %v1548 = vadd.f32 %v354, %v1547
    %v1549 = vpop.f32.mrb[0].mxu0
    %v1550 = vpop.f32.mrb[0].mxu0
    %1551 = vdwg.mxu0
    %1552 = vmatprep.subr.bf16.mxu0 %v882
    %1553 = vmatpush1.bf16.msra.mxu0 %v881
    %1554 = vmatprep.subr.bf16.mxu0 %v902
    %1555 = vmatpush1.bf16.msra.mxu0 %v901
    %1556 = vmatprep.subr.bf16.mxu0 %v922
    %1557 = vmatpush1.bf16.msra.mxu0 %v921
    %1558 = vmatprep.subr.bf16.mxu0 %v942
    %1559 = vmatpush1.bf16.msra.mxu0 %v941
    %1560 = vmatprep.subr.bf16.mxu0 %v962
    %1561 = vmatpush1.bf16.msra.mxu0 %v961
    %1562 = vmatprep.subr.bf16.mxu0 %v982
    %1563 = vmatpush1.bf16.msra.mxu0 %v981
    %1564 = vmatprep.subr.bf16.mxu0 %v1002
    %1565 = vmatpush1.bf16.msra.mxu0 %v1001
    %1566 = vmatprep.subr.bf16.mxu0 %v1022
    %1567 = vmatpush1.bf16.msra.mxu0 %v1021
    %1568 = vmatprep.subr.bf16.mxu0 0
    %1569 = vmatpush1.bf16.msra.mxu0 0
    %1570 = vmatprep.subr.bf16.mxu0 0
    %1571 = vmatpush1.bf16.msra.mxu0 0
    %1572 = vmatprep.subr.bf16.mxu0 0
    %1573 = vmatpush1.bf16.msra.mxu0 0
    %1574 = vmatprep.subr.bf16.mxu0 0
    %1575 = vmatpush1.bf16.msra.mxu0 0
    %1576 = vmatprep.subr.bf16.mxu0 0
    %1577 = vmatpush1.bf16.msra.mxu0 0
    %1578 = vmatprep.subr.bf16.mxu0 0
    %1579 = vmatpush1.bf16.msra.mxu0 0
    %1580 = vmatprep.subr.bf16.mxu0 0
    %1581 = vmatpush1.bf16.msra.mxu0 0
    %1582 = vmatprep.subr.bf16.mxu0 0
    %1583 = vmatpush1.bf16.msra.mxu0 0
    %1584 = vmatprep.mubr.bf16.mxu0 0
    %1585 = vmatmul.mubr.bf16.gmra.mrb[0].mxu0 %v116
    %v1586 = vpop.f32.mrb[0].mxu0
    %v1587 = vadd.f32 %v358, %v1586
    %v1588 = vpop.f32.mrb[0].mxu0
    %v1589 = vadd.f32 %v362, %v1588
    %v1590 = vpop.f32.mrb[0].mxu0
    %v1591 = vpop.f32.mrb[0].mxu0
    %1592 = vdwg.mxu0
    %vm1593 = vcmp.ge.f32.partialorder %v1218, 0.0
    %vm1594 = vcmp.ge.f32.partialorder %v1220, 0.0
    %vm1595 = vcmp.ge.f32.partialorder %v1259, 0.0
    %vm1596 = vcmp.ge.f32.partialorder %v1261, 0.0
    %vm1597 = vcmp.ge.f32.partialorder %v1300, 0.0
    %vm1598 = vcmp.ge.f32.partialorder %v1302, 0.0
    %vm1599 = vcmp.ge.f32.partialorder %v1341, 0.0
    %vm1600 = vcmp.ge.f32.partialorder %v1343, 0.0
    %vm1601 = vcmp.ge.f32.partialorder %v1382, 0.0
    %vm1602 = vcmp.ge.f32.partialorder %v1384, 0.0
    %vm1603 = vcmp.ge.f32.partialorder %v1423, 0.0
    %vm1604 = vcmp.ge.f32.partialorder %v1425, 0.0
    %vm1605 = vcmp.ge.f32.partialorder %v1464, 0.0
    %vm1606 = vcmp.ge.f32.partialorder %v1466, 0.0
    %vm1607 = vcmp.ge.f32.partialorder %v1505, 0.0
    %vm1608 = vcmp.ge.f32.partialorder %v1507, 0.0
    %vm1609 = vcmp.ge.f32.partialorder %v1546, 0.0
    %vm1610 = vcmp.ge.f32.partialorder %v1548, 0.0
    %vm1611 = vcmp.ge.f32.partialorder %v1587, 0.0
    %vm1612 = vcmp.ge.f32.partialorder %v1589, 0.0
    %v1613 = vmul.f32 %v1218, 0.02
    %v1614 = vmul.f32 %v1220, 0.02
    %v1615 = vmul.f32 %v1259, 0.02
    %v1616 = vmul.f32 %v1261, 0.02
    %v1617 = vmul.f32 %v1300, 0.02
    %v1618 = vmul.f32 %v1302, 0.02
    %v1619 = vmul.f32 %v1341, 0.02
    %v1620 = vmul.f32 %v1343, 0.02
    %v1621 = vmul.f32 %v1382, 0.02
    %v1622 = vmul.f32 %v1384, 0.02
    %v1623 = vmul.f32 %v1423, 0.02
    %v1624 = vmul.f32 %v1425, 0.02
    %v1625 = vmul.f32 %v1464, 0.02
    %v1626 = vmul.f32 %v1466, 0.02
    %v1627 = vmul.f32 %v1505, 0.02
    %v1628 = vmul.f32 %v1507, 0.02
    %v1629 = vmul.f32 %v1546, 0.02
    %v1630 = vmul.f32 %v1548, 0.02
    %v1631 = vmul.f32 %v1587, 0.02
    %v1632 = vmul.f32 %v1589, 0.02
    %v1633 = vsel %vm1593, %v1218, %v1613
    %v1634 = vsel %vm1594, %v1220, %v1614
    %v1635 = vsel %vm1595, %v1259, %v1615
    %v1636 = vsel %vm1596, %v1261, %v1616
    %v1637 = vsel %vm1597, %v1300, %v1617
    %v1638 = vsel %vm1598, %v1302, %v1618
    %v1639 = vsel %vm1599, %v1341, %v1619
    %v1640 = vsel %vm1600, %v1343, %v1620
    %v1641 = vsel %vm1601, %v1382, %v1621
    %v1642 = vsel %vm1602, %v1384, %v1622
    %v1643 = vsel %vm1603, %v1423, %v1623
    %v1644 = vsel %vm1604, %v1425, %v1624
    %v1645 = vsel %vm1605, %v1464, %v1625
    %v1646 = vsel %vm1606, %v1466, %v1626
    %v1647 = vsel %vm1607, %v1505, %v1627
    %v1648 = vsel %vm1608, %v1507, %v1628
    %v1649 = vsel %vm1609, %v1546, %v1629
    %v1650 = vsel %vm1610, %v1548, %v1630
    %v1651 = vsel %vm1611, %v1587, %v1631
    %v1652 = vsel %vm1612, %v1589, %v1632
    %v1653 = vadd.f32 %v1633, %v1638
    %v1654 = vadd.f32 %v1634, %v1639
    %v1655 = vadd.f32 %v1635, %v1640
    %v1656 = vadd.f32 %v1636, %v1641
    %v1657 = vadd.f32 %v1637, %v1642
    %v1658 = vadd.f32 %v1653, %v1643
    %v1659 = vadd.f32 %v1654, %v1644
    %v1660 = vadd.f32 %v1655, %v1645
    %v1661 = vadd.f32 %v1656, %v1646
    %v1662 = vadd.f32 %v1657, %v1647
    %v1663 = vadd.f32 %v1658, %v1648
    %v1664 = vadd.f32 %v1659, %v1649
    %v1665 = vadd.f32 %v1660, %v1650
    %v1666 = vadd.f32 %v1661, %v1651
    %v1667 = vadd.f32 %v1662, %v1652
    %v1668 = vmul.f32 %v1663, 0.25
    %v1669 = vmul.f32 %v1664, 0.25
    %v1670 = vmul.f32 %v1665, 0.25
    %v1671 = vmul.f32 %v1666, 0.25
    %v1672 = vmul.f32 %v1667, 0.25
    %v1673 = vpack.c.bf16 %v1668, %v1668
    %v1674 = vpack.c.bf16 %v1669, %v1669
    %v1675 = vpack.c.bf16 %v1670, %v1670
    %v1676 = vpack.c.bf16 %v1671, %v1671
    %v1677 = vpack.c.bf16 %v1672, %v1672
    %v1678 = vld [vmem:[#allocation8] sm:$0xff]
    %v1679 = vld [vmem:[#allocation8 + $0x8] sm:$0xff]
    %v1680 = vld [vmem:[#allocation8 + $0x10] sm:$0xff]
    %v1681 = vld [vmem:[#allocation8 + $0x18] sm:$0xff]
    %v1682 = vld [vmem:[#allocation8 + $0x20] sm:$0xf]
    %v1683 = vld [vmem:[#allocation8 + $0x24] sm:$0xff]
    %v1684 = vld [vmem:[#allocation8 + $0x2c] sm:$0xff]
    %v1685 = vld [vmem:[#allocation8 + $0x34] sm:$0xff]
    %v1686 = vld [vmem:[#allocation8 + $0x3c] sm:$0xff]
    %v1687 = vld [vmem:[#allocation8 + $0x44] sm:$0xf]
    %v1688 = vld [vmem:[#allocation8 + $0x48] sm:$0xff]
    %v1689 = vld [vmem:[#allocation8 + $0x50] sm:$0xff]
    %v1690 = vld [vmem:[#allocation8 + $0x58] sm:$0xff]
    %v1691 = vld [vmem:[#allocation8 + $0x60] sm:$0xff]
    %v1692 = vld [vmem:[#allocation8 + $0x68] sm:$0xf]
    %v1693 = vld [vmem:[#allocation8 + $0x6c] sm:$0xff]
    %v1694 = vld [vmem:[#allocation8 + $0x74] sm:$0xff]
    %v1695 = vld [vmem:[#allocation8 + $0x7c] sm:$0xff]
    %v1696 = vld [vmem:[#allocation8 + $0x84] sm:$0xff]
    %v1697 = vld [vmem:[#allocation8 + $0x8c] sm:$0xf]
    %v1698 = vld [vmem:[#allocation8 + $0x90] sm:$0xff]
    %v1699 = vld [vmem:[#allocation8 + $0x98] sm:$0xff]
    %v1700 = vld [vmem:[#allocation8 + $0xa0] sm:$0xff]
    %v1701 = vld [vmem:[#allocation8 + $0xa8] sm:$0xff]
    %v1702 = vld [vmem:[#allocation8 + $0xb0] sm:$0xf]
    %v1703 = vld [vmem:[#allocation8 + $0xb4] sm:$0xff]
    %v1704 = vld [vmem:[#allocation8 + $0xbc] sm:$0xff]
    %v1705 = vld [vmem:[#allocation8 + $0xc4] sm:$0xff]
    %v1706 = vld [vmem:[#allocation8 + $0xcc] sm:$0xff]
    %v1707 = vld [vmem:[#allocation8 + $0xd4] sm:$0xf]
    %v1708 = vld [vmem:[#allocation8 + $0xd8] sm:$0xff]
    %v1709 = vld [vmem:[#allocation8 + $0xe0] sm:$0xff]
    %v1710 = vld [vmem:[#allocation8 + $0xe8] sm:$0xff]
    %v1711 = vld [vmem:[#allocation8 + $0xf0] sm:$0xff]
    %v1712 = vld [vmem:[#allocation8 + $0xf8] sm:$0xf]
    %v1713 = vld [vmem:[#allocation8 + $0xfc] sm:$0xff]
    %v1714 = vld [vmem:[#allocation8 + $0x104] sm:$0xff]
    %v1715 = vld [vmem:[#allocation8 + $0x10c] sm:$0xff]
    %v1716 = vld [vmem:[#allocation8 + $0x114] sm:$0xff]
    %v1717 = vld [vmem:[#allocation8 + $0x11c] sm:$0xf]
    %v1718 = vld [vmem:[#allocation8 + $0x120] sm:$0xff]
    %v1719 = vld [vmem:[#allocation8 + $0x128] sm:$0xff]
    %v1720 = vld [vmem:[#allocation8 + $0x130] sm:$0xff]
    %v1721 = vld [vmem:[#allocation8 + $0x138] sm:$0xff]
    %v1722 = vld [vmem:[#allocation8 + $0x140] sm:$0xf]
    %v1723 = vld [vmem:[#allocation8 + $0x144] sm:$0xff]
    %v1724 = vld [vmem:[#allocation8 + $0x14c] sm:$0xff]
    %v1725 = vld [vmem:[#allocation8 + $0x154] sm:$0xff]
    %v1726 = vld [vmem:[#allocation8 + $0x15c] sm:$0xff]
    %v1727 = vld [vmem:[#allocation8 + $0x164] sm:$0xf]
    %v1728 = vld [vmem:[#allocation8 + $0x168] sm:$0xff]
    %v1729 = vld [vmem:[#allocation8 + $0x170] sm:$0xff]
    %v1730 = vld [vmem:[#allocation8 + $0x178] sm:$0xff]
    %v1731 = vld [vmem:[#allocation8 + $0x180] sm:$0xff]
    %v1732 = vld [vmem:[#allocation8 + $0x188] sm:$0xf]
    %v1733 = vld [vmem:[#allocation8 + $0x18c] sm:$0xff]
    %v1734 = vld [vmem:[#allocation8 + $0x194] sm:$0xff]
    %v1735 = vld [vmem:[#allocation8 + $0x19c] sm:$0xff]
    %v1736 = vld [vmem:[#allocation8 + $0x1a4] sm:$0xff]
    %v1737 = vld [vmem:[#allocation8 + $0x1ac] sm:$0xf]
    %v1738 = vld [vmem:[#allocation8 + $0x1b0] sm:$0xff]
    %v1739 = vld [vmem:[#allocation8 + $0x1b8] sm:$0xff]
    %v1740 = vld [vmem:[#allocation8 + $0x1c0] sm:$0xff]
    %v1741 = vld [vmem:[#allocation8 + $0x1c8] sm:$0xff]
    %v1742 = vld [vmem:[#allocation8 + $0x1d0] sm:$0xf]
    %v1743 = vld [vmem:[#allocation8 + $0x1d4] sm:$0xff]
    %v1744 = vld [vmem:[#allocation8 + $0x1dc] sm:$0xff]
    %v1745 = vld [vmem:[#allocation8 + $0x1e4] sm:$0xff]
    %v1746 = vld [vmem:[#allocation8 + $0x1ec] sm:$0xff]
    %v1747 = vld [vmem:[#allocation8 + $0x1f4] sm:$0xf]
    %v1748 = vld [vmem:[#allocation8 + $0x1f8] sm:$0xff]
    %v1749 = vld [vmem:[#allocation8 + $0x200] sm:$0xff]
    %v1750 = vld [vmem:[#allocation8 + $0x208] sm:$0xff]
    %v1751 = vld [vmem:[#allocation8 + $0x210] sm:$0xff]
    %v1752 = vld [vmem:[#allocation8 + $0x218] sm:$0xf]
    %v1753 = vld [vmem:[#allocation8 + $0x21c] sm:$0xff]
    %v1754 = vld [vmem:[#allocation8 + $0x224] sm:$0xff]
    %v1755 = vld [vmem:[#allocation8 + $0x22c] sm:$0xff]
    %v1756 = vld [vmem:[#allocation8 + $0x234] sm:$0xff]
    %v1757 = vld [vmem:[#allocation8 + $0x23c] sm:$0xf]
    %v1758 = vld [vmem:[#allocation8 + $0x240] sm:$0xff]
    %v1759 = vld [vmem:[#allocation8 + $0x248] sm:$0xff]
    %v1760 = vld [vmem:[#allocation8 + $0x250] sm:$0xff]
    %v1761 = vld [vmem:[#allocation8 + $0x258] sm:$0xff]
    %v1762 = vld [vmem:[#allocation8 + $0x260] sm:$0xf]
    %v1763 = vld [vmem:[#allocation8 + $0x264] sm:$0xff]
    %v1764 = vld [vmem:[#allocation8 + $0x26c] sm:$0xff]
    %v1765 = vld [vmem:[#allocation8 + $0x274] sm:$0xff]
    %v1766 = vld [vmem:[#allocation8 + $0x27c] sm:$0xff]
    %v1767 = vld [vmem:[#allocation8 + $0x284] sm:$0xf]
    %v1768 = vld [vmem:[#allocation8 + $0x288] sm:$0xff]
    %v1769 = vld [vmem:[#allocation8 + $0x290] sm:$0xff]
    %v1770 = vld [vmem:[#allocation8 + $0x298] sm:$0xff]
    %v1771 = vld [vmem:[#allocation8 + $0x2a0] sm:$0xff]
    %v1772 = vld [vmem:[#allocation8 + $0x2a8] sm:$0xf]
    %v1773 = vld [vmem:[#allocation8 + $0x2ac] sm:$0xff]
    %v1774 = vld [vmem:[#allocation8 + $0x2b4] sm:$0xff]
    %v1775 = vld [vmem:[#allocation8 + $0x2bc] sm:$0xff]
    %v1776 = vld [vmem:[#allocation8 + $0x2c4] sm:$0xff]
    %v1777 = vld [vmem:[#allocation8 + $0x2cc] sm:$0xf]
    %v1778 = vld [vmem:[#allocation8 + $0x2d0] sm:$0xff]
    %v1779 = vld [vmem:[#allocation8 + $0x2d8] sm:$0xff]
    %v1780 = vld [vmem:[#allocation8 + $0x2e0] sm:$0xff]
    %v1781 = vld [vmem:[#allocation8 + $0x2e8] sm:$0xff]
    %v1782 = vld [vmem:[#allocation8 + $0x2f0] sm:$0xf]
    %v1783 = vld [vmem:[#allocation8 + $0x2f4] sm:$0xff]
    %v1784 = vld [vmem:[#allocation8 + $0x2fc] sm:$0xff]
    %v1785 = vld [vmem:[#allocation8 + $0x304] sm:$0xff]
    %v1786 = vld [vmem:[#allocation8 + $0x30c] sm:$0xff]
    %v1787 = vld [vmem:[#allocation8 + $0x314] sm:$0xf]
    %v1788 = vld [vmem:[#allocation8 + $0x318] sm:$0xff]
    %v1789 = vld [vmem:[#allocation8 + $0x320] sm:$0xff]
    %v1790 = vld [vmem:[#allocation8 + $0x328] sm:$0xff]
    %v1791 = vld [vmem:[#allocation8 + $0x330] sm:$0xff]
    %v1792 = vld [vmem:[#allocation8 + $0x338] sm:$0xf]
    %v1793 = vld [vmem:[#allocation8 + $0x33c] sm:$0xff]
    %v1794 = vld [vmem:[#allocation8 + $0x344] sm:$0xff]
    %v1795 = vld [vmem:[#allocation8 + $0x34c] sm:$0xff]
    %v1796 = vld [vmem:[#allocation8 + $0x354] sm:$0xff]
    %v1797 = vld [vmem:[#allocation8 + $0x35c] sm:$0xf]
    %v1798 = vld [vmem:[#allocation8 + $0x360] sm:$0xff]
    %v1799 = vld [vmem:[#allocation8 + $0x368] sm:$0xff]
    %v1800 = vld [vmem:[#allocation8 + $0x370] sm:$0xff]
    %v1801 = vld [vmem:[#allocation8 + $0x378] sm:$0xff]
    %v1802 = vld [vmem:[#allocation8 + $0x380] sm:$0xf]
    %v1803 = vld [vmem:[#allocation8 + $0x384] sm:$0xff]
    %v1804 = vld [vmem:[#allocation8 + $0x38c] sm:$0xff]
    %v1805 = vld [vmem:[#allocation8 + $0x394] sm:$0xff]
    %v1806 = vld [vmem:[#allocation8 + $0x39c] sm:$0xff]
    %v1807 = vld [vmem:[#allocation8 + $0x3a4] sm:$0xf]
    %v1808 = vld [vmem:[#allocation8 + $0x3a8] sm:$0xff]
    %v1809 = vld [vmem:[#allocation8 + $0x3b0] sm:$0xff]
    %v1810 = vld [vmem:[#allocation8 + $0x3b8] sm:$0xff]
    %v1811 = vld [vmem:[#allocation8 + $0x3c0] sm:$0xff]
    %v1812 = vld [vmem:[#allocation8 + $0x3c8] sm:$0xf]
    %v1813 = vld [vmem:[#allocation8 + $0x3cc] sm:$0xff]
    %v1814 = vld [vmem:[#allocation8 + $0x3d4] sm:$0xff]
    %v1815 = vld [vmem:[#allocation8 + $0x3dc] sm:$0xff]
    %v1816 = vld [vmem:[#allocation8 + $0x3e4] sm:$0xff]
    %v1817 = vld [vmem:[#allocation8 + $0x3ec] sm:$0xf]
    %v1818 = vld [vmem:[#allocation8 + $0x3f0] sm:$0xff]
    %v1819 = vld [vmem:[#allocation8 + $0x3f8] sm:$0xff]
    %v1820 = vld [vmem:[#allocation8 + $0x400] sm:$0xff]
    %v1821 = vld [vmem:[#allocation8 + $0x408] sm:$0xff]
    %v1822 = vld [vmem:[#allocation8 + $0x410] sm:$0xf]
    %v1823 = vld [vmem:[#allocation8 + $0x414] sm:$0xff]
    %v1824 = vld [vmem:[#allocation8 + $0x41c] sm:$0xff]
    %v1825 = vld [vmem:[#allocation8 + $0x424] sm:$0xff]
    %v1826 = vld [vmem:[#allocation8 + $0x42c] sm:$0xff]
    %v1827 = vld [vmem:[#allocation8 + $0x434] sm:$0xf]
    %v1828 = vld [vmem:[#allocation8 + $0x438] sm:$0xff]
    %v1829 = vld [vmem:[#allocation8 + $0x440] sm:$0xff]
    %v1830 = vld [vmem:[#allocation8 + $0x448] sm:$0xff]
    %v1831 = vld [vmem:[#allocation8 + $0x450] sm:$0xff]
    %v1832 = vld [vmem:[#allocation8 + $0x458] sm:$0xf]
    %v1833 = vld [vmem:[#allocation8 + $0x45c] sm:$0xff]
    %v1834 = vld [vmem:[#allocation8 + $0x464] sm:$0xff]
    %v1835 = vld [vmem:[#allocation8 + $0x46c] sm:$0xff]
    %v1836 = vld [vmem:[#allocation8 + $0x474] sm:$0xff]
    %v1837 = vld [vmem:[#allocation8 + $0x47c] sm:$0xf]
    %v1838 = vld [vmem:[#allocation8 + $0x480] sm:$0xff]
    %v1839 = vld [vmem:[#allocation8 + $0x488] sm:$0xff]
    %v1840 = vld [vmem:[#allocation8 + $0x490] sm:$0xff]
    %v1841 = vld [vmem:[#allocation8 + $0x498] sm:$0xff]
    %v1842 = vld [vmem:[#allocation8 + $0x4a0] sm:$0xf]
    %v1843 = vld [vmem:[#allocation8 + $0x4a4] sm:$0xff]
    %v1844 = vld [vmem:[#allocation8 + $0x4ac] sm:$0xff]
    %v1845 = vld [vmem:[#allocation8 + $0x4b4] sm:$0xff]
    %v1846 = vld [vmem:[#allocation8 + $0x4bc] sm:$0xff]
    %v1847 = vld [vmem:[#allocation8 + $0x4c4] sm:$0xf]
    %v1848 = vld [vmem:[#allocation8 + $0x4c8] sm:$0xff]
    %v1849 = vld [vmem:[#allocation8 + $0x4d0] sm:$0xff]
    %v1850 = vld [vmem:[#allocation8 + $0x4d8] sm:$0xff]
    %v1851 = vld [vmem:[#allocation8 + $0x4e0] sm:$0xff]
    %v1852 = vld [vmem:[#allocation8 + $0x4e8] sm:$0xf]
    %v1853 = vld [vmem:[#allocation8 + $0x4ec] sm:$0xff]
    %v1854 = vld [vmem:[#allocation8 + $0x4f4] sm:$0xff]
    %v1855 = vld [vmem:[#allocation8 + $0x4fc] sm:$0xff]
    %v1856 = vld [vmem:[#allocation8 + $0x504] sm:$0xff]
    %v1857 = vld [vmem:[#allocation8 + $0x50c] sm:$0xf]
    %v1858 = vld [vmem:[#allocation8 + $0x510] sm:$0xff]
    %v1859 = vld [vmem:[#allocation8 + $0x518] sm:$0xff]
    %v1860 = vld [vmem:[#allocation8 + $0x520] sm:$0xff]
    %v1861 = vld [vmem:[#allocation8 + $0x528] sm:$0xff]
    %v1862 = vld [vmem:[#allocation8 + $0x530] sm:$0xf]
    %v1863 = vld [vmem:[#allocation8 + $0x534] sm:$0xff]
    %v1864 = vld [vmem:[#allocation8 + $0x53c] sm:$0xff]
    %v1865 = vld [vmem:[#allocation8 + $0x544] sm:$0xff]
    %v1866 = vld [vmem:[#allocation8 + $0x54c] sm:$0xff]
    %v1867 = vld [vmem:[#allocation8 + $0x554] sm:$0xf]
    %v1868 = vld [vmem:[#allocation8 + $0x558] sm:$0xff]
    %v1869 = vld [vmem:[#allocation8 + $0x560] sm:$0xff]
    %v1870 = vld [vmem:[#allocation8 + $0x568] sm:$0xff]
    %v1871 = vld [vmem:[#allocation8 + $0x570] sm:$0xff]
    %v1872 = vld [vmem:[#allocation8 + $0x578] sm:$0xf]
    %v1873 = vld [vmem:[#allocation8 + $0x57c] sm:$0xff]
    %v1874 = vld [vmem:[#allocation8 + $0x584] sm:$0xff]
    %v1875 = vld [vmem:[#allocation8 + $0x58c] sm:$0xff]
    %v1876 = vld [vmem:[#allocation8 + $0x594] sm:$0xff]
    %v1877 = vld [vmem:[#allocation8 + $0x59c] sm:$0xf]
    %v1878 = vld [vmem:[#allocation8 + $0x5a0] sm:$0xff]
    %v1879 = vld [vmem:[#allocation8 + $0x5a8] sm:$0xff]
    %v1880 = vld [vmem:[#allocation8 + $0x5b0] sm:$0xff]
    %v1881 = vld [vmem:[#allocation8 + $0x5b8] sm:$0xff]
    %v1882 = vld [vmem:[#allocation8 + $0x5c0] sm:$0xf]
    %v1883 = vld [vmem:[#allocation8 + $0x5c4] sm:$0xff]
    %v1884 = vld [vmem:[#allocation8 + $0x5cc] sm:$0xff]
    %v1885 = vld [vmem:[#allocation8 + $0x5d4] sm:$0xff]
    %v1886 = vld [vmem:[#allocation8 + $0x5dc] sm:$0xff]
    %v1887 = vld [vmem:[#allocation8 + $0x5e4] sm:$0xf]
    %v1888 = vld [vmem:[#allocation8 + $0x5e8] sm:$0xff]
    %v1889 = vld [vmem:[#allocation8 + $0x5f0] sm:$0xff]
    %v1890 = vld [vmem:[#allocation8 + $0x5f8] sm:$0xff]
    %v1891 = vld [vmem:[#allocation8 + $0x600] sm:$0xff]
    %v1892 = vld [vmem:[#allocation8 + $0x608] sm:$0xf]
    %v1893 = vld [vmem:[#allocation8 + $0x60c] sm:$0xff]
    %v1894 = vld [vmem:[#allocation8 + $0x614] sm:$0xff]
    %v1895 = vld [vmem:[#allocation8 + $0x61c] sm:$0xff]
    %v1896 = vld [vmem:[#allocation8 + $0x624] sm:$0xff]
    %v1897 = vld [vmem:[#allocation8 + $0x62c] sm:$0xf]
    %v1898 = vld [vmem:[#allocation8 + $0x630] sm:$0xff]
    %v1899 = vld [vmem:[#allocation8 + $0x638] sm:$0xff]
    %v1900 = vld [vmem:[#allocation8 + $0x640] sm:$0xff]
    %v1901 = vld [vmem:[#allocation8 + $0x648] sm:$0xff]
    %v1902 = vld [vmem:[#allocation8 + $0x650] sm:$0xf]
    %v1903 = vld [vmem:[#allocation8 + $0x654] sm:$0xff]
    %v1904 = vld [vmem:[#allocation8 + $0x65c] sm:$0xff]
    %v1905 = vld [vmem:[#allocation8 + $0x664] sm:$0xff]
    %v1906 = vld [vmem:[#allocation8 + $0x66c] sm:$0xff]
    %v1907 = vld [vmem:[#allocation8 + $0x674] sm:$0xf]
    %v1908 = vld [vmem:[#allocation8 + $0x678] sm:$0xff]
    %v1909 = vld [vmem:[#allocation8 + $0x680] sm:$0xff]
    %v1910 = vld [vmem:[#allocation8 + $0x688] sm:$0xff]
    %v1911 = vld [vmem:[#allocation8 + $0x690] sm:$0xff]
    %v1912 = vld [vmem:[#allocation8 + $0x698] sm:$0xf]
    %v1913 = vld [vmem:[#allocation8 + $0x69c] sm:$0xff]
    %v1914 = vld [vmem:[#allocation8 + $0x6a4] sm:$0xff]
    %v1915 = vld [vmem:[#allocation8 + $0x6ac] sm:$0xff]
    %v1916 = vld [vmem:[#allocation8 + $0x6b4] sm:$0xff]
    %v1917 = vld [vmem:[#allocation8 + $0x6bc] sm:$0xf]
    %v1918 = vld [vmem:[#allocation8 + $0x6c0] sm:$0xff]
    %v1919 = vld [vmem:[#allocation8 + $0x6c8] sm:$0xff]
    %v1920 = vld [vmem:[#allocation8 + $0x6d0] sm:$0xff]
    %v1921 = vld [vmem:[#allocation8 + $0x6d8] sm:$0xff]
    %v1922 = vld [vmem:[#allocation8 + $0x6e0] sm:$0xf]
    %v1923 = vld [vmem:[#allocation8 + $0x6e4] sm:$0xff]
    %v1924 = vld [vmem:[#allocation8 + $0x6ec] sm:$0xff]
    %v1925 = vld [vmem:[#allocation8 + $0x6f4] sm:$0xff]
    %v1926 = vld [vmem:[#allocation8 + $0x6fc] sm:$0xff]
    %v1927 = vld [vmem:[#allocation8 + $0x704] sm:$0xf]
    %v1928 = vld [vmem:[#allocation8 + $0x708] sm:$0xff]
    %v1929 = vld [vmem:[#allocation8 + $0x710] sm:$0xff]
    %v1930 = vld [vmem:[#allocation8 + $0x718] sm:$0xff]
    %v1931 = vld [vmem:[#allocation8 + $0x720] sm:$0xff]
    %v1932 = vld [vmem:[#allocation8 + $0x728] sm:$0xf]
    %v1933 = vld [vmem:[#allocation8 + $0x72c] sm:$0xff]
    %v1934 = vld [vmem:[#allocation8 + $0x734] sm:$0xff]
    %v1935 = vld [vmem:[#allocation8 + $0x73c] sm:$0xff]
    %v1936 = vld [vmem:[#allocation8 + $0x744] sm:$0xff]
    %v1937 = vld [vmem:[#allocation8 + $0x74c] sm:$0xf]
    %v1938 = vld [vmem:[#allocation8 + $0x750] sm:$0xff]
    %v1939 = vld [vmem:[#allocation8 + $0x758] sm:$0xff]
    %v1940 = vld [vmem:[#allocation8 + $0x760] sm:$0xff]
    %v1941 = vld [vmem:[#allocation8 + $0x768] sm:$0xff]
    %v1942 = vld [vmem:[#allocation8 + $0x770] sm:$0xf]
    %v1943 = vld [vmem:[#allocation8 + $0x774] sm:$0xff]
    %v1944 = vld [vmem:[#allocation8 + $0x77c] sm:$0xff]
    %v1945 = vld [vmem:[#allocation8 + $0x784] sm:$0xff]
    %v1946 = vld [vmem:[#allocation8 + $0x78c] sm:$0xff]
    %v1947 = vld [vmem:[#allocation8 + $0x794] sm:$0xf]
    %v1948 = vld [vmem:[#allocation8 + $0x798] sm:$0xff]
    %v1949 = vld [vmem:[#allocation8 + $0x7a0] sm:$0xff]
    %v1950 = vld [vmem:[#allocation8 + $0x7a8] sm:$0xff]
    %v1951 = vld [vmem:[#allocation8 + $0x7b0] sm:$0xff]
    %v1952 = vld [vmem:[#allocation8 + $0x7b8] sm:$0xf]
    %v1953 = vld [vmem:[#allocation8 + $0x7bc] sm:$0xff]
    %v1954 = vld [vmem:[#allocation8 + $0x7c4] sm:$0xff]
    %v1955 = vld [vmem:[#allocation8 + $0x7cc] sm:$0xff]
    %v1956 = vld [vmem:[#allocation8 + $0x7d4] sm:$0xff]
    %v1957 = vld [vmem:[#allocation8 + $0x7dc] sm:$0xf]
    %v1958 = vld [vmem:[#allocation8 + $0x7e0] sm:$0xff]
    %v1959 = vld [vmem:[#allocation8 + $0x7e8] sm:$0xff]
    %v1960 = vld [vmem:[#allocation8 + $0x7f0] sm:$0xff]
    %v1961 = vld [vmem:[#allocation8 + $0x7f8] sm:$0xff]
    %v1962 = vld [vmem:[#allocation8 + $0x800] sm:$0xf]
    %v1963 = vld [vmem:[#allocation8 + $0x804] sm:$0xff]
    %v1964 = vld [vmem:[#allocation8 + $0x80c] sm:$0xff]
    %v1965 = vld [vmem:[#allocation8 + $0x814] sm:$0xff]
    %v1966 = vld [vmem:[#allocation8 + $0x81c] sm:$0xff]
    %v1967 = vld [vmem:[#allocation8 + $0x824] sm:$0xf]
    %v1968 = vld [vmem:[#allocation8 + $0x828] sm:$0xff]
    %v1969 = vld [vmem:[#allocation8 + $0x830] sm:$0xff]
    %v1970 = vld [vmem:[#allocation8 + $0x838] sm:$0xff]
    %v1971 = vld [vmem:[#allocation8 + $0x840] sm:$0xff]
    %v1972 = vld [vmem:[#allocation8 + $0x848] sm:$0xf]
    %v1973 = vld [vmem:[#allocation8 + $0x84c] sm:$0xff]
    %v1974 = vld [vmem:[#allocation8 + $0x854] sm:$0xff]
    %v1975 = vld [vmem:[#allocation8 + $0x85c] sm:$0xff]
    %v1976 = vld [vmem:[#allocation8 + $0x864] sm:$0xff]
    %v1977 = vld [vmem:[#allocation8 + $0x86c] sm:$0xf]
    %v1978 = vld [vmem:[#allocation8 + $0x870] sm:$0xff]
    %v1979 = vld [vmem:[#allocation8 + $0x878] sm:$0xff]
    %v1980 = vld [vmem:[#allocation8 + $0x880] sm:$0xff]
    %v1981 = vld [vmem:[#allocation8 + $0x888] sm:$0xff]
    %v1982 = vld [vmem:[#allocation8 + $0x890] sm:$0xf]
    %v1983 = vld [vmem:[#allocation8 + $0x894] sm:$0xff]
    %v1984 = vld [vmem:[#allocation8 + $0x89c] sm:$0xff]
    %v1985 = vld [vmem:[#allocation8 + $0x8a4] sm:$0xff]
    %v1986 = vld [vmem:[#allocation8 + $0x8ac] sm:$0xff]
    %v1987 = vld [vmem:[#allocation8 + $0x8b4] sm:$0xf]
    %v1988 = vld [vmem:[#allocation8 + $0x8b8] sm:$0xff]
    %v1989 = vld [vmem:[#allocation8 + $0x8c0] sm:$0xff]
    %v1990 = vld [vmem:[#allocation8 + $0x8c8] sm:$0xff]
    %v1991 = vld [vmem:[#allocation8 + $0x8d0] sm:$0xff]
    %v1992 = vld [vmem:[#allocation8 + $0x8d8] sm:$0xf]
    %v1993 = vld [vmem:[#allocation8 + $0x8dc] sm:$0xff]
    %v1994 = vld [vmem:[#allocation8 + $0x8e4] sm:$0xff]
    %v1995 = vld [vmem:[#allocation8 + $0x8ec] sm:$0xff]
    %v1996 = vld [vmem:[#allocation8 + $0x8f4] sm:$0xff]
    %v1997 = vld [vmem:[#allocation8 + $0x8fc] sm:$0xf]
    %v1998 = vld [vmem:[#allocation8 + $0x900] sm:$0xff]
    %v1999 = vld [vmem:[#allocation8 + $0x908] sm:$0xff]
    %v2000 = vld [vmem:[#allocation8 + $0x910] sm:$0xff]
    %v2001 = vld [vmem:[#allocation8 + $0x918] sm:$0xff]
    %v2002 = vld [vmem:[#allocation8 + $0x920] sm:$0xf]
    %v2003 = vld [vmem:[#allocation8 + $0x924] sm:$0xff]
    %v2004 = vld [vmem:[#allocation8 + $0x92c] sm:$0xff]
    %v2005 = vld [vmem:[#allocation8 + $0x934] sm:$0xff]
    %v2006 = vld [vmem:[#allocation8 + $0x93c] sm:$0xff]
    %v2007 = vld [vmem:[#allocation8 + $0x944] sm:$0xf]
    %v2008 = vld [vmem:[#allocation8 + $0x948] sm:$0xff]
    %v2009 = vld [vmem:[#allocation8 + $0x950] sm:$0xff]
    %v2010 = vld [vmem:[#allocation8 + $0x958] sm:$0xff]
    %v2011 = vld [vmem:[#allocation8 + $0x960] sm:$0xff]
    %v2012 = vld [vmem:[#allocation8 + $0x968] sm:$0xf]
    %v2013 = vld [vmem:[#allocation8 + $0x96c] sm:$0xff]
    %v2014 = vld [vmem:[#allocation8 + $0x974] sm:$0xff]
    %v2015 = vld [vmem:[#allocation8 + $0x97c] sm:$0xff]
    %v2016 = vld [vmem:[#allocation8 + $0x984] sm:$0xff]
    %v2017 = vld [vmem:[#allocation8 + $0x98c] sm:$0xf]
    %v2018 = vld [vmem:[#allocation8 + $0x990] sm:$0xff]
    %v2019 = vld [vmem:[#allocation8 + $0x998] sm:$0xff]
    %v2020 = vld [vmem:[#allocation8 + $0x9a0] sm:$0xff]
    %v2021 = vld [vmem:[#allocation8 + $0x9a8] sm:$0xff]
    %v2022 = vld [vmem:[#allocation8 + $0x9b0] sm:$0xf]
    %v2023 = vld [vmem:[#allocation8 + $0x9b4] sm:$0xff]
    %v2024 = vld [vmem:[#allocation8 + $0x9bc] sm:$0xff]
    %v2025 = vld [vmem:[#allocation8 + $0x9c4] sm:$0xff]
    %v2026 = vld [vmem:[#allocation8 + $0x9cc] sm:$0xff]
    %v2027 = vld [vmem:[#allocation8 + $0x9d4] sm:$0xf]
    %v2028 = vld [vmem:[#allocation8 + $0x9d8] sm:$0xff]
    %v2029 = vld [vmem:[#allocation8 + $0x9e0] sm:$0xff]
    %v2030 = vld [vmem:[#allocation8 + $0x9e8] sm:$0xff]
    %v2031 = vld [vmem:[#allocation8 + $0x9f0] sm:$0xff]
    %v2032 = vld [vmem:[#allocation8 + $0x9f8] sm:$0xf]
    %v2033 = vld [vmem:[#allocation8 + $0x9fc] sm:$0xff]
    %v2034 = vld [vmem:[#allocation8 + $0xa04] sm:$0xff]
    %v2035 = vld [vmem:[#allocation8 + $0xa0c] sm:$0xff]
    %v2036 = vld [vmem:[#allocation8 + $0xa14] sm:$0xff]
    %v2037 = vld [vmem:[#allocation8 + $0xa1c] sm:$0xf]
    %v2038 = vld [vmem:[#allocation8 + $0xa20] sm:$0xff]
    %v2039 = vld [vmem:[#allocation8 + $0xa28] sm:$0xff]
    %v2040 = vld [vmem:[#allocation8 + $0xa30] sm:$0xff]
    %v2041 = vld [vmem:[#allocation8 + $0xa38] sm:$0xff]
    %v2042 = vld [vmem:[#allocation8 + $0xa40] sm:$0xf]
    %v2043 = vld [vmem:[#allocation8 + $0xa44] sm:$0xff]
    %v2044 = vld [vmem:[#allocation8 + $0xa4c] sm:$0xff]
    %v2045 = vld [vmem:[#allocation8 + $0xa54] sm:$0xff]
    %v2046 = vld [vmem:[#allocation8 + $0xa5c] sm:$0xff]
    %v2047 = vld [vmem:[#allocation8 + $0xa64] sm:$0xf]
    %v2048 = vld [vmem:[#allocation8 + $0xa68] sm:$0xff]
    %v2049 = vld [vmem:[#allocation8 + $0xa70] sm:$0xff]
    %v2050 = vld [vmem:[#allocation8 + $0xa78] sm:$0xff]
    %v2051 = vld [vmem:[#allocation8 + $0xa80] sm:$0xff]
    %v2052 = vld [vmem:[#allocation8 + $0xa88] sm:$0xf]
    %v2053 = vld [vmem:[#allocation8 + $0xa8c] sm:$0xff]
    %v2054 = vld [vmem:[#allocation8 + $0xa94] sm:$0xff]
    %v2055 = vld [vmem:[#allocation8 + $0xa9c] sm:$0xff]
    %v2056 = vld [vmem:[#allocation8 + $0xaa4] sm:$0xff]
    %v2057 = vld [vmem:[#allocation8 + $0xaac] sm:$0xf]
    %v2058 = vld [vmem:[#allocation8 + $0xab0] sm:$0xff]
    %v2059 = vld [vmem:[#allocation8 + $0xab8] sm:$0xff]
    %v2060 = vld [vmem:[#allocation8 + $0xac0] sm:$0xff]
    %v2061 = vld [vmem:[#allocation8 + $0xac8] sm:$0xff]
    %v2062 = vld [vmem:[#allocation8 + $0xad0] sm:$0xf]
    %v2063 = vld [vmem:[#allocation8 + $0xad4] sm:$0xff]
    %v2064 = vld [vmem:[#allocation8 + $0xadc] sm:$0xff]
    %v2065 = vld [vmem:[#allocation8 + $0xae4] sm:$0xff]
    %v2066 = vld [vmem:[#allocation8 + $0xaec] sm:$0xff]
    %v2067 = vld [vmem:[#allocation8 + $0xaf4] sm:$0xf]
    %v2068 = vld [vmem:[#allocation8 + $0xaf8] sm:$0xff]
    %v2069 = vld [vmem:[#allocation8 + $0xb00] sm:$0xff]
    %v2070 = vld [vmem:[#allocation8 + $0xb08] sm:$0xff]
    %v2071 = vld [vmem:[#allocation8 + $0xb10] sm:$0xff]
    %v2072 = vld [vmem:[#allocation8 + $0xb18] sm:$0xf]
    %v2073 = vld [vmem:[#allocation8 + $0xb1c] sm:$0xff]
    %v2074 = vld [vmem:[#allocation8 + $0xb24] sm:$0xff]
    %v2075 = vld [vmem:[#allocation8 + $0xb2c] sm:$0xff]
    %v2076 = vld [vmem:[#allocation8 + $0xb34] sm:$0xff]
    %v2077 = vld [vmem:[#allocation8 + $0xb3c] sm:$0xf]
    %v2078 = vld [vmem:[#allocation10] sm:$0xff]
    %v2079 = vld [vmem:[#allocation10 + $0x8] sm:$0x1]
    %v2082 = vlaneseq
    %v2083 = vshrl.u32 %v2082, 7
    %v2084 = vsub.s32 0, %v2083
    %v2085 = vrot.slane %v2078, %v2084
    %v2086 = vlaneseq
    %v2087 = vshrl.u32 %v2086, 7
    %v2088 = vsub.s32 1, %v2087
    %v2089 = vrot.slane %v2078, %v2088
    %v2090 = vlaneseq
    %v2091 = vshrl.u32 %v2090, 7
    %v2092 = vsub.s32 2, %v2091
    %v2093 = vrot.slane %v2078, %v2092
    %v2094 = vlaneseq
    %v2095 = vshrl.u32 %v2094, 7
    %v2096 = vsub.s32 3, %v2095
    %v2097 = vrot.slane %v2078, %v2096
    %v2098 = vlaneseq
    %v2099 = vshrl.u32 %v2098, 7
    %v2100 = vsub.s32 4, %v2099
    %v2101 = vrot.slane %v2078, %v2100
    %v2102 = vlaneseq
    %v2103 = vshrl.u32 %v2102, 7
    %v2104 = vsub.s32 5, %v2103
    %v2105 = vrot.slane %v2078, %v2104
    %v2106 = vlaneseq
    %v2107 = vshrl.u32 %v2106, 7
    %v2108 = vsub.s32 6, %v2107
    %v2109 = vrot.slane %v2078, %v2108
    %v2110 = vlaneseq
    %v2111 = vshrl.u32 %v2110, 7
    %v2112 = vsub.s32 7, %v2111
    %v2113 = vrot.slane %v2078, %v2112
    %v2114 = vlaneseq
    %v2115 = vshrl.u32 %v2114, 7
    %v2116 = vsub.s32 0, %v2115
    %v2117 = vrot.slane %v2079, %v2116
    %v2527 = vunpack.c.l.b16 %v1678
    %v2528 = vunpack.c.h.b16 %v1678
    %v2529 = vunpack.c.l.b16 %v1679
    %v2530 = vunpack.c.h.b16 %v1679
    %v2531 = vunpack.c.l.b16 %v1680
    %v2532 = vunpack.c.h.b16 %v1680
    %v2533 = vunpack.c.l.b16 %v1681
    %v2534 = vunpack.c.h.b16 %v1681
    %v2535 = vunpack.c.l.b16 %v1682
    %v2536 = vunpack.c.l.b16 %v1683
    %v2537 = vunpack.c.h.b16 %v1683
    %v2538 = vunpack.c.l.b16 %v1684
    %v2539 = vunpack.c.h.b16 %v1684
    %v2540 = vunpack.c.l.b16 %v1685
    %v2541 = vunpack.c.h.b16 %v1685
    %v2542 = vunpack.c.l.b16 %v1686
    %v2543 = vunpack.c.h.b16 %v1686
    %v2544 = vunpack.c.l.b16 %v1687
    %v2545 = vunpack.c.l.b16 %v1688
    %v2546 = vunpack.c.h.b16 %v1688
    %v2547 = vunpack.c.l.b16 %v1689
    %v2548 = vunpack.c.h.b16 %v1689
    %v2549 = vunpack.c.l.b16 %v1690
    %v2550 = vunpack.c.h.b16 %v1690
    %v2551 = vunpack.c.l.b16 %v1691
    %v2552 = vunpack.c.h.b16 %v1691
    %v2553 = vunpack.c.l.b16 %v1692
    %v2554 = vunpack.c.l.b16 %v1693
    %v2555 = vunpack.c.h.b16 %v1693
    %v2556 = vunpack.c.l.b16 %v1694
    %v2557 = vunpack.c.h.b16 %v1694
    %v2558 = vunpack.c.l.b16 %v1695
    %v2559 = vunpack.c.h.b16 %v1695
    %v2560 = vunpack.c.l.b16 %v1696
    %v2561 = vunpack.c.h.b16 %v1696
    %v2562 = vunpack.c.l.b16 %v1697
    %v2563 = vunpack.c.l.b16 %v1698
    %v2564 = vunpack.c.h.b16 %v1698
    %v2565 = vunpack.c.l.b16 %v1699
    %v2566 = vunpack.c.h.b16 %v1699
    %v2567 = vunpack.c.l.b16 %v1700
    %v2568 = vunpack.c.h.b16 %v1700
    %v2569 = vunpack.c.l.b16 %v1701
    %v2570 = vunpack.c.h.b16 %v1701
    %v2571 = vunpack.c.l.b16 %v1702
    %v2572 = vunpack.c.l.b16 %v1703
    %v2573 = vunpack.c.h.b16 %v1703
    %v2574 = vunpack.c.l.b16 %v1704
    %v2575 = vunpack.c.h.b16 %v1704
    %v2576 = vunpack.c.l.b16 %v1705
    %v2577 = vunpack.c.h.b16 %v1705
    %v2578 = vunpack.c.l.b16 %v1706
    %v2579 = vunpack.c.h.b16 %v1706
    %v2580 = vunpack.c.l.b16 %v1707
    %v2581 = vunpack.c.l.b16 %v1708
    %v2582 = vunpack.c.h.b16 %v1708
    %v2583 = vunpack.c.l.b16 %v1709
    %v2584 = vunpack.c.h.b16 %v1709
    %v2585 = vunpack.c.l.b16 %v1710
    %v2586 = vunpack.c.h.b16 %v1710
    %v2587 = vunpack.c.l.b16 %v1711
    %v2588 = vunpack.c.h.b16 %v1711
    %v2589 = vunpack.c.l.b16 %v1712
    %v2590 = vunpack.c.l.b16 %v1713
    %v2591 = vunpack.c.h.b16 %v1713
    %v2592 = vunpack.c.l.b16 %v1714
    %v2593 = vunpack.c.h.b16 %v1714
    %v2594 = vunpack.c.l.b16 %v1715
    %v2595 = vunpack.c.h.b16 %v1715
    %v2596 = vunpack.c.l.b16 %v1716
    %v2597 = vunpack.c.h.b16 %v1716
    %v2598 = vunpack.c.l.b16 %v1717
    %v2599 = vunpack.c.l.b16 %v1718
    %v2600 = vunpack.c.h.b16 %v1718
    %v2601 = vunpack.c.l.b16 %v1719
    %v2602 = vunpack.c.h.b16 %v1719
    %v2603 = vunpack.c.l.b16 %v1720
    %v2604 = vunpack.c.h.b16 %v1720
    %v2605 = vunpack.c.l.b16 %v1721
    %v2606 = vunpack.c.h.b16 %v1721
    %v2607 = vunpack.c.l.b16 %v1722
    %v2608 = vunpack.c.l.b16 %v1723
    %v2609 = vunpack.c.h.b16 %v1723
    %v2610 = vunpack.c.l.b16 %v1724
    %v2611 = vunpack.c.h.b16 %v1724
    %v2612 = vunpack.c.l.b16 %v1725
    %v2613 = vunpack.c.h.b16 %v1725
    %v2614 = vunpack.c.l.b16 %v1726
    %v2615 = vunpack.c.h.b16 %v1726
    %v2616 = vunpack.c.l.b16 %v1727
    %v2617 = vunpack.c.l.b16 %v1728
    %v2618 = vunpack.c.h.b16 %v1728
    %v2619 = vunpack.c.l.b16 %v1729
    %v2620 = vunpack.c.h.b16 %v1729
    %v2621 = vunpack.c.l.b16 %v1730
    %v2622 = vunpack.c.h.b16 %v1730
    %v2623 = vunpack.c.l.b16 %v1731
    %v2624 = vunpack.c.h.b16 %v1731
    %v2625 = vunpack.c.l.b16 %v1732
    %v2626 = vunpack.c.l.b16 %v1733
    %v2627 = vunpack.c.h.b16 %v1733
    %v2628 = vunpack.c.l.b16 %v1734
    %v2629 = vunpack.c.h.b16 %v1734
    %v2630 = vunpack.c.l.b16 %v1735
    %v2631 = vunpack.c.h.b16 %v1735
    %v2632 = vunpack.c.l.b16 %v1736
    %v2633 = vunpack.c.h.b16 %v1736
    %v2634 = vunpack.c.l.b16 %v1737
    %v2635 = vunpack.c.l.b16 %v1738
    %v2636 = vunpack.c.h.b16 %v1738
    %v2637 = vunpack.c.l.b16 %v1739
    %v2638 = vunpack.c.h.b16 %v1739
    %v2639 = vunpack.c.l.b16 %v1740
    %v2640 = vunpack.c.h.b16 %v1740
    %v2641 = vunpack.c.l.b16 %v1741
    %v2642 = vunpack.c.h.b16 %v1741
    %v2643 = vunpack.c.l.b16 %v1742
    %v2644 = vunpack.c.l.b16 %v1743
    %v2645 = vunpack.c.h.b16 %v1743
    %v2646 = vunpack.c.l.b16 %v1744
    %v2647 = vunpack.c.h.b16 %v1744
    %v2648 = vunpack.c.l.b16 %v1745
    %v2649 = vunpack.c.h.b16 %v1745
    %v2650 = vunpack.c.l.b16 %v1746
    %v2651 = vunpack.c.h.b16 %v1746
    %v2652 = vunpack.c.l.b16 %v1747
    %v2653 = vunpack.c.l.b16 %v1748
    %v2654 = vunpack.c.h.b16 %v1748
    %v2655 = vunpack.c.l.b16 %v1749
    %v2656 = vunpack.c.h.b16 %v1749
    %v2657 = vunpack.c.l.b16 %v1750
    %v2658 = vunpack.c.h.b16 %v1750
    %v2659 = vunpack.c.l.b16 %v1751
    %v2660 = vunpack.c.h.b16 %v1751
    %v2661 = vunpack.c.l.b16 %v1752
    %v2662 = vunpack.c.l.b16 %v1753
    %v2663 = vunpack.c.h.b16 %v1753
    %v2664 = vunpack.c.l.b16 %v1754
    %v2665 = vunpack.c.h.b16 %v1754
    %v2666 = vunpack.c.l.b16 %v1755
    %v2667 = vunpack.c.h.b16 %v1755
    %v2668 = vunpack.c.l.b16 %v1756
    %v2669 = vunpack.c.h.b16 %v1756
    %v2670 = vunpack.c.l.b16 %v1757
    %v2671 = vunpack.c.l.b16 %v1758
    %v2672 = vunpack.c.h.b16 %v1758
    %v2673 = vunpack.c.l.b16 %v1759
    %v2674 = vunpack.c.h.b16 %v1759
    %v2675 = vunpack.c.l.b16 %v1760
    %v2676 = vunpack.c.h.b16 %v1760
    %v2677 = vunpack.c.l.b16 %v1761
    %v2678 = vunpack.c.h.b16 %v1761
    %v2679 = vunpack.c.l.b16 %v1762
    %v2680 = vunpack.c.l.b16 %v1763
    %v2681 = vunpack.c.h.b16 %v1763
    %v2682 = vunpack.c.l.b16 %v1764
    %v2683 = vunpack.c.h.b16 %v1764
    %v2684 = vunpack.c.l.b16 %v1765
    %v2685 = vunpack.c.h.b16 %v1765
    %v2686 = vunpack.c.l.b16 %v1766
    %v2687 = vunpack.c.h.b16 %v1766
    %v2688 = vunpack.c.l.b16 %v1767
    %v2689 = vunpack.c.l.b16 %v1768
    %v2690 = vunpack.c.h.b16 %v1768
    %v2691 = vunpack.c.l.b16 %v1769
    %v2692 = vunpack.c.h.b16 %v1769
    %v2693 = vunpack.c.l.b16 %v1770
    %v2694 = vunpack.c.h.b16 %v1770
    %v2695 = vunpack.c.l.b16 %v1771
    %v2696 = vunpack.c.h.b16 %v1771
    %v2697 = vunpack.c.l.b16 %v1772
    %v2698 = vunpack.c.l.b16 %v1773
    %v2699 = vunpack.c.h.b16 %v1773
    %v2700 = vunpack.c.l.b16 %v1774
    %v2701 = vunpack.c.h.b16 %v1774
    %v2702 = vunpack.c.l.b16 %v1775
    %v2703 = vunpack.c.h.b16 %v1775
    %v2704 = vunpack.c.l.b16 %v1776
    %v2705 = vunpack.c.h.b16 %v1776
    %v2706 = vunpack.c.l.b16 %v1777
    %v2707 = vunpack.c.l.b16 %v1778
    %v2708 = vunpack.c.h.b16 %v1778
    %v2709 = vunpack.c.l.b16 %v1779
    %v2710 = vunpack.c.h.b16 %v1779
    %v2711 = vunpack.c.l.b16 %v1780
    %v2712 = vunpack.c.h.b16 %v1780
    %v2713 = vunpack.c.l.b16 %v1781
    %v2714 = vunpack.c.h.b16 %v1781
    %v2715 = vunpack.c.l.b16 %v1782
    %v2716 = vunpack.c.l.b16 %v1783
    %v2717 = vunpack.c.h.b16 %v1783
    %v2718 = vunpack.c.l.b16 %v1784
    %v2719 = vunpack.c.h.b16 %v1784
    %v2720 = vunpack.c.l.b16 %v1785
    %v2721 = vunpack.c.h.b16 %v1785
    %v2722 = vunpack.c.l.b16 %v1786
    %v2723 = vunpack.c.h.b16 %v1786
    %v2724 = vunpack.c.l.b16 %v1787
    %v2725 = vunpack.c.l.b16 %v1788
    %v2726 = vunpack.c.h.b16 %v1788
    %v2727 = vunpack.c.l.b16 %v1789
    %v2728 = vunpack.c.h.b16 %v1789
    %v2729 = vunpack.c.l.b16 %v1790
    %v2730 = vunpack.c.h.b16 %v1790
    %v2731 = vunpack.c.l.b16 %v1791
    %v2732 = vunpack.c.h.b16 %v1791
    %v2733 = vunpack.c.l.b16 %v1792
    %v2734 = vunpack.c.l.b16 %v1793
    %v2735 = vunpack.c.h.b16 %v1793
    %v2736 = vunpack.c.l.b16 %v1794
    %v2737 = vunpack.c.h.b16 %v1794
    %v2738 = vunpack.c.l.b16 %v1795
    %v2739 = vunpack.c.h.b16 %v1795
    %v2740 = vunpack.c.l.b16 %v1796
    %v2741 = vunpack.c.h.b16 %v1796
    %v2742 = vunpack.c.l.b16 %v1797
    %v2743 = vunpack.c.l.b16 %v1798
    %v2744 = vunpack.c.h.b16 %v1798
    %v2745 = vunpack.c.l.b16 %v1799
    %v2746 = vunpack.c.h.b16 %v1799
    %v2747 = vunpack.c.l.b16 %v1800
    %v2748 = vunpack.c.h.b16 %v1800
    %v2749 = vunpack.c.l.b16 %v1801
    %v2750 = vunpack.c.h.b16 %v1801
    %v2751 = vunpack.c.l.b16 %v1802
    %v2752 = vunpack.c.l.b16 %v1803
    %v2753 = vunpack.c.h.b16 %v1803
    %v2754 = vunpack.c.l.b16 %v1804
    %v2755 = vunpack.c.h.b16 %v1804
    %v2756 = vunpack.c.l.b16 %v1805
    %v2757 = vunpack.c.h.b16 %v1805
    %v2758 = vunpack.c.l.b16 %v1806
    %v2759 = vunpack.c.h.b16 %v1806
    %v2760 = vunpack.c.l.b16 %v1807
    %v2761 = vunpack.c.l.b16 %v1808
    %v2762 = vunpack.c.h.b16 %v1808
    %v2763 = vunpack.c.l.b16 %v1809
    %v2764 = vunpack.c.h.b16 %v1809
    %v2765 = vunpack.c.l.b16 %v1810
    %v2766 = vunpack.c.h.b16 %v1810
    %v2767 = vunpack.c.l.b16 %v1811
    %v2768 = vunpack.c.h.b16 %v1811
    %v2769 = vunpack.c.l.b16 %v1812
    %v2770 = vunpack.c.l.b16 %v1813
    %v2771 = vunpack.c.h.b16 %v1813
    %v2772 = vunpack.c.l.b16 %v1814
    %v2773 = vunpack.c.h.b16 %v1814
    %v2774 = vunpack.c.l.b16 %v1815
    %v2775 = vunpack.c.h.b16 %v1815
    %v2776 = vunpack.c.l.b16 %v1816
    %v2777 = vunpack.c.h.b16 %v1816
    %v2778 = vunpack.c.l.b16 %v1817
    %v2779 = vunpack.c.l.b16 %v1818
    %v2780 = vunpack.c.h.b16 %v1818
    %v2781 = vunpack.c.l.b16 %v1819
    %v2782 = vunpack.c.h.b16 %v1819
    %v2783 = vunpack.c.l.b16 %v1820
    %v2784 = vunpack.c.h.b16 %v1820
    %v2785 = vunpack.c.l.b16 %v1821
    %v2786 = vunpack.c.h.b16 %v1821
    %v2787 = vunpack.c.l.b16 %v1822
    %v2788 = vunpack.c.l.b16 %v1823
    %v2789 = vunpack.c.h.b16 %v1823
    %v2790 = vunpack.c.l.b16 %v1824
    %v2791 = vunpack.c.h.b16 %v1824
    %v2792 = vunpack.c.l.b16 %v1825
    %v2793 = vunpack.c.h.b16 %v1825
    %v2794 = vunpack.c.l.b16 %v1826
    %v2795 = vunpack.c.h.b16 %v1826
    %v2796 = vunpack.c.l.b16 %v1827
    %v2797 = vunpack.c.l.b16 %v1828
    %v2798 = vunpack.c.h.b16 %v1828
    %v2799 = vunpack.c.l.b16 %v1829
    %v2800 = vunpack.c.h.b16 %v1829
    %v2801 = vunpack.c.l.b16 %v1830
    %v2802 = vunpack.c.h.b16 %v1830
    %v2803 = vunpack.c.l.b16 %v1831
    %v2804 = vunpack.c.h.b16 %v1831
    %v2805 = vunpack.c.l.b16 %v1832
    %v2806 = vunpack.c.l.b16 %v1833
    %v2807 = vunpack.c.h.b16 %v1833
    %v2808 = vunpack.c.l.b16 %v1834
    %v2809 = vunpack.c.h.b16 %v1834
    %v2810 = vunpack.c.l.b16 %v1835
    %v2811 = vunpack.c.h.b16 %v1835
    %v2812 = vunpack.c.l.b16 %v1836
    %v2813 = vunpack.c.h.b16 %v1836
    %v2814 = vunpack.c.l.b16 %v1837
    %v2815 = vunpack.c.l.b16 %v1838
    %v2816 = vunpack.c.h.b16 %v1838
    %v2817 = vunpack.c.l.b16 %v1839
    %v2818 = vunpack.c.h.b16 %v1839
    %v2819 = vunpack.c.l.b16 %v1840
    %v2820 = vunpack.c.h.b16 %v1840
    %v2821 = vunpack.c.l.b16 %v1841
    %v2822 = vunpack.c.h.b16 %v1841
    %v2823 = vunpack.c.l.b16 %v1842
    %v2824 = vunpack.c.l.b16 %v1843
    %v2825 = vunpack.c.h.b16 %v1843
    %v2826 = vunpack.c.l.b16 %v1844
    %v2827 = vunpack.c.h.b16 %v1844
    %v2828 = vunpack.c.l.b16 %v1845
    %v2829 = vunpack.c.h.b16 %v1845
    %v2830 = vunpack.c.l.b16 %v1846
    %v2831 = vunpack.c.h.b16 %v1846
    %v2832 = vunpack.c.l.b16 %v1847
    %v2833 = vunpack.c.l.b16 %v1848
    %v2834 = vunpack.c.h.b16 %v1848
    %v2835 = vunpack.c.l.b16 %v1849
    %v2836 = vunpack.c.h.b16 %v1849
    %v2837 = vunpack.c.l.b16 %v1850
    %v2838 = vunpack.c.h.b16 %v1850
    %v2839 = vunpack.c.l.b16 %v1851
    %v2840 = vunpack.c.h.b16 %v1851
    %v2841 = vunpack.c.l.b16 %v1852
    %v2842 = vunpack.c.l.b16 %v1853
    %v2843 = vunpack.c.h.b16 %v1853
    %v2844 = vunpack.c.l.b16 %v1854
    %v2845 = vunpack.c.h.b16 %v1854
    %v2846 = vunpack.c.l.b16 %v1855
    %v2847 = vunpack.c.h.b16 %v1855
    %v2848 = vunpack.c.l.b16 %v1856
    %v2849 = vunpack.c.h.b16 %v1856
    %v2850 = vunpack.c.l.b16 %v1857
    %v2851 = vunpack.c.l.b16 %v1858
    %v2852 = vunpack.c.h.b16 %v1858
    %v2853 = vunpack.c.l.b16 %v1859
    %v2854 = vunpack.c.h.b16 %v1859
    %v2855 = vunpack.c.l.b16 %v1860
    %v2856 = vunpack.c.h.b16 %v1860
    %v2857 = vunpack.c.l.b16 %v1861
    %v2858 = vunpack.c.h.b16 %v1861
    %v2859 = vunpack.c.l.b16 %v1862
    %v2860 = vunpack.c.l.b16 %v1863
    %v2861 = vunpack.c.h.b16 %v1863
    %v2862 = vunpack.c.l.b16 %v1864
    %v2863 = vunpack.c.h.b16 %v1864
    %v2864 = vunpack.c.l.b16 %v1865
    %v2865 = vunpack.c.h.b16 %v1865
    %v2866 = vunpack.c.l.b16 %v1866
    %v2867 = vunpack.c.h.b16 %v1866
    %v2868 = vunpack.c.l.b16 %v1867
    %v2869 = vunpack.c.l.b16 %v1868
    %v2870 = vunpack.c.h.b16 %v1868
    %v2871 = vunpack.c.l.b16 %v1869
    %v2872 = vunpack.c.h.b16 %v1869
    %v2873 = vunpack.c.l.b16 %v1870
    %v2874 = vunpack.c.h.b16 %v1870
    %v2875 = vunpack.c.l.b16 %v1871
    %v2876 = vunpack.c.h.b16 %v1871
    %v2877 = vunpack.c.l.b16 %v1872
    %v2878 = vunpack.c.l.b16 %v1873
    %v2879 = vunpack.c.h.b16 %v1873
    %v2880 = vunpack.c.l.b16 %v1874
    %v2881 = vunpack.c.h.b16 %v1874
    %v2882 = vunpack.c.l.b16 %v1875
    %v2883 = vunpack.c.h.b16 %v1875
    %v2884 = vunpack.c.l.b16 %v1876
    %v2885 = vunpack.c.h.b16 %v1876
    %v2886 = vunpack.c.l.b16 %v1877
    %v2887 = vunpack.c.l.b16 %v1878
    %v2888 = vunpack.c.h.b16 %v1878
    %v2889 = vunpack.c.l.b16 %v1879
    %v2890 = vunpack.c.h.b16 %v1879
    %v2891 = vunpack.c.l.b16 %v1880
    %v2892 = vunpack.c.h.b16 %v1880
    %v2893 = vunpack.c.l.b16 %v1881
    %v2894 = vunpack.c.h.b16 %v1881
    %v2895 = vunpack.c.l.b16 %v1882
    %v2896 = vunpack.c.l.b16 %v1883
    %v2897 = vunpack.c.h.b16 %v1883
    %v2898 = vunpack.c.l.b16 %v1884
    %v2899 = vunpack.c.h.b16 %v1884
    %v2900 = vunpack.c.l.b16 %v1885
    %v2901 = vunpack.c.h.b16 %v1885
    %v2902 = vunpack.c.l.b16 %v1886
    %v2903 = vunpack.c.h.b16 %v1886
    %v2904 = vunpack.c.l.b16 %v1887
    %v2905 = vunpack.c.l.b16 %v1888
    %v2906 = vunpack.c.h.b16 %v1888
    %v2907 = vunpack.c.l.b16 %v1889
    %v2908 = vunpack.c.h.b16 %v1889
    %v2909 = vunpack.c.l.b16 %v1890
    %v2910 = vunpack.c.h.b16 %v1890
    %v2911 = vunpack.c.l.b16 %v1891
    %v2912 = vunpack.c.h.b16 %v1891
    %v2913 = vunpack.c.l.b16 %v1892
    %v2914 = vunpack.c.l.b16 %v1893
    %v2915 = vunpack.c.h.b16 %v1893
    %v2916 = vunpack.c.l.b16 %v1894
    %v2917 = vunpack.c.h.b16 %v1894
    %v2918 = vunpack.c.l.b16 %v1895
    %v2919 = vunpack.c.h.b16 %v1895
    %v2920 = vunpack.c.l.b16 %v1896
    %v2921 = vunpack.c.h.b16 %v1896
    %v2922 = vunpack.c.l.b16 %v1897
    %v2923 = vunpack.c.l.b16 %v1898
    %v2924 = vunpack.c.h.b16 %v1898
    %v2925 = vunpack.c.l.b16 %v1899
    %v2926 = vunpack.c.h.b16 %v1899
    %v2927 = vunpack.c.l.b16 %v1900
    %v2928 = vunpack.c.h.b16 %v1900
    %v2929 = vunpack.c.l.b16 %v1901
    %v2930 = vunpack.c.h.b16 %v1901
    %v2931 = vunpack.c.l.b16 %v1902
    %v2932 = vunpack.c.l.b16 %v1903
    %v2933 = vunpack.c.h.b16 %v1903
    %v2934 = vunpack.c.l.b16 %v1904
    %v2935 = vunpack.c.h.b16 %v1904
    %v2936 = vunpack.c.l.b16 %v1905
    %v2937 = vunpack.c.h.b16 %v1905
    %v2938 = vunpack.c.l.b16 %v1906
    %v2939 = vunpack.c.h.b16 %v1906
    %v2940 = vunpack.c.l.b16 %v1907
    %v2941 = vunpack.c.l.b16 %v1908
    %v2942 = vunpack.c.h.b16 %v1908
    %v2943 = vunpack.c.l.b16 %v1909
    %v2944 = vunpack.c.h.b16 %v1909
    %v2945 = vunpack.c.l.b16 %v1910
    %v2946 = vunpack.c.h.b16 %v1910
    %v2947 = vunpack.c.l.b16 %v1911
    %v2948 = vunpack.c.h.b16 %v1911
    %v2949 = vunpack.c.l.b16 %v1912
    %v2950 = vunpack.c.l.b16 %v1913
    %v2951 = vunpack.c.h.b16 %v1913
    %v2952 = vunpack.c.l.b16 %v1914
    %v2953 = vunpack.c.h.b16 %v1914
    %v2954 = vunpack.c.l.b16 %v1915
    %v2955 = vunpack.c.h.b16 %v1915
    %v2956 = vunpack.c.l.b16 %v1916
    %v2957 = vunpack.c.h.b16 %v1916
    %v2958 = vunpack.c.l.b16 %v1917
    %v2959 = vunpack.c.l.b16 %v1918
    %v2960 = vunpack.c.h.b16 %v1918
    %v2961 = vunpack.c.l.b16 %v1919
    %v2962 = vunpack.c.h.b16 %v1919
    %v2963 = vunpack.c.l.b16 %v1920
    %v2964 = vunpack.c.h.b16 %v1920
    %v2965 = vunpack.c.l.b16 %v1921
    %v2966 = vunpack.c.h.b16 %v1921
    %v2967 = vunpack.c.l.b16 %v1922
    %v2968 = vunpack.c.l.b16 %v1923
    %v2969 = vunpack.c.h.b16 %v1923
    %v2970 = vunpack.c.l.b16 %v1924
    %v2971 = vunpack.c.h.b16 %v1924
    %v2972 = vunpack.c.l.b16 %v1925
    %v2973 = vunpack.c.h.b16 %v1925
    %v2974 = vunpack.c.l.b16 %v1926
    %v2975 = vunpack.c.h.b16 %v1926
    %v2976 = vunpack.c.l.b16 %v1927
    %v2977 = vunpack.c.l.b16 %v1928
    %v2978 = vunpack.c.h.b16 %v1928
    %v2979 = vunpack.c.l.b16 %v1929
    %v2980 = vunpack.c.h.b16 %v1929
    %v2981 = vunpack.c.l.b16 %v1930
    %v2982 = vunpack.c.h.b16 %v1930
    %v2983 = vunpack.c.l.b16 %v1931
    %v2984 = vunpack.c.h.b16 %v1931
    %v2985 = vunpack.c.l.b16 %v1932
    %v2986 = vunpack.c.l.b16 %v1933
    %v2987 = vunpack.c.h.b16 %v1933
    %v2988 = vunpack.c.l.b16 %v1934
    %v2989 = vunpack.c.h.b16 %v1934
    %v2990 = vunpack.c.l.b16 %v1935
    %v2991 = vunpack.c.h.b16 %v1935
    %v2992 = vunpack.c.l.b16 %v1936
    %v2993 = vunpack.c.h.b16 %v1936
    %v2994 = vunpack.c.l.b16 %v1937
    %v2995 = vunpack.c.l.b16 %v1938
    %v2996 = vunpack.c.h.b16 %v1938
    %v2997 = vunpack.c.l.b16 %v1939
    %v2998 = vunpack.c.h.b16 %v1939
    %v2999 = vunpack.c.l.b16 %v1940
    %v3000 = vunpack.c.h.b16 %v1940
    %v3001 = vunpack.c.l.b16 %v1941
    %v3002 = vunpack.c.h.b16 %v1941
    %v3003 = vunpack.c.l.b16 %v1942
    %v3004 = vunpack.c.l.b16 %v1943
    %v3005 = vunpack.c.h.b16 %v1943
    %v3006 = vunpack.c.l.b16 %v1944
    %v3007 = vunpack.c.h.b16 %v1944
    %v3008 = vunpack.c.l.b16 %v1945
    %v3009 = vunpack.c.h.b16 %v1945
    %v3010 = vunpack.c.l.b16 %v1946
    %v3011 = vunpack.c.h.b16 %v1946
    %v3012 = vunpack.c.l.b16 %v1947
    %v3013 = vunpack.c.l.b16 %v1948
    %v3014 = vunpack.c.h.b16 %v1948
    %v3015 = vunpack.c.l.b16 %v1949
    %v3016 = vunpack.c.h.b16 %v1949
    %v3017 = vunpack.c.l.b16 %v1950
    %v3018 = vunpack.c.h.b16 %v1950
    %v3019 = vunpack.c.l.b16 %v1951
    %v3020 = vunpack.c.h.b16 %v1951
    %v3021 = vunpack.c.l.b16 %v1952
    %v3022 = vunpack.c.l.b16 %v1953
    %v3023 = vunpack.c.h.b16 %v1953
    %v3024 = vunpack.c.l.b16 %v1954
    %v3025 = vunpack.c.h.b16 %v1954
    %v3026 = vunpack.c.l.b16 %v1955
    %v3027 = vunpack.c.h.b16 %v1955
    %v3028 = vunpack.c.l.b16 %v1956
    %v3029 = vunpack.c.h.b16 %v1956
    %v3030 = vunpack.c.l.b16 %v1957
    %v3031 = vunpack.c.l.b16 %v1958
    %v3032 = vunpack.c.h.b16 %v1958
    %v3033 = vunpack.c.l.b16 %v1959
    %v3034 = vunpack.c.h.b16 %v1959
    %v3035 = vunpack.c.l.b16 %v1960
    %v3036 = vunpack.c.h.b16 %v1960
    %v3037 = vunpack.c.l.b16 %v1961
    %v3038 = vunpack.c.h.b16 %v1961
    %v3039 = vunpack.c.l.b16 %v1962
    %v3040 = vunpack.c.l.b16 %v1963
    %v3041 = vunpack.c.h.b16 %v1963
    %v3042 = vunpack.c.l.b16 %v1964
    %v3043 = vunpack.c.h.b16 %v1964
    %v3044 = vunpack.c.l.b16 %v1965
    %v3045 = vunpack.c.h.b16 %v1965
    %v3046 = vunpack.c.l.b16 %v1966
    %v3047 = vunpack.c.h.b16 %v1966
    %v3048 = vunpack.c.l.b16 %v1967
    %v3049 = vunpack.c.l.b16 %v1968
    %v3050 = vunpack.c.h.b16 %v1968
    %v3051 = vunpack.c.l.b16 %v1969
    %v3052 = vunpack.c.h.b16 %v1969
    %v3053 = vunpack.c.l.b16 %v1970
    %v3054 = vunpack.c.h.b16 %v1970
    %v3055 = vunpack.c.l.b16 %v1971
    %v3056 = vunpack.c.h.b16 %v1971
    %v3057 = vunpack.c.l.b16 %v1972
    %v3058 = vunpack.c.l.b16 %v1973
    %v3059 = vunpack.c.h.b16 %v1973
    %v3060 = vunpack.c.l.b16 %v1974
    %v3061 = vunpack.c.h.b16 %v1974
    %v3062 = vunpack.c.l.b16 %v1975
    %v3063 = vunpack.c.h.b16 %v1975
    %v3064 = vunpack.c.l.b16 %v1976
    %v3065 = vunpack.c.h.b16 %v1976
    %v3066 = vunpack.c.l.b16 %v1977
    %v3067 = vunpack.c.l.b16 %v1978
    %v3068 = vunpack.c.h.b16 %v1978
    %v3069 = vunpack.c.l.b16 %v1979
    %v3070 = vunpack.c.h.b16 %v1979
    %v3071 = vunpack.c.l.b16 %v1980
    %v3072 = vunpack.c.h.b16 %v1980
    %v3073 = vunpack.c.l.b16 %v1981
    %v3074 = vunpack.c.h.b16 %v1981
    %v3075 = vunpack.c.l.b16 %v1982
    %v3076 = vunpack.c.l.b16 %v1983
    %v3077 = vunpack.c.h.b16 %v1983
    %v3078 = vunpack.c.l.b16 %v1984
    %v3079 = vunpack.c.h.b16 %v1984
    %v3080 = vunpack.c.l.b16 %v1985
    %v3081 = vunpack.c.h.b16 %v1985
    %v3082 = vunpack.c.l.b16 %v1986
    %v3083 = vunpack.c.h.b16 %v1986
    %v3084 = vunpack.c.l.b16 %v1987
    %v3085 = vunpack.c.l.b16 %v1988
    %v3086 = vunpack.c.h.b16 %v1988
    %v3087 = vunpack.c.l.b16 %v1989
    %v3088 = vunpack.c.h.b16 %v1989
    %v3089 = vunpack.c.l.b16 %v1990
    %v3090 = vunpack.c.h.b16 %v1990
    %v3091 = vunpack.c.l.b16 %v1991
    %v3092 = vunpack.c.h.b16 %v1991
    %v3093 = vunpack.c.l.b16 %v1992
    %v3094 = vunpack.c.l.b16 %v1993
    %v3095 = vunpack.c.h.b16 %v1993
    %v3096 = vunpack.c.l.b16 %v1994
    %v3097 = vunpack.c.h.b16 %v1994
    %v3098 = vunpack.c.l.b16 %v1995
    %v3099 = vunpack.c.h.b16 %v1995
    %v3100 = vunpack.c.l.b16 %v1996
    %v3101 = vunpack.c.h.b16 %v1996
    %v3102 = vunpack.c.l.b16 %v1997
    %v3103 = vunpack.c.l.b16 %v1998
    %v3104 = vunpack.c.h.b16 %v1998
    %v3105 = vunpack.c.l.b16 %v1999
    %v3106 = vunpack.c.h.b16 %v1999
    %v3107 = vunpack.c.l.b16 %v2000
    %v3108 = vunpack.c.h.b16 %v2000
    %v3109 = vunpack.c.l.b16 %v2001
    %v3110 = vunpack.c.h.b16 %v2001
    %v3111 = vunpack.c.l.b16 %v2002
    %v3112 = vunpack.c.l.b16 %v2003
    %v3113 = vunpack.c.h.b16 %v2003
    %v3114 = vunpack.c.l.b16 %v2004
    %v3115 = vunpack.c.h.b16 %v2004
    %v3116 = vunpack.c.l.b16 %v2005
    %v3117 = vunpack.c.h.b16 %v2005
    %v3118 = vunpack.c.l.b16 %v2006
    %v3119 = vunpack.c.h.b16 %v2006
    %v3120 = vunpack.c.l.b16 %v2007
    %v3121 = vunpack.c.l.b16 %v2008
    %v3122 = vunpack.c.h.b16 %v2008
    %v3123 = vunpack.c.l.b16 %v2009
    %v3124 = vunpack.c.h.b16 %v2009
    %v3125 = vunpack.c.l.b16 %v2010
    %v3126 = vunpack.c.h.b16 %v2010
    %v3127 = vunpack.c.l.b16 %v2011
    %v3128 = vunpack.c.h.b16 %v2011
    %v3129 = vunpack.c.l.b16 %v2012
    %v3130 = vunpack.c.l.b16 %v2013
    %v3131 = vunpack.c.h.b16 %v2013
    %v3132 = vunpack.c.l.b16 %v2014
    %v3133 = vunpack.c.h.b16 %v2014
    %v3134 = vunpack.c.l.b16 %v2015
    %v3135 = vunpack.c.h.b16 %v2015
    %v3136 = vunpack.c.l.b16 %v2016
    %v3137 = vunpack.c.h.b16 %v2016
    %v3138 = vunpack.c.l.b16 %v2017
    %v3139 = vunpack.c.l.b16 %v2018
    %v3140 = vunpack.c.h.b16 %v2018
    %v3141 = vunpack.c.l.b16 %v2019
    %v3142 = vunpack.c.h.b16 %v2019
    %v3143 = vunpack.c.l.b16 %v2020
    %v3144 = vunpack.c.h.b16 %v2020
    %v3145 = vunpack.c.l.b16 %v2021
    %v3146 = vunpack.c.h.b16 %v2021
    %v3147 = vunpack.c.l.b16 %v2022
    %v3148 = vunpack.c.l.b16 %v2023
    %v3149 = vunpack.c.h.b16 %v2023
    %v3150 = vunpack.c.l.b16 %v2024
    %v3151 = vunpack.c.h.b16 %v2024
    %v3152 = vunpack.c.l.b16 %v2025
    %v3153 = vunpack.c.h.b16 %v2025
    %v3154 = vunpack.c.l.b16 %v2026
    %v3155 = vunpack.c.h.b16 %v2026
    %v3156 = vunpack.c.l.b16 %v2027
    %v3157 = vunpack.c.l.b16 %v2028
    %v3158 = vunpack.c.h.b16 %v2028
    %v3159 = vunpack.c.l.b16 %v2029
    %v3160 = vunpack.c.h.b16 %v2029
    %v3161 = vunpack.c.l.b16 %v2030
    %v3162 = vunpack.c.h.b16 %v2030
    %v3163 = vunpack.c.l.b16 %v2031
    %v3164 = vunpack.c.h.b16 %v2031
    %v3165 = vunpack.c.l.b16 %v2032
    %v3166 = vunpack.c.l.b16 %v2033
    %v3167 = vunpack.c.h.b16 %v2033
    %v3168 = vunpack.c.l.b16 %v2034
    %v3169 = vunpack.c.h.b16 %v2034
    %v3170 = vunpack.c.l.b16 %v2035
    %v3171 = vunpack.c.h.b16 %v2035
    %v3172 = vunpack.c.l.b16 %v2036
    %v3173 = vunpack.c.h.b16 %v2036
    %v3174 = vunpack.c.l.b16 %v2037
    %v3175 = vunpack.c.l.b16 %v2038
    %v3176 = vunpack.c.h.b16 %v2038
    %v3177 = vunpack.c.l.b16 %v2039
    %v3178 = vunpack.c.h.b16 %v2039
    %v3179 = vunpack.c.l.b16 %v2040
    %v3180 = vunpack.c.h.b16 %v2040
    %v3181 = vunpack.c.l.b16 %v2041
    %v3182 = vunpack.c.h.b16 %v2041
    %v3183 = vunpack.c.l.b16 %v2042
    %v3184 = vunpack.c.l.b16 %v2043
    %v3185 = vunpack.c.h.b16 %v2043
    %v3186 = vunpack.c.l.b16 %v2044
    %v3187 = vunpack.c.h.b16 %v2044
    %v3188 = vunpack.c.l.b16 %v2045
    %v3189 = vunpack.c.h.b16 %v2045
    %v3190 = vunpack.c.l.b16 %v2046
    %v3191 = vunpack.c.h.b16 %v2046
    %v3192 = vunpack.c.l.b16 %v2047
    %v3193 = vunpack.c.l.b16 %v2048
    %v3194 = vunpack.c.h.b16 %v2048
    %v3195 = vunpack.c.l.b16 %v2049
    %v3196 = vunpack.c.h.b16 %v2049
    %v3197 = vunpack.c.l.b16 %v2050
    %v3198 = vunpack.c.h.b16 %v2050
    %v3199 = vunpack.c.l.b16 %v2051
    %v3200 = vunpack.c.h.b16 %v2051
    %v3201 = vunpack.c.l.b16 %v2052
    %v3202 = vunpack.c.l.b16 %v2053
    %v3203 = vunpack.c.h.b16 %v2053
    %v3204 = vunpack.c.l.b16 %v2054
    %v3205 = vunpack.c.h.b16 %v2054
    %v3206 = vunpack.c.l.b16 %v2055
    %v3207 = vunpack.c.h.b16 %v2055
    %v3208 = vunpack.c.l.b16 %v2056
    %v3209 = vunpack.c.h.b16 %v2056
    %v3210 = vunpack.c.l.b16 %v2057
    %v3211 = vunpack.c.l.b16 %v2058
    %v3212 = vunpack.c.h.b16 %v2058
    %v3213 = vunpack.c.l.b16 %v2059
    %v3214 = vunpack.c.h.b16 %v2059
    %v3215 = vunpack.c.l.b16 %v2060
    %v3216 = vunpack.c.h.b16 %v2060
    %v3217 = vunpack.c.l.b16 %v2061
    %v3218 = vunpack.c.h.b16 %v2061
    %v3219 = vunpack.c.l.b16 %v2062
    %v3220 = vunpack.c.l.b16 %v2063
    %v3221 = vunpack.c.h.b16 %v2063
    %v3222 = vunpack.c.l.b16 %v2064
    %v3223 = vunpack.c.h.b16 %v2064
    %v3224 = vunpack.c.l.b16 %v2065
    %v3225 = vunpack.c.h.b16 %v2065
    %v3226 = vunpack.c.l.b16 %v2066
    %v3227 = vunpack.c.h.b16 %v2066
    %v3228 = vunpack.c.l.b16 %v2067
    %v3229 = vunpack.c.l.b16 %v2068
    %v3230 = vunpack.c.h.b16 %v2068
    %v3231 = vunpack.c.l.b16 %v2069
    %v3232 = vunpack.c.h.b16 %v2069
    %v3233 = vunpack.c.l.b16 %v2070
    %v3234 = vunpack.c.h.b16 %v2070
    %v3235 = vunpack.c.l.b16 %v2071
    %v3236 = vunpack.c.h.b16 %v2071
    %v3237 = vunpack.c.l.b16 %v2072
    %v3238 = vunpack.c.l.b16 %v2073
    %v3239 = vunpack.c.h.b16 %v2073
    %v3240 = vunpack.c.l.b16 %v2074
    %v3241 = vunpack.c.h.b16 %v2074
    %v3242 = vunpack.c.l.b16 %v2075
    %v3243 = vunpack.c.h.b16 %v2075
    %v3244 = vunpack.c.l.b16 %v2076
    %v3245 = vunpack.c.h.b16 %v2076
    %v3246 = vunpack.c.l.b16 %v2077
    %v3247 = vpack.c.b16 %v2536, %v2527
    %v3248 = vpack.c.b16 %v2537, %v2528
    %v3249 = vpack.c.b16 %v2538, %v2529
    %v3250 = vpack.c.b16 %v2539, %v2530
    %v3251 = vpack.c.b16 %v2540, %v2531
    %v3252 = vpack.c.b16 %v2541, %v2532
    %v3253 = vpack.c.b16 %v2542, %v2533
    %v3254 = vpack.c.b16 %v2543, %v2534
    %v3255 = vpack.c.b16 %v2544, %v2535
    %v3256 = vpack.c.b16 %v2554, %v2545
    %v3257 = vpack.c.b16 %v2555, %v2546
    %v3258 = vpack.c.b16 %v2556, %v2547
    %v3259 = vpack.c.b16 %v2557, %v2548
    %v3260 = vpack.c.b16 %v2558, %v2549
    %v3261 = vpack.c.b16 %v2559, %v2550
    %v3262 = vpack.c.b16 %v2560, %v2551
    %v3263 = vpack.c.b16 %v2561, %v2552
    %v3264 = vpack.c.b16 %v2562, %v2553
    %v3265 = vpack.c.b16 %v2572, %v2563
    %v3266 = vpack.c.b16 %v2573, %v2564
    %v3267 = vpack.c.b16 %v2574, %v2565
    %v3268 = vpack.c.b16 %v2575, %v2566
    %v3269 = vpack.c.b16 %v2576, %v2567
    %v3270 = vpack.c.b16 %v2577, %v2568
    %v3271 = vpack.c.b16 %v2578, %v2569
    %v3272 = vpack.c.b16 %v2579, %v2570
    %v3273 = vpack.c.b16 %v2580, %v2571
    %v3274 = vpack.c.b16 %v2590, %v2581
    %v3275 = vpack.c.b16 %v2591, %v2582
    %v3276 = vpack.c.b16 %v2592, %v2583
    %v3277 = vpack.c.b16 %v2593, %v2584
    %v3278 = vpack.c.b16 %v2594, %v2585
    %v3279 = vpack.c.b16 %v2595, %v2586
    %v3280 = vpack.c.b16 %v2596, %v2587
    %v3281 = vpack.c.b16 %v2597, %v2588
    %v3282 = vpack.c.b16 %v2598, %v2589
    %v3283 = vpack.c.b16 %v2608, %v2599
    %v3284 = vpack.c.b16 %v2609, %v2600
    %v3285 = vpack.c.b16 %v2610, %v2601
    %v3286 = vpack.c.b16 %v2611, %v2602
    %v3287 = vpack.c.b16 %v2612, %v2603
    %v3288 = vpack.c.b16 %v2613, %v2604
    %v3289 = vpack.c.b16 %v2614, %v2605
    %v3290 = vpack.c.b16 %v2615, %v2606
    %v3291 = vpack.c.b16 %v2616, %v2607
    %v3292 = vpack.c.b16 %v2626, %v2617
    %v3293 = vpack.c.b16 %v2627, %v2618
    %v3294 = vpack.c.b16 %v2628, %v2619
    %v3295 = vpack.c.b16 %v2629, %v2620
    %v3296 = vpack.c.b16 %v2630, %v2621
    %v3297 = vpack.c.b16 %v2631, %v2622
    %v3298 = vpack.c.b16 %v2632, %v2623
    %v3299 = vpack.c.b16 %v2633, %v2624
    %v3300 = vpack.c.b16 %v2634, %v2625
    %v3301 = vpack.c.b16 %v2644, %v2635
    %v3302 = vpack.c.b16 %v2645, %v2636
    %v3303 = vpack.c.b16 %v2646, %v2637
    %v3304 = vpack.c.b16 %v2647, %v2638
    %v3305 = vpack.c.b16 %v2648, %v2639
    %v3306 = vpack.c.b16 %v2649, %v2640
    %v3307 = vpack.c.b16 %v2650, %v2641
    %v3308 = vpack.c.b16 %v2651, %v2642
    %v3309 = vpack.c.b16 %v2652, %v2643
    %v3310 = vpack.c.b16 %v2662, %v2653
    %v3311 = vpack.c.b16 %v2663, %v2654
    %v3312 = vpack.c.b16 %v2664, %v2655
    %v3313 = vpack.c.b16 %v2665, %v2656
    %v3314 = vpack.c.b16 %v2666, %v2657
    %v3315 = vpack.c.b16 %v2667, %v2658
    %v3316 = vpack.c.b16 %v2668, %v2659
    %v3317 = vpack.c.b16 %v2669, %v2660
    %v3318 = vpack.c.b16 %v2670, %v2661
    %v3319 = vpack.c.b16 %v2680, %v2671
    %v3320 = vpack.c.b16 %v2681, %v2672
    %v3321 = vpack.c.b16 %v2682, %v2673
    %v3322 = vpack.c.b16 %v2683, %v2674
    %v3323 = vpack.c.b16 %v2684, %v2675
    %v3324 = vpack.c.b16 %v2685, %v2676
    %v3325 = vpack.c.b16 %v2686, %v2677
    %v3326 = vpack.c.b16 %v2687, %v2678
    %v3327 = vpack.c.b16 %v2688, %v2679
    %v3328 = vpack.c.b16 %v2698, %v2689
    %v3329 = vpack.c.b16 %v2699, %v2690
    %v3330 = vpack.c.b16 %v2700, %v2691
    %v3331 = vpack.c.b16 %v2701, %v2692
    %v3332 = vpack.c.b16 %v2702, %v2693
    %v3333 = vpack.c.b16 %v2703, %v2694
    %v3334 = vpack.c.b16 %v2704, %v2695
    %v3335 = vpack.c.b16 %v2705, %v2696
    %v3336 = vpack.c.b16 %v2706, %v2697
    %v3337 = vpack.c.b16 %v2716, %v2707
    %v3338 = vpack.c.b16 %v2717, %v2708
    %v3339 = vpack.c.b16 %v2718, %v2709
    %v3340 = vpack.c.b16 %v2719, %v2710
    %v3341 = vpack.c.b16 %v2720, %v2711
    %v3342 = vpack.c.b16 %v2721, %v2712
    %v3343 = vpack.c.b16 %v2722, %v2713
    %v3344 = vpack.c.b16 %v2723, %v2714
    %v3345 = vpack.c.b16 %v2724, %v2715
    %v3346 = vpack.c.b16 %v2734, %v2725
    %v3347 = vpack.c.b16 %v2735, %v2726
    %v3348 = vpack.c.b16 %v2736, %v2727
    %v3349 = vpack.c.b16 %v2737, %v2728
    %v3350 = vpack.c.b16 %v2738, %v2729
    %v3351 = vpack.c.b16 %v2739, %v2730
    %v3352 = vpack.c.b16 %v2740, %v2731
    %v3353 = vpack.c.b16 %v2741, %v2732
    %v3354 = vpack.c.b16 %v2742, %v2733
    %v3355 = vpack.c.b16 %v2752, %v2743
    %v3356 = vpack.c.b16 %v2753, %v2744
    %v3357 = vpack.c.b16 %v2754, %v2745
    %v3358 = vpack.c.b16 %v2755, %v2746
    %v3359 = vpack.c.b16 %v2756, %v2747
    %v3360 = vpack.c.b16 %v2757, %v2748
    %v3361 = vpack.c.b16 %v2758, %v2749
    %v3362 = vpack.c.b16 %v2759, %v2750
    %v3363 = vpack.c.b16 %v2760, %v2751
    %v3364 = vpack.c.b16 %v2770, %v2761
    %v3365 = vpack.c.b16 %v2771, %v2762
    %v3366 = vpack.c.b16 %v2772, %v2763
    %v3367 = vpack.c.b16 %v2773, %v2764
    %v3368 = vpack.c.b16 %v2774, %v2765
    %v3369 = vpack.c.b16 %v2775, %v2766
    %v3370 = vpack.c.b16 %v2776, %v2767
    %v3371 = vpack.c.b16 %v2777, %v2768
    %v3372 = vpack.c.b16 %v2778, %v2769
    %v3373 = vpack.c.b16 %v2788, %v2779
    %v3374 = vpack.c.b16 %v2789, %v2780
    %v3375 = vpack.c.b16 %v2790, %v2781
    %v3376 = vpack.c.b16 %v2791, %v2782
    %v3377 = vpack.c.b16 %v2792, %v2783
    %v3378 = vpack.c.b16 %v2793, %v2784
    %v3379 = vpack.c.b16 %v2794, %v2785
    %v3380 = vpack.c.b16 %v2795, %v2786
    %v3381 = vpack.c.b16 %v2796, %v2787
    %v3382 = vpack.c.b16 %v2806, %v2797
    %v3383 = vpack.c.b16 %v2807, %v2798
    %v3384 = vpack.c.b16 %v2808, %v2799
    %v3385 = vpack.c.b16 %v2809, %v2800
    %v3386 = vpack.c.b16 %v2810, %v2801
    %v3387 = vpack.c.b16 %v2811, %v2802
    %v3388 = vpack.c.b16 %v2812, %v2803
    %v3389 = vpack.c.b16 %v2813, %v2804
    %v3390 = vpack.c.b16 %v2814, %v2805
    %v3391 = vpack.c.b16 %v2824, %v2815
    %v3392 = vpack.c.b16 %v2825, %v2816
    %v3393 = vpack.c.b16 %v2826, %v2817
    %v3394 = vpack.c.b16 %v2827, %v2818
    %v3395 = vpack.c.b16 %v2828, %v2819
    %v3396 = vpack.c.b16 %v2829, %v2820
    %v3397 = vpack.c.b16 %v2830, %v2821
    %v3398 = vpack.c.b16 %v2831, %v2822
    %v3399 = vpack.c.b16 %v2832, %v2823
    %v3400 = vpack.c.b16 %v2842, %v2833
    %v3401 = vpack.c.b16 %v2843, %v2834
    %v3402 = vpack.c.b16 %v2844, %v2835
    %v3403 = vpack.c.b16 %v2845, %v2836
    %v3404 = vpack.c.b16 %v2846, %v2837
    %v3405 = vpack.c.b16 %v2847, %v2838
    %v3406 = vpack.c.b16 %v2848, %v2839
    %v3407 = vpack.c.b16 %v2849, %v2840
    %v3408 = vpack.c.b16 %v2850, %v2841
    %v3409 = vpack.c.b16 %v2860, %v2851
    %v3410 = vpack.c.b16 %v2861, %v2852
    %v3411 = vpack.c.b16 %v2862, %v2853
    %v3412 = vpack.c.b16 %v2863, %v2854
    %v3413 = vpack.c.b16 %v2864, %v2855
    %v3414 = vpack.c.b16 %v2865, %v2856
    %v3415 = vpack.c.b16 %v2866, %v2857
    %v3416 = vpack.c.b16 %v2867, %v2858
    %v3417 = vpack.c.b16 %v2868, %v2859
    %v3418 = vpack.c.b16 %v2878, %v2869
    %v3419 = vpack.c.b16 %v2879, %v2870
    %v3420 = vpack.c.b16 %v2880, %v2871
    %v3421 = vpack.c.b16 %v2881, %v2872
    %v3422 = vpack.c.b16 %v2882, %v2873
    %v3423 = vpack.c.b16 %v2883, %v2874
    %v3424 = vpack.c.b16 %v2884, %v2875
    %v3425 = vpack.c.b16 %v2885, %v2876
    %v3426 = vpack.c.b16 %v2886, %v2877
    %v3427 = vpack.c.b16 %v2896, %v2887
    %v3428 = vpack.c.b16 %v2897, %v2888
    %v3429 = vpack.c.b16 %v2898, %v2889
    %v3430 = vpack.c.b16 %v2899, %v2890
    %v3431 = vpack.c.b16 %v2900, %v2891
    %v3432 = vpack.c.b16 %v2901, %v2892
    %v3433 = vpack.c.b16 %v2902, %v2893
    %v3434 = vpack.c.b16 %v2903, %v2894
    %v3435 = vpack.c.b16 %v2904, %v2895
    %v3436 = vpack.c.b16 %v2914, %v2905
    %v3437 = vpack.c.b16 %v2915, %v2906
    %v3438 = vpack.c.b16 %v2916, %v2907
    %v3439 = vpack.c.b16 %v2917, %v2908
    %v3440 = vpack.c.b16 %v2918, %v2909
    %v3441 = vpack.c.b16 %v2919, %v2910
    %v3442 = vpack.c.b16 %v2920, %v2911
    %v3443 = vpack.c.b16 %v2921, %v2912
    %v3444 = vpack.c.b16 %v2922, %v2913
    %v3445 = vpack.c.b16 %v2932, %v2923
    %v3446 = vpack.c.b16 %v2933, %v2924
    %v3447 = vpack.c.b16 %v2934, %v2925
    %v3448 = vpack.c.b16 %v2935, %v2926
    %v3449 = vpack.c.b16 %v2936, %v2927
    %v3450 = vpack.c.b16 %v2937, %v2928
    %v3451 = vpack.c.b16 %v2938, %v2929
    %v3452 = vpack.c.b16 %v2939, %v2930
    %v3453 = vpack.c.b16 %v2940, %v2931
    %v3454 = vpack.c.b16 %v2950, %v2941
    %v3455 = vpack.c.b16 %v2951, %v2942
    %v3456 = vpack.c.b16 %v2952, %v2943
    %v3457 = vpack.c.b16 %v2953, %v2944
    %v3458 = vpack.c.b16 %v2954, %v2945
    %v3459 = vpack.c.b16 %v2955, %v2946
    %v3460 = vpack.c.b16 %v2956, %v2947
    %v3461 = vpack.c.b16 %v2957, %v2948
    %v3462 = vpack.c.b16 %v2958, %v2949
    %v3463 = vpack.c.b16 %v2968, %v2959
    %v3464 = vpack.c.b16 %v2969, %v2960
    %v3465 = vpack.c.b16 %v2970, %v2961
    %v3466 = vpack.c.b16 %v2971, %v2962
    %v3467 = vpack.c.b16 %v2972, %v2963
    %v3468 = vpack.c.b16 %v2973, %v2964
    %v3469 = vpack.c.b16 %v2974, %v2965
    %v3470 = vpack.c.b16 %v2975, %v2966
    %v3471 = vpack.c.b16 %v2976, %v2967
    %v3472 = vpack.c.b16 %v2986, %v2977
    %v3473 = vpack.c.b16 %v2987, %v2978
    %v3474 = vpack.c.b16 %v2988, %v2979
    %v3475 = vpack.c.b16 %v2989, %v2980
    %v3476 = vpack.c.b16 %v2990, %v2981
    %v3477 = vpack.c.b16 %v2991, %v2982
    %v3478 = vpack.c.b16 %v2992, %v2983
    %v3479 = vpack.c.b16 %v2993, %v2984
    %v3480 = vpack.c.b16 %v2994, %v2985
    %v3481 = vpack.c.b16 %v3004, %v2995
    %v3482 = vpack.c.b16 %v3005, %v2996
    %v3483 = vpack.c.b16 %v3006, %v2997
    %v3484 = vpack.c.b16 %v3007, %v2998
    %v3485 = vpack.c.b16 %v3008, %v2999
    %v3486 = vpack.c.b16 %v3009, %v3000
    %v3487 = vpack.c.b16 %v3010, %v3001
    %v3488 = vpack.c.b16 %v3011, %v3002
    %v3489 = vpack.c.b16 %v3012, %v3003
    %v3490 = vpack.c.b16 %v3022, %v3013
    %v3491 = vpack.c.b16 %v3023, %v3014
    %v3492 = vpack.c.b16 %v3024, %v3015
    %v3493 = vpack.c.b16 %v3025, %v3016
    %v3494 = vpack.c.b16 %v3026, %v3017
    %v3495 = vpack.c.b16 %v3027, %v3018
    %v3496 = vpack.c.b16 %v3028, %v3019
    %v3497 = vpack.c.b16 %v3029, %v3020
    %v3498 = vpack.c.b16 %v3030, %v3021
    %v3499 = vpack.c.b16 %v3040, %v3031
    %v3500 = vpack.c.b16 %v3041, %v3032
    %v3501 = vpack.c.b16 %v3042, %v3033
    %v3502 = vpack.c.b16 %v3043, %v3034
    %v3503 = vpack.c.b16 %v3044, %v3035
    %v3504 = vpack.c.b16 %v3045, %v3036
    %v3505 = vpack.c.b16 %v3046, %v3037
    %v3506 = vpack.c.b16 %v3047, %v3038
    %v3507 = vpack.c.b16 %v3048, %v3039
    %v3508 = vpack.c.b16 %v3058, %v3049
    %v3509 = vpack.c.b16 %v3059, %v3050
    %v3510 = vpack.c.b16 %v3060, %v3051
    %v3511 = vpack.c.b16 %v3061, %v3052
    %v3512 = vpack.c.b16 %v3062, %v3053
    %v3513 = vpack.c.b16 %v3063, %v3054
    %v3514 = vpack.c.b16 %v3064, %v3055
    %v3515 = vpack.c.b16 %v3065, %v3056
    %v3516 = vpack.c.b16 %v3066, %v3057
    %v3517 = vpack.c.b16 %v3076, %v3067
    %v3518 = vpack.c.b16 %v3077, %v3068
    %v3519 = vpack.c.b16 %v3078, %v3069
    %v3520 = vpack.c.b16 %v3079, %v3070
    %v3521 = vpack.c.b16 %v3080, %v3071
    %v3522 = vpack.c.b16 %v3081, %v3072
    %v3523 = vpack.c.b16 %v3082, %v3073
    %v3524 = vpack.c.b16 %v3083, %v3074
    %v3525 = vpack.c.b16 %v3084, %v3075
    %v3526 = vpack.c.b16 %v3094, %v3085
    %v3527 = vpack.c.b16 %v3095, %v3086
    %v3528 = vpack.c.b16 %v3096, %v3087
    %v3529 = vpack.c.b16 %v3097, %v3088
    %v3530 = vpack.c.b16 %v3098, %v3089
    %v3531 = vpack.c.b16 %v3099, %v3090
    %v3532 = vpack.c.b16 %v3100, %v3091
    %v3533 = vpack.c.b16 %v3101, %v3092
    %v3534 = vpack.c.b16 %v3102, %v3093
    %v3535 = vpack.c.b16 %v3112, %v3103
    %v3536 = vpack.c.b16 %v3113, %v3104
    %v3537 = vpack.c.b16 %v3114, %v3105
    %v3538 = vpack.c.b16 %v3115, %v3106
    %v3539 = vpack.c.b16 %v3116, %v3107
    %v3540 = vpack.c.b16 %v3117, %v3108
    %v3541 = vpack.c.b16 %v3118, %v3109
    %v3542 = vpack.c.b16 %v3119, %v3110
    %v3543 = vpack.c.b16 %v3120, %v3111
    %v3544 = vpack.c.b16 %v3130, %v3121
    %v3545 = vpack.c.b16 %v3131, %v3122
    %v3546 = vpack.c.b16 %v3132, %v3123
    %v3547 = vpack.c.b16 %v3133, %v3124
    %v3548 = vpack.c.b16 %v3134, %v3125
    %v3549 = vpack.c.b16 %v3135, %v3126
    %v3550 = vpack.c.b16 %v3136, %v3127
    %v3551 = vpack.c.b16 %v3137, %v3128
    %v3552 = vpack.c.b16 %v3138, %v3129
    %v3553 = vpack.c.b16 %v3148, %v3139
    %v3554 = vpack.c.b16 %v3149, %v3140
    %v3555 = vpack.c.b16 %v3150, %v3141
    %v3556 = vpack.c.b16 %v3151, %v3142
    %v3557 = vpack.c.b16 %v3152, %v3143
    %v3558 = vpack.c.b16 %v3153, %v3144
    %v3559 = vpack.c.b16 %v3154, %v3145
    %v3560 = vpack.c.b16 %v3155, %v3146
    %v3561 = vpack.c.b16 %v3156, %v3147
    %v3562 = vpack.c.b16 %v3166, %v3157
    %v3563 = vpack.c.b16 %v3167, %v3158
    %v3564 = vpack.c.b16 %v3168, %v3159
    %v3565 = vpack.c.b16 %v3169, %v3160
    %v3566 = vpack.c.b16 %v3170, %v3161
    %v3567 = vpack.c.b16 %v3171, %v3162
    %v3568 = vpack.c.b16 %v3172, %v3163
    %v3569 = vpack.c.b16 %v3173, %v3164
    %v3570 = vpack.c.b16 %v3174, %v3165
    %v3571 = vpack.c.b16 %v3184, %v3175
    %v3572 = vpack.c.b16 %v3185, %v3176
    %v3573 = vpack.c.b16 %v3186, %v3177
    %v3574 = vpack.c.b16 %v3187, %v3178
    %v3575 = vpack.c.b16 %v3188, %v3179
    %v3576 = vpack.c.b16 %v3189, %v3180
    %v3577 = vpack.c.b16 %v3190, %v3181
    %v3578 = vpack.c.b16 %v3191, %v3182
    %v3579 = vpack.c.b16 %v3192, %v3183
    %v3580 = vpack.c.b16 %v3202, %v3193
    %v3581 = vpack.c.b16 %v3203, %v3194
    %v3582 = vpack.c.b16 %v3204, %v3195
    %v3583 = vpack.c.b16 %v3205, %v3196
    %v3584 = vpack.c.b16 %v3206, %v3197
    %v3585 = vpack.c.b16 %v3207, %v3198
    %v3586 = vpack.c.b16 %v3208, %v3199
    %v3587 = vpack.c.b16 %v3209, %v3200
    %v3588 = vpack.c.b16 %v3210, %v3201
    %v3589 = vpack.c.b16 %v3220, %v3211
    %v3590 = vpack.c.b16 %v3221, %v3212
    %v3591 = vpack.c.b16 %v3222, %v3213
    %v3592 = vpack.c.b16 %v3223, %v3214
    %v3593 = vpack.c.b16 %v3224, %v3215
    %v3594 = vpack.c.b16 %v3225, %v3216
    %v3595 = vpack.c.b16 %v3226, %v3217
    %v3596 = vpack.c.b16 %v3227, %v3218
    %v3597 = vpack.c.b16 %v3228, %v3219
    %v3598 = vpack.c.b16 %v3238, %v3229
    %v3599 = vpack.c.b16 %v3239, %v3230
    %v3600 = vpack.c.b16 %v3240, %v3231
    %v3601 = vpack.c.b16 %v3241, %v3232
    %v3602 = vpack.c.b16 %v3242, %v3233
    %v3603 = vpack.c.b16 %v3243, %v3234
    %v3604 = vpack.c.b16 %v3244, %v3235
    %v3605 = vpack.c.b16 %v3245, %v3236
    %v3606 = vpack.c.b16 %v3246, %v3237
    %3967 = vmatprep.subr.bf16.mxu0 %v3248
    %3968 = vmatpush1.bf16.msra.mxu0 %v3247
    %3969 = vmatprep.subr.bf16.mxu0 %v3257
    %3970 = vmatpush1.bf16.msra.mxu0 %v3256
    %3971 = vmatprep.subr.bf16.mxu0 %v3266
    %3972 = vmatpush1.bf16.msra.mxu0 %v3265
    %3973 = vmatprep.subr.bf16.mxu0 %v3275
    %3974 = vmatpush1.bf16.msra.mxu0 %v3274
    %3975 = vmatprep.subr.bf16.mxu0 %v3284
    %3976 = vmatpush1.bf16.msra.mxu0 %v3283
    %3977 = vmatprep.subr.bf16.mxu0 %v3293
    %3978 = vmatpush1.bf16.msra.mxu0 %v3292
    %3979 = vmatprep.subr.bf16.mxu0 %v3302
    %3980 = vmatpush1.bf16.msra.mxu0 %v3301
    %3981 = vmatprep.subr.bf16.mxu0 %v3311
    %3982 = vmatpush1.bf16.msra.mxu0 %v3310
    %3983 = vmatprep.subr.bf16.mxu0 %v3320
    %3984 = vmatpush1.bf16.msra.mxu0 %v3319
    %3985 = vmatprep.subr.bf16.mxu0 %v3329
    %3986 = vmatpush1.bf16.msra.mxu0 %v3328
    %3987 = vmatprep.subr.bf16.mxu0 %v3338
    %3988 = vmatpush1.bf16.msra.mxu0 %v3337
    %3989 = vmatprep.subr.bf16.mxu0 %v3347
    %3990 = vmatpush1.bf16.msra.mxu0 %v3346
    %3991 = vmatprep.subr.bf16.mxu0 %v3356
    %3992 = vmatpush1.bf16.msra.mxu0 %v3355
    %3993 = vmatprep.subr.bf16.mxu0 %v3365
    %3994 = vmatpush1.bf16.msra.mxu0 %v3364
    %3995 = vmatprep.subr.bf16.mxu0 %v3374
    %3996 = vmatpush1.bf16.msra.mxu0 %v3373
    %3997 = vmatprep.subr.bf16.mxu0 %v3383
    %3998 = vmatpush1.bf16.msra.mxu0 %v3382
    %3999 = vmatprep.mubr.bf16.mxu0 %v1674
    %4000 = vmatmul.mubr.bf16.gmra.mrb[0].mxu0 %v1673
    %v4001 = vpop.f32.mrb[0].mxu0
    %v4002 = vadd.f32 %v2085, %v4001
    %v4003 = vpop.f32.mrb[0].mxu0
    %v4004 = vadd.f32 %v2089, %v4003
    %v4005 = vpop.f32.mrb[0].mxu0
    %v4006 = vpop.f32.mrb[0].mxu0
    %4007 = vdwg.mxu0
    %4008 = vmatprep.subr.bf16.mxu0 %v3392
    %4009 = vmatpush1.bf16.msra.mxu0 %v3391
    %4010 = vmatprep.subr.bf16.mxu0 %v3401
    %4011 = vmatpush1.bf16.msra.mxu0 %v3400
    %4012 = vmatprep.subr.bf16.mxu0 %v3410
    %4013 = vmatpush1.bf16.msra.mxu0 %v3409
    %4014 = vmatprep.subr.bf16.mxu0 %v3419
    %4015 = vmatpush1.bf16.msra.mxu0 %v3418
    %4016 = vmatprep.subr.bf16.mxu0 %v3428
    %4017 = vmatpush1.bf16.msra.mxu0 %v3427
    %4018 = vmatprep.subr.bf16.mxu0 %v3437
    %4019 = vmatpush1.bf16.msra.mxu0 %v3436
    %4020 = vmatprep.subr.bf16.mxu0 %v3446
    %4021 = vmatpush1.bf16.msra.mxu0 %v3445
    %4022 = vmatprep.subr.bf16.mxu0 %v3455
    %4023 = vmatpush1.bf16.msra.mxu0 %v3454
    %4024 = vmatprep.subr.bf16.mxu0 %v3464
    %4025 = vmatpush1.bf16.msra.mxu0 %v3463
    %4026 = vmatprep.subr.bf16.mxu0 %v3473
    %4027 = vmatpush1.bf16.msra.mxu0 %v3472
    %4028 = vmatprep.subr.bf16.mxu0 %v3482
    %4029 = vmatpush1.bf16.msra.mxu0 %v3481
    %4030 = vmatprep.subr.bf16.mxu0 %v3491
    %4031 = vmatpush1.bf16.msra.mxu0 %v3490
    %4032 = vmatprep.subr.bf16.mxu0 %v3500
    %4033 = vmatpush1.bf16.msra.mxu0 %v3499
    %4034 = vmatprep.subr.bf16.mxu0 %v3509
    %4035 = vmatpush1.bf16.msra.mxu0 %v3508
    %4036 = vmatprep.subr.bf16.mxu0 %v3518
    %4037 = vmatpush1.bf16.msra.mxu0 %v3517
    %4038 = vmatprep.subr.bf16.mxu0 %v3527
    %4039 = vmatpush1.bf16.msra.mxu0 %v3526
    %4040 = vmatprep.mubr.bf16.mxu0 %v1676
    %4041 = vmatmul.mubr.bf16.gmra.mrb[0].mxu0 %v1675
    %v4042 = vpop.f32.mrb[0].mxu0
    %v4043 = vadd.f32 %v4002, %v4042
    %v4044 = vpop.f32.mrb[0].mxu0
    %v4045 = vadd.f32 %v4004, %v4044
    %v4046 = vpop.f32.mrb[0].mxu0
    %v4047 = vpop.f32.mrb[0].mxu0
    %4048 = vdwg.mxu0
    %4049 = vmatprep.subr.bf16.mxu0 %v3536
    %4050 = vmatpush1.bf16.msra.mxu0 %v3535
    %4051 = vmatprep.subr.bf16.mxu0 %v3545
    %4052 = vmatpush1.bf16.msra.mxu0 %v3544
    %4053 = vmatprep.subr.bf16.mxu0 %v3554
    %4054 = vmatpush1.bf16.msra.mxu0 %v3553
    %4055 = vmatprep.subr.bf16.mxu0 %v3563
    %4056 = vmatpush1.bf16.msra.mxu0 %v3562
    %4057 = vmatprep.subr.bf16.mxu0 %v3572
    %4058 = vmatpush1.bf16.msra.mxu0 %v3571
    %4059 = vmatprep.subr.bf16.mxu0 %v3581
    %4060 = vmatpush1.bf16.msra.mxu0 %v3580
    %4061 = vmatprep.subr.bf16.mxu0 %v3590
    %4062 = vmatpush1.bf16.msra.mxu0 %v3589
    %4063 = vmatprep.subr.bf16.mxu0 %v3599
    %4064 = vmatpush1.bf16.msra.mxu0 %v3598
    %4065 = vmatprep.subr.bf16.mxu0 0
    %4066 = vmatpush1.bf16.msra.mxu0 0
    %4067 = vmatprep.subr.bf16.mxu0 0
    %4068 = vmatpush1.bf16.msra.mxu0 0
    %4069 = vmatprep.subr.bf16.mxu0 0
    %4070 = vmatpush1.bf16.msra.mxu0 0
    %4071 = vmatprep.subr.bf16.mxu0 0
    %4072 = vmatpush1.bf16.msra.mxu0 0
    %4073 = vmatprep.subr.bf16.mxu0 0
    %4074 = vmatpush1.bf16.msra.mxu0 0
    %4075 = vmatprep.subr.bf16.mxu0 0
    %4076 = vmatpush1.bf16.msra.mxu0 0
    %4077 = vmatprep.subr.bf16.mxu0 0
    %4078 = vmatpush1.bf16.msra.mxu0 0
    %4079 = vmatprep.subr.bf16.mxu0 0
    %4080 = vmatpush1.bf16.msra.mxu0 0
    %4081 = vmatprep.mubr.bf16.mxu0 0
    %4082 = vmatmul.mubr.bf16.gmra.mrb[0].mxu0 %v1677
    %v4083 = vpop.f32.mrb[0].mxu0
    %v4084 = vadd.f32 %v4043, %v4083
    %v4085 = vpop.f32.mrb[0].mxu0
    %v4086 = vadd.f32 %v4045, %v4085
    %v4087 = vpop.f32.mrb[0].mxu0
    %v4088 = vpop.f32.mrb[0].mxu0
    %4089 = vdwg.mxu0
    %4090 = vmatprep.subr.bf16.mxu0 %v3250
    %4091 = vmatpush1.bf16.msra.mxu0 %v3249
    %4092 = vmatprep.subr.bf16.mxu0 %v3259
    %4093 = vmatpush1.bf16.msra.mxu0 %v3258
    %4094 = vmatprep.subr.bf16.mxu0 %v3268
    %4095 = vmatpush1.bf16.msra.mxu0 %v3267
    %4096 = vmatprep.subr.bf16.mxu0 %v3277
    %4097 = vmatpush1.bf16.msra.mxu0 %v3276
    %4098 = vmatprep.subr.bf16.mxu0 %v3286
    %4099 = vmatpush1.bf16.msra.mxu0 %v3285
    %4100 = vmatprep.subr.bf16.mxu0 %v3295
    %4101 = vmatpush1.bf16.msra.mxu0 %v3294
    %4102 = vmatprep.subr.bf16.mxu0 %v3304
    %4103 = vmatpush1.bf16.msra.mxu0 %v3303
    %4104 = vmatprep.subr.bf16.mxu0 %v3313
    %4105 = vmatpush1.bf16.msra.mxu0 %v3312
    %4106 = vmatprep.subr.bf16.mxu0 %v3322
    %4107 = vmatpush1.bf16.msra.mxu0 %v3321
    %4108 = vmatprep.subr.bf16.mxu0 %v3331
    %4109 = vmatpush1.bf16.msra.mxu0 %v3330
    %4110 = vmatprep.subr.bf16.mxu0 %v3340
    %4111 = vmatpush1.bf16.msra.mxu0 %v3339
    %4112 = vmatprep.subr.bf16.mxu0 %v3349
    %4113 = vmatpush1.bf16.msra.mxu0 %v3348
    %4114 = vmatprep.subr.bf16.mxu0 %v3358
    %4115 = vmatpush1.bf16.msra.mxu0 %v3357
    %4116 = vmatprep.subr.bf16.mxu0 %v3367
    %4117 = vmatpush1.bf16.msra.mxu0 %v3366
    %4118 = vmatprep.subr.bf16.mxu0 %v3376
    %4119 = vmatpush1.bf16.msra.mxu0 %v3375
    %4120 = vmatprep.subr.bf16.mxu0 %v3385
    %4121 = vmatpush1.bf16.msra.mxu0 %v3384
    %4122 = vmatprep.mubr.bf16.mxu0 %v1674
    %4123 = vmatmul.mubr.bf16.gmra.mrb[0].mxu0 %v1673
    %v4124 = vpop.f32.mrb[0].mxu0
    %v4125 = vadd.f32 %v2093, %v4124
    %v4126 = vpop.f32.mrb[0].mxu0
    %v4127 = vadd.f32 %v2097, %v4126
    %v4128 = vpop.f32.mrb[0].mxu0
    %v4129 = vpop.f32.mrb[0].mxu0
    %4130 = vdwg.mxu0
    %4131 = vmatprep.subr.bf16.mxu0 %v3394
    %4132 = vmatpush1.bf16.msra.mxu0 %v3393
    %4133 = vmatprep.subr.bf16.mxu0 %v3403
    %4134 = vmatpush1.bf16.msra.mxu0 %v3402
    %4135 = vmatprep.subr.bf16.mxu0 %v3412
    %4136 = vmatpush1.bf16.msra.mxu0 %v3411
    %4137 = vmatprep.subr.bf16.mxu0 %v3421
    %4138 = vmatpush1.bf16.msra.mxu0 %v3420
    %4139 = vmatprep.subr.bf16.mxu0 %v3430
    %4140 = vmatpush1.bf16.msra.mxu0 %v3429
    %4141 = vmatprep.subr.bf16.mxu0 %v3439
    %4142 = vmatpush1.bf16.msra.mxu0 %v3438
    %4143 = vmatprep.subr.bf16.mxu0 %v3448
    %4144 = vmatpush1.bf16.msra.mxu0 %v3447
    %4145 = vmatprep.subr.bf16.mxu0 %v3457
    %4146 = vmatpush1.bf16.msra.mxu0 %v3456
    %4147 = vmatprep.subr.bf16.mxu0 %v3466
    %4148 = vmatpush1.bf16.msra.mxu0 %v3465
    %4149 = vmatprep.subr.bf16.mxu0 %v3475
    %4150 = vmatpush1.bf16.msra.mxu0 %v3474
    %4151 = vmatprep.subr.bf16.mxu0 %v3484
    %4152 = vmatpush1.bf16.msra.mxu0 %v3483
    %4153 = vmatprep.subr.bf16.mxu0 %v3493
    %4154 = vmatpush1.bf16.msra.mxu0 %v3492
    %4155 = vmatprep.subr.bf16.mxu0 %v3502
    %4156 = vmatpush1.bf16.msra.mxu0 %v3501
    %4157 = vmatprep.subr.bf16.mxu0 %v3511
    %4158 = vmatpush1.bf16.msra.mxu0 %v3510
    %4159 = vmatprep.subr.bf16.mxu0 %v3520
    %4160 = vmatpush1.bf16.msra.mxu0 %v3519
    %4161 = vmatprep.subr.bf16.mxu0 %v3529
    %4162 = vmatpush1.bf16.msra.mxu0 %v3528
    %4163 = vmatprep.mubr.bf16.mxu0 %v1676
    %4164 = vmatmul.mubr.bf16.gmra.mrb[0].mxu0 %v1675
    %v4165 = vpop.f32.mrb[0].mxu0
    %v4166 = vadd.f32 %v4125, %v4165
    %v4167 = vpop.f32.mrb[0].mxu0
    %v4168 = vadd.f32 %v4127, %v4167
    %v4169 = vpop.f32.mrb[0].mxu0
    %v4170 = vpop.f32.mrb[0].mxu0
    %4171 = vdwg.mxu0
    %4172 = vmatprep.subr.bf16.mxu0 %v3538
    %4173 = vmatpush1.bf16.msra.mxu0 %v3537
    %4174 = vmatprep.subr.bf16.mxu0 %v3547
    %4175 = vmatpush1.bf16.msra.mxu0 %v3546
    %4176 = vmatprep.subr.bf16.mxu0 %v3556
    %4177 = vmatpush1.bf16.msra.mxu0 %v3555
    %4178 = vmatprep.subr.bf16.mxu0 %v3565
    %4179 = vmatpush1.bf16.msra.mxu0 %v3564
    %4180 = vmatprep.subr.bf16.mxu0 %v3574
    %4181 = vmatpush1.bf16.msra.mxu0 %v3573
    %4182 = vmatprep.subr.bf16.mxu0 %v3583
    %4183 = vmatpush1.bf16.msra.mxu0 %v3582
    %4184 = vmatprep.subr.bf16.mxu0 %v3592
    %4185 = vmatpush1.bf16.msra.mxu0 %v3591
    %4186 = vmatprep.subr.bf16.mxu0 %v3601
    %4187 = vmatpush1.bf16.msra.mxu0 %v3600
    %4188 = vmatprep.subr.bf16.mxu0 0
    %4189 = vmatpush1.bf16.msra.mxu0 0
    %4190 = vmatprep.subr.bf16.mxu0 0
    %4191 = vmatpush1.bf16.msra.mxu0 0
    %4192 = vmatprep.subr.bf16.mxu0 0
    %4193 = vmatpush1.bf16.msra.mxu0 0
    %4194 = vmatprep.subr.bf16.mxu0 0
    %4195 = vmatpush1.bf16.msra.mxu0 0
    %4196 = vmatprep.subr.bf16.mxu0 0
    %4197 = vmatpush1.bf16.msra.mxu0 0
    %4198 = vmatprep.subr.bf16.mxu0 0
    %4199 = vmatpush1.bf16.msra.mxu0 0
    %4200 = vmatprep.subr.bf16.mxu0 0
    %4201 = vmatpush1.bf16.msra.mxu0 0
    %4202 = vmatprep.subr.bf16.mxu0 0
    %4203 = vmatpush1.bf16.msra.mxu0 0
    %4204 = vmatprep.mubr.bf16.mxu0 0
    %4205 = vmatmul.mubr.bf16.gmra.mrb[0].mxu0 %v1677
    %v4206 = vpop.f32.mrb[0].mxu0
    %v4207 = vadd.f32 %v4166, %v4206
    %v4208 = vpop.f32.mrb[0].mxu0
    %v4209 = vadd.f32 %v4168, %v4208
    %v4210 = vpop.f32.mrb[0].mxu0
    %v4211 = vpop.f32.mrb[0].mxu0
    %4212 = vdwg.mxu0
    %4213 = vmatprep.subr.bf16.mxu0 %v3252
    %4214 = vmatpush1.bf16.msra.mxu0 %v3251
    %4215 = vmatprep.subr.bf16.mxu0 %v3261
    %4216 = vmatpush1.bf16.msra.mxu0 %v3260
    %4217 = vmatprep.subr.bf16.mxu0 %v3270
    %4218 = vmatpush1.bf16.msra.mxu0 %v3269
    %4219 = vmatprep.subr.bf16.mxu0 %v3279
    %4220 = vmatpush1.bf16.msra.mxu0 %v3278
    %4221 = vmatprep.subr.bf16.mxu0 %v3288
    %4222 = vmatpush1.bf16.msra.mxu0 %v3287
    %4223 = vmatprep.subr.bf16.mxu0 %v3297
    %4224 = vmatpush1.bf16.msra.mxu0 %v3296
    %4225 = vmatprep.subr.bf16.mxu0 %v3306
    %4226 = vmatpush1.bf16.msra.mxu0 %v3305
    %4227 = vmatprep.subr.bf16.mxu0 %v3315
    %4228 = vmatpush1.bf16.msra.mxu0 %v3314
    %4229 = vmatprep.subr.bf16.mxu0 %v3324
    %4230 = vmatpush1.bf16.msra.mxu0 %v3323
    %4231 = vmatprep.subr.bf16.mxu0 %v3333
    %4232 = vmatpush1.bf16.msra.mxu0 %v3332
    %4233 = vmatprep.subr.bf16.mxu0 %v3342
    %4234 = vmatpush1.bf16.msra.mxu0 %v3341
    %4235 = vmatprep.subr.bf16.mxu0 %v3351
    %4236 = vmatpush1.bf16.msra.mxu0 %v3350
    %4237 = vmatprep.subr.bf16.mxu0 %v3360
    %4238 = vmatpush1.bf16.msra.mxu0 %v3359
    %4239 = vmatprep.subr.bf16.mxu0 %v3369
    %4240 = vmatpush1.bf16.msra.mxu0 %v3368
    %4241 = vmatprep.subr.bf16.mxu0 %v3378
    %4242 = vmatpush1.bf16.msra.mxu0 %v3377
    %4243 = vmatprep.subr.bf16.mxu0 %v3387
    %4244 = vmatpush1.bf16.msra.mxu0 %v3386
    %4245 = vmatprep.mubr.bf16.mxu0 %v1674
    %4246 = vmatmul.mubr.bf16.gmra.mrb[0].mxu0 %v1673
    %v4247 = vpop.f32.mrb[0].mxu0
    %v4248 = vadd.f32 %v2101, %v4247
    %v4249 = vpop.f32.mrb[0].mxu0
    %v4250 = vadd.f32 %v2105, %v4249
    %v4251 = vpop.f32.mrb[0].mxu0
    %v4252 = vpop.f32.mrb[0].mxu0
    %4253 = vdwg.mxu0
    %4254 = vmatprep.subr.bf16.mxu0 %v3396
    %4255 = vmatpush1.bf16.msra.mxu0 %v3395
    %4256 = vmatprep.subr.bf16.mxu0 %v3405
    %4257 = vmatpush1.bf16.msra.mxu0 %v3404
    %4258 = vmatprep.subr.bf16.mxu0 %v3414
    %4259 = vmatpush1.bf16.msra.mxu0 %v3413
    %4260 = vmatprep.subr.bf16.mxu0 %v3423
    %4261 = vmatpush1.bf16.msra.mxu0 %v3422
    %4262 = vmatprep.subr.bf16.mxu0 %v3432
    %4263 = vmatpush1.bf16.msra.mxu0 %v3431
    %4264 = vmatprep.subr.bf16.mxu0 %v3441
    %4265 = vmatpush1.bf16.msra.mxu0 %v3440
    %4266 = vmatprep.subr.bf16.mxu0 %v3450
    %4267 = vmatpush1.bf16.msra.mxu0 %v3449
    %4268 = vmatprep.subr.bf16.mxu0 %v3459
    %4269 = vmatpush1.bf16.msra.mxu0 %v3458
    %4270 = vmatprep.subr.bf16.mxu0 %v3468
    %4271 = vmatpush1.bf16.msra.mxu0 %v3467
    %4272 = vmatprep.subr.bf16.mxu0 %v3477
    %4273 = vmatpush1.bf16.msra.mxu0 %v3476
    %4274 = vmatprep.subr.bf16.mxu0 %v3486
    %4275 = vmatpush1.bf16.msra.mxu0 %v3485
    %4276 = vmatprep.subr.bf16.mxu0 %v3495
    %4277 = vmatpush1.bf16.msra.mxu0 %v3494
    %4278 = vmatprep.subr.bf16.mxu0 %v3504
    %4279 = vmatpush1.bf16.msra.mxu0 %v3503
    %4280 = vmatprep.subr.bf16.mxu0 %v3513
    %4281 = vmatpush1.bf16.msra.mxu0 %v3512
    %4282 = vmatprep.subr.bf16.mxu0 %v3522
    %4283 = vmatpush1.bf16.msra.mxu0 %v3521
    %4284 = vmatprep.subr.bf16.mxu0 %v3531
    %4285 = vmatpush1.bf16.msra.mxu0 %v3530
    %4286 = vmatprep.mubr.bf16.mxu0 %v1676
    %4287 = vmatmul.mubr.bf16.gmra.mrb[0].mxu0 %v1675
    %v4288 = vpop.f32.mrb[0].mxu0
    %v4289 = vadd.f32 %v4248, %v4288
    %v4290 = vpop.f32.mrb[0].mxu0
    %v4291 = vadd.f32 %v4250, %v4290
    %v4292 = vpop.f32.mrb[0].mxu0
    %v4293 = vpop.f32.mrb[0].mxu0
    %4294 = vdwg.mxu0
    %4295 = vmatprep.subr.bf16.mxu0 %v3540
    %4296 = vmatpush1.bf16.msra.mxu0 %v3539
    %4297 = vmatprep.subr.bf16.mxu0 %v3549
    %4298 = vmatpush1.bf16.msra.mxu0 %v3548
    %4299 = vmatprep.subr.bf16.mxu0 %v3558
    %4300 = vmatpush1.bf16.msra.mxu0 %v3557
    %4301 = vmatprep.subr.bf16.mxu0 %v3567
    %4302 = vmatpush1.bf16.msra.mxu0 %v3566
    %4303 = vmatprep.subr.bf16.mxu0 %v3576
    %4304 = vmatpush1.bf16.msra.mxu0 %v3575
    %4305 = vmatprep.subr.bf16.mxu0 %v3585
    %4306 = vmatpush1.bf16.msra.mxu0 %v3584
    %4307 = vmatprep.subr.bf16.mxu0 %v3594
    %4308 = vmatpush1.bf16.msra.mxu0 %v3593
    %4309 = vmatprep.subr.bf16.mxu0 %v3603
    %4310 = vmatpush1.bf16.msra.mxu0 %v3602
    %4311 = vmatprep.subr.bf16.mxu0 0
    %4312 = vmatpush1.bf16.msra.mxu0 0
    %4313 = vmatprep.subr.bf16.mxu0 0
    %4314 = vmatpush1.bf16.msra.mxu0 0
    %4315 = vmatprep.subr.bf16.mxu0 0
    %4316 = vmatpush1.bf16.msra.mxu0 0
    %4317 = vmatprep.subr.bf16.mxu0 0
    %4318 = vmatpush1.bf16.msra.mxu0 0
    %4319 = vmatprep.subr.bf16.mxu0 0
    %4320 = vmatpush1.bf16.msra.mxu0 0
    %4321 = vmatprep.subr.bf16.mxu0 0
    %4322 = vmatpush1.bf16.msra.mxu0 0
    %4323 = vmatprep.subr.bf16.mxu0 0
    %4324 = vmatpush1.bf16.msra.mxu0 0
    %4325 = vmatprep.subr.bf16.mxu0 0
    %4326 = vmatpush1.bf16.msra.mxu0 0
    %4327 = vmatprep.mubr.bf16.mxu0 0
    %4328 = vmatmul.mubr.bf16.gmra.mrb[0].mxu0 %v1677
    %v4329 = vpop.f32.mrb[0].mxu0
    %v4330 = vadd.f32 %v4289, %v4329
    %v4331 = vpop.f32.mrb[0].mxu0
    %v4332 = vadd.f32 %v4291, %v4331
    %v4333 = vpop.f32.mrb[0].mxu0
    %v4334 = vpop.f32.mrb[0].mxu0
    %4335 = vdwg.mxu0
    %4336 = vmatprep.subr.bf16.mxu0 %v3254
    %4337 = vmatpush1.bf16.msra.mxu0 %v3253
    %4338 = vmatprep.subr.bf16.mxu0 %v3263
    %4339 = vmatpush1.bf16.msra.mxu0 %v3262
    %4340 = vmatprep.subr.bf16.mxu0 %v3272
    %4341 = vmatpush1.bf16.msra.mxu0 %v3271
    %4342 = vmatprep.subr.bf16.mxu0 %v3281
    %4343 = vmatpush1.bf16.msra.mxu0 %v3280
    %4344 = vmatprep.subr.bf16.mxu0 %v3290
    %4345 = vmatpush1.bf16.msra.mxu0 %v3289
    %4346 = vmatprep.subr.bf16.mxu0 %v3299
    %4347 = vmatpush1.bf16.msra.mxu0 %v3298
    %4348 = vmatprep.subr.bf16.mxu0 %v3308
    %4349 = vmatpush1.bf16.msra.mxu0 %v3307
    %4350 = vmatprep.subr.bf16.mxu0 %v3317
    %4351 = vmatpush1.bf16.msra.mxu0 %v3316
    %4352 = vmatprep.subr.bf16.mxu0 %v3326
    %4353 = vmatpush1.bf16.msra.mxu0 %v3325
    %4354 = vmatprep.subr.bf16.mxu0 %v3335
    %4355 = vmatpush1.bf16.msra.mxu0 %v3334
    %4356 = vmatprep.subr.bf16.mxu0 %v3344
    %4357 = vmatpush1.bf16.msra.mxu0 %v3343
    %4358 = vmatprep.subr.bf16.mxu0 %v3353
    %4359 = vmatpush1.bf16.msra.mxu0 %v3352
    %4360 = vmatprep.subr.bf16.mxu0 %v3362
    %4361 = vmatpush1.bf16.msra.mxu0 %v3361
    %4362 = vmatprep.subr.bf16.mxu0 %v3371
    %4363 = vmatpush1.bf16.msra.mxu0 %v3370
    %4364 = vmatprep.subr.bf16.mxu0 %v3380
    %4365 = vmatpush1.bf16.msra.mxu0 %v3379
    %4366 = vmatprep.subr.bf16.mxu0 %v3389
    %4367 = vmatpush1.bf16.msra.mxu0 %v3388
    %4368 = vmatprep.mubr.bf16.mxu0 %v1674
    %4369 = vmatmul.mubr.bf16.gmra.mrb[0].mxu0 %v1673
    %v4370 = vpop.f32.mrb[0].mxu0
    %v4371 = vadd.f32 %v2109, %v4370
    %v4372 = vpop.f32.mrb[0].mxu0
    %v4373 = vadd.f32 %v2113, %v4372
    %v4374 = vpop.f32.mrb[0].mxu0
    %v4375 = vpop.f32.mrb[0].mxu0
    %4376 = vdwg.mxu0
    %4377 = vmatprep.subr.bf16.mxu0 %v3398
    %4378 = vmatpush1.bf16.msra.mxu0 %v3397
    %4379 = vmatprep.subr.bf16.mxu0 %v3407
    %4380 = vmatpush1.bf16.msra.mxu0 %v3406
    %4381 = vmatprep.subr.bf16.mxu0 %v3416
    %4382 = vmatpush1.bf16.msra.mxu0 %v3415
    %4383 = vmatprep.subr.bf16.mxu0 %v3425
    %4384 = vmatpush1.bf16.msra.mxu0 %v3424
    %4385 = vmatprep.subr.bf16.mxu0 %v3434
    %4386 = vmatpush1.bf16.msra.mxu0 %v3433
    %4387 = vmatprep.subr.bf16.mxu0 %v3443
    %4388 = vmatpush1.bf16.msra.mxu0 %v3442
    %4389 = vmatprep.subr.bf16.mxu0 %v3452
    %4390 = vmatpush1.bf16.msra.mxu0 %v3451
    %4391 = vmatprep.subr.bf16.mxu0 %v3461
    %4392 = vmatpush1.bf16.msra.mxu0 %v3460
    %4393 = vmatprep.subr.bf16.mxu0 %v3470
    %4394 = vmatpush1.bf16.msra.mxu0 %v3469
    %4395 = vmatprep.subr.bf16.mxu0 %v3479
    %4396 = vmatpush1.bf16.msra.mxu0 %v3478
    %4397 = vmatprep.subr.bf16.mxu0 %v3488
    %4398 = vmatpush1.bf16.msra.mxu0 %v3487
    %4399 = vmatprep.subr.bf16.mxu0 %v3497
    %4400 = vmatpush1.bf16.msra.mxu0 %v3496
    %4401 = vmatprep.subr.bf16.mxu0 %v3506
    %4402 = vmatpush1.bf16.msra.mxu0 %v3505
    %4403 = vmatprep.subr.bf16.mxu0 %v3515
    %4404 = vmatpush1.bf16.msra.mxu0 %v3514
    %4405 = vmatprep.subr.bf16.mxu0 %v3524
    %4406 = vmatpush1.bf16.msra.mxu0 %v3523
    %4407 = vmatprep.subr.bf16.mxu0 %v3533
    %4408 = vmatpush1.bf16.msra.mxu0 %v3532
    %4409 = vmatprep.mubr.bf16.mxu0 %v1676
    %4410 = vmatmul.mubr.bf16.gmra.mrb[0].mxu0 %v1675
    %v4411 = vpop.f32.mrb[0].mxu0
    %v4412 = vadd.f32 %v4371, %v4411
    %v4413 = vpop.f32.mrb[0].mxu0
    %v4414 = vadd.f32 %v4373, %v4413
    %v4415 = vpop.f32.mrb[0].mxu0
    %v4416 = vpop.f32.mrb[0].mxu0
    %4417 = vdwg.mxu0
    %4418 = vmatprep.subr.bf16.mxu0 %v3542
    %4419 = vmatpush1.bf16.msra.mxu0 %v3541
    %4420 = vmatprep.subr.bf16.mxu0 %v3551
    %4421 = vmatpush1.bf16.msra.mxu0 %v3550
    %4422 = vmatprep.subr.bf16.mxu0 %v3560
    %4423 = vmatpush1.bf16.msra.mxu0 %v3559
    %4424 = vmatprep.subr.bf16.mxu0 %v3569
    %4425 = vmatpush1.bf16.msra.mxu0 %v3568
    %4426 = vmatprep.subr.bf16.mxu0 %v3578
    %4427 = vmatpush1.bf16.msra.mxu0 %v3577
    %4428 = vmatprep.subr.bf16.mxu0 %v3587
    %4429 = vmatpush1.bf16.msra.mxu0 %v3586
    %4430 = vmatprep.subr.bf16.mxu0 %v3596
    %4431 = vmatpush1.bf16.msra.mxu0 %v3595
    %4432 = vmatprep.subr.bf16.mxu0 %v3605
    %4433 = vmatpush1.bf16.msra.mxu0 %v3604
    %4434 = vmatprep.subr.bf16.mxu0 0
    %4435 = vmatpush1.bf16.msra.mxu0 0
    %4436 = vmatprep.subr.bf16.mxu0 0
    %4437 = vmatpush1.bf16.msra.mxu0 0
    %4438 = vmatprep.subr.bf16.mxu0 0
    %4439 = vmatpush1.bf16.msra.mxu0 0
    %4440 = vmatprep.subr.bf16.mxu0 0
    %4441 = vmatpush1.bf16.msra.mxu0 0
    %4442 = vmatprep.subr.bf16.mxu0 0
    %4443 = vmatpush1.bf16.msra.mxu0 0
    %4444 = vmatprep.subr.bf16.mxu0 0
    %4445 = vmatpush1.bf16.msra.mxu0 0
    %4446 = vmatprep.subr.bf16.mxu0 0
    %4447 = vmatpush1.bf16.msra.mxu0 0
    %4448 = vmatprep.subr.bf16.mxu0 0
    %4449 = vmatpush1.bf16.msra.mxu0 0
    %4450 = vmatprep.mubr.bf16.mxu0 0
    %4451 = vmatmul.mubr.bf16.gmra.mrb[0].mxu0 %v1677
    %v4452 = vpop.f32.mrb[0].mxu0
    %v4453 = vadd.f32 %v4412, %v4452
    %v4454 = vpop.f32.mrb[0].mxu0
    %v4455 = vadd.f32 %v4414, %v4454
    %v4456 = vpop.f32.mrb[0].mxu0
    %v4457 = vpop.f32.mrb[0].mxu0
    %4458 = vdwg.mxu0
    %4459 = vmatprep.subr.bf16.mxu0 0
    %4460 = vmatpush1.bf16.msra.mxu0 %v3255
    %4461 = vmatprep.subr.bf16.mxu0 0
    %4462 = vmatpush1.bf16.msra.mxu0 %v3264
    %4463 = vmatprep.subr.bf16.mxu0 0
    %4464 = vmatpush1.bf16.msra.mxu0 %v3273
    %4465 = vmatprep.subr.bf16.mxu0 0
    %4466 = vmatpush1.bf16.msra.mxu0 %v3282
    %4467 = vmatprep.subr.bf16.mxu0 0
    %4468 = vmatpush1.bf16.msra.mxu0 %v3291
    %4469 = vmatprep.subr.bf16.mxu0 0
    %4470 = vmatpush1.bf16.msra.mxu0 %v3300
    %4471 = vmatprep.subr.bf16.mxu0 0
    %4472 = vmatpush1.bf16.msra.mxu0 %v3309
    %4473 = vmatprep.subr.bf16.mxu0 0
    %4474 = vmatpush1.bf16.msra.mxu0 %v3318
    %4475 = vmatprep.subr.bf16.mxu0 0
    %4476 = vmatpush1.bf16.msra.mxu0 %v3327
    %4477 = vmatprep.subr.bf16.mxu0 0
    %4478 = vmatpush1.bf16.msra.mxu0 %v3336
    %4479 = vmatprep.subr.bf16.mxu0 0
    %4480 = vmatpush1.bf16.msra.mxu0 %v3345
    %4481 = vmatprep.subr.bf16.mxu0 0
    %4482 = vmatpush1.bf16.msra.mxu0 %v3354
    %4483 = vmatprep.subr.bf16.mxu0 0
    %4484 = vmatpush1.bf16.msra.mxu0 %v3363
    %4485 = vmatprep.subr.bf16.mxu0 0
    %4486 = vmatpush1.bf16.msra.mxu0 %v3372
    %4487 = vmatprep.subr.bf16.mxu0 0
    %4488 = vmatpush1.bf16.msra.mxu0 %v3381
    %4489 = vmatprep.subr.bf16.mxu0 0
    %4490 = vmatpush1.bf16.msra.mxu0 %v3390
    %4491 = vmatprep.mubr.bf16.mxu0 %v1674
    %4492 = vmatmul.mubr.bf16.gmra.mrb[0].mxu0 %v1673
    %v4493 = vpop.f32.mrb[0].mxu0
    %v4494 = vadd.f32 %v2117, %v4493
    %v4495 = vpop.f32.mrb[0].mxu0
    %v4496 = vpop.f32.mrb[0].mxu0
    %v4497 = vpop.f32.mrb[0].mxu0
    %4498 = vdwg.mxu0
    %4499 = vmatprep.subr.bf16.mxu0 0
    %4500 = vmatpush1.bf16.msra.mxu0 %v3399
    %4501 = vmatprep.subr.bf16.mxu0 0
    %4502 = vmatpush1.bf16.msra.mxu0 %v3408
    %4503 = vmatprep.subr.bf16.mxu0 0
    %4504 = vmatpush1.bf16.msra.mxu0 %v3417
    %4505 = vmatprep.subr.bf16.mxu0 0
    %4506 = vmatpush1.bf16.msra.mxu0 %v3426
    %4507 = vmatprep.subr.bf16.mxu0 0
    %4508 = vmatpush1.bf16.msra.mxu0 %v3435
    %4509 = vmatprep.subr.bf16.mxu0 0
    %4510 = vmatpush1.bf16.msra.mxu0 %v3444
    %4511 = vmatprep.subr.bf16.mxu0 0
    %4512 = vmatpush1.bf16.msra.mxu0 %v3453
    %4513 = vmatprep.subr.bf16.mxu0 0
    %4514 = vmatpush1.bf16.msra.mxu0 %v3462
    %4515 = vmatprep.subr.bf16.mxu0 0
    %4516 = vmatpush1.bf16.msra.mxu0 %v3471
    %4517 = vmatprep.subr.bf16.mxu0 0
    %4518 = vmatpush1.bf16.msra.mxu0 %v3480
    %4519 = vmatprep.subr.bf16.mxu0 0
    %4520 = vmatpush1.bf16.msra.mxu0 %v3489
    %4521 = vmatprep.subr.bf16.mxu0 0
    %4522 = vmatpush1.bf16.msra.mxu0 %v3498
    %4523 = vmatprep.subr.bf16.mxu0 0
    %4524 = vmatpush1.bf16.msra.mxu0 %v3507
    %4525 = vmatprep.subr.bf16.mxu0 0
    %4526 = vmatpush1.bf16.msra.mxu0 %v3516
    %4527 = vmatprep.subr.bf16.mxu0 0
    %4528 = vmatpush1.bf16.msra.mxu0 %v3525
    %4529 = vmatprep.subr.bf16.mxu0 0
    %4530 = vmatpush1.bf16.msra.mxu0 %v3534
    %4531 = vmatprep.mubr.bf16.mxu0 %v1676
    %4532 = vmatmul.mubr.bf16.gmra.mrb[0].mxu0 %v1675
    %v4533 = vpop.f32.mrb[0].mxu0
    %v4534 = vadd.f32 %v4494, %v4533
    %v4535 = vpop.f32.mrb[0].mxu0
    %v4536 = vpop.f32.mrb[0].mxu0
    %v4537 = vpop.f32.mrb[0].mxu0
    %4538 = vdwg.mxu0
    %4539 = vmatprep.subr.bf16.mxu0 0
    %4540 = vmatpush1.bf16.msra.mxu0 %v3543
    %4541 = vmatprep.subr.bf16.mxu0 0
    %4542 = vmatpush1.bf16.msra.mxu0 %v3552
    %4543 = vmatprep.subr.bf16.mxu0 0
    %4544 = vmatpush1.bf16.msra.mxu0 %v3561
    %4545 = vmatprep.subr.bf16.mxu0 0
    %4546 = vmatpush1.bf16.msra.mxu0 %v3570
    %4547 = vmatprep.subr.bf16.mxu0 0
    %4548 = vmatpush1.bf16.msra.mxu0 %v3579
    %4549 = vmatprep.subr.bf16.mxu0 0
    %4550 = vmatpush1.bf16.msra.mxu0 %v3588
    %4551 = vmatprep.subr.bf16.mxu0 0
    %4552 = vmatpush1.bf16.msra.mxu0 %v3597
    %4553 = vmatprep.subr.bf16.mxu0 0
    %4554 = vmatpush1.bf16.msra.mxu0 %v3606
    %4555 = vmatprep.subr.bf16.mxu0 0
    %4556 = vmatpush1.bf16.msra.mxu0 0
    %4557 = vmatprep.subr.bf16.mxu0 0
    %4558 = vmatpush1.bf16.msra.mxu0 0
    %4559 = vmatprep.subr.bf16.mxu0 0
    %4560 = vmatpush1.bf16.msra.mxu0 0
    %4561 = vmatprep.subr.bf16.mxu0 0
    %4562 = vmatpush1.bf16.msra.mxu0 0
    %4563 = vmatprep.subr.bf16.mxu0 0
    %4564 = vmatpush1.bf16.msra.mxu0 0
    %4565 = vmatprep.subr.bf16.mxu0 0
    %4566 = vmatpush1.bf16.msra.mxu0 0
    %4567 = vmatprep.subr.bf16.mxu0 0
    %4568 = vmatpush1.bf16.msra.mxu0 0
    %4569 = vmatprep.subr.bf16.mxu0 0
    %4570 = vmatpush1.bf16.msra.mxu0 0
    %4571 = vmatprep.mubr.bf16.mxu0 0
    %4572 = vmatmul.mubr.bf16.gmra.mrb[0].mxu0 %v1677
    %v4573 = vpop.f32.mrb[0].mxu0
    %v4574 = vadd.f32 %v4534, %v4573
    %v4575 = vpop.f32.mrb[0].mxu0
    %v4576 = vpop.f32.mrb[0].mxu0
    %v4577 = vpop.f32.mrb[0].mxu0
    %4578 = vdwg.mxu0
    %vm4579 = vcmp.ge.f32.partialorder %v4084, 0.0
    %vm4580 = vcmp.ge.f32.partialorder %v4086, 0.0
    %vm4581 = vcmp.ge.f32.partialorder %v4207, 0.0
    %vm4582 = vcmp.ge.f32.partialorder %v4209, 0.0
    %vm4583 = vcmp.ge.f32.partialorder %v4330, 0.0
    %vm4584 = vcmp.ge.f32.partialorder %v4332, 0.0
    %vm4585 = vcmp.ge.f32.partialorder %v4453, 0.0
    %vm4586 = vcmp.ge.f32.partialorder %v4455, 0.0
    %vm4587 = vcmp.ge.f32.partialorder %v4574, 0.0
    %v4588 = vmul.f32 %v4084, 0.02
    %v4589 = vmul.f32 %v4086, 0.02
    %v4590 = vmul.f32 %v4207, 0.02
    %v4591 = vmul.f32 %v4209, 0.02
    %v4592 = vmul.f32 %v4330, 0.02
    %v4593 = vmul.f32 %v4332, 0.02
    %v4594 = vmul.f32 %v4453, 0.02
    %v4595 = vmul.f32 %v4455, 0.02
    %v4596 = vmul.f32 %v4574, 0.02
    %v4597 = vsel %vm4579, %v4084, %v4588
    %v4598 = vsel %vm4580, %v4086, %v4589
    %v4599 = vsel %vm4581, %v4207, %v4590
    %v4600 = vsel %vm4582, %v4209, %v4591
    %v4601 = vsel %vm4583, %v4330, %v4592
    %v4602 = vsel %vm4584, %v4332, %v4593
    %v4603 = vsel %vm4585, %v4453, %v4594
    %v4604 = vsel %vm4586, %v4455, %v4595
    %v4605 = vsel %vm4587, %v4574, %v4596
    %v4606 = vpack.c.bf16 %v4597, %v4597
    %v4607 = vpack.c.bf16 %v4598, %v4598
    %v4608 = vpack.c.bf16 %v4599, %v4599
    %v4609 = vpack.c.bf16 %v4600, %v4600
    %v4610 = vpack.c.bf16 %v4601, %v4601
    %v4611 = vpack.c.bf16 %v4602, %v4602
    %v4612 = vpack.c.bf16 %v4603, %v4603
    %v4613 = vpack.c.bf16 %v4604, %v4604
    %v4614 = vpack.c.bf16 %v4605, %v4605
    %v4615 = vld [vmem:[#allocation11] sm:$0xf]
    %v4616 = vld [vmem:[#allocation11 + $0x4] sm:$0xf]
    %v4617 = vld [vmem:[#allocation11 + $0x8] sm:$0xf]
    %v4618 = vld [vmem:[#allocation11 + $0xc] sm:$0xf]
    %v4619 = vld [vmem:[#allocation11 + $0x10] sm:$0xf]
    %v4620 = vld [vmem:[#allocation11 + $0x14] sm:$0xf]
    %v4621 = vld [vmem:[#allocation11 + $0x18] sm:$0xf]
    %v4622 = vld [vmem:[#allocation11 + $0x1c] sm:$0xf]
    %v4623 = vld [vmem:[#allocation11 + $0x20] sm:$0xf]
    %v4624 = vld [vmem:[#allocation11 + $0x24] sm:$0xf]
    %v4625 = vld [vmem:[#allocation11 + $0x28] sm:$0xf]
    %v4626 = vld [vmem:[#allocation11 + $0x2c] sm:$0xf]
    %v4627 = vld [vmem:[#allocation11 + $0x30] sm:$0xf]
    %v4628 = vld [vmem:[#allocation11 + $0x34] sm:$0xf]
    %v4629 = vld [vmem:[#allocation11 + $0x38] sm:$0xf]
    %v4630 = vld [vmem:[#allocation11 + $0x3c] sm:$0xf]
    %v4631 = vld [vmem:[#allocation11 + $0x40] sm:$0xf]
    %v4632 = vld [vmem:[#allocation11 + $0x44] sm:$0xf]
    %v4633 = vld [vmem:[#allocation11 + $0x48] sm:$0xf]
    %v4634 = vld [vmem:[#allocation11 + $0x4c] sm:$0xf]
    %v4635 = vld [vmem:[#allocation11 + $0x50] sm:$0xf]
    %v4636 = vld [vmem:[#allocation11 + $0x54] sm:$0xf]
    %v4637 = vld [vmem:[#allocation11 + $0x58] sm:$0xf]
    %v4638 = vld [vmem:[#allocation11 + $0x5c] sm:$0xf]
    %v4639 = vld [vmem:[#allocation11 + $0x60] sm:$0xf]
    %v4640 = vld [vmem:[#allocation11 + $0x64] sm:$0xf]
    %v4641 = vld [vmem:[#allocation11 + $0x68] sm:$0xf]
    %v4642 = vld [vmem:[#allocation11 + $0x6c] sm:$0xf]
    %v4643 = vld [vmem:[#allocation11 + $0x70] sm:$0xf]
    %v4644 = vld [vmem:[#allocation11 + $0x74] sm:$0xf]
    %v4645 = vld [vmem:[#allocation11 + $0x78] sm:$0xf]
    %v4646 = vld [vmem:[#allocation11 + $0x7c] sm:$0xf]
    %v4647 = vld [vmem:[#allocation11 + $0x80] sm:$0xf]
    %v4648 = vld [vmem:[#allocation11 + $0x84] sm:$0xf]
    %v4649 = vld [vmem:[#allocation11 + $0x88] sm:$0xf]
    %v4650 = vld [vmem:[#allocation11 + $0x8c] sm:$0xf]
    %v4651 = vld [vmem:[#allocation11 + $0x90] sm:$0xf]
    %v4652 = vld [vmem:[#allocation11 + $0x94] sm:$0xf]
    %v4653 = vld [vmem:[#allocation11 + $0x98] sm:$0xf]
    %v4654 = vld [vmem:[#allocation11 + $0x9c] sm:$0xf]
    %v4655 = vld [vmem:[#allocation11 + $0xa0] sm:$0xf]
    %v4656 = vld [vmem:[#allocation11 + $0xa4] sm:$0xf]
    %v4657 = vld [vmem:[#allocation11 + $0xa8] sm:$0xf]
    %v4658 = vld [vmem:[#allocation11 + $0xac] sm:$0xf]
    %v4659 = vld [vmem:[#allocation11 + $0xb0] sm:$0xf]
    %v4660 = vld [vmem:[#allocation11 + $0xb4] sm:$0xf]
    %v4661 = vld [vmem:[#allocation11 + $0xb8] sm:$0xf]
    %v4662 = vld [vmem:[#allocation11 + $0xbc] sm:$0xf]
    %v4663 = vld [vmem:[#allocation11 + $0xc0] sm:$0xf]
    %v4664 = vld [vmem:[#allocation11 + $0xc4] sm:$0xf]
    %v4665 = vld [vmem:[#allocation11 + $0xc8] sm:$0xf]
    %v4666 = vld [vmem:[#allocation11 + $0xcc] sm:$0xf]
    %v4667 = vld [vmem:[#allocation11 + $0xd0] sm:$0xf]
    %v4668 = vld [vmem:[#allocation11 + $0xd4] sm:$0xf]
    %v4669 = vld [vmem:[#allocation11 + $0xd8] sm:$0xf]
    %v4670 = vld [vmem:[#allocation11 + $0xdc] sm:$0xf]
    %v4671 = vld [vmem:[#allocation11 + $0xe0] sm:$0xf]
    %v4672 = vld [vmem:[#allocation11 + $0xe4] sm:$0xf]
    %v4673 = vld [vmem:[#allocation11 + $0xe8] sm:$0xf]
    %v4674 = vld [vmem:[#allocation11 + $0xec] sm:$0xf]
    %v4675 = vld [vmem:[#allocation11 + $0xf0] sm:$0xf]
    %v4676 = vld [vmem:[#allocation11 + $0xf4] sm:$0xf]
    %v4677 = vld [vmem:[#allocation11 + $0xf8] sm:$0xf]
    %v4678 = vld [vmem:[#allocation11 + $0xfc] sm:$0xf]
    %v4679 = vld [vmem:[#allocation11 + $0x100] sm:$0xf]
    %v4680 = vld [vmem:[#allocation11 + $0x104] sm:$0xf]
    %v4681 = vld [vmem:[#allocation11 + $0x108] sm:$0xf]
    %v4682 = vld [vmem:[#allocation11 + $0x10c] sm:$0xf]
    %v4683 = vld [vmem:[#allocation11 + $0x110] sm:$0xf]
    %v4684 = vld [vmem:[#allocation11 + $0x114] sm:$0xf]
    %v4685 = vld [vmem:[#allocation11 + $0x118] sm:$0xf]
    %v4686 = vld [vmem:[#allocation11 + $0x11c] sm:$0xf]
    %v4687 = vld [vmem:[#allocation11 + $0x120] sm:$0xf]
    %v4688 = vld [vmem:[#allocation11 + $0x124] sm:$0xf]
    %v4689 = vld [vmem:[#allocation11 + $0x128] sm:$0xf]
    %v4690 = vld [vmem:[#allocation11 + $0x12c] sm:$0xf]
    %v4691 = vld [vmem:[#allocation11 + $0x130] sm:$0xf]
    %v4692 = vld [vmem:[#allocation11 + $0x134] sm:$0xf]
    %v4693 = vld [vmem:[#allocation11 + $0x138] sm:$0xf]
    %v4694 = vld [vmem:[#allocation11 + $0x13c] sm:$0xf]
    %v4695 = vld [vmem:[#allocation11 + $0x140] sm:$0xf]
    %v4696 = vld [vmem:[#allocation11 + $0x144] sm:$0xf]
    %v4697 = vld [vmem:[#allocation11 + $0x148] sm:$0xf]
    %v4698 = vld [vmem:[#allocation11 + $0x14c] sm:$0xf]
    %v4699 = vld [vmem:[#allocation11 + $0x150] sm:$0xf]
    %v4700 = vld [vmem:[#allocation11 + $0x154] sm:$0xf]
    %v4701 = vld [vmem:[#allocation11 + $0x158] sm:$0xf]
    %v4702 = vld [vmem:[#allocation11 + $0x15c] sm:$0xf]
    %v4703 = vld [vmem:[#allocation11 + $0x160] sm:$0xf]
    %v4704 = vld [vmem:[#allocation11 + $0x164] sm:$0xf]
    %v4705 = vld [vmem:[#allocation11 + $0x168] sm:$0xf]
    %v4706 = vld [vmem:[#allocation11 + $0x16c] sm:$0xf]
    %v4707 = vld [vmem:[#allocation11 + $0x170] sm:$0xf]
    %v4708 = vld [vmem:[#allocation11 + $0x174] sm:$0xf]
    %v4709 = vld [vmem:[#allocation11 + $0x178] sm:$0xf]
    %v4710 = vld [vmem:[#allocation11 + $0x17c] sm:$0xf]
    %v4711 = vld [vmem:[#allocation11 + $0x180] sm:$0xf]
    %v4712 = vld [vmem:[#allocation11 + $0x184] sm:$0xf]
    %v4713 = vld [vmem:[#allocation11 + $0x188] sm:$0xf]
    %v4714 = vld [vmem:[#allocation11 + $0x18c] sm:$0xf]
    %v4715 = vld [vmem:[#allocation11 + $0x190] sm:$0xf]
    %v4716 = vld [vmem:[#allocation11 + $0x194] sm:$0xf]
    %v4717 = vld [vmem:[#allocation11 + $0x198] sm:$0xf]
    %v4718 = vld [vmem:[#allocation11 + $0x19c] sm:$0xf]
    %v4719 = vld [vmem:[#allocation11 + $0x1a0] sm:$0xf]
    %v4720 = vld [vmem:[#allocation11 + $0x1a4] sm:$0xf]
    %v4721 = vld [vmem:[#allocation11 + $0x1a8] sm:$0xf]
    %v4722 = vld [vmem:[#allocation11 + $0x1ac] sm:$0xf]
    %v4723 = vld [vmem:[#allocation11 + $0x1b0] sm:$0xf]
    %v4724 = vld [vmem:[#allocation11 + $0x1b4] sm:$0xf]
    %v4725 = vld [vmem:[#allocation11 + $0x1b8] sm:$0xf]
    %v4726 = vld [vmem:[#allocation11 + $0x1bc] sm:$0xf]
    %v4727 = vld [vmem:[#allocation11 + $0x1c0] sm:$0xf]
    %v4728 = vld [vmem:[#allocation11 + $0x1c4] sm:$0xf]
    %v4729 = vld [vmem:[#allocation11 + $0x1c8] sm:$0xf]
    %v4730 = vld [vmem:[#allocation11 + $0x1cc] sm:$0xf]
    %v4731 = vld [vmem:[#allocation11 + $0x1d0] sm:$0xf]
    %v4732 = vld [vmem:[#allocation11 + $0x1d4] sm:$0xf]
    %v4733 = vld [vmem:[#allocation11 + $0x1d8] sm:$0xf]
    %v4734 = vld [vmem:[#allocation11 + $0x1dc] sm:$0xf]
    %v4735 = vld [vmem:[#allocation11 + $0x1e0] sm:$0xf]
    %v4736 = vld [vmem:[#allocation11 + $0x1e4] sm:$0xf]
    %v4737 = vld [vmem:[#allocation11 + $0x1e8] sm:$0xf]
    %v4738 = vld [vmem:[#allocation11 + $0x1ec] sm:$0xf]
    %v4739 = vld [vmem:[#allocation11 + $0x1f0] sm:$0xf]
    %v4740 = vld [vmem:[#allocation11 + $0x1f4] sm:$0xf]
    %v4741 = vld [vmem:[#allocation11 + $0x1f8] sm:$0xf]
    %v4742 = vld [vmem:[#allocation11 + $0x1fc] sm:$0xf]
    %v4743 = vld [vmem:[#allocation11 + $0x200] sm:$0xf]
    %v4744 = vld [vmem:[#allocation11 + $0x204] sm:$0xf]
    %v4745 = vld [vmem:[#allocation11 + $0x208] sm:$0xf]
    %v4746 = vld [vmem:[#allocation11 + $0x20c] sm:$0xf]
    %v4747 = vld [vmem:[#allocation11 + $0x210] sm:$0xf]
    %v4748 = vld [vmem:[#allocation11 + $0x214] sm:$0xf]
    %v4749 = vld [vmem:[#allocation11 + $0x218] sm:$0xf]
    %v4750 = vld [vmem:[#allocation11 + $0x21c] sm:$0xf]
    %v4751 = vld [vmem:[#allocation11 + $0x220] sm:$0xf]
    %v4752 = vld [vmem:[#allocation11 + $0x224] sm:$0xf]
    %v4753 = vld [vmem:[#allocation11 + $0x228] sm:$0xf]
    %v4754 = vld [vmem:[#allocation11 + $0x22c] sm:$0xf]
    %v4755 = vld [vmem:[#allocation11 + $0x230] sm:$0xf]
    %v4756 = vld [vmem:[#allocation11 + $0x234] sm:$0xf]
    %v4757 = vld [vmem:[#allocation11 + $0x238] sm:$0xf]
    %v4758 = vld [vmem:[#allocation11 + $0x23c] sm:$0xf]
    %v4759 = vld [vmem:[#allocation13] sm:$0x1]
    %v4761 = vlaneseq
    %v4762 = vshrl.u32 %v4761, 7
    %v4763 = vsub.s32 0, %v4762
    %v4764 = vrot.slane %v4759, %v4763
    %v4910 = vunpack.c.l.b16 %v4615
    %v4911 = vunpack.c.l.b16 %v4616
    %v4912 = vunpack.c.l.b16 %v4617
    %v4913 = vunpack.c.l.b16 %v4618
    %v4914 = vunpack.c.l.b16 %v4619
    %v4915 = vunpack.c.l.b16 %v4620
    %v4916 = vunpack.c.l.b16 %v4621
    %v4917 = vunpack.c.l.b16 %v4622
    %v4918 = vunpack.c.l.b16 %v4623
    %v4919 = vunpack.c.l.b16 %v4624
    %v4920 = vunpack.c.l.b16 %v4625
    %v4921 = vunpack.c.l.b16 %v4626
    %v4922 = vunpack.c.l.b16 %v4627
    %v4923 = vunpack.c.l.b16 %v4628
    %v4924 = vunpack.c.l.b16 %v4629
    %v4925 = vunpack.c.l.b16 %v4630
    %v4926 = vunpack.c.l.b16 %v4631
    %v4927 = vunpack.c.l.b16 %v4632
    %v4928 = vunpack.c.l.b16 %v4633
    %v4929 = vunpack.c.l.b16 %v4634
    %v4930 = vunpack.c.l.b16 %v4635
    %v4931 = vunpack.c.l.b16 %v4636
    %v4932 = vunpack.c.l.b16 %v4637
    %v4933 = vunpack.c.l.b16 %v4638
    %v4934 = vunpack.c.l.b16 %v4639
    %v4935 = vunpack.c.l.b16 %v4640
    %v4936 = vunpack.c.l.b16 %v4641
    %v4937 = vunpack.c.l.b16 %v4642
    %v4938 = vunpack.c.l.b16 %v4643
    %v4939 = vunpack.c.l.b16 %v4644
    %v4940 = vunpack.c.l.b16 %v4645
    %v4941 = vunpack.c.l.b16 %v4646
    %v4942 = vunpack.c.l.b16 %v4647
    %v4943 = vunpack.c.l.b16 %v4648
    %v4944 = vunpack.c.l.b16 %v4649
    %v4945 = vunpack.c.l.b16 %v4650
    %v4946 = vunpack.c.l.b16 %v4651
    %v4947 = vunpack.c.l.b16 %v4652
    %v4948 = vunpack.c.l.b16 %v4653
    %v4949 = vunpack.c.l.b16 %v4654
    %v4950 = vunpack.c.l.b16 %v4655
    %v4951 = vunpack.c.l.b16 %v4656
    %v4952 = vunpack.c.l.b16 %v4657
    %v4953 = vunpack.c.l.b16 %v4658
    %v4954 = vunpack.c.l.b16 %v4659
    %v4955 = vunpack.c.l.b16 %v4660
    %v4956 = vunpack.c.l.b16 %v4661
    %v4957 = vunpack.c.l.b16 %v4662
    %v4958 = vunpack.c.l.b16 %v4663
    %v4959 = vunpack.c.l.b16 %v4664
    %v4960 = vunpack.c.l.b16 %v4665
    %v4961 = vunpack.c.l.b16 %v4666
    %v4962 = vunpack.c.l.b16 %v4667
    %v4963 = vunpack.c.l.b16 %v4668
    %v4964 = vunpack.c.l.b16 %v4669
    %v4965 = vunpack.c.l.b16 %v4670
    %v4966 = vunpack.c.l.b16 %v4671
    %v4967 = vunpack.c.l.b16 %v4672
    %v4968 = vunpack.c.l.b16 %v4673
    %v4969 = vunpack.c.l.b16 %v4674
    %v4970 = vunpack.c.l.b16 %v4675
    %v4971 = vunpack.c.l.b16 %v4676
    %v4972 = vunpack.c.l.b16 %v4677
    %v4973 = vunpack.c.l.b16 %v4678
    %v4974 = vunpack.c.l.b16 %v4679
    %v4975 = vunpack.c.l.b16 %v4680
    %v4976 = vunpack.c.l.b16 %v4681
    %v4977 = vunpack.c.l.b16 %v4682
    %v4978 = vunpack.c.l.b16 %v4683
    %v4979 = vunpack.c.l.b16 %v4684
    %v4980 = vunpack.c.l.b16 %v4685
    %v4981 = vunpack.c.l.b16 %v4686
    %v4982 = vunpack.c.l.b16 %v4687
    %v4983 = vunpack.c.l.b16 %v4688
    %v4984 = vunpack.c.l.b16 %v4689
    %v4985 = vunpack.c.l.b16 %v4690
    %v4986 = vunpack.c.l.b16 %v4691
    %v4987 = vunpack.c.l.b16 %v4692
    %v4988 = vunpack.c.l.b16 %v4693
    %v4989 = vunpack.c.l.b16 %v4694
    %v4990 = vunpack.c.l.b16 %v4695
    %v4991 = vunpack.c.l.b16 %v4696
    %v4992 = vunpack.c.l.b16 %v4697
    %v4993 = vunpack.c.l.b16 %v4698
    %v4994 = vunpack.c.l.b16 %v4699
    %v4995 = vunpack.c.l.b16 %v4700
    %v4996 = vunpack.c.l.b16 %v4701
    %v4997 = vunpack.c.l.b16 %v4702
    %v4998 = vunpack.c.l.b16 %v4703
    %v4999 = vunpack.c.l.b16 %v4704
    %v5000 = vunpack.c.l.b16 %v4705
    %v5001 = vunpack.c.l.b16 %v4706
    %v5002 = vunpack.c.l.b16 %v4707
    %v5003 = vunpack.c.l.b16 %v4708
    %v5004 = vunpack.c.l.b16 %v4709
    %v5005 = vunpack.c.l.b16 %v4710
    %v5006 = vunpack.c.l.b16 %v4711
    %v5007 = vunpack.c.l.b16 %v4712
    %v5008 = vunpack.c.l.b16 %v4713
    %v5009 = vunpack.c.l.b16 %v4714
    %v5010 = vunpack.c.l.b16 %v4715
    %v5011 = vunpack.c.l.b16 %v4716
    %v5012 = vunpack.c.l.b16 %v4717
    %v5013 = vunpack.c.l.b16 %v4718
    %v5014 = vunpack.c.l.b16 %v4719
    %v5015 = vunpack.c.l.b16 %v4720
    %v5016 = vunpack.c.l.b16 %v4721
    %v5017 = vunpack.c.l.b16 %v4722
    %v5018 = vunpack.c.l.b16 %v4723
    %v5019 = vunpack.c.l.b16 %v4724
    %v5020 = vunpack.c.l.b16 %v4725
    %v5021 = vunpack.c.l.b16 %v4726
    %v5022 = vunpack.c.l.b16 %v4727
    %v5023 = vunpack.c.l.b16 %v4728
    %v5024 = vunpack.c.l.b16 %v4729
    %v5025 = vunpack.c.l.b16 %v4730
    %v5026 = vunpack.c.l.b16 %v4731
    %v5027 = vunpack.c.l.b16 %v4732
    %v5028 = vunpack.c.l.b16 %v4733
    %v5029 = vunpack.c.l.b16 %v4734
    %v5030 = vunpack.c.l.b16 %v4735
    %v5031 = vunpack.c.l.b16 %v4736
    %v5032 = vunpack.c.l.b16 %v4737
    %v5033 = vunpack.c.l.b16 %v4738
    %v5034 = vunpack.c.l.b16 %v4739
    %v5035 = vunpack.c.l.b16 %v4740
    %v5036 = vunpack.c.l.b16 %v4741
    %v5037 = vunpack.c.l.b16 %v4742
    %v5038 = vunpack.c.l.b16 %v4743
    %v5039 = vunpack.c.l.b16 %v4744
    %v5040 = vunpack.c.l.b16 %v4745
    %v5041 = vunpack.c.l.b16 %v4746
    %v5042 = vunpack.c.l.b16 %v4747
    %v5043 = vunpack.c.l.b16 %v4748
    %v5044 = vunpack.c.l.b16 %v4749
    %v5045 = vunpack.c.l.b16 %v4750
    %v5046 = vunpack.c.l.b16 %v4751
    %v5047 = vunpack.c.l.b16 %v4752
    %v5048 = vunpack.c.l.b16 %v4753
    %v5049 = vunpack.c.l.b16 %v4754
    %v5050 = vunpack.c.l.b16 %v4755
    %v5051 = vunpack.c.l.b16 %v4756
    %v5052 = vunpack.c.l.b16 %v4757
    %v5053 = vunpack.c.l.b16 %v4758
    %v5054 = vpack.c.b16 %v4911, %v4910
    %v5055 = vpack.c.b16 %v4913, %v4912
    %v5056 = vpack.c.b16 %v4915, %v4914
    %v5057 = vpack.c.b16 %v4917, %v4916
    %v5058 = vpack.c.b16 %v4919, %v4918
    %v5059 = vpack.c.b16 %v4921, %v4920
    %v5060 = vpack.c.b16 %v4923, %v4922
    %v5061 = vpack.c.b16 %v4925, %v4924
    %v5062 = vpack.c.b16 %v4927, %v4926
    %v5063 = vpack.c.b16 %v4929, %v4928
    %v5064 = vpack.c.b16 %v4931, %v4930
    %v5065 = vpack.c.b16 %v4933, %v4932
    %v5066 = vpack.c.b16 %v4935, %v4934
    %v5067 = vpack.c.b16 %v4937, %v4936
    %v5068 = vpack.c.b16 %v4939, %v4938
    %v5069 = vpack.c.b16 %v4941, %v4940
    %v5070 = vpack.c.b16 %v4943, %v4942
    %v5071 = vpack.c.b16 %v4945, %v4944
    %v5072 = vpack.c.b16 %v4947, %v4946
    %v5073 = vpack.c.b16 %v4949, %v4948
    %v5074 = vpack.c.b16 %v4951, %v4950
    %v5075 = vpack.c.b16 %v4953, %v4952
    %v5076 = vpack.c.b16 %v4955, %v4954
    %v5077 = vpack.c.b16 %v4957, %v4956
    %v5078 = vpack.c.b16 %v4959, %v4958
    %v5079 = vpack.c.b16 %v4961, %v4960
    %v5080 = vpack.c.b16 %v4963, %v4962
    %v5081 = vpack.c.b16 %v4965, %v4964
    %v5082 = vpack.c.b16 %v4967, %v4966
    %v5083 = vpack.c.b16 %v4969, %v4968
    %v5084 = vpack.c.b16 %v4971, %v4970
    %v5085 = vpack.c.b16 %v4973, %v4972
    %v5086 = vpack.c.b16 %v4975, %v4974
    %v5087 = vpack.c.b16 %v4977, %v4976
    %v5088 = vpack.c.b16 %v4979, %v4978
    %v5089 = vpack.c.b16 %v4981, %v4980
    %v5090 = vpack.c.b16 %v4983, %v4982
    %v5091 = vpack.c.b16 %v4985, %v4984
    %v5092 = vpack.c.b16 %v4987, %v4986
    %v5093 = vpack.c.b16 %v4989, %v4988
    %v5094 = vpack.c.b16 %v4991, %v4990
    %v5095 = vpack.c.b16 %v4993, %v4992
    %v5096 = vpack.c.b16 %v4995, %v4994
    %v5097 = vpack.c.b16 %v4997, %v4996
    %v5098 = vpack.c.b16 %v4999, %v4998
    %v5099 = vpack.c.b16 %v5001, %v5000
    %v5100 = vpack.c.b16 %v5003, %v5002
    %v5101 = vpack.c.b16 %v5005, %v5004
    %v5102 = vpack.c.b16 %v5007, %v5006
    %v5103 = vpack.c.b16 %v5009, %v5008
    %v5104 = vpack.c.b16 %v5011, %v5010
    %v5105 = vpack.c.b16 %v5013, %v5012
    %v5106 = vpack.c.b16 %v5015, %v5014
    %v5107 = vpack.c.b16 %v5017, %v5016
    %v5108 = vpack.c.b16 %v5019, %v5018
    %v5109 = vpack.c.b16 %v5021, %v5020
    %v5110 = vpack.c.b16 %v5023, %v5022
    %v5111 = vpack.c.b16 %v5025, %v5024
    %v5112 = vpack.c.b16 %v5027, %v5026
    %v5113 = vpack.c.b16 %v5029, %v5028
    %v5114 = vpack.c.b16 %v5031, %v5030
    %v5115 = vpack.c.b16 %v5033, %v5032
    %v5116 = vpack.c.b16 %v5035, %v5034
    %v5117 = vpack.c.b16 %v5037, %v5036
    %v5118 = vpack.c.b16 %v5039, %v5038
    %v5119 = vpack.c.b16 %v5041, %v5040
    %v5120 = vpack.c.b16 %v5043, %v5042
    %v5121 = vpack.c.b16 %v5045, %v5044
    %v5122 = vpack.c.b16 %v5047, %v5046
    %v5123 = vpack.c.b16 %v5049, %v5048
    %v5124 = vpack.c.b16 %v5051, %v5050
    %v5125 = vpack.c.b16 %v5053, %v5052
    %5198 = vmatprep.subr.bf16.mxu0 0
    %5199 = vmatpush1.bf16.msra.mxu0 %v5054
    %5200 = vmatprep.subr.bf16.mxu0 0
    %5201 = vmatpush1.bf16.msra.mxu0 %v5055
    %5202 = vmatprep.subr.bf16.mxu0 0
    %5203 = vmatpush1.bf16.msra.mxu0 %v5056
    %5204 = vmatprep.subr.bf16.mxu0 0
    %5205 = vmatpush1.bf16.msra.mxu0 %v5057
    %5206 = vmatprep.subr.bf16.mxu0 0
    %5207 = vmatpush1.bf16.msra.mxu0 %v5058
    %5208 = vmatprep.subr.bf16.mxu0 0
    %5209 = vmatpush1.bf16.msra.mxu0 %v5059
    %5210 = vmatprep.subr.bf16.mxu0 0
    %5211 = vmatpush1.bf16.msra.mxu0 %v5060
    %5212 = vmatprep.subr.bf16.mxu0 0
    %5213 = vmatpush1.bf16.msra.mxu0 %v5061
    %5214 = vmatprep.subr.bf16.mxu0 0
    %5215 = vmatpush1.bf16.msra.mxu0 %v5062
    %5216 = vmatprep.subr.bf16.mxu0 0
    %5217 = vmatpush1.bf16.msra.mxu0 %v5063
    %5218 = vmatprep.subr.bf16.mxu0 0
    %5219 = vmatpush1.bf16.msra.mxu0 %v5064
    %5220 = vmatprep.subr.bf16.mxu0 0
    %5221 = vmatpush1.bf16.msra.mxu0 %v5065
    %5222 = vmatprep.subr.bf16.mxu0 0
    %5223 = vmatpush1.bf16.msra.mxu0 %v5066
    %5224 = vmatprep.subr.bf16.mxu0 0
    %5225 = vmatpush1.bf16.msra.mxu0 %v5067
    %5226 = vmatprep.subr.bf16.mxu0 0
    %5227 = vmatpush1.bf16.msra.mxu0 %v5068
    %5228 = vmatprep.subr.bf16.mxu0 0
    %5229 = vmatpush1.bf16.msra.mxu0 %v5069
    %5230 = vmatprep.mubr.bf16.mxu0 %v4607
    %5231 = vmatmul.mubr.bf16.gmra.mrb[0].mxu0 %v4606
    %v5232 = vpop.f32.mrb[0].mxu0
    %v5233 = vadd.f32 %v4764, %v5232
    %v5234 = vpop.f32.mrb[0].mxu0
    %v5235 = vpop.f32.mrb[0].mxu0
    %v5236 = vpop.f32.mrb[0].mxu0
    %5237 = vdwg.mxu0
    %5238 = vmatprep.subr.bf16.mxu0 0
    %5239 = vmatpush1.bf16.msra.mxu0 %v5070
    %5240 = vmatprep.subr.bf16.mxu0 0
    %5241 = vmatpush1.bf16.msra.mxu0 %v5071
    %5242 = vmatprep.subr.bf16.mxu0 0
    %5243 = vmatpush1.bf16.msra.mxu0 %v5072
    %5244 = vmatprep.subr.bf16.mxu0 0
    %5245 = vmatpush1.bf16.msra.mxu0 %v5073
    %5246 = vmatprep.subr.bf16.mxu0 0
    %5247 = vmatpush1.bf16.msra.mxu0 %v5074
    %5248 = vmatprep.subr.bf16.mxu0 0
    %5249 = vmatpush1.bf16.msra.mxu0 %v5075
    %5250 = vmatprep.subr.bf16.mxu0 0
    %5251 = vmatpush1.bf16.msra.mxu0 %v5076
    %5252 = vmatprep.subr.bf16.mxu0 0
    %5253 = vmatpush1.bf16.msra.mxu0 %v5077
    %5254 = vmatprep.subr.bf16.mxu0 0
    %5255 = vmatpush1.bf16.msra.mxu0 %v5078
    %5256 = vmatprep.subr.bf16.mxu0 0
    %5257 = vmatpush1.bf16.msra.mxu0 %v5079
    %5258 = vmatprep.subr.bf16.mxu0 0
    %5259 = vmatpush1.bf16.msra.mxu0 %v5080
    %5260 = vmatprep.subr.bf16.mxu0 0
    %5261 = vmatpush1.bf16.msra.mxu0 %v5081
    %5262 = vmatprep.subr.bf16.mxu0 0
    %5263 = vmatpush1.bf16.msra.mxu0 %v5082
    %5264 = vmatprep.subr.bf16.mxu0 0
    %5265 = vmatpush1.bf16.msra.mxu0 %v5083
    %5266 = vmatprep.subr.bf16.mxu0 0
    %5267 = vmatpush1.bf16.msra.mxu0 %v5084
    %5268 = vmatprep.subr.bf16.mxu0 0
    %5269 = vmatpush1.bf16.msra.mxu0 %v5085
    %5270 = vmatprep.mubr.bf16.mxu0 %v4609
    %5271 = vmatmul.mubr.bf16.gmra.mrb[0].mxu0 %v4608
    %v5272 = vpop.f32.mrb[0].mxu0
    %v5273 = vadd.f32 %v5233, %v5272
    %v5274 = vpop.f32.mrb[0].mxu0
    %v5275 = vpop.f32.mrb[0].mxu0
    %v5276 = vpop.f32.mrb[0].mxu0
    %5277 = vdwg.mxu0
    %5278 = vmatprep.subr.bf16.mxu0 0
    %5279 = vmatpush1.bf16.msra.mxu0 %v5086
    %5280 = vmatprep.subr.bf16.mxu0 0
    %5281 = vmatpush1.bf16.msra.mxu0 %v5087
    %5282 = vmatprep.subr.bf16.mxu0 0
    %5283 = vmatpush1.bf16.msra.mxu0 %v5088
    %5284 = vmatprep.subr.bf16.mxu0 0
    %5285 = vmatpush1.bf16.msra.mxu0 %v5089
    %5286 = vmatprep.subr.bf16.mxu0 0
    %5287 = vmatpush1.bf16.msra.mxu0 %v5090
    %5288 = vmatprep.subr.bf16.mxu0 0
    %5289 = vmatpush1.bf16.msra.mxu0 %v5091
    %5290 = vmatprep.subr.bf16.mxu0 0
    %5291 = vmatpush1.bf16.msra.mxu0 %v5092
    %5292 = vmatprep.subr.bf16.mxu0 0
    %5293 = vmatpush1.bf16.msra.mxu0 %v5093
    %5294 = vmatprep.subr.bf16.mxu0 0
    %5295 = vmatpush1.bf16.msra.mxu0 %v5094
    %5296 = vmatprep.subr.bf16.mxu0 0
    %5297 = vmatpush1.bf16.msra.mxu0 %v5095
    %5298 = vmatprep.subr.bf16.mxu0 0
    %5299 = vmatpush1.bf16.msra.mxu0 %v5096
    %5300 = vmatprep.subr.bf16.mxu0 0
    %5301 = vmatpush1.bf16.msra.mxu0 %v5097
    %5302 = vmatprep.subr.bf16.mxu0 0
    %5303 = vmatpush1.bf16.msra.mxu0 %v5098
    %5304 = vmatprep.subr.bf16.mxu0 0
    %5305 = vmatpush1.bf16.msra.mxu0 %v5099
    %5306 = vmatprep.subr.bf16.mxu0 0
    %5307 = vmatpush1.bf16.msra.mxu0 %v5100
    %5308 = vmatprep.subr.bf16.mxu0 0
    %5309 = vmatpush1.bf16.msra.mxu0 %v5101
    %5310 = vmatprep.mubr.bf16.mxu0 %v4611
    %5311 = vmatmul.mubr.bf16.gmra.mrb[0].mxu0 %v4610
    %v5312 = vpop.f32.mrb[0].mxu0
    %v5313 = vadd.f32 %v5273, %v5312
    %v5314 = vpop.f32.mrb[0].mxu0
    %v5315 = vpop.f32.mrb[0].mxu0
    %v5316 = vpop.f32.mrb[0].mxu0
    %5317 = vdwg.mxu0
    %5318 = vmatprep.subr.bf16.mxu0 0
    %5319 = vmatpush1.bf16.msra.mxu0 %v5102
    %5320 = vmatprep.subr.bf16.mxu0 0
    %5321 = vmatpush1.bf16.msra.mxu0 %v5103
    %5322 = vmatprep.subr.bf16.mxu0 0
    %5323 = vmatpush1.bf16.msra.mxu0 %v5104
    %5324 = vmatprep.subr.bf16.mxu0 0
    %5325 = vmatpush1.bf16.msra.mxu0 %v5105
    %5326 = vmatprep.subr.bf16.mxu0 0
    %5327 = vmatpush1.bf16.msra.mxu0 %v5106
    %5328 = vmatprep.subr.bf16.mxu0 0
    %5329 = vmatpush1.bf16.msra.mxu0 %v5107
    %5330 = vmatprep.subr.bf16.mxu0 0
    %5331 = vmatpush1.bf16.msra.mxu0 %v5108
    %5332 = vmatprep.subr.bf16.mxu0 0
    %5333 = vmatpush1.bf16.msra.mxu0 %v5109
    %5334 = vmatprep.subr.bf16.mxu0 0
    %5335 = vmatpush1.bf16.msra.mxu0 %v5110
    %5336 = vmatprep.subr.bf16.mxu0 0
    %5337 = vmatpush1.bf16.msra.mxu0 %v5111
    %5338 = vmatprep.subr.bf16.mxu0 0
    %5339 = vmatpush1.bf16.msra.mxu0 %v5112
    %5340 = vmatprep.subr.bf16.mxu0 0
    %5341 = vmatpush1.bf16.msra.mxu0 %v5113
    %5342 = vmatprep.subr.bf16.mxu0 0
    %5343 = vmatpush1.bf16.msra.mxu0 %v5114
    %5344 = vmatprep.subr.bf16.mxu0 0
    %5345 = vmatpush1.bf16.msra.mxu0 %v5115
    %5346 = vmatprep.subr.bf16.mxu0 0
    %5347 = vmatpush1.bf16.msra.mxu0 %v5116
    %5348 = vmatprep.subr.bf16.mxu0 0
    %5349 = vmatpush1.bf16.msra.mxu0 %v5117
    %5350 = vmatprep.mubr.bf16.mxu0 %v4613
    %5351 = vmatmul.mubr.bf16.gmra.mrb[0].mxu0 %v4612
    %v5352 = vpop.f32.mrb[0].mxu0
    %v5353 = vadd.f32 %v5313, %v5352
    %v5354 = vpop.f32.mrb[0].mxu0
    %v5355 = vpop.f32.mrb[0].mxu0
    %v5356 = vpop.f32.mrb[0].mxu0
    %5357 = vdwg.mxu0
    %5358 = vmatprep.subr.bf16.mxu0 0
    %5359 = vmatpush1.bf16.msra.mxu0 %v5118
    %5360 = vmatprep.subr.bf16.mxu0 0
    %5361 = vmatpush1.bf16.msra.mxu0 %v5119
    %5362 = vmatprep.subr.bf16.mxu0 0
    %5363 = vmatpush1.bf16.msra.mxu0 %v5120
    %5364 = vmatprep.subr.bf16.mxu0 0
    %5365 = vmatpush1.bf16.msra.mxu0 %v5121
    %5366 = vmatprep.subr.bf16.mxu0 0
    %5367 = vmatpush1.bf16.msra.mxu0 %v5122
    %5368 = vmatprep.subr.bf16.mxu0 0
    %5369 = vmatpush1.bf16.msra.mxu0 %v5123
    %5370 = vmatprep.subr.bf16.mxu0 0
    %5371 = vmatpush1.bf16.msra.mxu0 %v5124
    %5372 = vmatprep.subr.bf16.mxu0 0
    %5373 = vmatpush1.bf16.msra.mxu0 %v5125
    %5374 = vmatprep.subr.bf16.mxu0 0
    %5375 = vmatpush1.bf16.msra.mxu0 0
    %5376 = vmatprep.subr.bf16.mxu0 0
    %5377 = vmatpush1.bf16.msra.mxu0 0
    %5378 = vmatprep.subr.bf16.mxu0 0
    %5379 = vmatpush1.bf16.msra.mxu0 0
    %5380 = vmatprep.subr.bf16.mxu0 0
    %5381 = vmatpush1.bf16.msra.mxu0 0
    %5382 = vmatprep.subr.bf16.mxu0 0
    %5383 = vmatpush1.bf16.msra.mxu0 0
    %5384 = vmatprep.subr.bf16.mxu0 0
    %5385 = vmatpush1.bf16.msra.mxu0 0
    %5386 = vmatprep.subr.bf16.mxu0 0
    %5387 = vmatpush1.bf16.msra.mxu0 0
    %5388 = vmatprep.subr.bf16.mxu0 0
    %5389 = vmatpush1.bf16.msra.mxu0 0
    %5390 = vmatprep.mubr.bf16.mxu0 0
    %5391 = vmatmul.mubr.bf16.gmra.mrb[0].mxu0 %v4614
    %v5392 = vpop.f32.mrb[0].mxu0
    %v5393 = vadd.f32 %v5353, %v5392
    %v5394 = vpop.f32.mrb[0].mxu0
    %v5395 = vpop.f32.mrb[0].mxu0
    %v5396 = vpop.f32.mrb[0].mxu0
    %5397 = vdwg.mxu0
    %v5398 = vlaneseq
    %v5399 = vand.u32 %v5398, 127
    %vm5400 = vcmp.lt.s32.totalorder %v5399, 10
    %v5401 = vsel %vm5400, %v5393, -1e+30
    %5402 = vmax.xlane.f32.xlu0 %v5401
    %v5403 = vpop.xlane.xlu0 %5402
    %v5404 = vsub.f32 %v5401, %v5403
    %v5405 = vmul.f32 %v5404, 1.442695
    %v5406 = vpow.pop %v5405
    %5407 = vadd.xlane.f32.xlu0 %v5406
    %v5408 = vpop.xlane.xlu0 %5407
    %v5409 = vlog2.pop %v5408
    %v5410 = vmul.f32 %v5409, 0.6931472
    %v5411 = vadd.f32 %v5410, %v5403
    %v5412 = vsub.f32 %v5393, %v5411
    %5413 = vst [vmem:[#allocation14] sm:$0xff] %v5412
    // Predicated region
    $region58: #{tpu_custom_call.1} parent=1 // pred_check
      _
    $region59: #{tpu_custom_call.1} parent=1 // pred_check_branch
      %5415 = sbr.rel (0) target = $region61
    $region60: #{tpu_custom_call.1} parent=1 // pred_region
      %s5417 = ssub.s32 128, 128
      %5418 = vsyncadd [#allocation4], %s5417
      %s5420 = sshll.u32 [#allocation14], 4
      %s5421 = int_to_ptr.vmem [resolvable:$true] %s5420
      %5423 = dma.vmem_to_hbm [thread:$0]  %s5421, 128, %s7, [#allocation4]
    $region61: #{tpu_custom_call.1} parent=1 // pred_fallthru
      _
    // Predicated region
    $region62: #{tpu_custom_call.1} parent=1 // pred_check
      _
    $region63: #{tpu_custom_call.1} parent=1 // pred_check_branch
      %5425 = sbr.rel (0) target = $region65
    $region64: #{tpu_custom_call.1} parent=1 // pred_region
      %5426 = dma.done [#allocation4], 128
    $region65: #{tpu_custom_call.1} parent=1 // pred_fallthru
      _
    %5427 = vsyncpa [#allocation3], 1
    %5428 = vsyncpa [#allocation6], 1
    %5429 = vsyncpa [#allocation9], 1
    %5430 = vsyncpa [#allocation12], 1
    %5431 = vsyncpa [#allocation4], 1

</llo_original>
